<compile_context>
chip_gen: v7x
topology: tpu7x:2x2x1
jax: 0.10.0
libtpu: 0.0.40
codegen_flags: <defaults>
</compile_context>

<pallas_src>
import functools
import math

import jax
import jax.numpy as jnp
from jax.experimental import pallas as pl
from jax.experimental.pallas import tpu as pltpu

EPS = 1e-5  # nn.LayerNorm default eps

# vector-slab row layout (see pack_params)
_ROW_PPB, _ROW_PPG, _ROW_PPBT = 0, 1, 2
_ROW_WPB, _ROW_WPG, _ROW_WPBT = 3, 4, 5
_ROW_O1B, _ROW_O1G, _ROW_O1BT = 6, 7, 8
_ROW_O2B = 9
_LAYER_BASE = 10
_ROWS_PER_LAYER = 8  # bqkv, bo, g1, bt1, b1, b2, g2, bt2


def _full_spec(shape):
    zeros = (0,) * len(shape)
    return pl.BlockSpec(shape, lambda *_: zeros)


# ----------------------------------------------------------------------------
# Single fused kernel: input projections -> encoder stack -> output head
# ----------------------------------------------------------------------------
def _fused_forward_kernel(past_ref, fut_ref, pos_ref, bias_ref,
                          ppw_ref, wpw_ref,
                          wqkv_ref, wo_ref, w1_ref, w2_ref,
                          o1w_ref, o2w_ref, vec_ref, out_ref,
                          *, B, Sp, Sf, nhead, num_layers):
    d = ppw_ref.shape[-1]
    ff = w1_ref.shape[-1]
    hd = d // nhead
    BS = B * (Sp + Sf)
    n_pad = out_ref.shape[-1]
    bf16 = jnp.bfloat16

    def vrow(r, w):                      # (1, w) f32 row of the vector slab
        return vec_ref[r:r + 1, :w]

    def layer_norm(y, g, bt):            # f32 elementwise path
        mu = jnp.mean(y, axis=-1, keepdims=True)
        var = jnp.mean(jnp.square(y - mu), axis=-1, keepdims=True)
        return (y - mu) * jax.lax.rsqrt(var + EPS) * g + bt

    def bdot(x, w):                      # bf16 MXU operands, f32 accumulation
        return jnp.dot(x.astype(bf16), w, preferred_element_type=jnp.float32)

    # ---- input projections (batch-folded slabs) + positional encoding -----
    pe = jnp.maximum(
        layer_norm(bdot(past_ref[...], ppw_ref[...]) + vrow(_ROW_PPB, d),
                   vrow(_ROW_PPG, d), vrow(_ROW_PPBT, d)), 0.0)
    fe = jnp.maximum(
        layer_norm(bdot(fut_ref[...], wpw_ref[...]) + vrow(_ROW_WPB, d),
                   vrow(_ROW_WPG, d), vrow(_ROW_WPBT, d)), 0.0)
    # Rows ordered [past batch-major | future batch-major]; pos_ref is
    # pre-tiled in the wrapper with the same ordering.
    x = jnp.concatenate([pe, fe], axis=0) + pos_ref[...]          # (BS, d) f32

    # block-diagonal attention bias; head broadcast hoisted out of the loop
    bias_h = jnp.broadcast_to(bias_ref[...], (nhead, BS, BS))     # f32

    def to_heads(t):                     # (BS, d) -> (nhead, BS, hd)
        return jnp.transpose(t.reshape(BS, nhead, hd), (1, 0, 2))

    for li in range(num_layers):
        base = _LAYER_BASE + _ROWS_PER_LAYER * li
        bqkv = vrow(base + 0, 3 * d)
        bo = vrow(base + 1, d)
        g1, bt1 = vrow(base + 2, d), vrow(base + 3, d)
        b1 = vrow(base + 4, ff)
        b2 = vrow(base + 5, d)
        g2, bt2 = vrow(base + 6, d), vrow(base + 7, d)

        # fused QKV: ONE lane-dense (BS,d)x(d,3d) matmul (1/sqrt(hd) folded
        # into the Q block of wqkv/bqkv at pack time).
        qkv = bdot(x, wqkv_ref[li]) + bqkv                        # (BS,3d) f32
        q = to_heads(qkv[:, :d])                                  # (h,BS,hd)
        k = to_heads(qkv[:, d:2 * d])
        v = to_heads(qkv[:, 2 * d:])

        # scores / mask-add / softmax stay in f32 (exact division)
        s = jnp.einsum("hqe,hke->hqk", q.astype(bf16), k.astype(bf16),
                       preferred_element_type=jnp.float32) + bias_h
        s = s - jnp.max(s, axis=-1, keepdims=True)
        p = jnp.exp(s)
        p = p / jnp.sum(p, axis=-1, keepdims=True)

        ctx = jnp.einsum("hqk,hke->hqe", p.astype(bf16), v.astype(bf16),
                         preferred_element_type=jnp.float32)      # (h,BS,hd)
        # head concat + a single lane-dense (d,d) output projection
        ctx = jnp.transpose(ctx, (1, 0, 2)).reshape(BS, d)
        attn = bdot(ctx, wo_ref[li]) + bo

        # post-norm encoder layer (norm_first=False, ReLU activation)
        y = layer_norm(x + attn, g1, bt1)
        h = jnp.maximum(bdot(y, w1_ref[li]) + b1, 0.0)
        h = bdot(h, w2_ref[li]) + b2
        x = layer_norm(y + h, g2, bt2)

    # output head on future tokens; B*Sp is a multiple of 8 so the slice stays
    # sublane-aligned (no relayout of the future slab).
    fut_tok = x[B * Sp:, :]
    h = jnp.maximum(
        layer_norm(bdot(fut_tok, o1w_ref[...]) + vrow(_ROW_O1B, ff),
                   vrow(_ROW_O1G, ff), vrow(_ROW_O1BT, ff)), 0.0)
    # o2w/o2b zero-padded to n_pad lanes -> lane-dense unmasked store
    out_ref[...] = bdot(h, o2w_ref[...]) + vrow(_ROW_O2B, n_pad)


# ----------------------------------------------------------------------------
# jit-compiled wrapper: builds mask / tiled pos and launches the fused kernel
# ----------------------------------------------------------------------------
@functools.partial(jax.jit, static_argnames=("n_zones", "nhead"))
def forward(packed, past_tload_weather, future_weather, *, n_zones, nhead):
    B, Sp, _ = past_tload_weather.shape
    _, Sf, _ = future_weather.shape
    num_layers = packed["wqkv"].shape[0]
    n_pad = packed["o2w"].shape[-1]

    past2d = past_tload_weather.reshape(B * Sp, -1).astype(jnp.float32)
    fut2d = future_weather.reshape(B * Sf, -1).astype(jnp.float32)

    # positional table replicated over batch here (XLA), not inside the kernel
    pos_all = jnp.concatenate([jnp.tile(packed["pos"][:Sp], (B, 1)),
                               jnp.tile(packed["pos"][:Sf], (B, 1))], axis=0)

    # Additive block-diagonal mask: tokens attend only within their own batch
    # element (row order = [past batch-major | future batch-major]).
    bid = jnp.concatenate([jnp.repeat(jnp.arange(B), Sp),
                           jnp.repeat(jnp.arange(B), Sf)])
    attn_bias = jnp.where(bid[:, None] == bid[None, :], 0.0, -1e30)
    attn_bias = attn_bias.astype(jnp.float32)[None]               # (1, BS, BS)

    inputs = [past2d, fut2d, pos_all, attn_bias,
              packed["ppw"], packed["wpw"],
              packed["wqkv"], packed["wo"], packed["w1"], packed["w2"],
              packed["o1w"], packed["o2w"], packed["vecs"]]

    kernel = functools.partial(_fused_forward_kernel, B=B, Sp=Sp, Sf=Sf,
                               nhead=nhead, num_layers=num_layers)
    out = pl.pallas_call(
        kernel,
        out_shape=jax.ShapeDtypeStruct((B * Sf, n_pad), jnp.float32),
        grid=(1,),
        in_specs=[_full_spec(a.shape) for a in inputs],
        out_specs=_full_spec((B * Sf, n_pad)),
        compiler_params=pltpu.CompilerParams(
            dimension_semantics=("arbitrary",)),
    )(*inputs)
    return out[:, :n_zones].reshape(B, Sf, n_zones)


# ----------------------------------------------------------------------------
# Parameter construction (PyTorch-equivalent shapes/init) + kernel packing
# ----------------------------------------------------------------------------
def _xavier(key, fan_in, fan_out, gain):
    bound = gain * math.sqrt(6.0 / (fan_in + fan_out))
    return jax.random.uniform(key, (fan_in, fan_out), jnp.float32, -bound, bound)


def init_params(key, n_zones, n_weather, d_model, nhead, num_layers, dim_ff):
    keys = jax.random.split(key, 16 + 8 * num_layers)
    ki = iter(range(len(keys)))
    nk = lambda: keys[next(ki)]
    ones = lambda dd: jnp.ones((1, dd), jnp.float32)
    zeros = lambda dd: jnp.zeros((1, dd), jnp.float32)

    params = {
        "d_model": d_model, "nhead": nhead, "ff": dim_ff, "n_zones": n_zones,
        # Linear weights stored as (in, out); xavier gain 0.01 per _init_weights
        "past_proj": (_xavier(nk(), n_zones + n_weather, d_model, 0.01),
                      zeros(d_model), ones(d_model), zeros(d_model)),
        "weather_proj": (_xavier(nk(), n_weather, d_model, 0.01),
                         zeros(d_model), ones(d_model), zeros(d_model)),
        "pos": jax.random.normal(nk(), (1000, d_model), jnp.float32) * 0.02,
        "output_proj1": (_xavier(nk(), d_model, dim_ff, 0.01),
                         zeros(dim_ff), ones(dim_ff), zeros(dim_ff)),
        "output_proj2": (_xavier(nk(), dim_ff, n_zones, 0.01), zeros(n_zones)),
        "layers": [],
    }
    for _ in range(num_layers):
        params["layers"].append((
            _xavier(nk(), d_model, 3 * d_model, 1.0),  # MHA in_proj (gain 1)
            zeros(3 * d_model),
            _xavier(nk(), d_model, d_model, 0.01),     # MHA out_proj (nn.Linear)
            zeros(d_model),
            ones(d_model), zeros(d_model),             # norm1
            _xavier(nk(), d_model, dim_ff, 0.01),      # linear1
            zeros(dim_ff),
            _xavier(nk(), dim_ff, d_model, 0.01),      # linear2
            zeros(d_model),
            ones(d_model), zeros(d_model),             # norm2
        ))
    return params


def pack_params(params):
    """Repack raw params into the kernel layout: merged bf16 QKV weights with
    the 1/sqrt(hd) scale folded into the Q block, stacked per-layer weight
    slabs, one f32 bias/LayerNorm vector slab, lane-padded output head.
    Mathematically equivalent to the raw params (modulo bf16 weight cast)."""
    d, nhead, ff, nz = (params["d_model"], params["nhead"],
                        params["ff"], params["n_zones"])
    hd = d // nhead
    scale = 1.0 / math.sqrt(hd)
    n_pad = max(128, ((nz + 127) // 128) * 128)
    W = max(3 * d, ff, d, n_pad)
    bf16 = jnp.bfloat16

    def row(v):
        v = jnp.asarray(v, jnp.float32).reshape(-1)
        return jnp.zeros((W,), jnp.float32).at[:v.shape[0]].set(v)

    ppw, ppb, ppg, ppbt = params["past_proj"]
    wpw, wpb, wpg, wpbt = params["weather_proj"]
    o1w, o1b, o1g, o1bt = params["output_proj1"]
    o2w, o2b = params["output_proj2"]

    vec_rows = [row(ppb), row(ppg), row(ppbt),
                row(wpb), row(wpg), row(wpbt),
                row(o1b), row(o1g), row(o1bt),
                row(jnp.zeros((n_pad,), jnp.float32).at[:nz].set(o2b.reshape(-1)))]

    qscale = jnp.concatenate([jnp.full((d,), scale, jnp.float32),
                              jnp.ones((2 * d,), jnp.float32)])

    wqkv_l, wo_l, w1_l, w2_l = [], [], [], []
    for (wqkv, bqkv, wo, bo, g1, bt1, w1, bf1, w2, bf2, g2, bt2) in params["layers"]:
        wqkv_l.append(wqkv * qscale[None, :])       # fold 1/sqrt(hd) into Q
        wo_l.append(wo)
        w1_l.append(w1)
        w2_l.append(w2)
        vec_rows += [row(bqkv.reshape(-1) * qscale), row(bo), row(g1), row(bt1),
                     row(bf1), row(bf2), row(g2), row(bt2)]

    o2w_pad = jnp.zeros((ff, n_pad), jnp.float32).at[:, :nz].set(o2w)

    return {
        "pos": params["pos"],
        "ppw": ppw.astype(bf16),
        "wpw": wpw.astype(bf16),
        "wqkv": jnp.stack(wqkv_l).astype(bf16),     # (L, d, 3d)
        "wo": jnp.stack(wo_l).astype(bf16),         # (L, d, d)
        "w1": jnp.stack(w1_l).astype(bf16),         # (L, d, ff)
        "w2": jnp.stack(w2_l).astype(bf16),         # (L, ff, d)
        "o1w": o1w.astype(bf16),                    # (d, ff)
        "o2w": o2w_pad.astype(bf16),                # (ff, n_pad)
        "vecs": jnp.stack(vec_rows),                # (10 + 8L, W) f32
    }


# ----------------------------------------------------------------------------
# Pure-JAX reference (straightforward per-batch transformer) for validation
# ----------------------------------------------------------------------------
def reference_forward(params, past, future):
    d, nhead = params["d_model"], params["nhead"]
    hd = d // nhead
    B, Sp, _ = past.shape
    _, Sf, _ = future.shape

    def ln(y, g, bt):
        mu = y.mean(-1, keepdims=True)
        var = ((y - mu) ** 2).mean(-1, keepdims=True)
        return (y - mu) / jnp.sqrt(var + EPS) * g + bt

    pw, pb, pg, pbt = params["past_proj"]
    ww, wb, wg, wbt = params["weather_proj"]
    pe = jnp.maximum(ln(past @ pw + pb, pg, pbt), 0.0) + params["pos"][None, :Sp]
    fe = jnp.maximum(ln(future @ ww + wb, wg, wbt), 0.0) + params["pos"][None, :Sf]
    x = jnp.concatenate([pe, fe], axis=1)                     # (B, S, d)
    S = x.shape[1]

    for (wqkv, bqkv, wo, bo, g1, bt1, w1, bf1, w2, bf2, g2, bt2) in params["layers"]:
        qkv = x @ wqkv + bqkv
        q, k, v = qkv[..., :d], qkv[..., d:2 * d], qkv[..., 2 * d:]
        split = lambda t: t.reshape(B, S, nhead, hd).transpose(0, 2, 1, 3)
        qh, kh, vh = split(q), split(k), split(v)
        s = jnp.einsum("bhqe,bhke->bhqk", qh, kh) / math.sqrt(hd)
        p = jax.nn.softmax(s, axis=-1)
        ctx = jnp.einsum("bhqk,bhke->bhqe", p, vh)
        ctx = ctx.transpose(0, 2, 1, 3).reshape(B, S, d)
        attn = ctx @ wo + bo
        y = ln(x + attn, g1, bt1)
        h = jnp.maximum(y @ w1 + bf1, 0.0)
        x = ln(y + h @ w2 + bf2, g2, bt2)

    fo = x[:, -Sf:, :]
    o1w, o1b, o1g, o1bt = params["output_proj1"]
    o2w, o2b = params["output_proj2"]
    h = jnp.maximum(ln(fo @ o1w + o1b, o1g, o1bt), 0.0)
    return h @ o2w + o2b


if __name__ == "__main__":
    n_zones = 8
    n_weather = 4
    d_model = 128
    nhead = 4
    num_layers = 2
    dim_ff = 128
    B, Sp, Sf = 2, 8, 4          # B*Sp = 16 -> sublane-aligned future slice

    key = jax.random.PRNGKey(0)
    kp, kpast, kfut = jax.random.split(key, 3)

    params = init_params(kp, n_zones, n_weather, d_model, nhead, num_layers, dim_ff)
    packed = pack_params(params)

    past = jax.random.normal(kpast, (B, Sp, n_zones + n_weather), jnp.float32)
    future = jax.random.normal(kfut, (B, Sf, n_weather), jnp.float32)

    preds = forward(packed, past, future, n_zones=n_zones, nhead=nhead)
    preds = jax.block_until_ready(preds)

    assert preds.shape == (B, Sf, n_zones), preds.shape
    assert bool(jnp.all(jnp.isfinite(preds)))

    with jax.default_matmul_precision("highest"):
        ref = reference_forward(params, past, future)
    # bf16 MXU operands (f32 accumulation) vs f32 reference -> modest atol
    assert jnp.allclose(preds, ref, rtol=2e-2, atol=5e-3), (
        float(jnp.max(jnp.abs(preds - ref))))

    print("KERNEL_OK")
</pallas_src>

<mosaic_0001>
module attributes {stable_mosaic.version = 11 : i64} {
  func.func @_fused_forward_kernel(%arg0: i32, %arg1: memref<16x12xf32, #tpu.memory_space<vmem>>, %arg2: memref<8x4xf32, #tpu.memory_space<vmem>>, %arg3: memref<24x128xf32, #tpu.memory_space<vmem>>, %arg4: memref<1x24x24xf32, #tpu.memory_space<vmem>>, %arg5: memref<12x128xbf16, #tpu.memory_space<vmem>>, %arg6: memref<4x128xbf16, #tpu.memory_space<vmem>>, %arg7: memref<2x128x384xbf16, #tpu.memory_space<vmem>>, %arg8: memref<2x128x128xbf16, #tpu.memory_space<vmem>>, %arg9: memref<2x128x128xbf16, #tpu.memory_space<vmem>>, %arg10: memref<2x128x128xbf16, #tpu.memory_space<vmem>>, %arg11: memref<128x128xbf16, #tpu.memory_space<vmem>>, %arg12: memref<128x128xbf16, #tpu.memory_space<vmem>>, %arg13: memref<26x384xf32, #tpu.memory_space<vmem>>, %arg14: memref<8x128xf32, #tpu.memory_space<vmem>>) attributes {dimension_semantics = [#tpu.dimension_semantics<arbitrary>], iteration_bounds = array<i64: 1>, scalar_prefetch = 0 : i64, scratch_operands = 0 : i64, tpu.core_type = #tpu.core_type<tc>, window_params = [{pipeline_mode = #tpu.pipeline_mode<synchronous>, transform_indices = @transform_0, window_bounds = array<i64: 16, 12>}, {pipeline_mode = #tpu.pipeline_mode<synchronous>, transform_indices = @transform_1, window_bounds = array<i64: 8, 4>}, {pipeline_mode = #tpu.pipeline_mode<synchronous>, transform_indices = @transform_2, window_bounds = array<i64: 24, 128>}, {pipeline_mode = #tpu.pipeline_mode<synchronous>, transform_indices = @transform_3, window_bounds = array<i64: 1, 24, 24>}, {pipeline_mode = #tpu.pipeline_mode<synchronous>, transform_indices = @transform_4, window_bounds = array<i64: 12, 128>}, {pipeline_mode = #tpu.pipeline_mode<synchronous>, transform_indices = @transform_5, window_bounds = array<i64: 4, 128>}, {pipeline_mode = #tpu.pipeline_mode<synchronous>, transform_indices = @transform_6, window_bounds = array<i64: 2, 128, 384>}, {pipeline_mode = #tpu.pipeline_mode<synchronous>, transform_indices = @transform_7, window_bounds = array<i64: 2, 128, 128>}, {pipeline_mode = #tpu.pipeline_mode<synchronous>, transform_indices = @transform_8, window_bounds = array<i64: 2, 128, 128>}, {pipeline_mode = #tpu.pipeline_mode<synchronous>, transform_indices = @transform_9, window_bounds = array<i64: 2, 128, 128>}, {pipeline_mode = #tpu.pipeline_mode<synchronous>, transform_indices = @transform_10, window_bounds = array<i64: 128, 128>}, {pipeline_mode = #tpu.pipeline_mode<synchronous>, transform_indices = @transform_11, window_bounds = array<i64: 128, 128>}, {pipeline_mode = #tpu.pipeline_mode<synchronous>, transform_indices = @transform_12, window_bounds = array<i64: 26, 384>}, {pipeline_mode = #tpu.pipeline_mode<synchronous>, transform_indices = @transform_13, window_bounds = array<i64: 8, 128>}]} {
    %c0 = arith.constant 0 : index
    %c0_0 = arith.constant 0 : index
    %0 = vector.load %arg1[%c0, %c0_0] : memref<16x12xf32, #tpu.memory_space<vmem>>, vector<16x12xf32>
    %c0_1 = arith.constant 0 : index
    %c0_2 = arith.constant 0 : index
    %1 = vector.load %arg5[%c0_1, %c0_2] : memref<12x128xbf16, #tpu.memory_space<vmem>>, vector<12x128xbf16>
    %2 = arith.truncf %0 : vector<16x12xf32> to vector<16x12xbf16>
    %cst = arith.constant dense<0.000000e+00> : vector<16x128xf32>
    %3 = tpu.matmul %2, %1, %cst {dimension_numbers = #tpu.dot_dimension_numbers<[1], [0], [0], [1], [0, 0, 1, 1], [], []>} : vector<16x12xbf16>, vector<12x128xbf16>, vector<16x128xf32> -> vector<16x128xf32>
    %c0_3 = arith.constant 0 : index
    %c0_4 = arith.constant 0 : index
    %4 = vector.load %arg13[%c0_3, %c0_4] : memref<26x384xf32, #tpu.memory_space<vmem>>, vector<1x128xf32>
    %5 = vector.broadcast %4 : vector<1x128xf32> to vector<16x128xf32>
    %6 = arith.addf %3, %5 : vector<16x128xf32>
    %c1 = arith.constant 1 : index
    %c0_5 = arith.constant 0 : index
    %7 = vector.load %arg13[%c1, %c0_5] : memref<26x384xf32, #tpu.memory_space<vmem>>, vector<1x128xf32>
    %c2 = arith.constant 2 : index
    %c0_6 = arith.constant 0 : index
    %8 = vector.load %arg13[%c2, %c0_6] : memref<26x384xf32, #tpu.memory_space<vmem>>, vector<1x128xf32>
    %cst_7 = arith.constant dense<0.000000e+00> : vector<16xf32>
    %9 = vector.multi_reduction <add>, %6, %cst_7 [1] : vector<16x128xf32> to vector<16xf32>
    %10 = vector.shape_cast %9 : vector<16xf32> to vector<16x1xf32>
    %cst_8 = arith.constant 1.280000e+02 : f32
    %11 = vector.broadcast %cst_8 : f32 to vector<16x1xf32>
    %12 = arith.divf %10, %11 : vector<16x1xf32>
    %13 = vector.broadcast %12 : vector<16x1xf32> to vector<16x128xf32>
    %14 = arith.subf %6, %13 : vector<16x128xf32>
    %15 = arith.mulf %14, %14 : vector<16x128xf32>
    %cst_9 = arith.constant dense<0.000000e+00> : vector<16xf32>
    %16 = vector.multi_reduction <add>, %15, %cst_9 [1] : vector<16x128xf32> to vector<16xf32>
    %17 = vector.shape_cast %16 : vector<16xf32> to vector<16x1xf32>
    %cst_10 = arith.constant 1.280000e+02 : f32
    %18 = vector.broadcast %cst_10 : f32 to vector<16x1xf32>
    %19 = arith.divf %17, %18 : vector<16x1xf32>
    %20 = vector.broadcast %12 : vector<16x1xf32> to vector<16x128xf32>
    %21 = arith.subf %6, %20 : vector<16x128xf32>
    %cst_11 = arith.constant 9.99999974E-6 : f32
    %22 = vector.broadcast %cst_11 : f32 to vector<16x1xf32>
    %23 = arith.addf %19, %22 : vector<16x1xf32>
    %24 = math.rsqrt %23 : vector<16x1xf32>
    %25 = vector.broadcast %24 : vector<16x1xf32> to vector<16x128xf32>
    %26 = arith.mulf %21, %25 : vector<16x128xf32>
    %27 = vector.broadcast %7 : vector<1x128xf32> to vector<16x128xf32>
    %28 = arith.mulf %26, %27 : vector<16x128xf32>
    %29 = vector.broadcast %8 : vector<1x128xf32> to vector<16x128xf32>
    %30 = arith.addf %28, %29 : vector<16x128xf32>
    %cst_12 = arith.constant 0.000000e+00 : f32
    %31 = vector.broadcast %cst_12 : f32 to vector<16x128xf32>
    %32 = arith.maximumf %30, %31 : vector<16x128xf32>
    %c0_13 = arith.constant 0 : index
    %c0_14 = arith.constant 0 : index
    %33 = vector.load %arg2[%c0_13, %c0_14] : memref<8x4xf32, #tpu.memory_space<vmem>>, vector<8x4xf32>
    %c0_15 = arith.constant 0 : index
    %c0_16 = arith.constant 0 : index
    %34 = vector.load %arg6[%c0_15, %c0_16] : memref<4x128xbf16, #tpu.memory_space<vmem>>, vector<4x128xbf16>
    %35 = arith.truncf %33 : vector<8x4xf32> to vector<8x4xbf16>
    %cst_17 = arith.constant dense<0.000000e+00> : vector<8x128xf32>
    %36 = tpu.matmul %35, %34, %cst_17 {dimension_numbers = #tpu.dot_dimension_numbers<[1], [0], [0], [1], [0, 0, 1, 1], [], []>} : vector<8x4xbf16>, vector<4x128xbf16>, vector<8x128xf32> -> vector<8x128xf32>
    %c3 = arith.constant 3 : index
    %c0_18 = arith.constant 0 : index
    %37 = vector.load %arg13[%c3, %c0_18] : memref<26x384xf32, #tpu.memory_space<vmem>>, vector<1x128xf32>
    %38 = vector.broadcast %37 : vector<1x128xf32> to vector<8x128xf32>
    %39 = arith.addf %36, %38 : vector<8x128xf32>
    %c4 = arith.constant 4 : index
    %c0_19 = arith.constant 0 : index
    %40 = vector.load %arg13[%c4, %c0_19] : memref<26x384xf32, #tpu.memory_space<vmem>>, vector<1x128xf32>
    %c5 = arith.constant 5 : index
    %c0_20 = arith.constant 0 : index
    %41 = vector.load %arg13[%c5, %c0_20] : memref<26x384xf32, #tpu.memory_space<vmem>>, vector<1x128xf32>
    %cst_21 = arith.constant dense<0.000000e+00> : vector<8xf32>
    %42 = vector.multi_reduction <add>, %39, %cst_21 [1] : vector<8x128xf32> to vector<8xf32>
    %43 = vector.shape_cast %42 : vector<8xf32> to vector<8x1xf32>
    %cst_22 = arith.constant 1.280000e+02 : f32
    %44 = vector.broadcast %cst_22 : f32 to vector<8x1xf32>
    %45 = arith.divf %43, %44 : vector<8x1xf32>
    %46 = vector.broadcast %45 : vector<8x1xf32> to vector<8x128xf32>
    %47 = arith.subf %39, %46 : vector<8x128xf32>
    %48 = arith.mulf %47, %47 : vector<8x128xf32>
    %cst_23 = arith.constant dense<0.000000e+00> : vector<8xf32>
    %49 = vector.multi_reduction <add>, %48, %cst_23 [1] : vector<8x128xf32> to vector<8xf32>
    %50 = vector.shape_cast %49 : vector<8xf32> to vector<8x1xf32>
    %cst_24 = arith.constant 1.280000e+02 : f32
    %51 = vector.broadcast %cst_24 : f32 to vector<8x1xf32>
    %52 = arith.divf %50, %51 : vector<8x1xf32>
    %53 = vector.broadcast %45 : vector<8x1xf32> to vector<8x128xf32>
    %54 = arith.subf %39, %53 : vector<8x128xf32>
    %cst_25 = arith.constant 9.99999974E-6 : f32
    %55 = vector.broadcast %cst_25 : f32 to vector<8x1xf32>
    %56 = arith.addf %52, %55 : vector<8x1xf32>
    %57 = math.rsqrt %56 : vector<8x1xf32>
    %58 = vector.broadcast %57 : vector<8x1xf32> to vector<8x128xf32>
    %59 = arith.mulf %54, %58 : vector<8x128xf32>
    %60 = vector.broadcast %40 : vector<1x128xf32> to vector<8x128xf32>
    %61 = arith.mulf %59, %60 : vector<8x128xf32>
    %62 = vector.broadcast %41 : vector<1x128xf32> to vector<8x128xf32>
    %63 = arith.addf %61, %62 : vector<8x128xf32>
    %cst_26 = arith.constant 0.000000e+00 : f32
    %64 = vector.broadcast %cst_26 : f32 to vector<8x128xf32>
    %65 = arith.maximumf %63, %64 : vector<8x128xf32>
    %66 = tpu.concatenate %32, %65 in 0 : vector<16x128xf32>, vector<8x128xf32> -> vector<24x128xf32>
    %c0_27 = arith.constant 0 : index
    %c0_28 = arith.constant 0 : index
    %67 = vector.load %arg3[%c0_27, %c0_28] : memref<24x128xf32, #tpu.memory_space<vmem>>, vector<24x128xf32>
    %68 = arith.addf %66, %67 : vector<24x128xf32>
    %c0_29 = arith.constant 0 : index
    %c0_30 = arith.constant 0 : index
    %c0_31 = arith.constant 0 : index
    %69 = vector.load %arg4[%c0_29, %c0_30, %c0_31] : memref<1x24x24xf32, #tpu.memory_space<vmem>>, vector<1x24x24xf32>
    %70 = vector.shape_cast %69 : vector<1x24x24xf32> to vector<1x24x24xf32>
    %71 = vector.broadcast %70 : vector<1x24x24xf32> to vector<4x24x24xf32>
    %c10 = arith.constant 10 : index
    %c0_32 = arith.constant 0 : index
    %72 = vector.load %arg13[%c10, %c0_32] : memref<26x384xf32, #tpu.memory_space<vmem>>, vector<1x384xf32>
    %c11 = arith.constant 11 : index
    %c0_33 = arith.constant 0 : index
    %73 = vector.load %arg13[%c11, %c0_33] : memref<26x384xf32, #tpu.memory_space<vmem>>, vector<1x128xf32>
    %c12 = arith.constant 12 : index
    %c0_34 = arith.constant 0 : index
    %74 = vector.load %arg13[%c12, %c0_34] : memref<26x384xf32, #tpu.memory_space<vmem>>, vector<1x128xf32>
    %c13 = arith.constant 13 : index
    %c0_35 = arith.constant 0 : index
    %75 = vector.load %arg13[%c13, %c0_35] : memref<26x384xf32, #tpu.memory_space<vmem>>, vector<1x128xf32>
    %c14 = arith.constant 14 : index
    %c0_36 = arith.constant 0 : index
    %76 = vector.load %arg13[%c14, %c0_36] : memref<26x384xf32, #tpu.memory_space<vmem>>, vector<1x128xf32>
    %c15 = arith.constant 15 : index
    %c0_37 = arith.constant 0 : index
    %77 = vector.load %arg13[%c15, %c0_37] : memref<26x384xf32, #tpu.memory_space<vmem>>, vector<1x128xf32>
    %c16 = arith.constant 16 : index
    %c0_38 = arith.constant 0 : index
    %78 = vector.load %arg13[%c16, %c0_38] : memref<26x384xf32, #tpu.memory_space<vmem>>, vector<1x128xf32>
    %c17 = arith.constant 17 : index
    %c0_39 = arith.constant 0 : index
    %79 = vector.load %arg13[%c17, %c0_39] : memref<26x384xf32, #tpu.memory_space<vmem>>, vector<1x128xf32>
    %c0_40 = arith.constant 0 : index
    %c0_41 = arith.constant 0 : index
    %c0_42 = arith.constant 0 : index
    %80 = vector.load %arg7[%c0_40, %c0_41, %c0_42] : memref<2x128x384xbf16, #tpu.memory_space<vmem>>, vector<1x128x384xbf16>
    %81 = vector.shape_cast %80 : vector<1x128x384xbf16> to vector<128x384xbf16>
    %82 = arith.truncf %68 : vector<24x128xf32> to vector<24x128xbf16>
    %cst_43 = arith.constant dense<0.000000e+00> : vector<24x384xf32>
    %83 = tpu.matmul %82, %81, %cst_43 {dimension_numbers = #tpu.dot_dimension_numbers<[1], [0], [0], [1], [0, 0, 1, 1], [], []>} : vector<24x128xbf16>, vector<128x384xbf16>, vector<24x384xf32> -> vector<24x384xf32>
    %84 = vector.broadcast %72 : vector<1x384xf32> to vector<24x384xf32>
    %85 = arith.addf %83, %84 : vector<24x384xf32>
    %86 = vector.extract_strided_slice %85 {offsets = [0, 0], sizes = [24, 128], strides = [1, 1]} : vector<24x384xf32> to vector<24x128xf32>
    %87 = vector.shape_cast %86 : vector<24x128xf32> to vector<24x4x32xf32>
    %88 = tpu.transpose %87, [1, 0, 2] : vector<24x4x32xf32> -> vector<4x24x32xf32>
    %89 = vector.extract_strided_slice %85 {offsets = [0, 128], sizes = [24, 128], strides = [1, 1]} : vector<24x384xf32> to vector<24x128xf32>
    %90 = vector.shape_cast %89 : vector<24x128xf32> to vector<24x4x32xf32>
    %91 = tpu.transpose %90, [1, 0, 2] : vector<24x4x32xf32> -> vector<4x24x32xf32>
    %92 = vector.extract_strided_slice %85 {offsets = [0, 256], sizes = [24, 128], strides = [1, 1]} : vector<24x384xf32> to vector<24x128xf32>
    %93 = vector.shape_cast %92 : vector<24x128xf32> to vector<24x4x32xf32>
    %94 = tpu.transpose %93, [1, 0, 2] : vector<24x4x32xf32> -> vector<4x24x32xf32>
    %95 = arith.truncf %88 : vector<4x24x32xf32> to vector<4x24x32xbf16>
    %96 = arith.truncf %91 : vector<4x24x32xf32> to vector<4x24x32xbf16>
    "tpu.trace_start"() <{level = 10 : i32, message = "hqe,hke->hqk"}> : () -> ()
    %cst_44 = arith.constant dense<0.000000e+00> : vector<4x24x24xf32>
    %97 = tpu.matmul %95, %96, %cst_44 {dimension_numbers = #tpu.dot_dimension_numbers<[2], [2], [1], [1], [0, 0, 0, 1, 1, 1], [0], [0]>} : vector<4x24x32xbf16>, vector<4x24x32xbf16>, vector<4x24x24xf32> -> vector<4x24x24xf32>
    "tpu.trace_stop"() : () -> ()
    %98 = arith.addf %97, %71 : vector<4x24x24xf32>
    %cst_45 = arith.constant dense<0xFF800000> : vector<4x24xf32>
    %99 = vector.multi_reduction <maximumf>, %98, %cst_45 [2] : vector<4x24x24xf32> to vector<4x24xf32>
    %100 = vector.shape_cast %99 : vector<4x24xf32> to vector<4x24x1xf32>
    %101 = vector.broadcast %100 : vector<4x24x1xf32> to vector<4x24x24xf32>
    %102 = arith.subf %98, %101 : vector<4x24x24xf32>
    %103 = math.exp %102 : vector<4x24x24xf32>
    %cst_46 = arith.constant dense<0.000000e+00> : vector<4x24xf32>
    %104 = vector.multi_reduction <add>, %103, %cst_46 [2] : vector<4x24x24xf32> to vector<4x24xf32>
    %105 = vector.shape_cast %104 : vector<4x24xf32> to vector<4x24x1xf32>
    %106 = vector.broadcast %105 : vector<4x24x1xf32> to vector<4x24x24xf32>
    %107 = arith.divf %103, %106 : vector<4x24x24xf32>
    %108 = arith.truncf %107 : vector<4x24x24xf32> to vector<4x24x24xbf16>
    %109 = arith.truncf %94 : vector<4x24x32xf32> to vector<4x24x32xbf16>
    "tpu.trace_start"() <{level = 10 : i32, message = "hqk,hke->hqe"}> : () -> ()
    %cst_47 = arith.constant dense<0.000000e+00> : vector<4x24x32xf32>
    %110 = tpu.matmul %108, %109, %cst_47 {dimension_numbers = #tpu.dot_dimension_numbers<[2], [1], [1], [2], [0, 0, 0, 1, 1, 2], [0], [0]>} : vector<4x24x24xbf16>, vector<4x24x32xbf16>, vector<4x24x32xf32> -> vector<4x24x32xf32>
    "tpu.trace_stop"() : () -> ()
    %111 = tpu.transpose %110, [1, 0, 2] : vector<4x24x32xf32> -> vector<24x4x32xf32>
    %112 = vector.shape_cast %111 : vector<24x4x32xf32> to vector<24x128xf32>
    %c0_48 = arith.constant 0 : index
    %c0_49 = arith.constant 0 : index
    %c0_50 = arith.constant 0 : index
    %113 = vector.load %arg8[%c0_48, %c0_49, %c0_50] : memref<2x128x128xbf16, #tpu.memory_space<vmem>>, vector<1x128x128xbf16>
    %114 = vector.shape_cast %113 : vector<1x128x128xbf16> to vector<128x128xbf16>
    %115 = arith.truncf %112 : vector<24x128xf32> to vector<24x128xbf16>
    %cst_51 = arith.constant dense<0.000000e+00> : vector<24x128xf32>
    %116 = tpu.matmul %115, %114, %cst_51 {dimension_numbers = #tpu.dot_dimension_numbers<[1], [0], [0], [1], [0, 0, 1, 1], [], []>} : vector<24x128xbf16>, vector<128x128xbf16>, vector<24x128xf32> -> vector<24x128xf32>
    %117 = vector.broadcast %73 : vector<1x128xf32> to vector<24x128xf32>
    %118 = arith.addf %116, %117 : vector<24x128xf32>
    %119 = arith.addf %68, %118 : vector<24x128xf32>
    %cst_52 = arith.constant dense<0.000000e+00> : vector<24xf32>
    %120 = vector.multi_reduction <add>, %119, %cst_52 [1] : vector<24x128xf32> to vector<24xf32>
    %121 = vector.shape_cast %120 : vector<24xf32> to vector<24x1xf32>
    %cst_53 = arith.constant 1.280000e+02 : f32
    %122 = vector.broadcast %cst_53 : f32 to vector<24x1xf32>
    %123 = arith.divf %121, %122 : vector<24x1xf32>
    %124 = vector.broadcast %123 : vector<24x1xf32> to vector<24x128xf32>
    %125 = arith.subf %119, %124 : vector<24x128xf32>
    %126 = arith.mulf %125, %125 : vector<24x128xf32>
    %cst_54 = arith.constant dense<0.000000e+00> : vector<24xf32>
    %127 = vector.multi_reduction <add>, %126, %cst_54 [1] : vector<24x128xf32> to vector<24xf32>
    %128 = vector.shape_cast %127 : vector<24xf32> to vector<24x1xf32>
    %cst_55 = arith.constant 1.280000e+02 : f32
    %129 = vector.broadcast %cst_55 : f32 to vector<24x1xf32>
    %130 = arith.divf %128, %129 : vector<24x1xf32>
    %131 = vector.broadcast %123 : vector<24x1xf32> to vector<24x128xf32>
    %132 = arith.subf %119, %131 : vector<24x128xf32>
    %cst_56 = arith.constant 9.99999974E-6 : f32
    %133 = vector.broadcast %cst_56 : f32 to vector<24x1xf32>
    %134 = arith.addf %130, %133 : vector<24x1xf32>
    %135 = math.rsqrt %134 : vector<24x1xf32>
    %136 = vector.broadcast %135 : vector<24x1xf32> to vector<24x128xf32>
    %137 = arith.mulf %132, %136 : vector<24x128xf32>
    %138 = vector.broadcast %74 : vector<1x128xf32> to vector<24x128xf32>
    %139 = arith.mulf %137, %138 : vector<24x128xf32>
    %140 = vector.broadcast %75 : vector<1x128xf32> to vector<24x128xf32>
    %141 = arith.addf %139, %140 : vector<24x128xf32>
    %c0_57 = arith.constant 0 : index
    %c0_58 = arith.constant 0 : index
    %c0_59 = arith.constant 0 : index
    %142 = vector.load %arg9[%c0_57, %c0_58, %c0_59] : memref<2x128x128xbf16, #tpu.memory_space<vmem>>, vector<1x128x128xbf16>
    %143 = vector.shape_cast %142 : vector<1x128x128xbf16> to vector<128x128xbf16>
    %144 = arith.truncf %141 : vector<24x128xf32> to vector<24x128xbf16>
    %cst_60 = arith.constant dense<0.000000e+00> : vector<24x128xf32>
    %145 = tpu.matmul %144, %143, %cst_60 {dimension_numbers = #tpu.dot_dimension_numbers<[1], [0], [0], [1], [0, 0, 1, 1], [], []>} : vector<24x128xbf16>, vector<128x128xbf16>, vector<24x128xf32> -> vector<24x128xf32>
    %146 = vector.broadcast %76 : vector<1x128xf32> to vector<24x128xf32>
    %147 = arith.addf %145, %146 : vector<24x128xf32>
    %cst_61 = arith.constant 0.000000e+00 : f32
    %148 = vector.broadcast %cst_61 : f32 to vector<24x128xf32>
    %149 = arith.maximumf %147, %148 : vector<24x128xf32>
    %c0_62 = arith.constant 0 : index
    %c0_63 = arith.constant 0 : index
    %c0_64 = arith.constant 0 : index
    %150 = vector.load %arg10[%c0_62, %c0_63, %c0_64] : memref<2x128x128xbf16, #tpu.memory_space<vmem>>, vector<1x128x128xbf16>
    %151 = vector.shape_cast %150 : vector<1x128x128xbf16> to vector<128x128xbf16>
    %152 = arith.truncf %149 : vector<24x128xf32> to vector<24x128xbf16>
    %cst_65 = arith.constant dense<0.000000e+00> : vector<24x128xf32>
    %153 = tpu.matmul %152, %151, %cst_65 {dimension_numbers = #tpu.dot_dimension_numbers<[1], [0], [0], [1], [0, 0, 1, 1], [], []>} : vector<24x128xbf16>, vector<128x128xbf16>, vector<24x128xf32> -> vector<24x128xf32>
    %154 = vector.broadcast %77 : vector<1x128xf32> to vector<24x128xf32>
    %155 = arith.addf %153, %154 : vector<24x128xf32>
    %156 = arith.addf %141, %155 : vector<24x128xf32>
    %cst_66 = arith.constant dense<0.000000e+00> : vector<24xf32>
    %157 = vector.multi_reduction <add>, %156, %cst_66 [1] : vector<24x128xf32> to vector<24xf32>
    %158 = vector.shape_cast %157 : vector<24xf32> to vector<24x1xf32>
    %cst_67 = arith.constant 1.280000e+02 : f32
    %159 = vector.broadcast %cst_67 : f32 to vector<24x1xf32>
    %160 = arith.divf %158, %159 : vector<24x1xf32>
    %161 = vector.broadcast %160 : vector<24x1xf32> to vector<24x128xf32>
    %162 = arith.subf %156, %161 : vector<24x128xf32>
    %163 = arith.mulf %162, %162 : vector<24x128xf32>
    %cst_68 = arith.constant dense<0.000000e+00> : vector<24xf32>
    %164 = vector.multi_reduction <add>, %163, %cst_68 [1] : vector<24x128xf32> to vector<24xf32>
    %165 = vector.shape_cast %164 : vector<24xf32> to vector<24x1xf32>
    %cst_69 = arith.constant 1.280000e+02 : f32
    %166 = vector.broadcast %cst_69 : f32 to vector<24x1xf32>
    %167 = arith.divf %165, %166 : vector<24x1xf32>
    %168 = vector.broadcast %160 : vector<24x1xf32> to vector<24x128xf32>
    %169 = arith.subf %156, %168 : vector<24x128xf32>
    %cst_70 = arith.constant 9.99999974E-6 : f32
    %170 = vector.broadcast %cst_70 : f32 to vector<24x1xf32>
    %171 = arith.addf %167, %170 : vector<24x1xf32>
    %172 = math.rsqrt %171 : vector<24x1xf32>
    %173 = vector.broadcast %172 : vector<24x1xf32> to vector<24x128xf32>
    %174 = arith.mulf %169, %173 : vector<24x128xf32>
    %175 = vector.broadcast %78 : vector<1x128xf32> to vector<24x128xf32>
    %176 = arith.mulf %174, %175 : vector<24x128xf32>
    %177 = vector.broadcast %79 : vector<1x128xf32> to vector<24x128xf32>
    %178 = arith.addf %176, %177 : vector<24x128xf32>
    %c18 = arith.constant 18 : index
    %c0_71 = arith.constant 0 : index
    %179 = vector.load %arg13[%c18, %c0_71] : memref<26x384xf32, #tpu.memory_space<vmem>>, vector<1x384xf32>
    %c19 = arith.constant 19 : index
    %c0_72 = arith.constant 0 : index
    %180 = vector.load %arg13[%c19, %c0_72] : memref<26x384xf32, #tpu.memory_space<vmem>>, vector<1x128xf32>
    %c20 = arith.constant 20 : index
    %c0_73 = arith.constant 0 : index
    %181 = vector.load %arg13[%c20, %c0_73] : memref<26x384xf32, #tpu.memory_space<vmem>>, vector<1x128xf32>
    %c21 = arith.constant 21 : index
    %c0_74 = arith.constant 0 : index
    %182 = vector.load %arg13[%c21, %c0_74] : memref<26x384xf32, #tpu.memory_space<vmem>>, vector<1x128xf32>
    %c22 = arith.constant 22 : index
    %c0_75 = arith.constant 0 : index
    %183 = vector.load %arg13[%c22, %c0_75] : memref<26x384xf32, #tpu.memory_space<vmem>>, vector<1x128xf32>
    %c23 = arith.constant 23 : index
    %c0_76 = arith.constant 0 : index
    %184 = vector.load %arg13[%c23, %c0_76] : memref<26x384xf32, #tpu.memory_space<vmem>>, vector<1x128xf32>
    %c24 = arith.constant 24 : index
    %c0_77 = arith.constant 0 : index
    %185 = vector.load %arg13[%c24, %c0_77] : memref<26x384xf32, #tpu.memory_space<vmem>>, vector<1x128xf32>
    %c25 = arith.constant 25 : index
    %c0_78 = arith.constant 0 : index
    %186 = vector.load %arg13[%c25, %c0_78] : memref<26x384xf32, #tpu.memory_space<vmem>>, vector<1x128xf32>
    %c1_79 = arith.constant 1 : index
    %c0_80 = arith.constant 0 : index
    %c0_81 = arith.constant 0 : index
    %187 = vector.load %arg7[%c1_79, %c0_80, %c0_81] : memref<2x128x384xbf16, #tpu.memory_space<vmem>>, vector<1x128x384xbf16>
    %188 = vector.shape_cast %187 : vector<1x128x384xbf16> to vector<128x384xbf16>
    %189 = arith.truncf %178 : vector<24x128xf32> to vector<24x128xbf16>
    %cst_82 = arith.constant dense<0.000000e+00> : vector<24x384xf32>
    %190 = tpu.matmul %189, %188, %cst_82 {dimension_numbers = #tpu.dot_dimension_numbers<[1], [0], [0], [1], [0, 0, 1, 1], [], []>} : vector<24x128xbf16>, vector<128x384xbf16>, vector<24x384xf32> -> vector<24x384xf32>
    %191 = vector.broadcast %179 : vector<1x384xf32> to vector<24x384xf32>
    %192 = arith.addf %190, %191 : vector<24x384xf32>
    %193 = vector.extract_strided_slice %192 {offsets = [0, 0], sizes = [24, 128], strides = [1, 1]} : vector<24x384xf32> to vector<24x128xf32>
    %194 = vector.shape_cast %193 : vector<24x128xf32> to vector<24x4x32xf32>
    %195 = tpu.transpose %194, [1, 0, 2] : vector<24x4x32xf32> -> vector<4x24x32xf32>
    %196 = vector.extract_strided_slice %192 {offsets = [0, 128], sizes = [24, 128], strides = [1, 1]} : vector<24x384xf32> to vector<24x128xf32>
    %197 = vector.shape_cast %196 : vector<24x128xf32> to vector<24x4x32xf32>
    %198 = tpu.transpose %197, [1, 0, 2] : vector<24x4x32xf32> -> vector<4x24x32xf32>
    %199 = vector.extract_strided_slice %192 {offsets = [0, 256], sizes = [24, 128], strides = [1, 1]} : vector<24x384xf32> to vector<24x128xf32>
    %200 = vector.shape_cast %199 : vector<24x128xf32> to vector<24x4x32xf32>
    %201 = tpu.transpose %200, [1, 0, 2] : vector<24x4x32xf32> -> vector<4x24x32xf32>
    %202 = arith.truncf %195 : vector<4x24x32xf32> to vector<4x24x32xbf16>
    %203 = arith.truncf %198 : vector<4x24x32xf32> to vector<4x24x32xbf16>
    "tpu.trace_start"() <{level = 10 : i32, message = "hqe,hke->hqk"}> : () -> ()
    %cst_83 = arith.constant dense<0.000000e+00> : vector<4x24x24xf32>
    %204 = tpu.matmul %202, %203, %cst_83 {dimension_numbers = #tpu.dot_dimension_numbers<[2], [2], [1], [1], [0, 0, 0, 1, 1, 1], [0], [0]>} : vector<4x24x32xbf16>, vector<4x24x32xbf16>, vector<4x24x24xf32> -> vector<4x24x24xf32>
    "tpu.trace_stop"() : () -> ()
    %205 = arith.addf %204, %71 : vector<4x24x24xf32>
    %cst_84 = arith.constant dense<0xFF800000> : vector<4x24xf32>
    %206 = vector.multi_reduction <maximumf>, %205, %cst_84 [2] : vector<4x24x24xf32> to vector<4x24xf32>
    %207 = vector.shape_cast %206 : vector<4x24xf32> to vector<4x24x1xf32>
    %208 = vector.broadcast %207 : vector<4x24x1xf32> to vector<4x24x24xf32>
    %209 = arith.subf %205, %208 : vector<4x24x24xf32>
    %210 = math.exp %209 : vector<4x24x24xf32>
    %cst_85 = arith.constant dense<0.000000e+00> : vector<4x24xf32>
    %211 = vector.multi_reduction <add>, %210, %cst_85 [2] : vector<4x24x24xf32> to vector<4x24xf32>
    %212 = vector.shape_cast %211 : vector<4x24xf32> to vector<4x24x1xf32>
    %213 = vector.broadcast %212 : vector<4x24x1xf32> to vector<4x24x24xf32>
    %214 = arith.divf %210, %213 : vector<4x24x24xf32>
    %215 = arith.truncf %214 : vector<4x24x24xf32> to vector<4x24x24xbf16>
    %216 = arith.truncf %201 : vector<4x24x32xf32> to vector<4x24x32xbf16>
    "tpu.trace_start"() <{level = 10 : i32, message = "hqk,hke->hqe"}> : () -> ()
    %cst_86 = arith.constant dense<0.000000e+00> : vector<4x24x32xf32>
    %217 = tpu.matmul %215, %216, %cst_86 {dimension_numbers = #tpu.dot_dimension_numbers<[2], [1], [1], [2], [0, 0, 0, 1, 1, 2], [0], [0]>} : vector<4x24x24xbf16>, vector<4x24x32xbf16>, vector<4x24x32xf32> -> vector<4x24x32xf32>
    "tpu.trace_stop"() : () -> ()
    %218 = tpu.transpose %217, [1, 0, 2] : vector<4x24x32xf32> -> vector<24x4x32xf32>
    %219 = vector.shape_cast %218 : vector<24x4x32xf32> to vector<24x128xf32>
    %c1_87 = arith.constant 1 : index
    %c0_88 = arith.constant 0 : index
    %c0_89 = arith.constant 0 : index
    %220 = vector.load %arg8[%c1_87, %c0_88, %c0_89] : memref<2x128x128xbf16, #tpu.memory_space<vmem>>, vector<1x128x128xbf16>
    %221 = vector.shape_cast %220 : vector<1x128x128xbf16> to vector<128x128xbf16>
    %222 = arith.truncf %219 : vector<24x128xf32> to vector<24x128xbf16>
    %cst_90 = arith.constant dense<0.000000e+00> : vector<24x128xf32>
    %223 = tpu.matmul %222, %221, %cst_90 {dimension_numbers = #tpu.dot_dimension_numbers<[1], [0], [0], [1], [0, 0, 1, 1], [], []>} : vector<24x128xbf16>, vector<128x128xbf16>, vector<24x128xf32> -> vector<24x128xf32>
    %224 = vector.broadcast %180 : vector<1x128xf32> to vector<24x128xf32>
    %225 = arith.addf %223, %224 : vector<24x128xf32>
    %226 = arith.addf %178, %225 : vector<24x128xf32>
    %cst_91 = arith.constant dense<0.000000e+00> : vector<24xf32>
    %227 = vector.multi_reduction <add>, %226, %cst_91 [1] : vector<24x128xf32> to vector<24xf32>
    %228 = vector.shape_cast %227 : vector<24xf32> to vector<24x1xf32>
    %cst_92 = arith.constant 1.280000e+02 : f32
    %229 = vector.broadcast %cst_92 : f32 to vector<24x1xf32>
    %230 = arith.divf %228, %229 : vector<24x1xf32>
    %231 = vector.broadcast %230 : vector<24x1xf32> to vector<24x128xf32>
    %232 = arith.subf %226, %231 : vector<24x128xf32>
    %233 = arith.mulf %232, %232 : vector<24x128xf32>
    %cst_93 = arith.constant dense<0.000000e+00> : vector<24xf32>
    %234 = vector.multi_reduction <add>, %233, %cst_93 [1] : vector<24x128xf32> to vector<24xf32>
    %235 = vector.shape_cast %234 : vector<24xf32> to vector<24x1xf32>
    %cst_94 = arith.constant 1.280000e+02 : f32
    %236 = vector.broadcast %cst_94 : f32 to vector<24x1xf32>
    %237 = arith.divf %235, %236 : vector<24x1xf32>
    %238 = vector.broadcast %230 : vector<24x1xf32> to vector<24x128xf32>
    %239 = arith.subf %226, %238 : vector<24x128xf32>
    %cst_95 = arith.constant 9.99999974E-6 : f32
    %240 = vector.broadcast %cst_95 : f32 to vector<24x1xf32>
    %241 = arith.addf %237, %240 : vector<24x1xf32>
    %242 = math.rsqrt %241 : vector<24x1xf32>
    %243 = vector.broadcast %242 : vector<24x1xf32> to vector<24x128xf32>
    %244 = arith.mulf %239, %243 : vector<24x128xf32>
    %245 = vector.broadcast %181 : vector<1x128xf32> to vector<24x128xf32>
    %246 = arith.mulf %244, %245 : vector<24x128xf32>
    %247 = vector.broadcast %182 : vector<1x128xf32> to vector<24x128xf32>
    %248 = arith.addf %246, %247 : vector<24x128xf32>
    %c1_96 = arith.constant 1 : index
    %c0_97 = arith.constant 0 : index
    %c0_98 = arith.constant 0 : index
    %249 = vector.load %arg9[%c1_96, %c0_97, %c0_98] : memref<2x128x128xbf16, #tpu.memory_space<vmem>>, vector<1x128x128xbf16>
    %250 = vector.shape_cast %249 : vector<1x128x128xbf16> to vector<128x128xbf16>
    %251 = arith.truncf %248 : vector<24x128xf32> to vector<24x128xbf16>
    %cst_99 = arith.constant dense<0.000000e+00> : vector<24x128xf32>
    %252 = tpu.matmul %251, %250, %cst_99 {dimension_numbers = #tpu.dot_dimension_numbers<[1], [0], [0], [1], [0, 0, 1, 1], [], []>} : vector<24x128xbf16>, vector<128x128xbf16>, vector<24x128xf32> -> vector<24x128xf32>
    %253 = vector.broadcast %183 : vector<1x128xf32> to vector<24x128xf32>
    %254 = arith.addf %252, %253 : vector<24x128xf32>
    %cst_100 = arith.constant 0.000000e+00 : f32
    %255 = vector.broadcast %cst_100 : f32 to vector<24x128xf32>
    %256 = arith.maximumf %254, %255 : vector<24x128xf32>
    %c1_101 = arith.constant 1 : index
    %c0_102 = arith.constant 0 : index
    %c0_103 = arith.constant 0 : index
    %257 = vector.load %arg10[%c1_101, %c0_102, %c0_103] : memref<2x128x128xbf16, #tpu.memory_space<vmem>>, vector<1x128x128xbf16>
    %258 = vector.shape_cast %257 : vector<1x128x128xbf16> to vector<128x128xbf16>
    %259 = arith.truncf %256 : vector<24x128xf32> to vector<24x128xbf16>
    %cst_104 = arith.constant dense<0.000000e+00> : vector<24x128xf32>
    %260 = tpu.matmul %259, %258, %cst_104 {dimension_numbers = #tpu.dot_dimension_numbers<[1], [0], [0], [1], [0, 0, 1, 1], [], []>} : vector<24x128xbf16>, vector<128x128xbf16>, vector<24x128xf32> -> vector<24x128xf32>
    %261 = vector.broadcast %184 : vector<1x128xf32> to vector<24x128xf32>
    %262 = arith.addf %260, %261 : vector<24x128xf32>
    %263 = arith.addf %248, %262 : vector<24x128xf32>
    %cst_105 = arith.constant dense<0.000000e+00> : vector<24xf32>
    %264 = vector.multi_reduction <add>, %263, %cst_105 [1] : vector<24x128xf32> to vector<24xf32>
    %265 = vector.shape_cast %264 : vector<24xf32> to vector<24x1xf32>
    %cst_106 = arith.constant 1.280000e+02 : f32
    %266 = vector.broadcast %cst_106 : f32 to vector<24x1xf32>
    %267 = arith.divf %265, %266 : vector<24x1xf32>
    %268 = vector.broadcast %267 : vector<24x1xf32> to vector<24x128xf32>
    %269 = arith.subf %263, %268 : vector<24x128xf32>
    %270 = arith.mulf %269, %269 : vector<24x128xf32>
    %cst_107 = arith.constant dense<0.000000e+00> : vector<24xf32>
    %271 = vector.multi_reduction <add>, %270, %cst_107 [1] : vector<24x128xf32> to vector<24xf32>
    %272 = vector.shape_cast %271 : vector<24xf32> to vector<24x1xf32>
    %cst_108 = arith.constant 1.280000e+02 : f32
    %273 = vector.broadcast %cst_108 : f32 to vector<24x1xf32>
    %274 = arith.divf %272, %273 : vector<24x1xf32>
    %275 = vector.broadcast %267 : vector<24x1xf32> to vector<24x128xf32>
    %276 = arith.subf %263, %275 : vector<24x128xf32>
    %cst_109 = arith.constant 9.99999974E-6 : f32
    %277 = vector.broadcast %cst_109 : f32 to vector<24x1xf32>
    %278 = arith.addf %274, %277 : vector<24x1xf32>
    %279 = math.rsqrt %278 : vector<24x1xf32>
    %280 = vector.broadcast %279 : vector<24x1xf32> to vector<24x128xf32>
    %281 = arith.mulf %276, %280 : vector<24x128xf32>
    %282 = vector.broadcast %185 : vector<1x128xf32> to vector<24x128xf32>
    %283 = arith.mulf %281, %282 : vector<24x128xf32>
    %284 = vector.broadcast %186 : vector<1x128xf32> to vector<24x128xf32>
    %285 = arith.addf %283, %284 : vector<24x128xf32>
    %286 = vector.extract_strided_slice %285 {offsets = [16, 0], sizes = [8, 128], strides = [1, 1]} : vector<24x128xf32> to vector<8x128xf32>
    %c0_110 = arith.constant 0 : index
    %c0_111 = arith.constant 0 : index
    %287 = vector.load %arg11[%c0_110, %c0_111] : memref<128x128xbf16, #tpu.memory_space<vmem>>, vector<128x128xbf16>
    %288 = arith.truncf %286 : vector<8x128xf32> to vector<8x128xbf16>
    %cst_112 = arith.constant dense<0.000000e+00> : vector<8x128xf32>
    %289 = tpu.matmul %288, %287, %cst_112 {dimension_numbers = #tpu.dot_dimension_numbers<[1], [0], [0], [1], [0, 0, 1, 1], [], []>} : vector<8x128xbf16>, vector<128x128xbf16>, vector<8x128xf32> -> vector<8x128xf32>
    %c6 = arith.constant 6 : index
    %c0_113 = arith.constant 0 : index
    %290 = vector.load %arg13[%c6, %c0_113] : memref<26x384xf32, #tpu.memory_space<vmem>>, vector<1x128xf32>
    %291 = vector.broadcast %290 : vector<1x128xf32> to vector<8x128xf32>
    %292 = arith.addf %289, %291 : vector<8x128xf32>
    %c7 = arith.constant 7 : index
    %c0_114 = arith.constant 0 : index
    %293 = vector.load %arg13[%c7, %c0_114] : memref<26x384xf32, #tpu.memory_space<vmem>>, vector<1x128xf32>
    %c8 = arith.constant 8 : index
    %c0_115 = arith.constant 0 : index
    %294 = vector.load %arg13[%c8, %c0_115] : memref<26x384xf32, #tpu.memory_space<vmem>>, vector<1x128xf32>
    %cst_116 = arith.constant dense<0.000000e+00> : vector<8xf32>
    %295 = vector.multi_reduction <add>, %292, %cst_116 [1] : vector<8x128xf32> to vector<8xf32>
    %296 = vector.shape_cast %295 : vector<8xf32> to vector<8x1xf32>
    %cst_117 = arith.constant 1.280000e+02 : f32
    %297 = vector.broadcast %cst_117 : f32 to vector<8x1xf32>
    %298 = arith.divf %296, %297 : vector<8x1xf32>
    %299 = vector.broadcast %298 : vector<8x1xf32> to vector<8x128xf32>
    %300 = arith.subf %292, %299 : vector<8x128xf32>
    %301 = arith.mulf %300, %300 : vector<8x128xf32>
    %cst_118 = arith.constant dense<0.000000e+00> : vector<8xf32>
    %302 = vector.multi_reduction <add>, %301, %cst_118 [1] : vector<8x128xf32> to vector<8xf32>
    %303 = vector.shape_cast %302 : vector<8xf32> to vector<8x1xf32>
    %cst_119 = arith.constant 1.280000e+02 : f32
    %304 = vector.broadcast %cst_119 : f32 to vector<8x1xf32>
    %305 = arith.divf %303, %304 : vector<8x1xf32>
    %306 = vector.broadcast %298 : vector<8x1xf32> to vector<8x128xf32>
    %307 = arith.subf %292, %306 : vector<8x128xf32>
    %cst_120 = arith.constant 9.99999974E-6 : f32
    %308 = vector.broadcast %cst_120 : f32 to vector<8x1xf32>
    %309 = arith.addf %305, %308 : vector<8x1xf32>
    %310 = math.rsqrt %309 : vector<8x1xf32>
    %311 = vector.broadcast %310 : vector<8x1xf32> to vector<8x128xf32>
    %312 = arith.mulf %307, %311 : vector<8x128xf32>
    %313 = vector.broadcast %293 : vector<1x128xf32> to vector<8x128xf32>
    %314 = arith.mulf %312, %313 : vector<8x128xf32>
    %315 = vector.broadcast %294 : vector<1x128xf32> to vector<8x128xf32>
    %316 = arith.addf %314, %315 : vector<8x128xf32>
    %cst_121 = arith.constant 0.000000e+00 : f32
    %317 = vector.broadcast %cst_121 : f32 to vector<8x128xf32>
    %318 = arith.maximumf %316, %317 : vector<8x128xf32>
    %c0_122 = arith.constant 0 : index
    %c0_123 = arith.constant 0 : index
    %319 = vector.load %arg12[%c0_122, %c0_123] : memref<128x128xbf16, #tpu.memory_space<vmem>>, vector<128x128xbf16>
    %320 = arith.truncf %318 : vector<8x128xf32> to vector<8x128xbf16>
    %cst_124 = arith.constant dense<0.000000e+00> : vector<8x128xf32>
    %321 = tpu.matmul %320, %319, %cst_124 {dimension_numbers = #tpu.dot_dimension_numbers<[1], [0], [0], [1], [0, 0, 1, 1], [], []>} : vector<8x128xbf16>, vector<128x128xbf16>, vector<8x128xf32> -> vector<8x128xf32>
    %c9 = arith.constant 9 : index
    %c0_125 = arith.constant 0 : index
    %322 = vector.load %arg13[%c9, %c0_125] : memref<26x384xf32, #tpu.memory_space<vmem>>, vector<1x128xf32>
    %323 = vector.broadcast %322 : vector<1x128xf32> to vector<8x128xf32>
    %324 = arith.addf %321, %323 : vector<8x128xf32>
    %c0_126 = arith.constant 0 : index
    %c0_127 = arith.constant 0 : index
    %325 = vector.load %arg14[%c0_126, %c0_127] : memref<8x128xf32, #tpu.memory_space<vmem>>, vector<8x128xf32>
    tpu.vector_store %arg14[%c0_126, %c0_127], %324 {strides = array<i32>} : memref<8x128xf32, #tpu.memory_space<vmem>>, vector<8x128xf32>,
    return
  }
  func.func @transform_0(%arg0: i32) -> (i32, i32) {
    %c0_i32 = arith.constant 0 : i32
    %c0_i32_0 = arith.constant 0 : i32
    %c0_i32_1 = arith.constant 0 : i32
    return %c0_i32, %c0_i32_0 : i32, i32
  }
  func.func @transform_1(%arg0: i32) -> (i32, i32) {
    %c0_i32 = arith.constant 0 : i32
    %c0_i32_0 = arith.constant 0 : i32
    %c0_i32_1 = arith.constant 0 : i32
    return %c0_i32, %c0_i32_0 : i32, i32
  }
  func.func @transform_2(%arg0: i32) -> (i32, i32) {
    %c0_i32 = arith.constant 0 : i32
    %c0_i32_0 = arith.constant 0 : i32
    %c0_i32_1 = arith.constant 0 : i32
    return %c0_i32, %c0_i32_0 : i32, i32
  }
  func.func @transform_3(%arg0: i32) -> (i32, i32, i32) {
    %c0_i32 = arith.constant 0 : i32
    %c0_i32_0 = arith.constant 0 : i32
    %c0_i32_1 = arith.constant 0 : i32
    %c0_i32_2 = arith.constant 0 : i32
    return %c0_i32, %c0_i32_0, %c0_i32_1 : i32, i32, i32
  }
  func.func @transform_4(%arg0: i32) -> (i32, i32) {
    %c0_i32 = arith.constant 0 : i32
    %c0_i32_0 = arith.constant 0 : i32
    %c0_i32_1 = arith.constant 0 : i32
    return %c0_i32, %c0_i32_0 : i32, i32
  }
  func.func @transform_5(%arg0: i32) -> (i32, i32) {
    %c0_i32 = arith.constant 0 : i32
    %c0_i32_0 = arith.constant 0 : i32
    %c0_i32_1 = arith.constant 0 : i32
    return %c0_i32, %c0_i32_0 : i32, i32
  }
  func.func @transform_6(%arg0: i32) -> (i32, i32, i32) {
    %c0_i32 = arith.constant 0 : i32
    %c0_i32_0 = arith.constant 0 : i32
    %c0_i32_1 = arith.constant 0 : i32
    %c0_i32_2 = arith.constant 0 : i32
    return %c0_i32, %c0_i32_0, %c0_i32_1 : i32, i32, i32
  }
  func.func @transform_7(%arg0: i32) -> (i32, i32, i32) {
    %c0_i32 = arith.constant 0 : i32
    %c0_i32_0 = arith.constant 0 : i32
    %c0_i32_1 = arith.constant 0 : i32
    %c0_i32_2 = arith.constant 0 : i32
    return %c0_i32, %c0_i32_0, %c0_i32_1 : i32, i32, i32
  }
  func.func @transform_8(%arg0: i32) -> (i32, i32, i32) {
    %c0_i32 = arith.constant 0 : i32
    %c0_i32_0 = arith.constant 0 : i32
    %c0_i32_1 = arith.constant 0 : i32
    %c0_i32_2 = arith.constant 0 : i32
    return %c0_i32, %c0_i32_0, %c0_i32_1 : i32, i32, i32
  }
  func.func @transform_9(%arg0: i32) -> (i32, i32, i32) {
    %c0_i32 = arith.constant 0 : i32
    %c0_i32_0 = arith.constant 0 : i32
    %c0_i32_1 = arith.constant 0 : i32
    %c0_i32_2 = arith.constant 0 : i32
    return %c0_i32, %c0_i32_0, %c0_i32_1 : i32, i32, i32
  }
  func.func @transform_10(%arg0: i32) -> (i32, i32) {
    %c0_i32 = arith.constant 0 : i32
    %c0_i32_0 = arith.constant 0 : i32
    %c0_i32_1 = arith.constant 0 : i32
    return %c0_i32, %c0_i32_0 : i32, i32
  }
  func.func @transform_11(%arg0: i32) -> (i32, i32) {
    %c0_i32 = arith.constant 0 : i32
    %c0_i32_0 = arith.constant 0 : i32
    %c0_i32_1 = arith.constant 0 : i32
    return %c0_i32, %c0_i32_0 : i32, i32
  }
  func.func @transform_12(%arg0: i32) -> (i32, i32) {
    %c0_i32 = arith.constant 0 : i32
    %c0_i32_0 = arith.constant 0 : i32
    %c0_i32_1 = arith.constant 0 : i32
    return %c0_i32, %c0_i32_0 : i32, i32
  }
  func.func @transform_13(%arg0: i32) -> (i32, i32) {
    %c0_i32 = arith.constant 0 : i32
    %c0_i32_0 = arith.constant 0 : i32
    %c0_i32_1 = arith.constant 0 : i32
    return %c0_i32, %c0_i32_0 : i32, i32
  }
}

</mosaic_0001>

<llo_original>
// kernel: forward.1
$region0: #{forward.1}
  #allocation0 [shape = 'u32[]', space=smem, size = 0x4, offset = 0x4, fixed_abs, tag = 'smem constant byte address 0x4 - core index']
  #allocation1 [shape = 'u32[144,128]{1,0:T(1,128)}', space=vmem, size = 0x12000, scoped, tag = 'internal scratch']
  %s0 = inlined_call_operand.vmem [shape: f32[16,12], index: 0, kind: input, shape index: {}]
  %s1 = inlined_call_operand.vmem [shape: f32[8,4], index: 1, kind: input, shape index: {}]
  %s2 = inlined_call_operand.vmem [shape: f32[24,128], index: 2, kind: input, shape index: {}]
  %s3 = inlined_call_operand.vmem [shape: f32[1,24,24], index: 3, kind: input, shape index: {}]
  %s4 = inlined_call_operand.vmem [shape: bf16[12,128], index: 4, kind: input, shape index: {}]
  %s5 = inlined_call_operand.vmem [shape: bf16[4,128], index: 5, kind: input, shape index: {}]
  %s6 = inlined_call_operand.hbm [shape: bf16[2,128,384], index: 6, kind: input, shape index: {}]
  %s7 = inlined_call_operand.vmem [shape: bf16[2,128,128], index: 7, kind: input, shape index: {}]
  %s8 = inlined_call_operand.hbm [shape: bf16[2,128,128], index: 8, kind: input, shape index: {}]
  %s9 = inlined_call_operand.hbm [shape: bf16[2,128,128], index: 9, kind: input, shape index: {}]
  %s10 = inlined_call_operand.hbm [shape: bf16[128,128], index: 10, kind: input, shape index: {}]
  %s11 = inlined_call_operand.hbm [shape: bf16[128,128], index: 11, kind: input, shape index: {}]
  %s12 = inlined_call_operand.hbm [shape: f32[26,384], index: 12, kind: input, shape index: {}]
  %s13 = inlined_call_operand.hbm [shape: f32[8,128], index: 13, kind: output, shape index: {}]
  %s14 = sld [smem:[#allocation0]]
  $region86: #{forward.1} parent=0
    _
  %s16 = ssub.s32 1, %s14
  %s17 = scalar_select 0, %s16, %s14
  $region1: #{forward.1} parent=0
    #allocation2 [shape = 'u8[196608]{0}', space=vmem, size = 0x30000, scoped, tag = 'input window, operand 6, single buffered']
    #allocation3 [shape = 's32[1]{0}', space=sflag, size = 0x4, scoped, tag = 'scoped memory for forward.1']
    #allocation4 [shape = 's32[1]{0}', space=sflag, size = 0x4, scoped, tag = 'scoped memory for forward.1']
    #allocation5 [shape = 'u8[65536]{0}', space=vmem, size = 0x10000, scoped, tag = 'input window, operand 8, single buffered']
    #allocation6 [shape = 's32[1]{0}', space=sflag, size = 0x4, scoped, tag = 'scoped memory for forward.1']
    #allocation7 [shape = 'u8[65536]{0}', space=vmem, size = 0x10000, scoped, tag = 'input window, operand 9, single buffered']
    #allocation8 [shape = 'u8[32768]{0}', space=vmem, size = 0x8000, scoped, tag = 'input window, operand 10, single buffered']
    #allocation9 [shape = 's32[1]{0}', space=sflag, size = 0x4, scoped, tag = 'scoped memory for forward.1']
    #allocation10 [shape = 'u8[32768]{0}', space=vmem, size = 0x8000, scoped, tag = 'input window, operand 11, single buffered']
    #allocation11 [shape = 'u8[49152]{0}', space=vmem, size = 0xc000, scoped, tag = 'input window, operand 12, single buffered']
    #allocation12 [shape = 's32[1]{0}', space=sflag, size = 0x4, scoped, tag = 'scoped memory for forward.1']
    #allocation13 [shape = 'u8[4096]{0}', space=vmem, size = 0x1000, scoped, tag = 'output window, operand 0, single buffered']
    %18 = vsyncpa [#allocation3], 0
    %19 = vsyncpa [#allocation6], 0
    %20 = vsyncpa [#allocation9], 0
    %21 = vsyncpa [#allocation12], 0
    %22 = vsyncpa [#allocation4], 0
    // Predicated region
    $region2: #{forward.1} parent=1 // pred_check
      _
    $region3: #{forward.1} parent=1 // pred_check_branch
      %24 = sbr.rel (0) target = $region5
    $region4: #{forward.1} parent=1 // pred_region
      _
    $region5: #{forward.1} parent=1 // pred_fallthru
      _
    // Predicated region
    $region6: #{forward.1} parent=1 // pred_check
      _
    $region7: #{forward.1} parent=1 // pred_check_branch
      %26 = sbr.rel (0) target = $region9
    $region8: #{forward.1} parent=1 // pred_region
      _
    $region9: #{forward.1} parent=1 // pred_fallthru
      _
    // Predicated region
    $region10: #{forward.1} parent=1 // pred_check
      _
    $region11: #{forward.1} parent=1 // pred_check_branch
      %28 = sbr.rel (0) target = $region13
    $region12: #{forward.1} parent=1 // pred_region
      _
    $region13: #{forward.1} parent=1 // pred_fallthru
      _
    // Predicated region
    $region14: #{forward.1} parent=1 // pred_check
      _
    $region15: #{forward.1} parent=1 // pred_check_branch
      %30 = sbr.rel (0) target = $region17
    $region16: #{forward.1} parent=1 // pred_region
      _
    $region17: #{forward.1} parent=1 // pred_fallthru
      _
    // Predicated region
    $region18: #{forward.1} parent=1 // pred_check
      _
    $region19: #{forward.1} parent=1 // pred_check_branch
      %32 = sbr.rel (0) target = $region21
    $region20: #{forward.1} parent=1 // pred_region
      _
    $region21: #{forward.1} parent=1 // pred_fallthru
      _
    // Predicated region
    $region22: #{forward.1} parent=1 // pred_check
      _
    $region23: #{forward.1} parent=1 // pred_check_branch
      %34 = sbr.rel (0) target = $region25
    $region24: #{forward.1} parent=1 // pred_region
      _
    $region25: #{forward.1} parent=1 // pred_fallthru
      _
    // Predicated region
    $region26: #{forward.1} parent=1 // pred_check
      _
    $region27: #{forward.1} parent=1 // pred_check_branch
      %36 = sbr.rel (0) target = $region29
    $region28: #{forward.1} parent=1 // pred_region
      %s38 = ssub.s32 6144, 6144
      %39 = vsyncadd [#allocation3], %s38
      %s40 = sshll.u32 [#allocation2], 4
      %s41 = int_to_ptr.vmem [resolvable:$true] %s40
      %46 = dma.hbm_to_vmem [thread:$0]  %s6, 6144, %s41, [#allocation3], 192, 192, 12
    $region29: #{forward.1} parent=1 // pred_fallthru
      _
    // Predicated region
    $region30: #{forward.1} parent=1 // pred_check
      _
    $region31: #{forward.1} parent=1 // pred_check_branch
      %48 = sbr.rel (0) target = $region33
    $region32: #{forward.1} parent=1 // pred_region
      _
    $region33: #{forward.1} parent=1 // pred_fallthru
      _
    // Predicated region
    $region34: #{forward.1} parent=1 // pred_check
      _
    $region35: #{forward.1} parent=1 // pred_check_branch
      %50 = sbr.rel (0) target = $region37
    $region36: #{forward.1} parent=1 // pred_region
      %s52 = ssub.s32 2048, 2048
      %53 = vsyncadd [#allocation6], %s52
      %s54 = sshll.u32 [#allocation5], 4
      %s55 = int_to_ptr.vmem [resolvable:$true] %s54
      %60 = dma.hbm_to_vmem [thread:$0]  %s8, 2048, %s55, [#allocation6], 64, 64, 4
    $region37: #{forward.1} parent=1 // pred_fallthru
      _
    // Predicated region
    $region38: #{forward.1} parent=1 // pred_check
      _
    $region39: #{forward.1} parent=1 // pred_check_branch
      %62 = sbr.rel (0) target = $region41
    $region40: #{forward.1} parent=1 // pred_region
      %s64 = ssub.s32 2048, 2048
      %65 = vsyncadd [#allocation6], %s64
      %s66 = sshll.u32 [#allocation7], 4
      %s67 = int_to_ptr.vmem [resolvable:$true] %s66
      %72 = dma.hbm_to_vmem [thread:$0]  %s9, 2048, %s67, [#allocation6], 64, 64, 4
    $region41: #{forward.1} parent=1 // pred_fallthru
      _
    // Predicated region
    $region42: #{forward.1} parent=1 // pred_check
      _
    $region43: #{forward.1} parent=1 // pred_check_branch
      %74 = sbr.rel (0) target = $region45
    $region44: #{forward.1} parent=1 // pred_region
      %s76 = ssub.s32 1024, 1024
      %77 = vsyncadd [#allocation9], %s76
      %s78 = sshll.u32 [#allocation8], 4
      %s79 = int_to_ptr.vmem [resolvable:$true] %s78
      %84 = dma.hbm_to_vmem [thread:$0]  %s10, 1024, %s79, [#allocation9], 64, 64, 4
    $region45: #{forward.1} parent=1 // pred_fallthru
      _
    // Predicated region
    $region46: #{forward.1} parent=1 // pred_check
      _
    $region47: #{forward.1} parent=1 // pred_check_branch
      %86 = sbr.rel (0) target = $region49
    $region48: #{forward.1} parent=1 // pred_region
      %s88 = ssub.s32 1024, 1024
      %89 = vsyncadd [#allocation9], %s88
      %s90 = sshll.u32 [#allocation10], 4
      %s91 = int_to_ptr.vmem [resolvable:$true] %s90
      %96 = dma.hbm_to_vmem [thread:$0]  %s11, 1024, %s91, [#allocation9], 64, 64, 4
    $region49: #{forward.1} parent=1 // pred_fallthru
      _
    // Predicated region
    $region50: #{forward.1} parent=1 // pred_check
      _
    $region51: #{forward.1} parent=1 // pred_check_branch
      %98 = sbr.rel (0) target = $region53
    $region52: #{forward.1} parent=1 // pred_region
      %s100 = ssub.s32 1536, 1536
      %101 = vsyncadd [#allocation12], %s100
      %s102 = sshll.u32 [#allocation11], 4
      %s103 = int_to_ptr.vmem [resolvable:$true] %s102
      %108 = dma.hbm_to_vmem [thread:$0]  %s12, 1536, %s103, [#allocation12], 384, 384, 24
    $region53: #{forward.1} parent=1 // pred_fallthru
      _
    // Predicated region
    $region54: #{forward.1} parent=1 // pred_check
      _
    $region55: #{forward.1} parent=1 // pred_check_branch
      %110 = sbr.rel (0) target = $region57
    $region56: #{forward.1} parent=1 // pred_region
      %111 = dma.done [#allocation3], 6144
    $region57: #{forward.1} parent=1 // pred_fallthru
      _
    // Predicated region
    $region58: #{forward.1} parent=1 // pred_check
      _
    $region59: #{forward.1} parent=1 // pred_check_branch
      %113 = sbr.rel (0) target = $region61
    $region60: #{forward.1} parent=1 // pred_region
      %114 = dma.done [#allocation6], 2048
    $region61: #{forward.1} parent=1 // pred_fallthru
      _
    // Predicated region
    $region62: #{forward.1} parent=1 // pred_check
      _
    $region63: #{forward.1} parent=1 // pred_check_branch
      %116 = sbr.rel (0) target = $region65
    $region64: #{forward.1} parent=1 // pred_region
      %117 = dma.done [#allocation6], 2048
    $region65: #{forward.1} parent=1 // pred_fallthru
      _
    // Predicated region
    $region66: #{forward.1} parent=1 // pred_check
      _
    $region67: #{forward.1} parent=1 // pred_check_branch
      %119 = sbr.rel (0) target = $region69
    $region68: #{forward.1} parent=1 // pred_region
      %120 = dma.done [#allocation9], 1024
    $region69: #{forward.1} parent=1 // pred_fallthru
      _
    // Predicated region
    $region70: #{forward.1} parent=1 // pred_check
      _
    $region71: #{forward.1} parent=1 // pred_check_branch
      %122 = sbr.rel (0) target = $region73
    $region72: #{forward.1} parent=1 // pred_region
      %123 = dma.done [#allocation9], 1024
    $region73: #{forward.1} parent=1 // pred_fallthru
      _
    // Predicated region
    $region74: #{forward.1} parent=1 // pred_check
      _
    $region75: #{forward.1} parent=1 // pred_check_branch
      %125 = sbr.rel (0) target = $region77
    $region76: #{forward.1} parent=1 // pred_region
      %126 = dma.done [#allocation12], 1536
    $region77: #{forward.1} parent=1 // pred_fallthru
      _
    %v128 = vld [vmem:[%s0] sm:$0xff]
    %v129 = vld [vmem:[%s0 + $0x8] sm:$0xff]
    %v130 = vld [vmem:[%s4] sm:$0xf]
    %v131 = vld [vmem:[%s4 + $0x4] sm:$0x3]
    %v132 = vpack.c.bf16 %v129, %v128
    %v133 = vld [vmem:[#allocation11] ss:$0 sm:$0xff]
    %v136 = vunpack.c.l.b16 %v130
    %v137 = vunpack.c.l.b16 %v131
    %v138 = vpack.c.b16 %v137, %v136
    %vm139 = vcmask 97280
    %v141 = vsel %vm139, %v132, 0
    %vm143 = vcmask 1045504
    %v145 = vsel %vm143, %v138, 0
    %147 = vmatprep.subr.bf16.mxu0 0
    %148 = vmatpush1.bf16.msra.mxu0 %v145
    %149 = vmatprep.subr.bf16.mxu0 0
    %150 = vmatpush1.bf16.msra.mxu0 0
    %151 = vmatprep.subr.bf16.mxu0 0
    %152 = vmatpush1.bf16.msra.mxu0 0
    %153 = vmatprep.subr.bf16.mxu0 0
    %154 = vmatpush1.bf16.msra.mxu0 0
    %155 = vmatprep.subr.bf16.mxu0 0
    %156 = vmatpush1.bf16.msra.mxu0 0
    %157 = vmatprep.subr.bf16.mxu0 0
    %158 = vmatpush1.bf16.msra.mxu0 0
    %159 = vmatprep.subr.bf16.mxu0 0
    %160 = vmatpush1.bf16.msra.mxu0 0
    %161 = vmatprep.subr.bf16.mxu0 0
    %162 = vmatpush1.bf16.msra.mxu0 0
    %163 = vmatprep.subr.bf16.mxu0 0
    %164 = vmatpush1.bf16.msra.mxu0 0
    %165 = vmatprep.subr.bf16.mxu0 0
    %166 = vmatpush1.bf16.msra.mxu0 0
    %167 = vmatprep.subr.bf16.mxu0 0
    %168 = vmatpush1.bf16.msra.mxu0 0
    %169 = vmatprep.subr.bf16.mxu0 0
    %170 = vmatpush1.bf16.msra.mxu0 0
    %171 = vmatprep.subr.bf16.mxu0 0
    %172 = vmatpush1.bf16.msra.mxu0 0
    %173 = vmatprep.subr.bf16.mxu0 0
    %174 = vmatpush1.bf16.msra.mxu0 0
    %175 = vmatprep.subr.bf16.mxu0 0
    %176 = vmatpush1.bf16.msra.mxu0 0
    %177 = vmatprep.subr.bf16.mxu0 0
    %178 = vmatpush1.bf16.msra.mxu0 0
    %179 = vmatprep.mubr.bf16.mxu0 0
    %180 = vmatmul.mubr.bf16.gmra.mrb[0].mxu0 %v141
    %v181 = vpop.f32.mrb[0].mxu0
    %v182 = vadd.f32 %v133, %v181
    %v183 = vpop.f32.mrb[0].mxu0
    %v184 = vpop.f32.mrb[0].mxu0
    %v185 = vadd.f32 %v133, %v184
    %v186 = vpop.f32.mrb[0].mxu0
    %187 = vdwg.mxu0
    %v188 = vld [vmem:[#allocation11 + $0x1] ss:$0 sm:$0xff]
    %v189 = vld [vmem:[#allocation11 + $0x2] ss:$0 sm:$0xff]
    %190 = vadd.xlane.f32.xlu0 %v182
    %v191 = vpop.xlane.xlu0 %190
    %192 = vadd.xlane.f32.xlu0 %v185
    %v193 = vpop.xlane.xlu0 %192
    %v194 = vrcp.pop 128.0
    %v195 = vmul.f32 %v191, %v194
    %v196 = vmul.f32 %v193, %v194
    %v197 = vsub.f32 %v182, %v195
    %v198 = vsub.f32 %v185, %v196
    %v199 = vmul.f32 %v197, %v197
    %v200 = vmul.f32 %v198, %v198
    %201 = vadd.xlane.f32.xlu0 %v199
    %v202 = vpop.xlane.xlu0 %201
    %203 = vadd.xlane.f32.xlu0 %v200
    %v204 = vpop.xlane.xlu0 %203
    %v205 = vmul.f32 %v202, %v194
    %v206 = vmul.f32 %v204, %v194
    %v207 = vadd.f32 %v205, 1e-05
    %v208 = vadd.f32 %v206, 1e-05
    %v209 = vrsqrt.pop %v207
    %v210 = vrsqrt.pop %v208
    %v211 = vmul.f32 %v197, %v209
    %v212 = vmul.f32 %v198, %v210
    %v213 = vmul.f32 %v211, %v188
    %v214 = vmul.f32 %v212, %v188
    %v215 = vadd.f32 %v213, %v189
    %v216 = vadd.f32 %v214, %v189
    %v217 = vmax.f32 %v215, 0.0
    %v218 = vmax.f32 %v216, 0.0
    %v219 = vld [vmem:[%s1] sm:$0xff]
    %v220 = vld [vmem:[%s5] sm:$0x3]
    %v221 = vpack.c.bf16 %v219, %v219
    %v222 = vld [vmem:[#allocation11 + $0x3] ss:$0 sm:$0xff]
    %vm223 = vcmask 31744
    %v225 = vsel %vm223, %v221, 0
    %vm227 = vcmask 1041408
    %v229 = vsel %vm227, %v220, 0
    %231 = vmatprep.subr.bf16.mxu0 0
    %232 = vmatpush1.bf16.msra.mxu0 %v229
    %233 = vmatprep.subr.bf16.mxu0 0
    %234 = vmatpush1.bf16.msra.mxu0 0
    %235 = vmatprep.subr.bf16.mxu0 0
    %236 = vmatpush1.bf16.msra.mxu0 0
    %237 = vmatprep.subr.bf16.mxu0 0
    %238 = vmatpush1.bf16.msra.mxu0 0
    %239 = vmatprep.subr.bf16.mxu0 0
    %240 = vmatpush1.bf16.msra.mxu0 0
    %241 = vmatprep.subr.bf16.mxu0 0
    %242 = vmatpush1.bf16.msra.mxu0 0
    %243 = vmatprep.subr.bf16.mxu0 0
    %244 = vmatpush1.bf16.msra.mxu0 0
    %245 = vmatprep.subr.bf16.mxu0 0
    %246 = vmatpush1.bf16.msra.mxu0 0
    %247 = vmatprep.subr.bf16.mxu0 0
    %248 = vmatpush1.bf16.msra.mxu0 0
    %249 = vmatprep.subr.bf16.mxu0 0
    %250 = vmatpush1.bf16.msra.mxu0 0
    %251 = vmatprep.subr.bf16.mxu0 0
    %252 = vmatpush1.bf16.msra.mxu0 0
    %253 = vmatprep.subr.bf16.mxu0 0
    %254 = vmatpush1.bf16.msra.mxu0 0
    %255 = vmatprep.subr.bf16.mxu0 0
    %256 = vmatpush1.bf16.msra.mxu0 0
    %257 = vmatprep.subr.bf16.mxu0 0
    %258 = vmatpush1.bf16.msra.mxu0 0
    %259 = vmatprep.subr.bf16.mxu0 0
    %260 = vmatpush1.bf16.msra.mxu0 0
    %261 = vmatprep.subr.bf16.mxu0 0
    %262 = vmatpush1.bf16.msra.mxu0 0
    %263 = vmatprep.mubr.bf16.mxu0 0
    %264 = vmatmul.mubr.bf16.gmra.mrb[0].mxu0 %v225
    %v265 = vpop.f32.mrb[0].mxu0
    %v266 = vadd.f32 %v222, %v265
    %v267 = vpop.f32.mrb[0].mxu0
    %v268 = vpop.f32.mrb[0].mxu0
    %v269 = vpop.f32.mrb[0].mxu0
    %270 = vdwg.mxu0
    %v271 = vld [vmem:[#allocation11 + $0x4] ss:$0 sm:$0xff]
    %v272 = vld [vmem:[#allocation11 + $0x5] ss:$0 sm:$0xff]
    %273 = vadd.xlane.f32.xlu0 %v266
    %v274 = vpop.xlane.xlu0 %273
    %v275 = vmul.f32 %v274, %v194
    %v276 = vsub.f32 %v266, %v275
    %v277 = vmul.f32 %v276, %v276
    %278 = vadd.xlane.f32.xlu0 %v277
    %v279 = vpop.xlane.xlu0 %278
    %v280 = vmul.f32 %v279, %v194
    %v281 = vadd.f32 %v280, 1e-05
    %v282 = vrsqrt.pop %v281
    %v283 = vmul.f32 %v276, %v282
    %v284 = vmul.f32 %v283, %v271
    %v285 = vadd.f32 %v284, %v272
    %v286 = vmax.f32 %v285, 0.0
    %v287 = vld [vmem:[%s2] sm:$0xff]
    %v288 = vld [vmem:[%s2 + $0x8] sm:$0xff]
    %v289 = vld [vmem:[%s2 + $0x10] sm:$0xff]
    %v290 = vadd.f32 %v217, %v287
    %v291 = vadd.f32 %v218, %v288
    %v292 = vadd.f32 %v286, %v289
    %v293 = vld [vmem:[%s3] sm:$0xff]
    %v294 = vld [vmem:[%s3 + $0x8] sm:$0xff]
    %v295 = vld [vmem:[%s3 + $0x10] sm:$0xff]
    %s296 = scalar_lea.vmem [#allocation11], 26
    %v297 = vld [vmem:[%s296] ss:$8 sm:$0x7]
    %v298 = vld [vmem:[#allocation11 + $0x1b] ss:$0 sm:$0xff]
    %v299 = vld [vmem:[#allocation11 + $0x1c] ss:$0 sm:$0xff]
    %v300 = vld [vmem:[#allocation11 + $0x1d] ss:$0 sm:$0xff]
    %v301 = vld [vmem:[#allocation11 + $0x1e] ss:$0 sm:$0xff]
    %v302 = vld [vmem:[#allocation11 + $0x1f] ss:$0 sm:$0xff]
    %v303 = vld [vmem:[#allocation11 + $0x30] ss:$0 sm:$0xff]
    %v304 = vld [vmem:[#allocation11 + $0x31] ss:$0 sm:$0xff]
    %v305 = vld [vmem:[#allocation2] sm:$0xff]
    %v306 = vld [vmem:[#allocation2 + $0x8] sm:$0xf]
    %v307 = vld [vmem:[#allocation2 + $0xc] sm:$0xff]
    %v308 = vld [vmem:[#allocation2 + $0x14] sm:$0xf]
    %v309 = vld [vmem:[#allocation2 + $0x18] sm:$0xff]
    %v310 = vld [vmem:[#allocation2 + $0x20] sm:$0xf]
    %v311 = vld [vmem:[#allocation2 + $0x24] sm:$0xff]
    %v312 = vld [vmem:[#allocation2 + $0x2c] sm:$0xf]
    %v313 = vld [vmem:[#allocation2 + $0x30] sm:$0xff]
    %v314 = vld [vmem:[#allocation2 + $0x38] sm:$0xf]
    %v315 = vld [vmem:[#allocation2 + $0x3c] sm:$0xff]
    %v316 = vld [vmem:[#allocation2 + $0x44] sm:$0xf]
    %v317 = vld [vmem:[#allocation2 + $0x48] sm:$0xff]
    %v318 = vld [vmem:[#allocation2 + $0x50] sm:$0xf]
    %v319 = vld [vmem:[#allocation2 + $0x54] sm:$0xff]
    %v320 = vld [vmem:[#allocation2 + $0x5c] sm:$0xf]
    %v321 = vld [vmem:[#allocation2 + $0x60] sm:$0xff]
    %v322 = vld [vmem:[#allocation2 + $0x68] sm:$0xf]
    %v323 = vld [vmem:[#allocation2 + $0x6c] sm:$0xff]
    %v324 = vld [vmem:[#allocation2 + $0x74] sm:$0xf]
    %v325 = vld [vmem:[#allocation2 + $0x78] sm:$0xff]
    %v326 = vld [vmem:[#allocation2 + $0x80] sm:$0xf]
    %v327 = vld [vmem:[#allocation2 + $0x84] sm:$0xff]
    %v328 = vld [vmem:[#allocation2 + $0x8c] sm:$0xf]
    %v329 = vld [vmem:[#allocation2 + $0x90] sm:$0xff]
    %v330 = vld [vmem:[#allocation2 + $0x98] sm:$0xf]
    %v331 = vld [vmem:[#allocation2 + $0x9c] sm:$0xff]
    %v332 = vld [vmem:[#allocation2 + $0xa4] sm:$0xf]
    %v333 = vld [vmem:[#allocation2 + $0xa8] sm:$0xff]
    %v334 = vld [vmem:[#allocation2 + $0xb0] sm:$0xf]
    %v335 = vld [vmem:[#allocation2 + $0xb4] sm:$0xff]
    %v336 = vld [vmem:[#allocation2 + $0xbc] sm:$0xf]
    %v337 = vpack.c.bf16 %v291, %v290
    %v338 = vpack.c.bf16 %v292, %v292
    %v340 = vlaneseq
    %v341 = vshrl.u32 %v340, 7
    %v342 = vsub.s32 0, %v341
    %v343 = vrot.slane %v297, %v342
    %v344 = vlaneseq
    %v345 = vshrl.u32 %v344, 7
    %v346 = vsub.s32 1, %v345
    %v347 = vrot.slane %v297, %v346
    %v348 = vlaneseq
    %v349 = vshrl.u32 %v348, 7
    %v350 = vsub.s32 2, %v349
    %v351 = vrot.slane %v297, %v350
    %v387 = vunpack.c.l.b16 %v305
    %v388 = vunpack.c.h.b16 %v305
    %v389 = vunpack.c.l.b16 %v306
    %v390 = vunpack.c.l.b16 %v307
    %v391 = vunpack.c.h.b16 %v307
    %v392 = vunpack.c.l.b16 %v308
    %v393 = vunpack.c.l.b16 %v309
    %v394 = vunpack.c.h.b16 %v309
    %v395 = vunpack.c.l.b16 %v310
    %v396 = vunpack.c.l.b16 %v311
    %v397 = vunpack.c.h.b16 %v311
    %v398 = vunpack.c.l.b16 %v312
    %v399 = vunpack.c.l.b16 %v313
    %v400 = vunpack.c.h.b16 %v313
    %v401 = vunpack.c.l.b16 %v314
    %v402 = vunpack.c.l.b16 %v315
    %v403 = vunpack.c.h.b16 %v315
    %v404 = vunpack.c.l.b16 %v316
    %v405 = vunpack.c.l.b16 %v317
    %v406 = vunpack.c.h.b16 %v317
    %v407 = vunpack.c.l.b16 %v318
    %v408 = vunpack.c.l.b16 %v319
    %v409 = vunpack.c.h.b16 %v319
    %v410 = vunpack.c.l.b16 %v320
    %v411 = vunpack.c.l.b16 %v321
    %v412 = vunpack.c.h.b16 %v321
    %v413 = vunpack.c.l.b16 %v322
    %v414 = vunpack.c.l.b16 %v323
    %v415 = vunpack.c.h.b16 %v323
    %v416 = vunpack.c.l.b16 %v324
    %v417 = vunpack.c.l.b16 %v325
    %v418 = vunpack.c.h.b16 %v325
    %v419 = vunpack.c.l.b16 %v326
    %v420 = vunpack.c.l.b16 %v327
    %v421 = vunpack.c.h.b16 %v327
    %v422 = vunpack.c.l.b16 %v328
    %v423 = vunpack.c.l.b16 %v329
    %v424 = vunpack.c.h.b16 %v329
    %v425 = vunpack.c.l.b16 %v330
    %v426 = vunpack.c.l.b16 %v331
    %v427 = vunpack.c.h.b16 %v331
    %v428 = vunpack.c.l.b16 %v332
    %v429 = vunpack.c.l.b16 %v333
    %v430 = vunpack.c.h.b16 %v333
    %v431 = vunpack.c.l.b16 %v334
    %v432 = vunpack.c.l.b16 %v335
    %v433 = vunpack.c.h.b16 %v335
    %v434 = vunpack.c.l.b16 %v336
    %v435 = vpack.c.b16 %v390, %v387
    %v436 = vpack.c.b16 %v391, %v388
    %v437 = vpack.c.b16 %v392, %v389
    %v438 = vpack.c.b16 %v396, %v393
    %v439 = vpack.c.b16 %v397, %v394
    %v440 = vpack.c.b16 %v398, %v395
    %v441 = vpack.c.b16 %v402, %v399
    %v442 = vpack.c.b16 %v403, %v400
    %v443 = vpack.c.b16 %v404, %v401
    %v444 = vpack.c.b16 %v408, %v405
    %v445 = vpack.c.b16 %v409, %v406
    %v446 = vpack.c.b16 %v410, %v407
    %v447 = vpack.c.b16 %v414, %v411
    %v448 = vpack.c.b16 %v415, %v412
    %v449 = vpack.c.b16 %v416, %v413
    %v450 = vpack.c.b16 %v420, %v417
    %v451 = vpack.c.b16 %v421, %v418
    %v452 = vpack.c.b16 %v422, %v419
    %v453 = vpack.c.b16 %v426, %v423
    %v454 = vpack.c.b16 %v427, %v424
    %v455 = vpack.c.b16 %v428, %v425
    %v456 = vpack.c.b16 %v432, %v429
    %v457 = vpack.c.b16 %v433, %v430
    %v458 = vpack.c.b16 %v434, %v431
    %483 = vmatprep.subr.bf16.mxu0 %v436
    %484 = vmatpush1.bf16.msra.mxu0 %v435
    %485 = vmatprep.subr.bf16.mxu0 %v439
    %486 = vmatpush1.bf16.msra.mxu0 %v438
    %487 = vmatprep.subr.bf16.mxu0 %v442
    %488 = vmatpush1.bf16.msra.mxu0 %v441
    %489 = vmatprep.subr.bf16.mxu0 %v445
    %490 = vmatpush1.bf16.msra.mxu0 %v444
    %491 = vmatprep.subr.bf16.mxu0 %v448
    %492 = vmatpush1.bf16.msra.mxu0 %v447
    %493 = vmatprep.subr.bf16.mxu0 %v451
    %494 = vmatpush1.bf16.msra.mxu0 %v450
    %495 = vmatprep.subr.bf16.mxu0 %v454
    %496 = vmatpush1.bf16.msra.mxu0 %v453
    %497 = vmatprep.subr.bf16.mxu0 %v457
    %498 = vmatpush1.bf16.msra.mxu0 %v456
    %499 = vmatprep.subr.bf16.mxu0 0
    %500 = vmatpush1.bf16.msra.mxu0 0
    %501 = vmatprep.subr.bf16.mxu0 0
    %502 = vmatpush1.bf16.msra.mxu0 0
    %503 = vmatprep.subr.bf16.mxu0 0
    %504 = vmatpush1.bf16.msra.mxu0 0
    %505 = vmatprep.subr.bf16.mxu0 0
    %506 = vmatpush1.bf16.msra.mxu0 0
    %507 = vmatprep.subr.bf16.mxu0 0
    %508 = vmatpush1.bf16.msra.mxu0 0
    %509 = vmatprep.subr.bf16.mxu0 0
    %510 = vmatpush1.bf16.msra.mxu0 0
    %511 = vmatprep.subr.bf16.mxu0 0
    %512 = vmatpush1.bf16.msra.mxu0 0
    %513 = vmatprep.subr.bf16.mxu0 0
    %514 = vmatpush1.bf16.msra.mxu0 0
    %515 = vmatprep.mubr.bf16.mxu0 0
    %516 = vmatmul.mubr.bf16.gmra.mrb[0].mxu0 %v337
    %v517 = vpop.f32.mrb[0].mxu0
    %v518 = vadd.f32 %v343, %v517
    %v519 = vpop.f32.mrb[0].mxu0
    %v520 = vadd.f32 %v347, %v519
    %v521 = vpop.f32.mrb[0].mxu0
    %v522 = vadd.f32 %v343, %v521
    %v523 = vpop.f32.mrb[0].mxu0
    %v524 = vadd.f32 %v347, %v523
    %525 = vmatprep.mubr.bf16.mxu0 0
    %526 = vmatmul.mubr.bf16.gmra.mrb[0].mxu0 %v338
    %v527 = vpop.f32.mrb[0].mxu0
    %v528 = vadd.f32 %v343, %v527
    %v529 = vpop.f32.mrb[0].mxu0
    %v530 = vadd.f32 %v347, %v529
    %v531 = vpop.f32.mrb[0].mxu0
    %v532 = vpop.f32.mrb[0].mxu0
    %533 = vdwg.mxu0
    %534 = vmatprep.subr.bf16.mxu0 0
    %535 = vmatpush1.bf16.msra.mxu0 %v437
    %536 = vmatprep.subr.bf16.mxu0 0
    %537 = vmatpush1.bf16.msra.mxu0 %v440
    %538 = vmatprep.subr.bf16.mxu0 0
    %539 = vmatpush1.bf16.msra.mxu0 %v443
    %540 = vmatprep.subr.bf16.mxu0 0
    %541 = vmatpush1.bf16.msra.mxu0 %v446
    %542 = vmatprep.subr.bf16.mxu0 0
    %543 = vmatpush1.bf16.msra.mxu0 %v449
    %544 = vmatprep.subr.bf16.mxu0 0
    %545 = vmatpush1.bf16.msra.mxu0 %v452
    %546 = vmatprep.subr.bf16.mxu0 0
    %547 = vmatpush1.bf16.msra.mxu0 %v455
    %548 = vmatprep.subr.bf16.mxu0 0
    %549 = vmatpush1.bf16.msra.mxu0 %v458
    %550 = vmatprep.subr.bf16.mxu0 0
    %551 = vmatpush1.bf16.msra.mxu0 0
    %552 = vmatprep.subr.bf16.mxu0 0
    %553 = vmatpush1.bf16.msra.mxu0 0
    %554 = vmatprep.subr.bf16.mxu0 0
    %555 = vmatpush1.bf16.msra.mxu0 0
    %556 = vmatprep.subr.bf16.mxu0 0
    %557 = vmatpush1.bf16.msra.mxu0 0
    %558 = vmatprep.subr.bf16.mxu0 0
    %559 = vmatpush1.bf16.msra.mxu0 0
    %560 = vmatprep.subr.bf16.mxu0 0
    %561 = vmatpush1.bf16.msra.mxu0 0
    %562 = vmatprep.subr.bf16.mxu0 0
    %563 = vmatpush1.bf16.msra.mxu0 0
    %564 = vmatprep.subr.bf16.mxu0 0
    %565 = vmatpush1.bf16.msra.mxu0 0
    %566 = vmatprep.mubr.bf16.mxu0 0
    %567 = vmatmul.mubr.bf16.gmra.mrb[0].mxu0 %v337
    %v568 = vpop.f32.mrb[0].mxu0
    %v569 = vadd.f32 %v351, %v568
    %v570 = vpop.f32.mrb[0].mxu0
    %v571 = vpop.f32.mrb[0].mxu0
    %v572 = vadd.f32 %v351, %v571
    %v573 = vpop.f32.mrb[0].mxu0
    %574 = vmatprep.mubr.bf16.mxu0 0
    %575 = vmatmul.mubr.bf16.gmra.mrb[0].mxu0 %v338
    %v576 = vpop.f32.mrb[0].mxu0
    %v577 = vadd.f32 %v351, %v576
    %v578 = vpop.f32.mrb[0].mxu0
    %v579 = vpop.f32.mrb[0].mxu0
    %v580 = vpop.f32.mrb[0].mxu0
    %581 = vdwg.mxu0
    %585 = vrot.lane.b32.xlu0 %v518, 96
    %v586 = vpop.permute.xlu0 %585
    %587 = vrot.lane.b32.xlu0 %v522, 96
    %v588 = vpop.permute.xlu0 %587
    %589 = vrot.lane.b32.xlu0 %v528, 96
    %v590 = vpop.permute.xlu0 %589
    %594 = vrot.lane.b32.xlu0 %v518, 64
    %v595 = vpop.permute.xlu0 %594
    %596 = vrot.lane.b32.xlu0 %v522, 64
    %v597 = vpop.permute.xlu0 %596
    %598 = vrot.lane.b32.xlu0 %v528, 64
    %v599 = vpop.permute.xlu0 %598
    %603 = vrot.lane.b32.xlu0 %v518, 32
    %v604 = vpop.permute.xlu0 %603
    %605 = vrot.lane.b32.xlu0 %v522, 32
    %v606 = vpop.permute.xlu0 %605
    %607 = vrot.lane.b32.xlu0 %v528, 32
    %v608 = vpop.permute.xlu0 %607
    %v612 = vcombine.low %v518, %v595
    %v613 = vcombine.high %v518, %v595
    %v615 = vunpack.c.l.s4 1983009808
    %v616 = vunpack.c.0.s8 %v615
    %v617 = vlaneseq
    %v618 = vshrl.u32 %v617, 7
    %v619 = vsub.s32 %v616, %v618
    %v620 = vrot.slane %v612, %v619
    %v622 = vunpack.c.l.s4 1983009808
    %v623 = vunpack.c.0.s8 %v622
    %v624 = vlaneseq
    %v625 = vshrl.u32 %v624, 7
    %v626 = vsub.s32 %v623, %v625
    %v627 = vrot.slane %v613, %v626
    %v628 = vcombine.low %v586, %v604
    %v629 = vcombine.high %v586, %v604
    %v631 = vunpack.c.l.s4 1983009808
    %v632 = vunpack.c.0.s8 %v631
    %v633 = vlaneseq
    %v634 = vshrl.u32 %v633, 7
    %v635 = vsub.s32 %v632, %v634
    %v636 = vrot.slane %v628, %v635
    %v638 = vunpack.c.l.s4 1983009808
    %v639 = vunpack.c.0.s8 %v638
    %v640 = vlaneseq
    %v641 = vshrl.u32 %v640, 7
    %v642 = vsub.s32 %v639, %v641
    %v643 = vrot.slane %v629, %v642
    %v644 = vcombine.low %v620, %v636
    %v645 = vcombine.high %v620, %v636
    %v647 = vunpack.c.l.s4 1934713408
    %v648 = vunpack.c.0.s8 %v647
    %v649 = vlaneseq
    %v650 = vshrl.u32 %v649, 7
    %v651 = vsub.s32 %v648, %v650
    %v652 = vrot.slane %v644, %v651
    %v654 = vunpack.c.l.s4 1934713408
    %v655 = vunpack.c.0.s8 %v654
    %v656 = vlaneseq
    %v657 = vshrl.u32 %v656, 7
    %v658 = vsub.s32 %v655, %v657
    %v659 = vrot.slane %v645, %v658
    %v660 = vcombine.low %v627, %v643
    %v661 = vcombine.high %v627, %v643
    %v663 = vunpack.c.l.s4 1934713408
    %v664 = vunpack.c.0.s8 %v663
    %v665 = vlaneseq
    %v666 = vshrl.u32 %v665, 7
    %v667 = vsub.s32 %v664, %v666
    %v668 = vrot.slane %v660, %v667
    %v670 = vunpack.c.l.s4 1934713408
    %v671 = vunpack.c.0.s8 %v670
    %v672 = vlaneseq
    %v673 = vshrl.u32 %v672, 7
    %v674 = vsub.s32 %v671, %v673
    %v675 = vrot.slane %v661, %v674
    %v676 = vcombine.high %v652, 0.0
    %v677 = vcombine.high %v659, 0.0
    %v678 = vcombine.high %v668, 0.0
    %v679 = vcombine.high %v675, 0.0
    %v680 = vcombine.low %v522, %v597
    %v681 = vcombine.high %v522, %v597
    %v683 = vunpack.c.l.s4 1983009808
    %v684 = vunpack.c.0.s8 %v683
    %v685 = vlaneseq
    %v686 = vshrl.u32 %v685, 7
    %v687 = vsub.s32 %v684, %v686
    %v688 = vrot.slane %v680, %v687
    %v690 = vunpack.c.l.s4 1983009808
    %v691 = vunpack.c.0.s8 %v690
    %v692 = vlaneseq
    %v693 = vshrl.u32 %v692, 7
    %v694 = vsub.s32 %v691, %v693
    %v695 = vrot.slane %v681, %v694
    %v696 = vcombine.low %v588, %v606
    %v697 = vcombine.high %v588, %v606
    %v699 = vunpack.c.l.s4 1983009808
    %v700 = vunpack.c.0.s8 %v699
    %v701 = vlaneseq
    %v702 = vshrl.u32 %v701, 7
    %v703 = vsub.s32 %v700, %v702
    %v704 = vrot.slane %v696, %v703
    %v706 = vunpack.c.l.s4 1983009808
    %v707 = vunpack.c.0.s8 %v706
    %v708 = vlaneseq
    %v709 = vshrl.u32 %v708, 7
    %v710 = vsub.s32 %v707, %v709
    %v711 = vrot.slane %v697, %v710
    %v712 = vcombine.low %v688, %v704
    %v713 = vcombine.high %v688, %v704
    %v715 = vunpack.c.l.s4 1934713408
    %v716 = vunpack.c.0.s8 %v715
    %v717 = vlaneseq
    %v718 = vshrl.u32 %v717, 7
    %v719 = vsub.s32 %v716, %v718
    %v720 = vrot.slane %v712, %v719
    %v722 = vunpack.c.l.s4 1934713408
    %v723 = vunpack.c.0.s8 %v722
    %v724 = vlaneseq
    %v725 = vshrl.u32 %v724, 7
    %v726 = vsub.s32 %v723, %v725
    %v727 = vrot.slane %v713, %v726
    %v728 = vcombine.low %v695, %v711
    %v729 = vcombine.high %v695, %v711
    %v731 = vunpack.c.l.s4 1934713408
    %v732 = vunpack.c.0.s8 %v731
    %v733 = vlaneseq
    %v734 = vshrl.u32 %v733, 7
    %v735 = vsub.s32 %v732, %v734
    %v736 = vrot.slane %v728, %v735
    %v738 = vunpack.c.l.s4 1934713408
    %v739 = vunpack.c.0.s8 %v738
    %v740 = vlaneseq
    %v741 = vshrl.u32 %v740, 7
    %v742 = vsub.s32 %v739, %v741
    %v743 = vrot.slane %v729, %v742
    %v744 = vcombine.high %v720, 0.0
    %v745 = vcombine.high %v727, 0.0
    %v746 = vcombine.high %v736, 0.0
    %v747 = vcombine.high %v743, 0.0
    %v748 = vcombine.low %v528, %v599
    %v749 = vcombine.high %v528, %v599
    %v751 = vunpack.c.l.s4 1983009808
    %v752 = vunpack.c.0.s8 %v751
    %v753 = vlaneseq
    %v754 = vshrl.u32 %v753, 7
    %v755 = vsub.s32 %v752, %v754
    %v756 = vrot.slane %v748, %v755
    %v758 = vunpack.c.l.s4 1983009808
    %v759 = vunpack.c.0.s8 %v758
    %v760 = vlaneseq
    %v761 = vshrl.u32 %v760, 7
    %v762 = vsub.s32 %v759, %v761
    %v763 = vrot.slane %v749, %v762
    %v764 = vcombine.low %v590, %v608
    %v765 = vcombine.high %v590, %v608
    %v767 = vunpack.c.l.s4 1983009808
    %v768 = vunpack.c.0.s8 %v767
    %v769 = vlaneseq
    %v770 = vshrl.u32 %v769, 7
    %v771 = vsub.s32 %v768, %v770
    %v772 = vrot.slane %v764, %v771
    %v774 = vunpack.c.l.s4 1983009808
    %v775 = vunpack.c.0.s8 %v774
    %v776 = vlaneseq
    %v777 = vshrl.u32 %v776, 7
    %v778 = vsub.s32 %v775, %v777
    %v779 = vrot.slane %v765, %v778
    %v780 = vcombine.low %v756, %v772
    %v781 = vcombine.high %v756, %v772
    %v783 = vunpack.c.l.s4 1934713408
    %v784 = vunpack.c.0.s8 %v783
    %v785 = vlaneseq
    %v786 = vshrl.u32 %v785, 7
    %v787 = vsub.s32 %v784, %v786
    %v788 = vrot.slane %v780, %v787
    %v790 = vunpack.c.l.s4 1934713408
    %v791 = vunpack.c.0.s8 %v790
    %v792 = vlaneseq
    %v793 = vshrl.u32 %v792, 7
    %v794 = vsub.s32 %v791, %v793
    %v795 = vrot.slane %v781, %v794
    %v796 = vcombine.low %v763, %v779
    %v797 = vcombine.high %v763, %v779
    %v799 = vunpack.c.l.s4 1934713408
    %v800 = vunpack.c.0.s8 %v799
    %v801 = vlaneseq
    %v802 = vshrl.u32 %v801, 7
    %v803 = vsub.s32 %v800, %v802
    %v804 = vrot.slane %v796, %v803
    %v806 = vunpack.c.l.s4 1934713408
    %v807 = vunpack.c.0.s8 %v806
    %v808 = vlaneseq
    %v809 = vshrl.u32 %v808, 7
    %v810 = vsub.s32 %v807, %v809
    %v811 = vrot.slane %v797, %v810
    %v812 = vcombine.high %v788, 0.0
    %v813 = vcombine.high %v795, 0.0
    %v814 = vcombine.high %v804, 0.0
    %v815 = vcombine.high %v811, 0.0
    %v816 = vcombine.low %v652, %v659
    %v818 = vunpack.c.l.s4 1983009808
    %v819 = vunpack.c.0.s8 %v818
    %v820 = vlaneseq
    %v821 = vshrl.u32 %v820, 7
    %v822 = vsub.s32 %v819, %v821
    %v823 = vrot.slane %v816, %v822
    %v824 = vcombine.low %v676, %v677
    %v826 = vunpack.c.l.s4 1983009808
    %v827 = vunpack.c.0.s8 %v826
    %v828 = vlaneseq
    %v829 = vshrl.u32 %v828, 7
    %v830 = vsub.s32 %v827, %v829
    %v831 = vrot.slane %v824, %v830
    %v832 = vcombine.low %v668, %v675
    %v834 = vunpack.c.l.s4 1983009808
    %v835 = vunpack.c.0.s8 %v834
    %v836 = vlaneseq
    %v837 = vshrl.u32 %v836, 7
    %v838 = vsub.s32 %v835, %v837
    %v839 = vrot.slane %v832, %v838
    %v840 = vcombine.low %v678, %v679
    %v842 = vunpack.c.l.s4 1983009808
    %v843 = vunpack.c.0.s8 %v842
    %v844 = vlaneseq
    %v845 = vshrl.u32 %v844, 7
    %v846 = vsub.s32 %v843, %v845
    %v847 = vrot.slane %v840, %v846
    %v848 = vcombine.low %v823, %v831
    %v849 = vcombine.high %v823, %v831
    %v851 = vunpack.c.l.s4 1934713408
    %v852 = vunpack.c.0.s8 %v851
    %v853 = vlaneseq
    %v854 = vshrl.u32 %v853, 7
    %v855 = vsub.s32 %v852, %v854
    %v856 = vrot.slane %v848, %v855
    %v858 = vunpack.c.l.s4 1934713408
    %v859 = vunpack.c.0.s8 %v858
    %v860 = vlaneseq
    %v861 = vshrl.u32 %v860, 7
    %v862 = vsub.s32 %v859, %v861
    %v863 = vrot.slane %v849, %v862
    %v864 = vcombine.low %v839, %v847
    %v865 = vcombine.high %v839, %v847
    %v867 = vunpack.c.l.s4 1934713408
    %v868 = vunpack.c.0.s8 %v867
    %v869 = vlaneseq
    %v870 = vshrl.u32 %v869, 7
    %v871 = vsub.s32 %v868, %v870
    %v872 = vrot.slane %v864, %v871
    %v874 = vunpack.c.l.s4 1934713408
    %v875 = vunpack.c.0.s8 %v874
    %v876 = vlaneseq
    %v877 = vshrl.u32 %v876, 7
    %v878 = vsub.s32 %v875, %v877
    %v879 = vrot.slane %v865, %v878
    %v880 = vcombine.low %v856, %v872
    %v881 = vcombine.high %v856, %v872
    %v882 = vcombine.low %v863, %v879
    %v883 = vcombine.high %v863, %v879
    %v884 = vcombine.low %v720, %v727
    %v886 = vunpack.c.l.s4 1983009808
    %v887 = vunpack.c.0.s8 %v886
    %v888 = vlaneseq
    %v889 = vshrl.u32 %v888, 7
    %v890 = vsub.s32 %v887, %v889
    %v891 = vrot.slane %v884, %v890
    %v892 = vcombine.low %v744, %v745
    %v894 = vunpack.c.l.s4 1983009808
    %v895 = vunpack.c.0.s8 %v894
    %v896 = vlaneseq
    %v897 = vshrl.u32 %v896, 7
    %v898 = vsub.s32 %v895, %v897
    %v899 = vrot.slane %v892, %v898
    %v900 = vcombine.low %v736, %v743
    %v902 = vunpack.c.l.s4 1983009808
    %v903 = vunpack.c.0.s8 %v902
    %v904 = vlaneseq
    %v905 = vshrl.u32 %v904, 7
    %v906 = vsub.s32 %v903, %v905
    %v907 = vrot.slane %v900, %v906
    %v908 = vcombine.low %v746, %v747
    %v910 = vunpack.c.l.s4 1983009808
    %v911 = vunpack.c.0.s8 %v910
    %v912 = vlaneseq
    %v913 = vshrl.u32 %v912, 7
    %v914 = vsub.s32 %v911, %v913
    %v915 = vrot.slane %v908, %v914
    %v916 = vcombine.low %v891, %v899
    %v917 = vcombine.high %v891, %v899
    %v919 = vunpack.c.l.s4 1934713408
    %v920 = vunpack.c.0.s8 %v919
    %v921 = vlaneseq
    %v922 = vshrl.u32 %v921, 7
    %v923 = vsub.s32 %v920, %v922
    %v924 = vrot.slane %v916, %v923
    %v926 = vunpack.c.l.s4 1934713408
    %v927 = vunpack.c.0.s8 %v926
    %v928 = vlaneseq
    %v929 = vshrl.u32 %v928, 7
    %v930 = vsub.s32 %v927, %v929
    %v931 = vrot.slane %v917, %v930
    %v932 = vcombine.low %v907, %v915
    %v933 = vcombine.high %v907, %v915
    %v935 = vunpack.c.l.s4 1934713408
    %v936 = vunpack.c.0.s8 %v935
    %v937 = vlaneseq
    %v938 = vshrl.u32 %v937, 7
    %v939 = vsub.s32 %v936, %v938
    %v940 = vrot.slane %v932, %v939
    %v942 = vunpack.c.l.s4 1934713408
    %v943 = vunpack.c.0.s8 %v942
    %v944 = vlaneseq
    %v945 = vshrl.u32 %v944, 7
    %v946 = vsub.s32 %v943, %v945
    %v947 = vrot.slane %v933, %v946
    %v948 = vcombine.low %v924, %v940
    %v949 = vcombine.high %v924, %v940
    %v950 = vcombine.low %v931, %v947
    %v951 = vcombine.high %v931, %v947
    %v952 = vcombine.low %v788, %v795
    %v954 = vunpack.c.l.s4 1983009808
    %v955 = vunpack.c.0.s8 %v954
    %v956 = vlaneseq
    %v957 = vshrl.u32 %v956, 7
    %v958 = vsub.s32 %v955, %v957
    %v959 = vrot.slane %v952, %v958
    %v960 = vcombine.low %v812, %v813
    %v962 = vunpack.c.l.s4 1983009808
    %v963 = vunpack.c.0.s8 %v962
    %v964 = vlaneseq
    %v965 = vshrl.u32 %v964, 7
    %v966 = vsub.s32 %v963, %v965
    %v967 = vrot.slane %v960, %v966
    %v968 = vcombine.low %v804, %v811
    %v970 = vunpack.c.l.s4 1983009808
    %v971 = vunpack.c.0.s8 %v970
    %v972 = vlaneseq
    %v973 = vshrl.u32 %v972, 7
    %v974 = vsub.s32 %v971, %v973
    %v975 = vrot.slane %v968, %v974
    %v976 = vcombine.low %v814, %v815
    %v978 = vunpack.c.l.s4 1983009808
    %v979 = vunpack.c.0.s8 %v978
    %v980 = vlaneseq
    %v981 = vshrl.u32 %v980, 7
    %v982 = vsub.s32 %v979, %v981
    %v983 = vrot.slane %v976, %v982
    %v984 = vcombine.low %v959, %v967
    %v985 = vcombine.high %v959, %v967
    %v987 = vunpack.c.l.s4 1934713408
    %v988 = vunpack.c.0.s8 %v987
    %v989 = vlaneseq
    %v990 = vshrl.u32 %v989, 7
    %v991 = vsub.s32 %v988, %v990
    %v992 = vrot.slane %v984, %v991
    %v994 = vunpack.c.l.s4 1934713408
    %v995 = vunpack.c.0.s8 %v994
    %v996 = vlaneseq
    %v997 = vshrl.u32 %v996, 7
    %v998 = vsub.s32 %v995, %v997
    %v999 = vrot.slane %v985, %v998
    %v1000 = vcombine.low %v975, %v983
    %v1001 = vcombine.high %v975, %v983
    %v1003 = vunpack.c.l.s4 1934713408
    %v1004 = vunpack.c.0.s8 %v1003
    %v1005 = vlaneseq
    %v1006 = vshrl.u32 %v1005, 7
    %v1007 = vsub.s32 %v1004, %v1006
    %v1008 = vrot.slane %v1000, %v1007
    %v1010 = vunpack.c.l.s4 1934713408
    %v1011 = vunpack.c.0.s8 %v1010
    %v1012 = vlaneseq
    %v1013 = vshrl.u32 %v1012, 7
    %v1014 = vsub.s32 %v1011, %v1013
    %v1015 = vrot.slane %v1001, %v1014
    %v1016 = vcombine.low %v992, %v1008
    %v1017 = vcombine.high %v992, %v1008
    %v1018 = vcombine.low %v999, %v1015
    %v1019 = vcombine.high %v999, %v1015
    %1023 = vrot.lane.b32.xlu0 %v520, 96
    %v1024 = vpop.permute.xlu0 %1023
    %1025 = vrot.lane.b32.xlu0 %v524, 96
    %v1026 = vpop.permute.xlu0 %1025
    %1027 = vrot.lane.b32.xlu0 %v530, 96
    %v1028 = vpop.permute.xlu0 %1027
    %1032 = vrot.lane.b32.xlu0 %v520, 64
    %v1033 = vpop.permute.xlu0 %1032
    %1034 = vrot.lane.b32.xlu0 %v524, 64
    %v1035 = vpop.permute.xlu0 %1034
    %1036 = vrot.lane.b32.xlu0 %v530, 64
    %v1037 = vpop.permute.xlu0 %1036
    %1041 = vrot.lane.b32.xlu0 %v520, 32
    %v1042 = vpop.permute.xlu0 %1041
    %1043 = vrot.lane.b32.xlu0 %v524, 32
    %v1044 = vpop.permute.xlu0 %1043
    %1045 = vrot.lane.b32.xlu0 %v530, 32
    %v1046 = vpop.permute.xlu0 %1045
    %v1050 = vcombine.low %v520, %v1033
    %v1051 = vcombine.high %v520, %v1033
    %v1053 = vunpack.c.l.s4 1983009808
    %v1054 = vunpack.c.0.s8 %v1053
    %v1055 = vlaneseq
    %v1056 = vshrl.u32 %v1055, 7
    %v1057 = vsub.s32 %v1054, %v1056
    %v1058 = vrot.slane %v1050, %v1057
    %v1060 = vunpack.c.l.s4 1983009808
    %v1061 = vunpack.c.0.s8 %v1060
    %v1062 = vlaneseq
    %v1063 = vshrl.u32 %v1062, 7
    %v1064 = vsub.s32 %v1061, %v1063
    %v1065 = vrot.slane %v1051, %v1064
    %v1066 = vcombine.low %v1024, %v1042
    %v1067 = vcombine.high %v1024, %v1042
    %v1069 = vunpack.c.l.s4 1983009808
    %v1070 = vunpack.c.0.s8 %v1069
    %v1071 = vlaneseq
    %v1072 = vshrl.u32 %v1071, 7
    %v1073 = vsub.s32 %v1070, %v1072
    %v1074 = vrot.slane %v1066, %v1073
    %v1076 = vunpack.c.l.s4 1983009808
    %v1077 = vunpack.c.0.s8 %v1076
    %v1078 = vlaneseq
    %v1079 = vshrl.u32 %v1078, 7
    %v1080 = vsub.s32 %v1077, %v1079
    %v1081 = vrot.slane %v1067, %v1080
    %v1082 = vcombine.low %v1058, %v1074
    %v1083 = vcombine.high %v1058, %v1074
    %v1085 = vunpack.c.l.s4 1934713408
    %v1086 = vunpack.c.0.s8 %v1085
    %v1087 = vlaneseq
    %v1088 = vshrl.u32 %v1087, 7
    %v1089 = vsub.s32 %v1086, %v1088
    %v1090 = vrot.slane %v1082, %v1089
    %v1092 = vunpack.c.l.s4 1934713408
    %v1093 = vunpack.c.0.s8 %v1092
    %v1094 = vlaneseq
    %v1095 = vshrl.u32 %v1094, 7
    %v1096 = vsub.s32 %v1093, %v1095
    %v1097 = vrot.slane %v1083, %v1096
    %v1098 = vcombine.low %v1065, %v1081
    %v1099 = vcombine.high %v1065, %v1081
    %v1101 = vunpack.c.l.s4 1934713408
    %v1102 = vunpack.c.0.s8 %v1101
    %v1103 = vlaneseq
    %v1104 = vshrl.u32 %v1103, 7
    %v1105 = vsub.s32 %v1102, %v1104
    %v1106 = vrot.slane %v1098, %v1105
    %v1108 = vunpack.c.l.s4 1934713408
    %v1109 = vunpack.c.0.s8 %v1108
    %v1110 = vlaneseq
    %v1111 = vshrl.u32 %v1110, 7
    %v1112 = vsub.s32 %v1109, %v1111
    %v1113 = vrot.slane %v1099, %v1112
    %v1114 = vcombine.high %v1090, 0.0
    %v1115 = vcombine.high %v1097, 0.0
    %v1116 = vcombine.high %v1106, 0.0
    %v1117 = vcombine.high %v1113, 0.0
    %v1118 = vcombine.low %v524, %v1035
    %v1119 = vcombine.high %v524, %v1035
    %v1121 = vunpack.c.l.s4 1983009808
    %v1122 = vunpack.c.0.s8 %v1121
    %v1123 = vlaneseq
    %v1124 = vshrl.u32 %v1123, 7
    %v1125 = vsub.s32 %v1122, %v1124
    %v1126 = vrot.slane %v1118, %v1125
    %v1128 = vunpack.c.l.s4 1983009808
    %v1129 = vunpack.c.0.s8 %v1128
    %v1130 = vlaneseq
    %v1131 = vshrl.u32 %v1130, 7
    %v1132 = vsub.s32 %v1129, %v1131
    %v1133 = vrot.slane %v1119, %v1132
    %v1134 = vcombine.low %v1026, %v1044
    %v1135 = vcombine.high %v1026, %v1044
    %v1137 = vunpack.c.l.s4 1983009808
    %v1138 = vunpack.c.0.s8 %v1137
    %v1139 = vlaneseq
    %v1140 = vshrl.u32 %v1139, 7
    %v1141 = vsub.s32 %v1138, %v1140
    %v1142 = vrot.slane %v1134, %v1141
    %v1144 = vunpack.c.l.s4 1983009808
    %v1145 = vunpack.c.0.s8 %v1144
    %v1146 = vlaneseq
    %v1147 = vshrl.u32 %v1146, 7
    %v1148 = vsub.s32 %v1145, %v1147
    %v1149 = vrot.slane %v1135, %v1148
    %v1150 = vcombine.low %v1126, %v1142
    %v1151 = vcombine.high %v1126, %v1142
    %v1153 = vunpack.c.l.s4 1934713408
    %v1154 = vunpack.c.0.s8 %v1153
    %v1155 = vlaneseq
    %v1156 = vshrl.u32 %v1155, 7
    %v1157 = vsub.s32 %v1154, %v1156
    %v1158 = vrot.slane %v1150, %v1157
    %v1160 = vunpack.c.l.s4 1934713408
    %v1161 = vunpack.c.0.s8 %v1160
    %v1162 = vlaneseq
    %v1163 = vshrl.u32 %v1162, 7
    %v1164 = vsub.s32 %v1161, %v1163
    %v1165 = vrot.slane %v1151, %v1164
    %v1166 = vcombine.low %v1133, %v1149
    %v1167 = vcombine.high %v1133, %v1149
    %v1169 = vunpack.c.l.s4 1934713408
    %v1170 = vunpack.c.0.s8 %v1169
    %v1171 = vlaneseq
    %v1172 = vshrl.u32 %v1171, 7
    %v1173 = vsub.s32 %v1170, %v1172
    %v1174 = vrot.slane %v1166, %v1173
    %v1176 = vunpack.c.l.s4 1934713408
    %v1177 = vunpack.c.0.s8 %v1176
    %v1178 = vlaneseq
    %v1179 = vshrl.u32 %v1178, 7
    %v1180 = vsub.s32 %v1177, %v1179
    %v1181 = vrot.slane %v1167, %v1180
    %v1182 = vcombine.high %v1158, 0.0
    %v1183 = vcombine.high %v1165, 0.0
    %v1184 = vcombine.high %v1174, 0.0
    %v1185 = vcombine.high %v1181, 0.0
    %v1186 = vcombine.low %v530, %v1037
    %v1187 = vcombine.high %v530, %v1037
    %v1189 = vunpack.c.l.s4 1983009808
    %v1190 = vunpack.c.0.s8 %v1189
    %v1191 = vlaneseq
    %v1192 = vshrl.u32 %v1191, 7
    %v1193 = vsub.s32 %v1190, %v1192
    %v1194 = vrot.slane %v1186, %v1193
    %v1196 = vunpack.c.l.s4 1983009808
    %v1197 = vunpack.c.0.s8 %v1196
    %v1198 = vlaneseq
    %v1199 = vshrl.u32 %v1198, 7
    %v1200 = vsub.s32 %v1197, %v1199
    %v1201 = vrot.slane %v1187, %v1200
    %v1202 = vcombine.low %v1028, %v1046
    %v1203 = vcombine.high %v1028, %v1046
    %v1205 = vunpack.c.l.s4 1983009808
    %v1206 = vunpack.c.0.s8 %v1205
    %v1207 = vlaneseq
    %v1208 = vshrl.u32 %v1207, 7
    %v1209 = vsub.s32 %v1206, %v1208
    %v1210 = vrot.slane %v1202, %v1209
    %v1212 = vunpack.c.l.s4 1983009808
    %v1213 = vunpack.c.0.s8 %v1212
    %v1214 = vlaneseq
    %v1215 = vshrl.u32 %v1214, 7
    %v1216 = vsub.s32 %v1213, %v1215
    %v1217 = vrot.slane %v1203, %v1216
    %v1218 = vcombine.low %v1194, %v1210
    %v1219 = vcombine.high %v1194, %v1210
    %v1221 = vunpack.c.l.s4 1934713408
    %v1222 = vunpack.c.0.s8 %v1221
    %v1223 = vlaneseq
    %v1224 = vshrl.u32 %v1223, 7
    %v1225 = vsub.s32 %v1222, %v1224
    %v1226 = vrot.slane %v1218, %v1225
    %v1228 = vunpack.c.l.s4 1934713408
    %v1229 = vunpack.c.0.s8 %v1228
    %v1230 = vlaneseq
    %v1231 = vshrl.u32 %v1230, 7
    %v1232 = vsub.s32 %v1229, %v1231
    %v1233 = vrot.slane %v1219, %v1232
    %v1234 = vcombine.low %v1201, %v1217
    %v1235 = vcombine.high %v1201, %v1217
    %v1237 = vunpack.c.l.s4 1934713408
    %v1238 = vunpack.c.0.s8 %v1237
    %v1239 = vlaneseq
    %v1240 = vshrl.u32 %v1239, 7
    %v1241 = vsub.s32 %v1238, %v1240
    %v1242 = vrot.slane %v1234, %v1241
    %v1244 = vunpack.c.l.s4 1934713408
    %v1245 = vunpack.c.0.s8 %v1244
    %v1246 = vlaneseq
    %v1247 = vshrl.u32 %v1246, 7
    %v1248 = vsub.s32 %v1245, %v1247
    %v1249 = vrot.slane %v1235, %v1248
    %v1250 = vcombine.high %v1226, 0.0
    %v1251 = vcombine.high %v1233, 0.0
    %v1252 = vcombine.high %v1242, 0.0
    %v1253 = vcombine.high %v1249, 0.0
    %v1254 = vcombine.low %v1090, %v1097
    %v1256 = vunpack.c.l.s4 1983009808
    %v1257 = vunpack.c.0.s8 %v1256
    %v1258 = vlaneseq
    %v1259 = vshrl.u32 %v1258, 7
    %v1260 = vsub.s32 %v1257, %v1259
    %v1261 = vrot.slane %v1254, %v1260
    %v1262 = vcombine.low %v1114, %v1115
    %v1264 = vunpack.c.l.s4 1983009808
    %v1265 = vunpack.c.0.s8 %v1264
    %v1266 = vlaneseq
    %v1267 = vshrl.u32 %v1266, 7
    %v1268 = vsub.s32 %v1265, %v1267
    %v1269 = vrot.slane %v1262, %v1268
    %v1270 = vcombine.low %v1106, %v1113
    %v1272 = vunpack.c.l.s4 1983009808
    %v1273 = vunpack.c.0.s8 %v1272
    %v1274 = vlaneseq
    %v1275 = vshrl.u32 %v1274, 7
    %v1276 = vsub.s32 %v1273, %v1275
    %v1277 = vrot.slane %v1270, %v1276
    %v1278 = vcombine.low %v1116, %v1117
    %v1280 = vunpack.c.l.s4 1983009808
    %v1281 = vunpack.c.0.s8 %v1280
    %v1282 = vlaneseq
    %v1283 = vshrl.u32 %v1282, 7
    %v1284 = vsub.s32 %v1281, %v1283
    %v1285 = vrot.slane %v1278, %v1284
    %v1286 = vcombine.low %v1261, %v1269
    %v1287 = vcombine.high %v1261, %v1269
    %v1289 = vunpack.c.l.s4 1934713408
    %v1290 = vunpack.c.0.s8 %v1289
    %v1291 = vlaneseq
    %v1292 = vshrl.u32 %v1291, 7
    %v1293 = vsub.s32 %v1290, %v1292
    %v1294 = vrot.slane %v1286, %v1293
    %v1296 = vunpack.c.l.s4 1934713408
    %v1297 = vunpack.c.0.s8 %v1296
    %v1298 = vlaneseq
    %v1299 = vshrl.u32 %v1298, 7
    %v1300 = vsub.s32 %v1297, %v1299
    %v1301 = vrot.slane %v1287, %v1300
    %v1302 = vcombine.low %v1277, %v1285
    %v1303 = vcombine.high %v1277, %v1285
    %v1305 = vunpack.c.l.s4 1934713408
    %v1306 = vunpack.c.0.s8 %v1305
    %v1307 = vlaneseq
    %v1308 = vshrl.u32 %v1307, 7
    %v1309 = vsub.s32 %v1306, %v1308
    %v1310 = vrot.slane %v1302, %v1309
    %v1312 = vunpack.c.l.s4 1934713408
    %v1313 = vunpack.c.0.s8 %v1312
    %v1314 = vlaneseq
    %v1315 = vshrl.u32 %v1314, 7
    %v1316 = vsub.s32 %v1313, %v1315
    %v1317 = vrot.slane %v1303, %v1316
    %v1318 = vcombine.low %v1294, %v1310
    %v1319 = vcombine.high %v1294, %v1310
    %v1320 = vcombine.low %v1301, %v1317
    %v1321 = vcombine.high %v1301, %v1317
    %v1322 = vcombine.low %v1158, %v1165
    %v1324 = vunpack.c.l.s4 1983009808
    %v1325 = vunpack.c.0.s8 %v1324
    %v1326 = vlaneseq
    %v1327 = vshrl.u32 %v1326, 7
    %v1328 = vsub.s32 %v1325, %v1327
    %v1329 = vrot.slane %v1322, %v1328
    %v1330 = vcombine.low %v1182, %v1183
    %v1332 = vunpack.c.l.s4 1983009808
    %v1333 = vunpack.c.0.s8 %v1332
    %v1334 = vlaneseq
    %v1335 = vshrl.u32 %v1334, 7
    %v1336 = vsub.s32 %v1333, %v1335
    %v1337 = vrot.slane %v1330, %v1336
    %v1338 = vcombine.low %v1174, %v1181
    %v1340 = vunpack.c.l.s4 1983009808
    %v1341 = vunpack.c.0.s8 %v1340
    %v1342 = vlaneseq
    %v1343 = vshrl.u32 %v1342, 7
    %v1344 = vsub.s32 %v1341, %v1343
    %v1345 = vrot.slane %v1338, %v1344
    %v1346 = vcombine.low %v1184, %v1185
    %v1348 = vunpack.c.l.s4 1983009808
    %v1349 = vunpack.c.0.s8 %v1348
    %v1350 = vlaneseq
    %v1351 = vshrl.u32 %v1350, 7
    %v1352 = vsub.s32 %v1349, %v1351
    %v1353 = vrot.slane %v1346, %v1352
    %v1354 = vcombine.low %v1329, %v1337
    %v1355 = vcombine.high %v1329, %v1337
    %v1357 = vunpack.c.l.s4 1934713408
    %v1358 = vunpack.c.0.s8 %v1357
    %v1359 = vlaneseq
    %v1360 = vshrl.u32 %v1359, 7
    %v1361 = vsub.s32 %v1358, %v1360
    %v1362 = vrot.slane %v1354, %v1361
    %v1364 = vunpack.c.l.s4 1934713408
    %v1365 = vunpack.c.0.s8 %v1364
    %v1366 = vlaneseq
    %v1367 = vshrl.u32 %v1366, 7
    %v1368 = vsub.s32 %v1365, %v1367
    %v1369 = vrot.slane %v1355, %v1368
    %v1370 = vcombine.low %v1345, %v1353
    %v1371 = vcombine.high %v1345, %v1353
    %v1373 = vunpack.c.l.s4 1934713408
    %v1374 = vunpack.c.0.s8 %v1373
    %v1375 = vlaneseq
    %v1376 = vshrl.u32 %v1375, 7
    %v1377 = vsub.s32 %v1374, %v1376
    %v1378 = vrot.slane %v1370, %v1377
    %v1380 = vunpack.c.l.s4 1934713408
    %v1381 = vunpack.c.0.s8 %v1380
    %v1382 = vlaneseq
    %v1383 = vshrl.u32 %v1382, 7
    %v1384 = vsub.s32 %v1381, %v1383
    %v1385 = vrot.slane %v1371, %v1384
    %v1386 = vcombine.low %v1362, %v1378
    %v1387 = vcombine.high %v1362, %v1378
    %v1388 = vcombine.low %v1369, %v1385
    %v1389 = vcombine.high %v1369, %v1385
    %v1390 = vcombine.low %v1226, %v1233
    %v1392 = vunpack.c.l.s4 1983009808
    %v1393 = vunpack.c.0.s8 %v1392
    %v1394 = vlaneseq
    %v1395 = vshrl.u32 %v1394, 7
    %v1396 = vsub.s32 %v1393, %v1395
    %v1397 = vrot.slane %v1390, %v1396
    %v1398 = vcombine.low %v1250, %v1251
    %v1400 = vunpack.c.l.s4 1983009808
    %v1401 = vunpack.c.0.s8 %v1400
    %v1402 = vlaneseq
    %v1403 = vshrl.u32 %v1402, 7
    %v1404 = vsub.s32 %v1401, %v1403
    %v1405 = vrot.slane %v1398, %v1404
    %v1406 = vcombine.low %v1242, %v1249
    %v1408 = vunpack.c.l.s4 1983009808
    %v1409 = vunpack.c.0.s8 %v1408
    %v1410 = vlaneseq
    %v1411 = vshrl.u32 %v1410, 7
    %v1412 = vsub.s32 %v1409, %v1411
    %v1413 = vrot.slane %v1406, %v1412
    %v1414 = vcombine.low %v1252, %v1253
    %v1416 = vunpack.c.l.s4 1983009808
    %v1417 = vunpack.c.0.s8 %v1416
    %v1418 = vlaneseq
    %v1419 = vshrl.u32 %v1418, 7
    %v1420 = vsub.s32 %v1417, %v1419
    %v1421 = vrot.slane %v1414, %v1420
    %v1422 = vcombine.low %v1397, %v1405
    %v1423 = vcombine.high %v1397, %v1405
    %v1425 = vunpack.c.l.s4 1934713408
    %v1426 = vunpack.c.0.s8 %v1425
    %v1427 = vlaneseq
    %v1428 = vshrl.u32 %v1427, 7
    %v1429 = vsub.s32 %v1426, %v1428
    %v1430 = vrot.slane %v1422, %v1429
    %v1432 = vunpack.c.l.s4 1934713408
    %v1433 = vunpack.c.0.s8 %v1432
    %v1434 = vlaneseq
    %v1435 = vshrl.u32 %v1434, 7
    %v1436 = vsub.s32 %v1433, %v1435
    %v1437 = vrot.slane %v1423, %v1436
    %v1438 = vcombine.low %v1413, %v1421
    %v1439 = vcombine.high %v1413, %v1421
    %v1441 = vunpack.c.l.s4 1934713408
    %v1442 = vunpack.c.0.s8 %v1441
    %v1443 = vlaneseq
    %v1444 = vshrl.u32 %v1443, 7
    %v1445 = vsub.s32 %v1442, %v1444
    %v1446 = vrot.slane %v1438, %v1445
    %v1448 = vunpack.c.l.s4 1934713408
    %v1449 = vunpack.c.0.s8 %v1448
    %v1450 = vlaneseq
    %v1451 = vshrl.u32 %v1450, 7
    %v1452 = vsub.s32 %v1449, %v1451
    %v1453 = vrot.slane %v1439, %v1452
    %v1454 = vcombine.low %v1430, %v1446
    %v1455 = vcombine.high %v1430, %v1446
    %v1456 = vcombine.low %v1437, %v1453
    %v1457 = vcombine.high %v1437, %v1453
    %1461 = vrot.lane.b32.xlu0 %v569, 96
    %v1462 = vpop.permute.xlu0 %1461
    %1463 = vrot.lane.b32.xlu0 %v572, 96
    %v1464 = vpop.permute.xlu0 %1463
    %1465 = vrot.lane.b32.xlu0 %v577, 96
    %v1466 = vpop.permute.xlu0 %1465
    %1470 = vrot.lane.b32.xlu0 %v569, 64
    %v1471 = vpop.permute.xlu0 %1470
    %1472 = vrot.lane.b32.xlu0 %v572, 64
    %v1473 = vpop.permute.xlu0 %1472
    %1474 = vrot.lane.b32.xlu0 %v577, 64
    %v1475 = vpop.permute.xlu0 %1474
    %1479 = vrot.lane.b32.xlu0 %v569, 32
    %v1480 = vpop.permute.xlu0 %1479
    %1481 = vrot.lane.b32.xlu0 %v572, 32
    %v1482 = vpop.permute.xlu0 %1481
    %1483 = vrot.lane.b32.xlu0 %v577, 32
    %v1484 = vpop.permute.xlu0 %1483
    %v1488 = vcombine.low %v569, %v1471
    %v1489 = vcombine.high %v569, %v1471
    %v1491 = vunpack.c.l.s4 1983009808
    %v1492 = vunpack.c.0.s8 %v1491
    %v1493 = vlaneseq
    %v1494 = vshrl.u32 %v1493, 7
    %v1495 = vsub.s32 %v1492, %v1494
    %v1496 = vrot.slane %v1488, %v1495
    %v1498 = vunpack.c.l.s4 1983009808
    %v1499 = vunpack.c.0.s8 %v1498
    %v1500 = vlaneseq
    %v1501 = vshrl.u32 %v1500, 7
    %v1502 = vsub.s32 %v1499, %v1501
    %v1503 = vrot.slane %v1489, %v1502
    %v1504 = vcombine.low %v1462, %v1480
    %v1505 = vcombine.high %v1462, %v1480
    %v1507 = vunpack.c.l.s4 1983009808
    %v1508 = vunpack.c.0.s8 %v1507
    %v1509 = vlaneseq
    %v1510 = vshrl.u32 %v1509, 7
    %v1511 = vsub.s32 %v1508, %v1510
    %v1512 = vrot.slane %v1504, %v1511
    %v1514 = vunpack.c.l.s4 1983009808
    %v1515 = vunpack.c.0.s8 %v1514
    %v1516 = vlaneseq
    %v1517 = vshrl.u32 %v1516, 7
    %v1518 = vsub.s32 %v1515, %v1517
    %v1519 = vrot.slane %v1505, %v1518
    %v1520 = vcombine.low %v1496, %v1512
    %v1521 = vcombine.high %v1496, %v1512
    %v1523 = vunpack.c.l.s4 1934713408
    %v1524 = vunpack.c.0.s8 %v1523
    %v1525 = vlaneseq
    %v1526 = vshrl.u32 %v1525, 7
    %v1527 = vsub.s32 %v1524, %v1526
    %v1528 = vrot.slane %v1520, %v1527
    %v1530 = vunpack.c.l.s4 1934713408
    %v1531 = vunpack.c.0.s8 %v1530
    %v1532 = vlaneseq
    %v1533 = vshrl.u32 %v1532, 7
    %v1534 = vsub.s32 %v1531, %v1533
    %v1535 = vrot.slane %v1521, %v1534
    %v1536 = vcombine.low %v1503, %v1519
    %v1537 = vcombine.high %v1503, %v1519
    %v1539 = vunpack.c.l.s4 1934713408
    %v1540 = vunpack.c.0.s8 %v1539
    %v1541 = vlaneseq
    %v1542 = vshrl.u32 %v1541, 7
    %v1543 = vsub.s32 %v1540, %v1542
    %v1544 = vrot.slane %v1536, %v1543
    %v1546 = vunpack.c.l.s4 1934713408
    %v1547 = vunpack.c.0.s8 %v1546
    %v1548 = vlaneseq
    %v1549 = vshrl.u32 %v1548, 7
    %v1550 = vsub.s32 %v1547, %v1549
    %v1551 = vrot.slane %v1537, %v1550
    %v1552 = vcombine.high %v1528, 0.0
    %v1553 = vcombine.high %v1535, 0.0
    %v1554 = vcombine.high %v1544, 0.0
    %v1555 = vcombine.high %v1551, 0.0
    %v1556 = vcombine.low %v572, %v1473
    %v1557 = vcombine.high %v572, %v1473
    %v1559 = vunpack.c.l.s4 1983009808
    %v1560 = vunpack.c.0.s8 %v1559
    %v1561 = vlaneseq
    %v1562 = vshrl.u32 %v1561, 7
    %v1563 = vsub.s32 %v1560, %v1562
    %v1564 = vrot.slane %v1556, %v1563
    %v1566 = vunpack.c.l.s4 1983009808
    %v1567 = vunpack.c.0.s8 %v1566
    %v1568 = vlaneseq
    %v1569 = vshrl.u32 %v1568, 7
    %v1570 = vsub.s32 %v1567, %v1569
    %v1571 = vrot.slane %v1557, %v1570
    %v1572 = vcombine.low %v1464, %v1482
    %v1573 = vcombine.high %v1464, %v1482
    %v1575 = vunpack.c.l.s4 1983009808
    %v1576 = vunpack.c.0.s8 %v1575
    %v1577 = vlaneseq
    %v1578 = vshrl.u32 %v1577, 7
    %v1579 = vsub.s32 %v1576, %v1578
    %v1580 = vrot.slane %v1572, %v1579
    %v1582 = vunpack.c.l.s4 1983009808
    %v1583 = vunpack.c.0.s8 %v1582
    %v1584 = vlaneseq
    %v1585 = vshrl.u32 %v1584, 7
    %v1586 = vsub.s32 %v1583, %v1585
    %v1587 = vrot.slane %v1573, %v1586
    %v1588 = vcombine.low %v1564, %v1580
    %v1589 = vcombine.high %v1564, %v1580
    %v1591 = vunpack.c.l.s4 1934713408
    %v1592 = vunpack.c.0.s8 %v1591
    %v1593 = vlaneseq
    %v1594 = vshrl.u32 %v1593, 7
    %v1595 = vsub.s32 %v1592, %v1594
    %v1596 = vrot.slane %v1588, %v1595
    %v1598 = vunpack.c.l.s4 1934713408
    %v1599 = vunpack.c.0.s8 %v1598
    %v1600 = vlaneseq
    %v1601 = vshrl.u32 %v1600, 7
    %v1602 = vsub.s32 %v1599, %v1601
    %v1603 = vrot.slane %v1589, %v1602
    %v1604 = vcombine.low %v1571, %v1587
    %v1605 = vcombine.high %v1571, %v1587
    %v1607 = vunpack.c.l.s4 1934713408
    %v1608 = vunpack.c.0.s8 %v1607
    %v1609 = vlaneseq
    %v1610 = vshrl.u32 %v1609, 7
    %v1611 = vsub.s32 %v1608, %v1610
    %v1612 = vrot.slane %v1604, %v1611
    %v1614 = vunpack.c.l.s4 1934713408
    %v1615 = vunpack.c.0.s8 %v1614
    %v1616 = vlaneseq
    %v1617 = vshrl.u32 %v1616, 7
    %v1618 = vsub.s32 %v1615, %v1617
    %v1619 = vrot.slane %v1605, %v1618
    %v1620 = vcombine.high %v1596, 0.0
    %v1621 = vcombine.high %v1603, 0.0
    %v1622 = vcombine.high %v1612, 0.0
    %v1623 = vcombine.high %v1619, 0.0
    %v1624 = vcombine.low %v577, %v1475
    %v1625 = vcombine.high %v577, %v1475
    %v1627 = vunpack.c.l.s4 1983009808
    %v1628 = vunpack.c.0.s8 %v1627
    %v1629 = vlaneseq
    %v1630 = vshrl.u32 %v1629, 7
    %v1631 = vsub.s32 %v1628, %v1630
    %v1632 = vrot.slane %v1624, %v1631
    %v1634 = vunpack.c.l.s4 1983009808
    %v1635 = vunpack.c.0.s8 %v1634
    %v1636 = vlaneseq
    %v1637 = vshrl.u32 %v1636, 7
    %v1638 = vsub.s32 %v1635, %v1637
    %v1639 = vrot.slane %v1625, %v1638
    %v1640 = vcombine.low %v1466, %v1484
    %v1641 = vcombine.high %v1466, %v1484
    %v1643 = vunpack.c.l.s4 1983009808
    %v1644 = vunpack.c.0.s8 %v1643
    %v1645 = vlaneseq
    %v1646 = vshrl.u32 %v1645, 7
    %v1647 = vsub.s32 %v1644, %v1646
    %v1648 = vrot.slane %v1640, %v1647
    %v1650 = vunpack.c.l.s4 1983009808
    %v1651 = vunpack.c.0.s8 %v1650
    %v1652 = vlaneseq
    %v1653 = vshrl.u32 %v1652, 7
    %v1654 = vsub.s32 %v1651, %v1653
    %v1655 = vrot.slane %v1641, %v1654
    %v1656 = vcombine.low %v1632, %v1648
    %v1657 = vcombine.high %v1632, %v1648
    %v1659 = vunpack.c.l.s4 1934713408
    %v1660 = vunpack.c.0.s8 %v1659
    %v1661 = vlaneseq
    %v1662 = vshrl.u32 %v1661, 7
    %v1663 = vsub.s32 %v1660, %v1662
    %v1664 = vrot.slane %v1656, %v1663
    %v1666 = vunpack.c.l.s4 1934713408
    %v1667 = vunpack.c.0.s8 %v1666
    %v1668 = vlaneseq
    %v1669 = vshrl.u32 %v1668, 7
    %v1670 = vsub.s32 %v1667, %v1669
    %v1671 = vrot.slane %v1657, %v1670
    %v1672 = vcombine.low %v1639, %v1655
    %v1673 = vcombine.high %v1639, %v1655
    %v1675 = vunpack.c.l.s4 1934713408
    %v1676 = vunpack.c.0.s8 %v1675
    %v1677 = vlaneseq
    %v1678 = vshrl.u32 %v1677, 7
    %v1679 = vsub.s32 %v1676, %v1678
    %v1680 = vrot.slane %v1672, %v1679
    %v1682 = vunpack.c.l.s4 1934713408
    %v1683 = vunpack.c.0.s8 %v1682
    %v1684 = vlaneseq
    %v1685 = vshrl.u32 %v1684, 7
    %v1686 = vsub.s32 %v1683, %v1685
    %v1687 = vrot.slane %v1673, %v1686
    %v1688 = vcombine.high %v1664, 0.0
    %v1689 = vcombine.high %v1671, 0.0
    %v1690 = vcombine.high %v1680, 0.0
    %v1691 = vcombine.high %v1687, 0.0
    %v1692 = vcombine.low %v1528, %v1535
    %v1694 = vunpack.c.l.s4 1983009808
    %v1695 = vunpack.c.0.s8 %v1694
    %v1696 = vlaneseq
    %v1697 = vshrl.u32 %v1696, 7
    %v1698 = vsub.s32 %v1695, %v1697
    %v1699 = vrot.slane %v1692, %v1698
    %v1700 = vcombine.low %v1552, %v1553
    %v1702 = vunpack.c.l.s4 1983009808
    %v1703 = vunpack.c.0.s8 %v1702
    %v1704 = vlaneseq
    %v1705 = vshrl.u32 %v1704, 7
    %v1706 = vsub.s32 %v1703, %v1705
    %v1707 = vrot.slane %v1700, %v1706
    %v1708 = vcombine.low %v1544, %v1551
    %v1710 = vunpack.c.l.s4 1983009808
    %v1711 = vunpack.c.0.s8 %v1710
    %v1712 = vlaneseq
    %v1713 = vshrl.u32 %v1712, 7
    %v1714 = vsub.s32 %v1711, %v1713
    %v1715 = vrot.slane %v1708, %v1714
    %v1716 = vcombine.low %v1554, %v1555
    %v1718 = vunpack.c.l.s4 1983009808
    %v1719 = vunpack.c.0.s8 %v1718
    %v1720 = vlaneseq
    %v1721 = vshrl.u32 %v1720, 7
    %v1722 = vsub.s32 %v1719, %v1721
    %v1723 = vrot.slane %v1716, %v1722
    %v1724 = vcombine.low %v1699, %v1707
    %v1725 = vcombine.high %v1699, %v1707
    %v1727 = vunpack.c.l.s4 1934713408
    %v1728 = vunpack.c.0.s8 %v1727
    %v1729 = vlaneseq
    %v1730 = vshrl.u32 %v1729, 7
    %v1731 = vsub.s32 %v1728, %v1730
    %v1732 = vrot.slane %v1724, %v1731
    %v1734 = vunpack.c.l.s4 1934713408
    %v1735 = vunpack.c.0.s8 %v1734
    %v1736 = vlaneseq
    %v1737 = vshrl.u32 %v1736, 7
    %v1738 = vsub.s32 %v1735, %v1737
    %v1739 = vrot.slane %v1725, %v1738
    %v1740 = vcombine.low %v1715, %v1723
    %v1741 = vcombine.high %v1715, %v1723
    %v1743 = vunpack.c.l.s4 1934713408
    %v1744 = vunpack.c.0.s8 %v1743
    %v1745 = vlaneseq
    %v1746 = vshrl.u32 %v1745, 7
    %v1747 = vsub.s32 %v1744, %v1746
    %v1748 = vrot.slane %v1740, %v1747
    %v1750 = vunpack.c.l.s4 1934713408
    %v1751 = vunpack.c.0.s8 %v1750
    %v1752 = vlaneseq
    %v1753 = vshrl.u32 %v1752, 7
    %v1754 = vsub.s32 %v1751, %v1753
    %v1755 = vrot.slane %v1741, %v1754
    %v1756 = vcombine.low %v1732, %v1748
    %v1757 = vcombine.high %v1732, %v1748
    %v1758 = vcombine.low %v1739, %v1755
    %v1759 = vcombine.high %v1739, %v1755
    %v1760 = vcombine.low %v1596, %v1603
    %v1762 = vunpack.c.l.s4 1983009808
    %v1763 = vunpack.c.0.s8 %v1762
    %v1764 = vlaneseq
    %v1765 = vshrl.u32 %v1764, 7
    %v1766 = vsub.s32 %v1763, %v1765
    %v1767 = vrot.slane %v1760, %v1766
    %v1768 = vcombine.low %v1620, %v1621
    %v1770 = vunpack.c.l.s4 1983009808
    %v1771 = vunpack.c.0.s8 %v1770
    %v1772 = vlaneseq
    %v1773 = vshrl.u32 %v1772, 7
    %v1774 = vsub.s32 %v1771, %v1773
    %v1775 = vrot.slane %v1768, %v1774
    %v1776 = vcombine.low %v1612, %v1619
    %v1778 = vunpack.c.l.s4 1983009808
    %v1779 = vunpack.c.0.s8 %v1778
    %v1780 = vlaneseq
    %v1781 = vshrl.u32 %v1780, 7
    %v1782 = vsub.s32 %v1779, %v1781
    %v1783 = vrot.slane %v1776, %v1782
    %v1784 = vcombine.low %v1622, %v1623
    %v1786 = vunpack.c.l.s4 1983009808
    %v1787 = vunpack.c.0.s8 %v1786
    %v1788 = vlaneseq
    %v1789 = vshrl.u32 %v1788, 7
    %v1790 = vsub.s32 %v1787, %v1789
    %v1791 = vrot.slane %v1784, %v1790
    %v1792 = vcombine.low %v1767, %v1775
    %v1793 = vcombine.high %v1767, %v1775
    %v1795 = vunpack.c.l.s4 1934713408
    %v1796 = vunpack.c.0.s8 %v1795
    %v1797 = vlaneseq
    %v1798 = vshrl.u32 %v1797, 7
    %v1799 = vsub.s32 %v1796, %v1798
    %v1800 = vrot.slane %v1792, %v1799
    %v1802 = vunpack.c.l.s4 1934713408
    %v1803 = vunpack.c.0.s8 %v1802
    %v1804 = vlaneseq
    %v1805 = vshrl.u32 %v1804, 7
    %v1806 = vsub.s32 %v1803, %v1805
    %v1807 = vrot.slane %v1793, %v1806
    %v1808 = vcombine.low %v1783, %v1791
    %v1809 = vcombine.high %v1783, %v1791
    %v1811 = vunpack.c.l.s4 1934713408
    %v1812 = vunpack.c.0.s8 %v1811
    %v1813 = vlaneseq
    %v1814 = vshrl.u32 %v1813, 7
    %v1815 = vsub.s32 %v1812, %v1814
    %v1816 = vrot.slane %v1808, %v1815
    %v1818 = vunpack.c.l.s4 1934713408
    %v1819 = vunpack.c.0.s8 %v1818
    %v1820 = vlaneseq
    %v1821 = vshrl.u32 %v1820, 7
    %v1822 = vsub.s32 %v1819, %v1821
    %v1823 = vrot.slane %v1809, %v1822
    %v1824 = vcombine.low %v1800, %v1816
    %v1825 = vcombine.high %v1800, %v1816
    %v1826 = vcombine.low %v1807, %v1823
    %v1827 = vcombine.high %v1807, %v1823
    %v1828 = vcombine.low %v1664, %v1671
    %v1830 = vunpack.c.l.s4 1983009808
    %v1831 = vunpack.c.0.s8 %v1830
    %v1832 = vlaneseq
    %v1833 = vshrl.u32 %v1832, 7
    %v1834 = vsub.s32 %v1831, %v1833
    %v1835 = vrot.slane %v1828, %v1834
    %v1836 = vcombine.low %v1688, %v1689
    %v1838 = vunpack.c.l.s4 1983009808
    %v1839 = vunpack.c.0.s8 %v1838
    %v1840 = vlaneseq
    %v1841 = vshrl.u32 %v1840, 7
    %v1842 = vsub.s32 %v1839, %v1841
    %v1843 = vrot.slane %v1836, %v1842
    %v1844 = vcombine.low %v1680, %v1687
    %v1846 = vunpack.c.l.s4 1983009808
    %v1847 = vunpack.c.0.s8 %v1846
    %v1848 = vlaneseq
    %v1849 = vshrl.u32 %v1848, 7
    %v1850 = vsub.s32 %v1847, %v1849
    %v1851 = vrot.slane %v1844, %v1850
    %v1852 = vcombine.low %v1690, %v1691
    %v1854 = vunpack.c.l.s4 1983009808
    %v1855 = vunpack.c.0.s8 %v1854
    %v1856 = vlaneseq
    %v1857 = vshrl.u32 %v1856, 7
    %v1858 = vsub.s32 %v1855, %v1857
    %v1859 = vrot.slane %v1852, %v1858
    %v1860 = vcombine.low %v1835, %v1843
    %v1861 = vcombine.high %v1835, %v1843
    %v1863 = vunpack.c.l.s4 1934713408
    %v1864 = vunpack.c.0.s8 %v1863
    %v1865 = vlaneseq
    %v1866 = vshrl.u32 %v1865, 7
    %v1867 = vsub.s32 %v1864, %v1866
    %v1868 = vrot.slane %v1860, %v1867
    %v1870 = vunpack.c.l.s4 1934713408
    %v1871 = vunpack.c.0.s8 %v1870
    %v1872 = vlaneseq
    %v1873 = vshrl.u32 %v1872, 7
    %v1874 = vsub.s32 %v1871, %v1873
    %v1875 = vrot.slane %v1861, %v1874
    %v1876 = vcombine.low %v1851, %v1859
    %v1877 = vcombine.high %v1851, %v1859
    %v1879 = vunpack.c.l.s4 1934713408
    %v1880 = vunpack.c.0.s8 %v1879
    %v1881 = vlaneseq
    %v1882 = vshrl.u32 %v1881, 7
    %v1883 = vsub.s32 %v1880, %v1882
    %v1884 = vrot.slane %v1876, %v1883
    %v1886 = vunpack.c.l.s4 1934713408
    %v1887 = vunpack.c.0.s8 %v1886
    %v1888 = vlaneseq
    %v1889 = vshrl.u32 %v1888, 7
    %v1890 = vsub.s32 %v1887, %v1889
    %v1891 = vrot.slane %v1877, %v1890
    %v1892 = vcombine.low %v1868, %v1884
    %v1893 = vcombine.high %v1868, %v1884
    %v1894 = vcombine.low %v1875, %v1891
    %v1895 = vcombine.high %v1875, %v1891
    %v1896 = vpack.c.bf16 %v948, %v880
    %v1897 = vpack.c.bf16 %v1016, %v1016
    %v1898 = vpack.c.bf16 %v949, %v881
    %v1899 = vpack.c.bf16 %v1017, %v1017
    %v1900 = vpack.c.bf16 %v950, %v882
    %v1901 = vpack.c.bf16 %v1018, %v1018
    %v1902 = vpack.c.bf16 %v951, %v883
    %v1903 = vpack.c.bf16 %v1019, %v1019
    %v1904 = vpack.c.bf16 %v1386, %v1318
    %v1905 = vpack.c.bf16 %v1454, %v1454
    %v1906 = vpack.c.bf16 %v1387, %v1319
    %v1907 = vpack.c.bf16 %v1455, %v1455
    %v1908 = vpack.c.bf16 %v1388, %v1320
    %v1909 = vpack.c.bf16 %v1456, %v1456
    %v1910 = vpack.c.bf16 %v1389, %v1321
    %v1911 = vpack.c.bf16 %v1457, %v1457
    %vm1912 = vcmask 261120
    %v1914 = vsel %vm1912, %v1896, 0
    %v1917 = vsel %vm1912, %v1897, 0
    %v1920 = vsel %vm1912, %v1904, 0
    %v1923 = vsel %vm1912, %v1905, 0
    %1925 = vmatprep.subr.bf16.mxu0 0
    %1926 = vmatpush1.bf16.xpose.msra.mxu0 %v1920
    %1927 = vmatprep.subr.bf16.mxu0 0
    %1928 = vmatpush1.bf16.xpose.msra.mxu0 %v1923
    %1929 = vmatprep.subr.bf16.mxu0 0
    %1930 = vmatpush1.bf16.xpose.msra.mxu0 0
    %1931 = vmatprep.subr.bf16.mxu0 0
    %1932 = vmatpush1.bf16.xpose.msra.mxu0 0
    %1933 = vmatprep.subr.bf16.mxu0 0
    %1934 = vmatpush1.bf16.xpose.msra.mxu0 0
    %1935 = vmatprep.subr.bf16.mxu0 0
    %1936 = vmatpush1.bf16.xpose.msra.mxu0 0
    %1937 = vmatprep.subr.bf16.mxu0 0
    %1938 = vmatpush1.bf16.xpose.msra.mxu0 0
    %1939 = vmatprep.subr.bf16.mxu0 0
    %1940 = vmatpush1.bf16.xpose.msra.mxu0 0
    %1941 = vmatprep.subr.bf16.mxu0 0
    %1942 = vmatpush1.bf16.xpose.msra.mxu0 0
    %1943 = vmatprep.subr.bf16.mxu0 0
    %1944 = vmatpush1.bf16.xpose.msra.mxu0 0
    %1945 = vmatprep.subr.bf16.mxu0 0
    %1946 = vmatpush1.bf16.xpose.msra.mxu0 0
    %1947 = vmatprep.subr.bf16.mxu0 0
    %1948 = vmatpush1.bf16.xpose.msra.mxu0 0
    %1949 = vmatprep.subr.bf16.mxu0 0
    %1950 = vmatpush1.bf16.xpose.msra.mxu0 0
    %1951 = vmatprep.subr.bf16.mxu0 0
    %1952 = vmatpush1.bf16.xpose.msra.mxu0 0
    %1953 = vmatprep.subr.bf16.mxu0 0
    %1954 = vmatpush1.bf16.xpose.msra.mxu0 0
    %1955 = vmatprep.subr.bf16.mxu0 0
    %1956 = vmatpush1.bf16.xpose.msra.mxu0 0
    %1957 = vmatprep.mubr.bf16.mxu0 0
    %1958 = vmatmul.mubr.bf16.gmra.mrb[0].mxu0 %v1914
    %v1959 = vpop.f32.mrb[0].mxu0
    %v1960 = vadd.f32 %v293, %v1959
    %v1961 = vpop.f32.mrb[0].mxu0
    %v1962 = vpop.f32.mrb[0].mxu0
    %v1963 = vadd.f32 %v294, %v1962
    %v1964 = vpop.f32.mrb[0].mxu0
    %1965 = vmatprep.mubr.bf16.mxu0 0
    %1966 = vmatmul.mubr.bf16.gmra.mrb[0].mxu0 %v1917
    %v1967 = vpop.f32.mrb[0].mxu0
    %v1968 = vadd.f32 %v295, %v1967
    %v1969 = vpop.f32.mrb[0].mxu0
    %v1970 = vpop.f32.mrb[0].mxu0
    %v1971 = vpop.f32.mrb[0].mxu0
    %1972 = vdwg.mxu0
    %v1974 = vsel %vm1912, %v1898, 0
    %v1977 = vsel %vm1912, %v1899, 0
    %v1980 = vsel %vm1912, %v1906, 0
    %v1983 = vsel %vm1912, %v1907, 0
    %1985 = vmatprep.subr.bf16.mxu0 0
    %1986 = vmatpush1.bf16.xpose.msra.mxu0 %v1980
    %1987 = vmatprep.subr.bf16.mxu0 0
    %1988 = vmatpush1.bf16.xpose.msra.mxu0 %v1983
    %1989 = vmatprep.subr.bf16.mxu0 0
    %1990 = vmatpush1.bf16.xpose.msra.mxu0 0
    %1991 = vmatprep.subr.bf16.mxu0 0
    %1992 = vmatpush1.bf16.xpose.msra.mxu0 0
    %1993 = vmatprep.subr.bf16.mxu0 0
    %1994 = vmatpush1.bf16.xpose.msra.mxu0 0
    %1995 = vmatprep.subr.bf16.mxu0 0
    %1996 = vmatpush1.bf16.xpose.msra.mxu0 0
    %1997 = vmatprep.subr.bf16.mxu0 0
    %1998 = vmatpush1.bf16.xpose.msra.mxu0 0
    %1999 = vmatprep.subr.bf16.mxu0 0
    %2000 = vmatpush1.bf16.xpose.msra.mxu0 0
    %2001 = vmatprep.subr.bf16.mxu0 0
    %2002 = vmatpush1.bf16.xpose.msra.mxu0 0
    %2003 = vmatprep.subr.bf16.mxu0 0
    %2004 = vmatpush1.bf16.xpose.msra.mxu0 0
    %2005 = vmatprep.subr.bf16.mxu0 0
    %2006 = vmatpush1.bf16.xpose.msra.mxu0 0
    %2007 = vmatprep.subr.bf16.mxu0 0
    %2008 = vmatpush1.bf16.xpose.msra.mxu0 0
    %2009 = vmatprep.subr.bf16.mxu0 0
    %2010 = vmatpush1.bf16.xpose.msra.mxu0 0
    %2011 = vmatprep.subr.bf16.mxu0 0
    %2012 = vmatpush1.bf16.xpose.msra.mxu0 0
    %2013 = vmatprep.subr.bf16.mxu0 0
    %2014 = vmatpush1.bf16.xpose.msra.mxu0 0
    %2015 = vmatprep.subr.bf16.mxu0 0
    %2016 = vmatpush1.bf16.xpose.msra.mxu0 0
    %2017 = vmatprep.mubr.bf16.mxu0 0
    %2018 = vmatmul.mubr.bf16.gmra.mrb[0].mxu0 %v1974
    %v2019 = vpop.f32.mrb[0].mxu0
    %v2020 = vadd.f32 %v293, %v2019
    %v2021 = vpop.f32.mrb[0].mxu0
    %v2022 = vpop.f32.mrb[0].mxu0
    %v2023 = vadd.f32 %v294, %v2022
    %v2024 = vpop.f32.mrb[0].mxu0
    %2025 = vmatprep.mubr.bf16.mxu0 0
    %2026 = vmatmul.mubr.bf16.gmra.mrb[0].mxu0 %v1977
    %v2027 = vpop.f32.mrb[0].mxu0
    %v2028 = vadd.f32 %v295, %v2027
    %v2029 = vpop.f32.mrb[0].mxu0
    %v2030 = vpop.f32.mrb[0].mxu0
    %v2031 = vpop.f32.mrb[0].mxu0
    %2032 = vdwg.mxu0
    %v2034 = vsel %vm1912, %v1900, 0
    %v2037 = vsel %vm1912, %v1901, 0
    %v2040 = vsel %vm1912, %v1908, 0
    %v2043 = vsel %vm1912, %v1909, 0
    %2045 = vmatprep.subr.bf16.mxu0 0
    %2046 = vmatpush1.bf16.xpose.msra.mxu0 %v2040
    %2047 = vmatprep.subr.bf16.mxu0 0
    %2048 = vmatpush1.bf16.xpose.msra.mxu0 %v2043
    %2049 = vmatprep.subr.bf16.mxu0 0
    %2050 = vmatpush1.bf16.xpose.msra.mxu0 0
    %2051 = vmatprep.subr.bf16.mxu0 0
    %2052 = vmatpush1.bf16.xpose.msra.mxu0 0
    %2053 = vmatprep.subr.bf16.mxu0 0
    %2054 = vmatpush1.bf16.xpose.msra.mxu0 0
    %2055 = vmatprep.subr.bf16.mxu0 0
    %2056 = vmatpush1.bf16.xpose.msra.mxu0 0
    %2057 = vmatprep.subr.bf16.mxu0 0
    %2058 = vmatpush1.bf16.xpose.msra.mxu0 0
    %2059 = vmatprep.subr.bf16.mxu0 0
    %2060 = vmatpush1.bf16.xpose.msra.mxu0 0
    %2061 = vmatprep.subr.bf16.mxu0 0
    %2062 = vmatpush1.bf16.xpose.msra.mxu0 0
    %2063 = vmatprep.subr.bf16.mxu0 0
    %2064 = vmatpush1.bf16.xpose.msra.mxu0 0
    %2065 = vmatprep.subr.bf16.mxu0 0
    %2066 = vmatpush1.bf16.xpose.msra.mxu0 0
    %2067 = vmatprep.subr.bf16.mxu0 0
    %2068 = vmatpush1.bf16.xpose.msra.mxu0 0
    %2069 = vmatprep.subr.bf16.mxu0 0
    %2070 = vmatpush1.bf16.xpose.msra.mxu0 0
    %2071 = vmatprep.subr.bf16.mxu0 0
    %2072 = vmatpush1.bf16.xpose.msra.mxu0 0
    %2073 = vmatprep.subr.bf16.mxu0 0
    %2074 = vmatpush1.bf16.xpose.msra.mxu0 0
    %2075 = vmatprep.subr.bf16.mxu0 0
    %2076 = vmatpush1.bf16.xpose.msra.mxu0 0
    %2077 = vmatprep.mubr.bf16.mxu0 0
    %2078 = vmatmul.mubr.bf16.gmra.mrb[0].mxu0 %v2034
    %v2079 = vpop.f32.mrb[0].mxu0
    %v2080 = vadd.f32 %v293, %v2079
    %v2081 = vpop.f32.mrb[0].mxu0
    %v2082 = vpop.f32.mrb[0].mxu0
    %v2083 = vadd.f32 %v294, %v2082
    %v2084 = vpop.f32.mrb[0].mxu0
    %2085 = vmatprep.mubr.bf16.mxu0 0
    %2086 = vmatmul.mubr.bf16.gmra.mrb[0].mxu0 %v2037
    %v2087 = vpop.f32.mrb[0].mxu0
    %v2088 = vadd.f32 %v295, %v2087
    %v2089 = vpop.f32.mrb[0].mxu0
    %v2090 = vpop.f32.mrb[0].mxu0
    %v2091 = vpop.f32.mrb[0].mxu0
    %2092 = vdwg.mxu0
    %v2094 = vsel %vm1912, %v1902, 0
    %v2097 = vsel %vm1912, %v1903, 0
    %v2100 = vsel %vm1912, %v1910, 0
    %v2103 = vsel %vm1912, %v1911, 0
    %2105 = vmatprep.subr.bf16.mxu0 0
    %2106 = vmatpush1.bf16.xpose.msra.mxu0 %v2100
    %2107 = vmatprep.subr.bf16.mxu0 0
    %2108 = vmatpush1.bf16.xpose.msra.mxu0 %v2103
    %2109 = vmatprep.subr.bf16.mxu0 0
    %2110 = vmatpush1.bf16.xpose.msra.mxu0 0
    %2111 = vmatprep.subr.bf16.mxu0 0
    %2112 = vmatpush1.bf16.xpose.msra.mxu0 0
    %2113 = vmatprep.subr.bf16.mxu0 0
    %2114 = vmatpush1.bf16.xpose.msra.mxu0 0
    %2115 = vmatprep.subr.bf16.mxu0 0
    %2116 = vmatpush1.bf16.xpose.msra.mxu0 0
    %2117 = vmatprep.subr.bf16.mxu0 0
    %2118 = vmatpush1.bf16.xpose.msra.mxu0 0
    %2119 = vmatprep.subr.bf16.mxu0 0
    %2120 = vmatpush1.bf16.xpose.msra.mxu0 0
    %2121 = vmatprep.subr.bf16.mxu0 0
    %2122 = vmatpush1.bf16.xpose.msra.mxu0 0
    %2123 = vmatprep.subr.bf16.mxu0 0
    %2124 = vmatpush1.bf16.xpose.msra.mxu0 0
    %2125 = vmatprep.subr.bf16.mxu0 0
    %2126 = vmatpush1.bf16.xpose.msra.mxu0 0
    %2127 = vmatprep.subr.bf16.mxu0 0
    %2128 = vmatpush1.bf16.xpose.msra.mxu0 0
    %2129 = vmatprep.subr.bf16.mxu0 0
    %2130 = vmatpush1.bf16.xpose.msra.mxu0 0
    %2131 = vmatprep.subr.bf16.mxu0 0
    %2132 = vmatpush1.bf16.xpose.msra.mxu0 0
    %2133 = vmatprep.subr.bf16.mxu0 0
    %2134 = vmatpush1.bf16.xpose.msra.mxu0 0
    %2135 = vmatprep.subr.bf16.mxu0 0
    %2136 = vmatpush1.bf16.xpose.msra.mxu0 0
    %2137 = vmatprep.mubr.bf16.mxu0 0
    %2138 = vmatmul.mubr.bf16.gmra.mrb[0].mxu0 %v2094
    %v2139 = vpop.f32.mrb[0].mxu0
    %v2140 = vadd.f32 %v293, %v2139
    %v2141 = vpop.f32.mrb[0].mxu0
    %v2142 = vpop.f32.mrb[0].mxu0
    %v2143 = vadd.f32 %v294, %v2142
    %v2144 = vpop.f32.mrb[0].mxu0
    %2145 = vmatprep.mubr.bf16.mxu0 0
    %2146 = vmatmul.mubr.bf16.gmra.mrb[0].mxu0 %v2097
    %v2147 = vpop.f32.mrb[0].mxu0
    %v2148 = vadd.f32 %v295, %v2147
    %v2149 = vpop.f32.mrb[0].mxu0
    %v2150 = vpop.f32.mrb[0].mxu0
    %v2151 = vpop.f32.mrb[0].mxu0
    %2152 = vdwg.mxu0
    %vm2153 = vcmask 195584
    %v2154 = vsel %vm2153, %v1960, -inf
    %2155 = vmax.xlane.f32.xlu0 %v2154
    %v2156 = vpop.xlane.xlu0 %2155
    %v2157 = vsel %vm2153, %v1963, -inf
    %2158 = vmax.xlane.f32.xlu0 %v2157
    %v2159 = vpop.xlane.xlu0 %2158
    %v2160 = vsel %vm2153, %v1968, -inf
    %2161 = vmax.xlane.f32.xlu0 %v2160
    %v2162 = vpop.xlane.xlu0 %2161
    %v2163 = vsel %vm2153, %v2020, -inf
    %2164 = vmax.xlane.f32.xlu0 %v2163
    %v2165 = vpop.xlane.xlu0 %2164
    %v2166 = vsel %vm2153, %v2023, -inf
    %2167 = vmax.xlane.f32.xlu0 %v2166
    %v2168 = vpop.xlane.xlu0 %2167
    %v2169 = vsel %vm2153, %v2028, -inf
    %2170 = vmax.xlane.f32.xlu0 %v2169
    %v2171 = vpop.xlane.xlu0 %2170
    %v2172 = vsel %vm2153, %v2080, -inf
    %2173 = vmax.xlane.f32.xlu0 %v2172
    %v2174 = vpop.xlane.xlu0 %2173
    %v2175 = vsel %vm2153, %v2083, -inf
    %2176 = vmax.xlane.f32.xlu0 %v2175
    %v2177 = vpop.xlane.xlu0 %2176
    %v2178 = vsel %vm2153, %v2088, -inf
    %2179 = vmax.xlane.f32.xlu0 %v2178
    %v2180 = vpop.xlane.xlu0 %2179
    %v2181 = vsel %vm2153, %v2140, -inf
    %2182 = vmax.xlane.f32.xlu0 %v2181
    %v2183 = vpop.xlane.xlu0 %2182
    %v2184 = vsel %vm2153, %v2143, -inf
    %2185 = vmax.xlane.f32.xlu0 %v2184
    %v2186 = vpop.xlane.xlu0 %2185
    %v2187 = vsel %vm2153, %v2148, -inf
    %2188 = vmax.xlane.f32.xlu0 %v2187
    %v2189 = vpop.xlane.xlu0 %2188
    %v2190 = vsub.f32 %v1960, %v2156
    %v2191 = vsub.f32 %v1963, %v2159
    %v2192 = vsub.f32 %v1968, %v2162
    %v2193 = vsub.f32 %v2020, %v2165
    %v2194 = vsub.f32 %v2023, %v2168
    %v2195 = vsub.f32 %v2028, %v2171
    %v2196 = vsub.f32 %v2080, %v2174
    %v2197 = vsub.f32 %v2083, %v2177
    %v2198 = vsub.f32 %v2088, %v2180
    %v2199 = vsub.f32 %v2140, %v2183
    %v2200 = vsub.f32 %v2143, %v2186
    %v2201 = vsub.f32 %v2148, %v2189
    %v2202 = vmul.f32 %v2190, 1.442695
    %v2203 = vpow.pop %v2202
    %v2204 = vmul.f32 %v2191, 1.442695
    %v2205 = vpow.pop %v2204
    %v2206 = vmul.f32 %v2192, 1.442695
    %v2207 = vpow.pop %v2206
    %v2208 = vmul.f32 %v2193, 1.442695
    %v2209 = vpow.pop %v2208
    %v2210 = vmul.f32 %v2194, 1.442695
    %v2211 = vpow.pop %v2210
    %v2212 = vmul.f32 %v2195, 1.442695
    %v2213 = vpow.pop %v2212
    %v2214 = vmul.f32 %v2196, 1.442695
    %v2215 = vpow.pop %v2214
    %v2216 = vmul.f32 %v2197, 1.442695
    %v2217 = vpow.pop %v2216
    %v2218 = vmul.f32 %v2198, 1.442695
    %v2219 = vpow.pop %v2218
    %v2220 = vmul.f32 %v2199, 1.442695
    %v2221 = vpow.pop %v2220
    %v2222 = vmul.f32 %v2200, 1.442695
    %v2223 = vpow.pop %v2222
    %v2224 = vmul.f32 %v2201, 1.442695
    %v2225 = vpow.pop %v2224
    %v2226 = vsel %vm2153, %v2203, 0.0
    %2227 = vadd.xlane.f32.xlu0 %v2226
    %v2228 = vpop.xlane.xlu0 %2227
    %v2229 = vsel %vm2153, %v2205, 0.0
    %2230 = vadd.xlane.f32.xlu0 %v2229
    %v2231 = vpop.xlane.xlu0 %2230
    %v2232 = vsel %vm2153, %v2207, 0.0
    %2233 = vadd.xlane.f32.xlu0 %v2232
    %v2234 = vpop.xlane.xlu0 %2233
    %v2235 = vsel %vm2153, %v2209, 0.0
    %2236 = vadd.xlane.f32.xlu0 %v2235
    %v2237 = vpop.xlane.xlu0 %2236
    %v2238 = vsel %vm2153, %v2211, 0.0
    %2239 = vadd.xlane.f32.xlu0 %v2238
    %v2240 = vpop.xlane.xlu0 %2239
    %v2241 = vsel %vm2153, %v2213, 0.0
    %2242 = vadd.xlane.f32.xlu0 %v2241
    %v2243 = vpop.xlane.xlu0 %2242
    %v2244 = vsel %vm2153, %v2215, 0.0
    %2245 = vadd.xlane.f32.xlu0 %v2244
    %v2246 = vpop.xlane.xlu0 %2245
    %v2247 = vsel %vm2153, %v2217, 0.0
    %2248 = vadd.xlane.f32.xlu0 %v2247
    %v2249 = vpop.xlane.xlu0 %2248
    %v2250 = vsel %vm2153, %v2219, 0.0
    %2251 = vadd.xlane.f32.xlu0 %v2250
    %v2252 = vpop.xlane.xlu0 %2251
    %v2253 = vsel %vm2153, %v2221, 0.0
    %2254 = vadd.xlane.f32.xlu0 %v2253
    %v2255 = vpop.xlane.xlu0 %2254
    %v2256 = vsel %vm2153, %v2223, 0.0
    %2257 = vadd.xlane.f32.xlu0 %v2256
    %v2258 = vpop.xlane.xlu0 %2257
    %v2259 = vsel %vm2153, %v2225, 0.0
    %2260 = vadd.xlane.f32.xlu0 %v2259
    %v2261 = vpop.xlane.xlu0 %2260
    %v2262 = vrcp.pop %v2228
    %v2263 = vmul.f32 %v2203, %v2262
    %v2264 = vrcp.pop %v2231
    %v2265 = vmul.f32 %v2205, %v2264
    %v2266 = vrcp.pop %v2234
    %v2267 = vmul.f32 %v2207, %v2266
    %v2268 = vrcp.pop %v2237
    %v2269 = vmul.f32 %v2209, %v2268
    %v2270 = vrcp.pop %v2240
    %v2271 = vmul.f32 %v2211, %v2270
    %v2272 = vrcp.pop %v2243
    %v2273 = vmul.f32 %v2213, %v2272
    %v2274 = vrcp.pop %v2246
    %v2275 = vmul.f32 %v2215, %v2274
    %v2276 = vrcp.pop %v2249
    %v2277 = vmul.f32 %v2217, %v2276
    %v2278 = vrcp.pop %v2252
    %v2279 = vmul.f32 %v2219, %v2278
    %v2280 = vrcp.pop %v2255
    %v2281 = vmul.f32 %v2221, %v2280
    %v2282 = vrcp.pop %v2258
    %v2283 = vmul.f32 %v2223, %v2282
    %v2284 = vrcp.pop %v2261
    %v2285 = vmul.f32 %v2225, %v2284
    %v2286 = vpack.c.bf16 %v2265, %v2263
    %v2287 = vpack.c.bf16 %v2267, %v2267
    %v2288 = vpack.c.bf16 %v2271, %v2269
    %v2289 = vpack.c.bf16 %v2273, %v2273
    %v2290 = vpack.c.bf16 %v2277, %v2275
    %v2291 = vpack.c.bf16 %v2279, %v2279
    %v2292 = vpack.c.bf16 %v2283, %v2281
    %v2293 = vpack.c.bf16 %v2285, %v2285
    %v2294 = vpack.c.bf16 %v1824, %v1756
    %v2295 = vpack.c.bf16 %v1892, %v1892
    %v2296 = vpack.c.bf16 %v1825, %v1757
    %v2297 = vpack.c.bf16 %v1893, %v1893
    %v2298 = vpack.c.bf16 %v1826, %v1758
    %v2299 = vpack.c.bf16 %v1894, %v1894
    %v2300 = vpack.c.bf16 %v1827, %v1759
    %v2301 = vpack.c.bf16 %v1895, %v1895
    %v2303 = vsel %vm2153, %v2286, 0
    %v2306 = vsel %vm2153, %v2287, 0
    %vm2308 = vcmask 1043456
    %v2310 = vsel %vm2308, %v2295, 0
    %2312 = vmatprep.subr.bf16.mxu0 0
    %2313 = vmatpush1.bf16.msra.mxu0 %v2294
    %2314 = vmatprep.subr.bf16.mxu0 0
    %2315 = vmatpush1.bf16.msra.mxu0 %v2310
    %2316 = vmatprep.subr.bf16.mxu0 0
    %2317 = vmatpush1.bf16.msra.mxu0 0
    %2318 = vmatprep.subr.bf16.mxu0 0
    %2319 = vmatpush1.bf16.msra.mxu0 0
    %2320 = vmatprep.subr.bf16.mxu0 0
    %2321 = vmatpush1.bf16.msra.mxu0 0
    %2322 = vmatprep.subr.bf16.mxu0 0
    %2323 = vmatpush1.bf16.msra.mxu0 0
    %2324 = vmatprep.subr.bf16.mxu0 0
    %2325 = vmatpush1.bf16.msra.mxu0 0
    %2326 = vmatprep.subr.bf16.mxu0 0
    %2327 = vmatpush1.bf16.msra.mxu0 0
    %2328 = vmatprep.subr.bf16.mxu0 0
    %2329 = vmatpush1.bf16.msra.mxu0 0
    %2330 = vmatprep.subr.bf16.mxu0 0
    %2331 = vmatpush1.bf16.msra.mxu0 0
    %2332 = vmatprep.subr.bf16.mxu0 0
    %2333 = vmatpush1.bf16.msra.mxu0 0
    %2334 = vmatprep.subr.bf16.mxu0 0
    %2335 = vmatpush1.bf16.msra.mxu0 0
    %2336 = vmatprep.subr.bf16.mxu0 0
    %2337 = vmatpush1.bf16.msra.mxu0 0
    %2338 = vmatprep.subr.bf16.mxu0 0
    %2339 = vmatpush1.bf16.msra.mxu0 0
    %2340 = vmatprep.subr.bf16.mxu0 0
    %2341 = vmatpush1.bf16.msra.mxu0 0
    %2342 = vmatprep.subr.bf16.mxu0 0
    %2343 = vmatpush1.bf16.msra.mxu0 0
    %2344 = vmatprep.mubr.bf16.mxu0 0
    %2345 = vmatmul.mubr.bf16.gmra.mrb[0].mxu0 %v2303
    %v2346 = vpop.f32.mrb[0].mxu0
    %v2347 = vadd.f32 0.0, %v2346
    %v2348 = vpop.f32.mrb[0].mxu0
    %v2349 = vpop.f32.mrb[0].mxu0
    %v2350 = vadd.f32 0.0, %v2349
    %v2351 = vpop.f32.mrb[0].mxu0
    %2352 = vmatprep.mubr.bf16.mxu0 0
    %2353 = vmatmul.mubr.bf16.gmra.mrb[0].mxu0 %v2306
    %v2354 = vpop.f32.mrb[0].mxu0
    %v2355 = vadd.f32 0.0, %v2354
    %v2356 = vpop.f32.mrb[0].mxu0
    %v2357 = vpop.f32.mrb[0].mxu0
    %v2358 = vpop.f32.mrb[0].mxu0
    %2359 = vdwg.mxu0
    %v2361 = vsel %vm2153, %v2288, 0
    %v2364 = vsel %vm2153, %v2289, 0
    %v2367 = vsel %vm2308, %v2297, 0
    %2369 = vmatprep.subr.bf16.mxu0 0
    %2370 = vmatpush1.bf16.msra.mxu0 %v2296
    %2371 = vmatprep.subr.bf16.mxu0 0
    %2372 = vmatpush1.bf16.msra.mxu0 %v2367
    %2373 = vmatprep.subr.bf16.mxu0 0
    %2374 = vmatpush1.bf16.msra.mxu0 0
    %2375 = vmatprep.subr.bf16.mxu0 0
    %2376 = vmatpush1.bf16.msra.mxu0 0
    %2377 = vmatprep.subr.bf16.mxu0 0
    %2378 = vmatpush1.bf16.msra.mxu0 0
    %2379 = vmatprep.subr.bf16.mxu0 0
    %2380 = vmatpush1.bf16.msra.mxu0 0
    %2381 = vmatprep.subr.bf16.mxu0 0
    %2382 = vmatpush1.bf16.msra.mxu0 0
    %2383 = vmatprep.subr.bf16.mxu0 0
    %2384 = vmatpush1.bf16.msra.mxu0 0
    %2385 = vmatprep.subr.bf16.mxu0 0
    %2386 = vmatpush1.bf16.msra.mxu0 0
    %2387 = vmatprep.subr.bf16.mxu0 0
    %2388 = vmatpush1.bf16.msra.mxu0 0
    %2389 = vmatprep.subr.bf16.mxu0 0
    %2390 = vmatpush1.bf16.msra.mxu0 0
    %2391 = vmatprep.subr.bf16.mxu0 0
    %2392 = vmatpush1.bf16.msra.mxu0 0
    %2393 = vmatprep.subr.bf16.mxu0 0
    %2394 = vmatpush1.bf16.msra.mxu0 0
    %2395 = vmatprep.subr.bf16.mxu0 0
    %2396 = vmatpush1.bf16.msra.mxu0 0
    %2397 = vmatprep.subr.bf16.mxu0 0
    %2398 = vmatpush1.bf16.msra.mxu0 0
    %2399 = vmatprep.subr.bf16.mxu0 0
    %2400 = vmatpush1.bf16.msra.mxu0 0
    %2401 = vmatprep.mubr.bf16.mxu0 0
    %2402 = vmatmul.mubr.bf16.gmra.mrb[0].mxu0 %v2361
    %v2403 = vpop.f32.mrb[0].mxu0
    %v2404 = vadd.f32 0.0, %v2403
    %v2405 = vpop.f32.mrb[0].mxu0
    %v2406 = vpop.f32.mrb[0].mxu0
    %v2407 = vadd.f32 0.0, %v2406
    %v2408 = vpop.f32.mrb[0].mxu0
    %2409 = vmatprep.mubr.bf16.mxu0 0
    %2410 = vmatmul.mubr.bf16.gmra.mrb[0].mxu0 %v2364
    %v2411 = vpop.f32.mrb[0].mxu0
    %v2412 = vadd.f32 0.0, %v2411
    %v2413 = vpop.f32.mrb[0].mxu0
    %v2414 = vpop.f32.mrb[0].mxu0
    %v2415 = vpop.f32.mrb[0].mxu0
    %2416 = vdwg.mxu0
    %v2418 = vsel %vm2153, %v2290, 0
    %v2421 = vsel %vm2153, %v2291, 0
    %v2424 = vsel %vm2308, %v2299, 0
    %2426 = vmatprep.subr.bf16.mxu0 0
    %2427 = vmatpush1.bf16.msra.mxu0 %v2298
    %2428 = vmatprep.subr.bf16.mxu0 0
    %2429 = vmatpush1.bf16.msra.mxu0 %v2424
    %2430 = vmatprep.subr.bf16.mxu0 0
    %2431 = vmatpush1.bf16.msra.mxu0 0
    %2432 = vmatprep.subr.bf16.mxu0 0
    %2433 = vmatpush1.bf16.msra.mxu0 0
    %2434 = vmatprep.subr.bf16.mxu0 0
    %2435 = vmatpush1.bf16.msra.mxu0 0
    %2436 = vmatprep.subr.bf16.mxu0 0
    %2437 = vmatpush1.bf16.msra.mxu0 0
    %2438 = vmatprep.subr.bf16.mxu0 0
    %2439 = vmatpush1.bf16.msra.mxu0 0
    %2440 = vmatprep.subr.bf16.mxu0 0
    %2441 = vmatpush1.bf16.msra.mxu0 0
    %2442 = vmatprep.subr.bf16.mxu0 0
    %2443 = vmatpush1.bf16.msra.mxu0 0
    %2444 = vmatprep.subr.bf16.mxu0 0
    %2445 = vmatpush1.bf16.msra.mxu0 0
    %2446 = vmatprep.subr.bf16.mxu0 0
    %2447 = vmatpush1.bf16.msra.mxu0 0
    %2448 = vmatprep.subr.bf16.mxu0 0
    %2449 = vmatpush1.bf16.msra.mxu0 0
    %2450 = vmatprep.subr.bf16.mxu0 0
    %2451 = vmatpush1.bf16.msra.mxu0 0
    %2452 = vmatprep.subr.bf16.mxu0 0
    %2453 = vmatpush1.bf16.msra.mxu0 0
    %2454 = vmatprep.subr.bf16.mxu0 0
    %2455 = vmatpush1.bf16.msra.mxu0 0
    %2456 = vmatprep.subr.bf16.mxu0 0
    %2457 = vmatpush1.bf16.msra.mxu0 0
    %2458 = vmatprep.mubr.bf16.mxu0 0
    %2459 = vmatmul.mubr.bf16.gmra.mrb[0].mxu0 %v2418
    %v2460 = vpop.f32.mrb[0].mxu0
    %v2461 = vadd.f32 0.0, %v2460
    %v2462 = vpop.f32.mrb[0].mxu0
    %v2463 = vpop.f32.mrb[0].mxu0
    %v2464 = vadd.f32 0.0, %v2463
    %v2465 = vpop.f32.mrb[0].mxu0
    %2466 = vmatprep.mubr.bf16.mxu0 0
    %2467 = vmatmul.mubr.bf16.gmra.mrb[0].mxu0 %v2421
    %v2468 = vpop.f32.mrb[0].mxu0
    %v2469 = vadd.f32 0.0, %v2468
    %v2470 = vpop.f32.mrb[0].mxu0
    %v2471 = vpop.f32.mrb[0].mxu0
    %v2472 = vpop.f32.mrb[0].mxu0
    %2473 = vdwg.mxu0
    %v2475 = vsel %vm2153, %v2292, 0
    %v2478 = vsel %vm2153, %v2293, 0
    %v2481 = vsel %vm2308, %v2301, 0
    %2483 = vmatprep.subr.bf16.mxu0 0
    %2484 = vmatpush1.bf16.msra.mxu0 %v2300
    %2485 = vmatprep.subr.bf16.mxu0 0
    %2486 = vmatpush1.bf16.msra.mxu0 %v2481
    %2487 = vmatprep.subr.bf16.mxu0 0
    %2488 = vmatpush1.bf16.msra.mxu0 0
    %2489 = vmatprep.subr.bf16.mxu0 0
    %2490 = vmatpush1.bf16.msra.mxu0 0
    %2491 = vmatprep.subr.bf16.mxu0 0
    %2492 = vmatpush1.bf16.msra.mxu0 0
    %2493 = vmatprep.subr.bf16.mxu0 0
    %2494 = vmatpush1.bf16.msra.mxu0 0
    %2495 = vmatprep.subr.bf16.mxu0 0
    %2496 = vmatpush1.bf16.msra.mxu0 0
    %2497 = vmatprep.subr.bf16.mxu0 0
    %2498 = vmatpush1.bf16.msra.mxu0 0
    %2499 = vmatprep.subr.bf16.mxu0 0
    %2500 = vmatpush1.bf16.msra.mxu0 0
    %2501 = vmatprep.subr.bf16.mxu0 0
    %2502 = vmatpush1.bf16.msra.mxu0 0
    %2503 = vmatprep.subr.bf16.mxu0 0
    %2504 = vmatpush1.bf16.msra.mxu0 0
    %2505 = vmatprep.subr.bf16.mxu0 0
    %2506 = vmatpush1.bf16.msra.mxu0 0
    %2507 = vmatprep.subr.bf16.mxu0 0
    %2508 = vmatpush1.bf16.msra.mxu0 0
    %2509 = vmatprep.subr.bf16.mxu0 0
    %2510 = vmatpush1.bf16.msra.mxu0 0
    %2511 = vmatprep.subr.bf16.mxu0 0
    %2512 = vmatpush1.bf16.msra.mxu0 0
    %2513 = vmatprep.subr.bf16.mxu0 0
    %2514 = vmatpush1.bf16.msra.mxu0 0
    %2515 = vmatprep.mubr.bf16.mxu0 0
    %2516 = vmatmul.mubr.bf16.gmra.mrb[0].mxu0 %v2475
    %v2517 = vpop.f32.mrb[0].mxu0
    %v2518 = vadd.f32 0.0, %v2517
    %v2519 = vpop.f32.mrb[0].mxu0
    %v2520 = vpop.f32.mrb[0].mxu0
    %v2521 = vadd.f32 0.0, %v2520
    %v2522 = vpop.f32.mrb[0].mxu0
    %2523 = vmatprep.mubr.bf16.mxu0 0
    %2524 = vmatmul.mubr.bf16.gmra.mrb[0].mxu0 %v2478
    %v2525 = vpop.f32.mrb[0].mxu0
    %v2526 = vadd.f32 0.0, %v2525
    %v2527 = vpop.f32.mrb[0].mxu0
    %v2528 = vpop.f32.mrb[0].mxu0
    %v2529 = vpop.f32.mrb[0].mxu0
    %2530 = vdwg.mxu0
    %v2531 = vcombine.low %v2347, %v2461
    %v2532 = vcombine.high %v2347, %v2461
    %v2534 = vunpack.c.l.s4 1983009808
    %v2535 = vunpack.c.0.s8 %v2534
    %v2536 = vlaneseq
    %v2537 = vshrl.u32 %v2536, 7
    %v2538 = vsub.s32 %v2535, %v2537
    %v2539 = vrot.slane %v2531, %v2538
    %v2541 = vunpack.c.l.s4 1983009808
    %v2542 = vunpack.c.0.s8 %v2541
    %v2543 = vlaneseq
    %v2544 = vshrl.u32 %v2543, 7
    %v2545 = vsub.s32 %v2542, %v2544
    %v2546 = vrot.slane %v2532, %v2545
    %v2547 = vcombine.low %v2404, %v2518
    %v2548 = vcombine.high %v2404, %v2518
    %v2550 = vunpack.c.l.s4 1983009808
    %v2551 = vunpack.c.0.s8 %v2550
    %v2552 = vlaneseq
    %v2553 = vshrl.u32 %v2552, 7
    %v2554 = vsub.s32 %v2551, %v2553
    %v2555 = vrot.slane %v2547, %v2554
    %v2557 = vunpack.c.l.s4 1983009808
    %v2558 = vunpack.c.0.s8 %v2557
    %v2559 = vlaneseq
    %v2560 = vshrl.u32 %v2559, 7
    %v2561 = vsub.s32 %v2558, %v2560
    %v2562 = vrot.slane %v2548, %v2561
    %v2563 = vcombine.low %v2539, %v2555
    %v2564 = vcombine.high %v2539, %v2555
    %v2566 = vunpack.c.l.s4 1934713408
    %v2567 = vunpack.c.0.s8 %v2566
    %v2568 = vlaneseq
    %v2569 = vshrl.u32 %v2568, 7
    %v2570 = vsub.s32 %v2567, %v2569
    %v2571 = vrot.slane %v2563, %v2570
    %v2573 = vunpack.c.l.s4 1934713408
    %v2574 = vunpack.c.0.s8 %v2573
    %v2575 = vlaneseq
    %v2576 = vshrl.u32 %v2575, 7
    %v2577 = vsub.s32 %v2574, %v2576
    %v2578 = vrot.slane %v2564, %v2577
    %v2579 = vcombine.low %v2546, %v2562
    %v2580 = vcombine.high %v2546, %v2562
    %v2582 = vunpack.c.l.s4 1934713408
    %v2583 = vunpack.c.0.s8 %v2582
    %v2584 = vlaneseq
    %v2585 = vshrl.u32 %v2584, 7
    %v2586 = vsub.s32 %v2583, %v2585
    %v2587 = vrot.slane %v2579, %v2586
    %v2589 = vunpack.c.l.s4 1934713408
    %v2590 = vunpack.c.0.s8 %v2589
    %v2591 = vlaneseq
    %v2592 = vshrl.u32 %v2591, 7
    %v2593 = vsub.s32 %v2590, %v2592
    %v2594 = vrot.slane %v2580, %v2593
    %v2595 = vcombine.high %v2571, 0.0
    %v2596 = vcombine.high %v2578, 0.0
    %v2597 = vcombine.high %v2587, 0.0
    %v2598 = vcombine.high %v2594, 0.0
    %v2599 = vcombine.low %v2350, %v2464
    %v2600 = vcombine.high %v2350, %v2464
    %v2602 = vunpack.c.l.s4 1983009808
    %v2603 = vunpack.c.0.s8 %v2602
    %v2604 = vlaneseq
    %v2605 = vshrl.u32 %v2604, 7
    %v2606 = vsub.s32 %v2603, %v2605
    %v2607 = vrot.slane %v2599, %v2606
    %v2609 = vunpack.c.l.s4 1983009808
    %v2610 = vunpack.c.0.s8 %v2609
    %v2611 = vlaneseq
    %v2612 = vshrl.u32 %v2611, 7
    %v2613 = vsub.s32 %v2610, %v2612
    %v2614 = vrot.slane %v2600, %v2613
    %v2615 = vcombine.low %v2407, %v2521
    %v2616 = vcombine.high %v2407, %v2521
    %v2618 = vunpack.c.l.s4 1983009808
    %v2619 = vunpack.c.0.s8 %v2618
    %v2620 = vlaneseq
    %v2621 = vshrl.u32 %v2620, 7
    %v2622 = vsub.s32 %v2619, %v2621
    %v2623 = vrot.slane %v2615, %v2622
    %v2625 = vunpack.c.l.s4 1983009808
    %v2626 = vunpack.c.0.s8 %v2625
    %v2627 = vlaneseq
    %v2628 = vshrl.u32 %v2627, 7
    %v2629 = vsub.s32 %v2626, %v2628
    %v2630 = vrot.slane %v2616, %v2629
    %v2631 = vcombine.low %v2607, %v2623
    %v2632 = vcombine.high %v2607, %v2623
    %v2634 = vunpack.c.l.s4 1934713408
    %v2635 = vunpack.c.0.s8 %v2634
    %v2636 = vlaneseq
    %v2637 = vshrl.u32 %v2636, 7
    %v2638 = vsub.s32 %v2635, %v2637
    %v2639 = vrot.slane %v2631, %v2638
    %v2641 = vunpack.c.l.s4 1934713408
    %v2642 = vunpack.c.0.s8 %v2641
    %v2643 = vlaneseq
    %v2644 = vshrl.u32 %v2643, 7
    %v2645 = vsub.s32 %v2642, %v2644
    %v2646 = vrot.slane %v2632, %v2645
    %v2647 = vcombine.low %v2614, %v2630
    %v2648 = vcombine.high %v2614, %v2630
    %v2650 = vunpack.c.l.s4 1934713408
    %v2651 = vunpack.c.0.s8 %v2650
    %v2652 = vlaneseq
    %v2653 = vshrl.u32 %v2652, 7
    %v2654 = vsub.s32 %v2651, %v2653
    %v2655 = vrot.slane %v2647, %v2654
    %v2657 = vunpack.c.l.s4 1934713408
    %v2658 = vunpack.c.0.s8 %v2657
    %v2659 = vlaneseq
    %v2660 = vshrl.u32 %v2659, 7
    %v2661 = vsub.s32 %v2658, %v2660
    %v2662 = vrot.slane %v2648, %v2661
    %v2663 = vcombine.high %v2639, 0.0
    %v2664 = vcombine.high %v2646, 0.0
    %v2665 = vcombine.high %v2655, 0.0
    %v2666 = vcombine.high %v2662, 0.0
    %v2667 = vcombine.low %v2355, %v2469
    %v2668 = vcombine.high %v2355, %v2469
    %v2670 = vunpack.c.l.s4 1983009808
    %v2671 = vunpack.c.0.s8 %v2670
    %v2672 = vlaneseq
    %v2673 = vshrl.u32 %v2672, 7
    %v2674 = vsub.s32 %v2671, %v2673
    %v2675 = vrot.slane %v2667, %v2674
    %v2677 = vunpack.c.l.s4 1983009808
    %v2678 = vunpack.c.0.s8 %v2677
    %v2679 = vlaneseq
    %v2680 = vshrl.u32 %v2679, 7
    %v2681 = vsub.s32 %v2678, %v2680
    %v2682 = vrot.slane %v2668, %v2681
    %v2683 = vcombine.low %v2412, %v2526
    %v2684 = vcombine.high %v2412, %v2526
    %v2686 = vunpack.c.l.s4 1983009808
    %v2687 = vunpack.c.0.s8 %v2686
    %v2688 = vlaneseq
    %v2689 = vshrl.u32 %v2688, 7
    %v2690 = vsub.s32 %v2687, %v2689
    %v2691 = vrot.slane %v2683, %v2690
    %v2693 = vunpack.c.l.s4 1983009808
    %v2694 = vunpack.c.0.s8 %v2693
    %v2695 = vlaneseq
    %v2696 = vshrl.u32 %v2695, 7
    %v2697 = vsub.s32 %v2694, %v2696
    %v2698 = vrot.slane %v2684, %v2697
    %v2699 = vcombine.low %v2675, %v2691
    %v2700 = vcombine.high %v2675, %v2691
    %v2702 = vunpack.c.l.s4 1934713408
    %v2703 = vunpack.c.0.s8 %v2702
    %v2704 = vlaneseq
    %v2705 = vshrl.u32 %v2704, 7
    %v2706 = vsub.s32 %v2703, %v2705
    %v2707 = vrot.slane %v2699, %v2706
    %v2709 = vunpack.c.l.s4 1934713408
    %v2710 = vunpack.c.0.s8 %v2709
    %v2711 = vlaneseq
    %v2712 = vshrl.u32 %v2711, 7
    %v2713 = vsub.s32 %v2710, %v2712
    %v2714 = vrot.slane %v2700, %v2713
    %v2715 = vcombine.low %v2682, %v2698
    %v2716 = vcombine.high %v2682, %v2698
    %v2718 = vunpack.c.l.s4 1934713408
    %v2719 = vunpack.c.0.s8 %v2718
    %v2720 = vlaneseq
    %v2721 = vshrl.u32 %v2720, 7
    %v2722 = vsub.s32 %v2719, %v2721
    %v2723 = vrot.slane %v2715, %v2722
    %v2725 = vunpack.c.l.s4 1934713408
    %v2726 = vunpack.c.0.s8 %v2725
    %v2727 = vlaneseq
    %v2728 = vshrl.u32 %v2727, 7
    %v2729 = vsub.s32 %v2726, %v2728
    %v2730 = vrot.slane %v2716, %v2729
    %v2731 = vcombine.high %v2707, 0.0
    %v2732 = vcombine.high %v2714, 0.0
    %v2733 = vcombine.high %v2723, 0.0
    %v2734 = vcombine.high %v2730, 0.0
    %v2735 = vcombine.low %v2571, %v2578
    %v2737 = vunpack.c.l.s4 1983009808
    %v2738 = vunpack.c.0.s8 %v2737
    %v2739 = vlaneseq
    %v2740 = vshrl.u32 %v2739, 7
    %v2741 = vsub.s32 %v2738, %v2740
    %v2742 = vrot.slane %v2735, %v2741
    %v2743 = vcombine.low %v2595, %v2596
    %v2745 = vunpack.c.l.s4 1983009808
    %v2746 = vunpack.c.0.s8 %v2745
    %v2747 = vlaneseq
    %v2748 = vshrl.u32 %v2747, 7
    %v2749 = vsub.s32 %v2746, %v2748
    %v2750 = vrot.slane %v2743, %v2749
    %v2751 = vcombine.low %v2587, %v2594
    %v2753 = vunpack.c.l.s4 1983009808
    %v2754 = vunpack.c.0.s8 %v2753
    %v2755 = vlaneseq
    %v2756 = vshrl.u32 %v2755, 7
    %v2757 = vsub.s32 %v2754, %v2756
    %v2758 = vrot.slane %v2751, %v2757
    %v2759 = vcombine.low %v2597, %v2598
    %v2761 = vunpack.c.l.s4 1983009808
    %v2762 = vunpack.c.0.s8 %v2761
    %v2763 = vlaneseq
    %v2764 = vshrl.u32 %v2763, 7
    %v2765 = vsub.s32 %v2762, %v2764
    %v2766 = vrot.slane %v2759, %v2765
    %v2767 = vcombine.low %v2742, %v2750
    %v2768 = vcombine.high %v2742, %v2750
    %v2770 = vunpack.c.l.s4 1934713408
    %v2771 = vunpack.c.0.s8 %v2770
    %v2772 = vlaneseq
    %v2773 = vshrl.u32 %v2772, 7
    %v2774 = vsub.s32 %v2771, %v2773
    %v2775 = vrot.slane %v2767, %v2774
    %v2777 = vunpack.c.l.s4 1934713408
    %v2778 = vunpack.c.0.s8 %v2777
    %v2779 = vlaneseq
    %v2780 = vshrl.u32 %v2779, 7
    %v2781 = vsub.s32 %v2778, %v2780
    %v2782 = vrot.slane %v2768, %v2781
    %v2783 = vcombine.low %v2758, %v2766
    %v2784 = vcombine.high %v2758, %v2766
    %v2786 = vunpack.c.l.s4 1934713408
    %v2787 = vunpack.c.0.s8 %v2786
    %v2788 = vlaneseq
    %v2789 = vshrl.u32 %v2788, 7
    %v2790 = vsub.s32 %v2787, %v2789
    %v2791 = vrot.slane %v2783, %v2790
    %v2793 = vunpack.c.l.s4 1934713408
    %v2794 = vunpack.c.0.s8 %v2793
    %v2795 = vlaneseq
    %v2796 = vshrl.u32 %v2795, 7
    %v2797 = vsub.s32 %v2794, %v2796
    %v2798 = vrot.slane %v2784, %v2797
    %v2799 = vcombine.low %v2775, %v2791
    %v2800 = vcombine.high %v2775, %v2791
    %v2801 = vcombine.low %v2782, %v2798
    %v2802 = vcombine.high %v2782, %v2798
    %v2803 = vcombine.low %v2639, %v2646
    %v2805 = vunpack.c.l.s4 1983009808
    %v2806 = vunpack.c.0.s8 %v2805
    %v2807 = vlaneseq
    %v2808 = vshrl.u32 %v2807, 7
    %v2809 = vsub.s32 %v2806, %v2808
    %v2810 = vrot.slane %v2803, %v2809
    %v2811 = vcombine.low %v2663, %v2664
    %v2813 = vunpack.c.l.s4 1983009808
    %v2814 = vunpack.c.0.s8 %v2813
    %v2815 = vlaneseq
    %v2816 = vshrl.u32 %v2815, 7
    %v2817 = vsub.s32 %v2814, %v2816
    %v2818 = vrot.slane %v2811, %v2817
    %v2819 = vcombine.low %v2655, %v2662
    %v2821 = vunpack.c.l.s4 1983009808
    %v2822 = vunpack.c.0.s8 %v2821
    %v2823 = vlaneseq
    %v2824 = vshrl.u32 %v2823, 7
    %v2825 = vsub.s32 %v2822, %v2824
    %v2826 = vrot.slane %v2819, %v2825
    %v2827 = vcombine.low %v2665, %v2666
    %v2829 = vunpack.c.l.s4 1983009808
    %v2830 = vunpack.c.0.s8 %v2829
    %v2831 = vlaneseq
    %v2832 = vshrl.u32 %v2831, 7
    %v2833 = vsub.s32 %v2830, %v2832
    %v2834 = vrot.slane %v2827, %v2833
    %v2835 = vcombine.low %v2810, %v2818
    %v2836 = vcombine.high %v2810, %v2818
    %v2838 = vunpack.c.l.s4 1934713408
    %v2839 = vunpack.c.0.s8 %v2838
    %v2840 = vlaneseq
    %v2841 = vshrl.u32 %v2840, 7
    %v2842 = vsub.s32 %v2839, %v2841
    %v2843 = vrot.slane %v2835, %v2842
    %v2845 = vunpack.c.l.s4 1934713408
    %v2846 = vunpack.c.0.s8 %v2845
    %v2847 = vlaneseq
    %v2848 = vshrl.u32 %v2847, 7
    %v2849 = vsub.s32 %v2846, %v2848
    %v2850 = vrot.slane %v2836, %v2849
    %v2851 = vcombine.low %v2826, %v2834
    %v2852 = vcombine.high %v2826, %v2834
    %v2854 = vunpack.c.l.s4 1934713408
    %v2855 = vunpack.c.0.s8 %v2854
    %v2856 = vlaneseq
    %v2857 = vshrl.u32 %v2856, 7
    %v2858 = vsub.s32 %v2855, %v2857
    %v2859 = vrot.slane %v2851, %v2858
    %v2861 = vunpack.c.l.s4 1934713408
    %v2862 = vunpack.c.0.s8 %v2861
    %v2863 = vlaneseq
    %v2864 = vshrl.u32 %v2863, 7
    %v2865 = vsub.s32 %v2862, %v2864
    %v2866 = vrot.slane %v2852, %v2865
    %v2867 = vcombine.low %v2843, %v2859
    %v2868 = vcombine.high %v2843, %v2859
    %v2869 = vcombine.low %v2850, %v2866
    %v2870 = vcombine.high %v2850, %v2866
    %v2871 = vcombine.low %v2707, %v2714
    %v2873 = vunpack.c.l.s4 1983009808
    %v2874 = vunpack.c.0.s8 %v2873
    %v2875 = vlaneseq
    %v2876 = vshrl.u32 %v2875, 7
    %v2877 = vsub.s32 %v2874, %v2876
    %v2878 = vrot.slane %v2871, %v2877
    %v2879 = vcombine.low %v2731, %v2732
    %v2881 = vunpack.c.l.s4 1983009808
    %v2882 = vunpack.c.0.s8 %v2881
    %v2883 = vlaneseq
    %v2884 = vshrl.u32 %v2883, 7
    %v2885 = vsub.s32 %v2882, %v2884
    %v2886 = vrot.slane %v2879, %v2885
    %v2887 = vcombine.low %v2723, %v2730
    %v2889 = vunpack.c.l.s4 1983009808
    %v2890 = vunpack.c.0.s8 %v2889
    %v2891 = vlaneseq
    %v2892 = vshrl.u32 %v2891, 7
    %v2893 = vsub.s32 %v2890, %v2892
    %v2894 = vrot.slane %v2887, %v2893
    %v2895 = vcombine.low %v2733, %v2734
    %v2897 = vunpack.c.l.s4 1983009808
    %v2898 = vunpack.c.0.s8 %v2897
    %v2899 = vlaneseq
    %v2900 = vshrl.u32 %v2899, 7
    %v2901 = vsub.s32 %v2898, %v2900
    %v2902 = vrot.slane %v2895, %v2901
    %v2903 = vcombine.low %v2878, %v2886
    %v2904 = vcombine.high %v2878, %v2886
    %v2906 = vunpack.c.l.s4 1934713408
    %v2907 = vunpack.c.0.s8 %v2906
    %v2908 = vlaneseq
    %v2909 = vshrl.u32 %v2908, 7
    %v2910 = vsub.s32 %v2907, %v2909
    %v2911 = vrot.slane %v2903, %v2910
    %v2913 = vunpack.c.l.s4 1934713408
    %v2914 = vunpack.c.0.s8 %v2913
    %v2915 = vlaneseq
    %v2916 = vshrl.u32 %v2915, 7
    %v2917 = vsub.s32 %v2914, %v2916
    %v2918 = vrot.slane %v2904, %v2917
    %v2919 = vcombine.low %v2894, %v2902
    %v2920 = vcombine.high %v2894, %v2902
    %v2922 = vunpack.c.l.s4 1934713408
    %v2923 = vunpack.c.0.s8 %v2922
    %v2924 = vlaneseq
    %v2925 = vshrl.u32 %v2924, 7
    %v2926 = vsub.s32 %v2923, %v2925
    %v2927 = vrot.slane %v2919, %v2926
    %v2929 = vunpack.c.l.s4 1934713408
    %v2930 = vunpack.c.0.s8 %v2929
    %v2931 = vlaneseq
    %v2932 = vshrl.u32 %v2931, 7
    %v2933 = vsub.s32 %v2930, %v2932
    %v2934 = vrot.slane %v2920, %v2933
    %v2935 = vcombine.low %v2911, %v2927
    %v2936 = vcombine.high %v2911, %v2927
    %v2937 = vcombine.low %v2918, %v2934
    %v2938 = vcombine.high %v2918, %v2934
    %2942 = vrot.lane.b32.xlu0 %v2800, 32
    %v2943 = vpop.permute.xlu0 %2942
    %2944 = vrot.lane.b32.xlu0 %v2868, 32
    %v2945 = vpop.permute.xlu0 %2944
    %2946 = vrot.lane.b32.xlu0 %v2936, 32
    %v2947 = vpop.permute.xlu0 %2946
    %2954 = vrot.lane.b32.xlu0 %v2801, 64
    %v2955 = vpop.permute.xlu0 %2954
    %2956 = vrot.lane.b32.xlu0 %v2869, 64
    %v2957 = vpop.permute.xlu0 %2956
    %2958 = vrot.lane.b32.xlu0 %v2937, 64
    %v2959 = vpop.permute.xlu0 %2958
    %2966 = vrot.lane.b32.xlu0 %v2802, 96
    %v2967 = vpop.permute.xlu0 %2966
    %2968 = vrot.lane.b32.xlu0 %v2870, 96
    %v2969 = vpop.permute.xlu0 %2968
    %2970 = vrot.lane.b32.xlu0 %v2938, 96
    %v2971 = vpop.permute.xlu0 %2970
    %v2975 = vsel %vm1912, %v2799, %v2943
    %v2976 = vsel %vm1912, %v2867, %v2945
    %v2977 = vsel %vm1912, %v2935, %v2947
    %vm2978 = vcmask 523264
    %v2979 = vsel %vm2978, %v2975, %v2955
    %v2980 = vsel %vm2978, %v2976, %v2957
    %v2981 = vsel %vm2978, %v2977, %v2959
    %vm2982 = vcmask 785408
    %v2983 = vsel %vm2982, %v2979, %v2967
    %v2984 = vsel %vm2982, %v2980, %v2969
    %v2985 = vsel %vm2982, %v2981, %v2971
    %v2986 = vld [vmem:[%s7] sm:$0xf]
    %v2987 = vld [vmem:[%s7 + $0x4] sm:$0xf]
    %v2988 = vld [vmem:[%s7 + $0x8] sm:$0xf]
    %v2989 = vld [vmem:[%s7 + $0xc] sm:$0xf]
    %v2990 = vld [vmem:[%s7 + $0x10] sm:$0xf]
    %v2991 = vld [vmem:[%s7 + $0x14] sm:$0xf]
    %v2992 = vld [vmem:[%s7 + $0x18] sm:$0xf]
    %v2993 = vld [vmem:[%s7 + $0x1c] sm:$0xf]
    %v2994 = vld [vmem:[%s7 + $0x20] sm:$0xf]
    %v2995 = vld [vmem:[%s7 + $0x24] sm:$0xf]
    %v2996 = vld [vmem:[%s7 + $0x28] sm:$0xf]
    %v2997 = vld [vmem:[%s7 + $0x2c] sm:$0xf]
    %v2998 = vld [vmem:[%s7 + $0x30] sm:$0xf]
    %v2999 = vld [vmem:[%s7 + $0x34] sm:$0xf]
    %v3000 = vld [vmem:[%s7 + $0x38] sm:$0xf]
    %v3001 = vld [vmem:[%s7 + $0x3c] sm:$0xf]
    %v3002 = vpack.c.bf16 %v2984, %v2983
    %v3003 = vpack.c.bf16 %v2985, %v2985
    %v3020 = vunpack.c.l.b16 %v2986
    %v3021 = vunpack.c.l.b16 %v2987
    %v3022 = vunpack.c.l.b16 %v2988
    %v3023 = vunpack.c.l.b16 %v2989
    %v3024 = vunpack.c.l.b16 %v2990
    %v3025 = vunpack.c.l.b16 %v2991
    %v3026 = vunpack.c.l.b16 %v2992
    %v3027 = vunpack.c.l.b16 %v2993
    %v3028 = vunpack.c.l.b16 %v2994
    %v3029 = vunpack.c.l.b16 %v2995
    %v3030 = vunpack.c.l.b16 %v2996
    %v3031 = vunpack.c.l.b16 %v2997
    %v3032 = vunpack.c.l.b16 %v2998
    %v3033 = vunpack.c.l.b16 %v2999
    %v3034 = vunpack.c.l.b16 %v3000
    %v3035 = vunpack.c.l.b16 %v3001
    %v3036 = vpack.c.b16 %v3021, %v3020
    %v3037 = vpack.c.b16 %v3023, %v3022
    %v3038 = vpack.c.b16 %v3025, %v3024
    %v3039 = vpack.c.b16 %v3027, %v3026
    %v3040 = vpack.c.b16 %v3029, %v3028
    %v3041 = vpack.c.b16 %v3031, %v3030
    %v3042 = vpack.c.b16 %v3033, %v3032
    %v3043 = vpack.c.b16 %v3035, %v3034
    %3052 = vmatprep.subr.bf16.mxu0 0
    %3053 = vmatpush1.bf16.msra.mxu0 %v3036
    %3054 = vmatprep.subr.bf16.mxu0 0
    %3055 = vmatpush1.bf16.msra.mxu0 %v3037
    %3056 = vmatprep.subr.bf16.mxu0 0
    %3057 = vmatpush1.bf16.msra.mxu0 %v3038
    %3058 = vmatprep.subr.bf16.mxu0 0
    %3059 = vmatpush1.bf16.msra.mxu0 %v3039
    %3060 = vmatprep.subr.bf16.mxu0 0
    %3061 = vmatpush1.bf16.msra.mxu0 %v3040
    %3062 = vmatprep.subr.bf16.mxu0 0
    %3063 = vmatpush1.bf16.msra.mxu0 %v3041
    %3064 = vmatprep.subr.bf16.mxu0 0
    %3065 = vmatpush1.bf16.msra.mxu0 %v3042
    %3066 = vmatprep.subr.bf16.mxu0 0
    %3067 = vmatpush1.bf16.msra.mxu0 %v3043
    %3068 = vmatprep.subr.bf16.mxu0 0
    %3069 = vmatpush1.bf16.msra.mxu0 0
    %3070 = vmatprep.subr.bf16.mxu0 0
    %3071 = vmatpush1.bf16.msra.mxu0 0
    %3072 = vmatprep.subr.bf16.mxu0 0
    %3073 = vmatpush1.bf16.msra.mxu0 0
    %3074 = vmatprep.subr.bf16.mxu0 0
    %3075 = vmatpush1.bf16.msra.mxu0 0
    %3076 = vmatprep.subr.bf16.mxu0 0
    %3077 = vmatpush1.bf16.msra.mxu0 0
    %3078 = vmatprep.subr.bf16.mxu0 0
    %3079 = vmatpush1.bf16.msra.mxu0 0
    %3080 = vmatprep.subr.bf16.mxu0 0
    %3081 = vmatpush1.bf16.msra.mxu0 0
    %3082 = vmatprep.subr.bf16.mxu0 0
    %3083 = vmatpush1.bf16.msra.mxu0 0
    %3084 = vmatprep.mubr.bf16.mxu0 0
    %3085 = vmatmul.mubr.bf16.gmra.mrb[0].mxu0 %v3002
    %v3086 = vpop.f32.mrb[0].mxu0
    %v3087 = vadd.f32 %v298, %v3086
    %v3088 = vpop.f32.mrb[0].mxu0
    %v3089 = vpop.f32.mrb[0].mxu0
    %v3090 = vadd.f32 %v298, %v3089
    %v3091 = vpop.f32.mrb[0].mxu0
    %3092 = vmatprep.mubr.bf16.mxu0 0
    %3093 = vmatmul.mubr.bf16.gmra.mrb[0].mxu0 %v3003
    %v3094 = vpop.f32.mrb[0].mxu0
    %v3095 = vadd.f32 %v298, %v3094
    %v3096 = vpop.f32.mrb[0].mxu0
    %v3097 = vpop.f32.mrb[0].mxu0
    %v3098 = vpop.f32.mrb[0].mxu0
    %3099 = vdwg.mxu0
    %v3100 = vadd.f32 %v290, %v3087
    %v3101 = vadd.f32 %v291, %v3090
    %v3102 = vadd.f32 %v292, %v3095
    %3103 = vadd.xlane.f32.xlu0 %v3100
    %v3104 = vpop.xlane.xlu0 %3103
    %3105 = vadd.xlane.f32.xlu0 %v3101
    %v3106 = vpop.xlane.xlu0 %3105
    %3107 = vadd.xlane.f32.xlu0 %v3102
    %v3108 = vpop.xlane.xlu0 %3107
    %v3109 = vmul.f32 %v3104, %v194
    %v3110 = vmul.f32 %v3106, %v194
    %v3111 = vmul.f32 %v3108, %v194
    %v3112 = vsub.f32 %v3100, %v3109
    %v3113 = vsub.f32 %v3101, %v3110
    %v3114 = vsub.f32 %v3102, %v3111
    %v3115 = vmul.f32 %v3112, %v3112
    %v3116 = vmul.f32 %v3113, %v3113
    %v3117 = vmul.f32 %v3114, %v3114
    %3118 = vadd.xlane.f32.xlu0 %v3115
    %v3119 = vpop.xlane.xlu0 %3118
    %3120 = vadd.xlane.f32.xlu0 %v3116
    %v3121 = vpop.xlane.xlu0 %3120
    %3122 = vadd.xlane.f32.xlu0 %v3117
    %v3123 = vpop.xlane.xlu0 %3122
    %v3124 = vmul.f32 %v3119, %v194
    %v3125 = vmul.f32 %v3121, %v194
    %v3126 = vmul.f32 %v3123, %v194
    %v3127 = vadd.f32 %v3124, 1e-05
    %v3128 = vadd.f32 %v3125, 1e-05
    %v3129 = vadd.f32 %v3126, 1e-05
    %v3130 = vrsqrt.pop %v3127
    %v3131 = vrsqrt.pop %v3128
    %v3132 = vrsqrt.pop %v3129
    %v3133 = vmul.f32 %v3112, %v3130
    %v3134 = vmul.f32 %v3113, %v3131
    %v3135 = vmul.f32 %v3114, %v3132
    %v3136 = vmul.f32 %v3133, %v299
    %v3137 = vmul.f32 %v3134, %v299
    %v3138 = vmul.f32 %v3135, %v299
    %v3139 = vadd.f32 %v3136, %v300
    %v3140 = vadd.f32 %v3137, %v300
    %v3141 = vadd.f32 %v3138, %v300
    %v3142 = vld [vmem:[#allocation5] sm:$0xf]
    %v3143 = vld [vmem:[#allocation5 + $0x4] sm:$0xf]
    %v3144 = vld [vmem:[#allocation5 + $0x8] sm:$0xf]
    %v3145 = vld [vmem:[#allocation5 + $0xc] sm:$0xf]
    %v3146 = vld [vmem:[#allocation5 + $0x10] sm:$0xf]
    %v3147 = vld [vmem:[#allocation5 + $0x14] sm:$0xf]
    %v3148 = vld [vmem:[#allocation5 + $0x18] sm:$0xf]
    %v3149 = vld [vmem:[#allocation5 + $0x1c] sm:$0xf]
    %v3150 = vld [vmem:[#allocation5 + $0x20] sm:$0xf]
    %v3151 = vld [vmem:[#allocation5 + $0x24] sm:$0xf]
    %v3152 = vld [vmem:[#allocation5 + $0x28] sm:$0xf]
    %v3153 = vld [vmem:[#allocation5 + $0x2c] sm:$0xf]
    %v3154 = vld [vmem:[#allocation5 + $0x30] sm:$0xf]
    %v3155 = vld [vmem:[#allocation5 + $0x34] sm:$0xf]
    %v3156 = vld [vmem:[#allocation5 + $0x38] sm:$0xf]
    %v3157 = vld [vmem:[#allocation5 + $0x3c] sm:$0xf]
    %v3158 = vpack.c.bf16 %v3140, %v3139
    %v3159 = vpack.c.bf16 %v3141, %v3141
    %v3176 = vunpack.c.l.b16 %v3142
    %v3177 = vunpack.c.l.b16 %v3143
    %v3178 = vunpack.c.l.b16 %v3144
    %v3179 = vunpack.c.l.b16 %v3145
    %v3180 = vunpack.c.l.b16 %v3146
    %v3181 = vunpack.c.l.b16 %v3147
    %v3182 = vunpack.c.l.b16 %v3148
    %v3183 = vunpack.c.l.b16 %v3149
    %v3184 = vunpack.c.l.b16 %v3150
    %v3185 = vunpack.c.l.b16 %v3151
    %v3186 = vunpack.c.l.b16 %v3152
    %v3187 = vunpack.c.l.b16 %v3153
    %v3188 = vunpack.c.l.b16 %v3154
    %v3189 = vunpack.c.l.b16 %v3155
    %v3190 = vunpack.c.l.b16 %v3156
    %v3191 = vunpack.c.l.b16 %v3157
    %v3192 = vpack.c.b16 %v3177, %v3176
    %v3193 = vpack.c.b16 %v3179, %v3178
    %v3194 = vpack.c.b16 %v3181, %v3180
    %v3195 = vpack.c.b16 %v3183, %v3182
    %v3196 = vpack.c.b16 %v3185, %v3184
    %v3197 = vpack.c.b16 %v3187, %v3186
    %v3198 = vpack.c.b16 %v3189, %v3188
    %v3199 = vpack.c.b16 %v3191, %v3190
    %3208 = vmatprep.subr.bf16.mxu0 0
    %3209 = vmatpush1.bf16.msra.mxu0 %v3192
    %3210 = vmatprep.subr.bf16.mxu0 0
    %3211 = vmatpush1.bf16.msra.mxu0 %v3193
    %3212 = vmatprep.subr.bf16.mxu0 0
    %3213 = vmatpush1.bf16.msra.mxu0 %v3194
    %3214 = vmatprep.subr.bf16.mxu0 0
    %3215 = vmatpush1.bf16.msra.mxu0 %v3195
    %3216 = vmatprep.subr.bf16.mxu0 0
    %3217 = vmatpush1.bf16.msra.mxu0 %v3196
    %3218 = vmatprep.subr.bf16.mxu0 0
    %3219 = vmatpush1.bf16.msra.mxu0 %v3197
    %3220 = vmatprep.subr.bf16.mxu0 0
    %3221 = vmatpush1.bf16.msra.mxu0 %v3198
    %3222 = vmatprep.subr.bf16.mxu0 0
    %3223 = vmatpush1.bf16.msra.mxu0 %v3199
    %3224 = vmatprep.subr.bf16.mxu0 0
    %3225 = vmatpush1.bf16.msra.mxu0 0
    %3226 = vmatprep.subr.bf16.mxu0 0
    %3227 = vmatpush1.bf16.msra.mxu0 0
    %3228 = vmatprep.subr.bf16.mxu0 0
    %3229 = vmatpush1.bf16.msra.mxu0 0
    %3230 = vmatprep.subr.bf16.mxu0 0
    %3231 = vmatpush1.bf16.msra.mxu0 0
    %3232 = vmatprep.subr.bf16.mxu0 0
    %3233 = vmatpush1.bf16.msra.mxu0 0
    %3234 = vmatprep.subr.bf16.mxu0 0
    %3235 = vmatpush1.bf16.msra.mxu0 0
    %3236 = vmatprep.subr.bf16.mxu0 0
    %3237 = vmatpush1.bf16.msra.mxu0 0
    %3238 = vmatprep.subr.bf16.mxu0 0
    %3239 = vmatpush1.bf16.msra.mxu0 0
    %3240 = vmatprep.mubr.bf16.mxu0 0
    %3241 = vmatmul.mubr.bf16.gmra.mrb[0].mxu0 %v3158
    %v3242 = vpop.f32.mrb[0].mxu0
    %v3243 = vadd.f32 %v301, %v3242
    %v3244 = vpop.f32.mrb[0].mxu0
    %v3245 = vpop.f32.mrb[0].mxu0
    %v3246 = vadd.f32 %v301, %v3245
    %v3247 = vpop.f32.mrb[0].mxu0
    %3248 = vmatprep.mubr.bf16.mxu0 0
    %3249 = vmatmul.mubr.bf16.gmra.mrb[0].mxu0 %v3159
    %v3250 = vpop.f32.mrb[0].mxu0
    %v3251 = vadd.f32 %v301, %v3250
    %v3252 = vpop.f32.mrb[0].mxu0
    %v3253 = vpop.f32.mrb[0].mxu0
    %v3254 = vpop.f32.mrb[0].mxu0
    %3255 = vdwg.mxu0
    %v3256 = vmax.f32 %v3243, 0.0
    %v3257 = vmax.f32 %v3246, 0.0
    %v3258 = vmax.f32 %v3251, 0.0
    %v3259 = vld [vmem:[#allocation7] sm:$0xf]
    %v3260 = vld [vmem:[#allocation7 + $0x4] sm:$0xf]
    %v3261 = vld [vmem:[#allocation7 + $0x8] sm:$0xf]
    %v3262 = vld [vmem:[#allocation7 + $0xc] sm:$0xf]
    %v3263 = vld [vmem:[#allocation7 + $0x10] sm:$0xf]
    %v3264 = vld [vmem:[#allocation7 + $0x14] sm:$0xf]
    %v3265 = vld [vmem:[#allocation7 + $0x18] sm:$0xf]
    %v3266 = vld [vmem:[#allocation7 + $0x1c] sm:$0xf]
    %v3267 = vld [vmem:[#allocation7 + $0x20] sm:$0xf]
    %v3268 = vld [vmem:[#allocation7 + $0x24] sm:$0xf]
    %v3269 = vld [vmem:[#allocation7 + $0x28] sm:$0xf]
    %v3270 = vld [vmem:[#allocation7 + $0x2c] sm:$0xf]
    %v3271 = vld [vmem:[#allocation7 + $0x30] sm:$0xf]
    %v3272 = vld [vmem:[#allocation7 + $0x34] sm:$0xf]
    %v3273 = vld [vmem:[#allocation7 + $0x38] sm:$0xf]
    %v3274 = vld [vmem:[#allocation7 + $0x3c] sm:$0xf]
    %v3275 = vpack.c.bf16 %v3257, %v3256
    %v3276 = vpack.c.bf16 %v3258, %v3258
    %v3293 = vunpack.c.l.b16 %v3259
    %v3294 = vunpack.c.l.b16 %v3260
    %v3295 = vunpack.c.l.b16 %v3261
    %v3296 = vunpack.c.l.b16 %v3262
    %v3297 = vunpack.c.l.b16 %v3263
    %v3298 = vunpack.c.l.b16 %v3264
    %v3299 = vunpack.c.l.b16 %v3265
    %v3300 = vunpack.c.l.b16 %v3266
    %v3301 = vunpack.c.l.b16 %v3267
    %v3302 = vunpack.c.l.b16 %v3268
    %v3303 = vunpack.c.l.b16 %v3269
    %v3304 = vunpack.c.l.b16 %v3270
    %v3305 = vunpack.c.l.b16 %v3271
    %v3306 = vunpack.c.l.b16 %v3272
    %v3307 = vunpack.c.l.b16 %v3273
    %v3308 = vunpack.c.l.b16 %v3274
    %v3309 = vpack.c.b16 %v3294, %v3293
    %v3310 = vpack.c.b16 %v3296, %v3295
    %v3311 = vpack.c.b16 %v3298, %v3297
    %v3312 = vpack.c.b16 %v3300, %v3299
    %v3313 = vpack.c.b16 %v3302, %v3301
    %v3314 = vpack.c.b16 %v3304, %v3303
    %v3315 = vpack.c.b16 %v3306, %v3305
    %v3316 = vpack.c.b16 %v3308, %v3307
    %3325 = vmatprep.subr.bf16.mxu0 0
    %3326 = vmatpush1.bf16.msra.mxu0 %v3309
    %3327 = vmatprep.subr.bf16.mxu0 0
    %3328 = vmatpush1.bf16.msra.mxu0 %v3310
    %3329 = vmatprep.subr.bf16.mxu0 0
    %3330 = vmatpush1.bf16.msra.mxu0 %v3311
    %3331 = vmatprep.subr.bf16.mxu0 0
    %3332 = vmatpush1.bf16.msra.mxu0 %v3312
    %3333 = vmatprep.subr.bf16.mxu0 0
    %3334 = vmatpush1.bf16.msra.mxu0 %v3313
    %3335 = vmatprep.subr.bf16.mxu0 0
    %3336 = vmatpush1.bf16.msra.mxu0 %v3314
    %3337 = vmatprep.subr.bf16.mxu0 0
    %3338 = vmatpush1.bf16.msra.mxu0 %v3315
    %3339 = vmatprep.subr.bf16.mxu0 0
    %3340 = vmatpush1.bf16.msra.mxu0 %v3316
    %3341 = vmatprep.subr.bf16.mxu0 0
    %3342 = vmatpush1.bf16.msra.mxu0 0
    %3343 = vmatprep.subr.bf16.mxu0 0
    %3344 = vmatpush1.bf16.msra.mxu0 0
    %3345 = vmatprep.subr.bf16.mxu0 0
    %3346 = vmatpush1.bf16.msra.mxu0 0
    %3347 = vmatprep.subr.bf16.mxu0 0
    %3348 = vmatpush1.bf16.msra.mxu0 0
    %3349 = vmatprep.subr.bf16.mxu0 0
    %3350 = vmatpush1.bf16.msra.mxu0 0
    %3351 = vmatprep.subr.bf16.mxu0 0
    %3352 = vmatpush1.bf16.msra.mxu0 0
    %3353 = vmatprep.subr.bf16.mxu0 0
    %3354 = vmatpush1.bf16.msra.mxu0 0
    %3355 = vmatprep.subr.bf16.mxu0 0
    %3356 = vmatpush1.bf16.msra.mxu0 0
    %3357 = vmatprep.mubr.bf16.mxu0 0
    %3358 = vmatmul.mubr.bf16.gmra.mrb[0].mxu0 %v3275
    %v3359 = vpop.f32.mrb[0].mxu0
    %v3360 = vadd.f32 %v302, %v3359
    %v3361 = vpop.f32.mrb[0].mxu0
    %v3362 = vpop.f32.mrb[0].mxu0
    %v3363 = vadd.f32 %v302, %v3362
    %v3364 = vpop.f32.mrb[0].mxu0
    %3365 = vmatprep.mubr.bf16.mxu0 0
    %3366 = vmatmul.mubr.bf16.gmra.mrb[0].mxu0 %v3276
    %v3367 = vpop.f32.mrb[0].mxu0
    %v3368 = vadd.f32 %v302, %v3367
    %v3369 = vpop.f32.mrb[0].mxu0
    %v3370 = vpop.f32.mrb[0].mxu0
    %v3371 = vpop.f32.mrb[0].mxu0
    %3372 = vdwg.mxu0
    %v3373 = vadd.f32 %v3139, %v3360
    %v3374 = vadd.f32 %v3140, %v3363
    %v3375 = vadd.f32 %v3141, %v3368
    %3376 = vadd.xlane.f32.xlu0 %v3373
    %v3377 = vpop.xlane.xlu0 %3376
    %3378 = vadd.xlane.f32.xlu0 %v3374
    %v3379 = vpop.xlane.xlu0 %3378
    %3380 = vadd.xlane.f32.xlu0 %v3375
    %v3381 = vpop.xlane.xlu0 %3380
    %v3382 = vmul.f32 %v3377, %v194
    %v3383 = vmul.f32 %v3379, %v194
    %v3384 = vmul.f32 %v3381, %v194
    %v3385 = vsub.f32 %v3373, %v3382
    %v3386 = vsub.f32 %v3374, %v3383
    %v3387 = vsub.f32 %v3375, %v3384
    %v3388 = vmul.f32 %v3385, %v3385
    %v3389 = vmul.f32 %v3386, %v3386
    %v3390 = vmul.f32 %v3387, %v3387
    %3391 = vadd.xlane.f32.xlu0 %v3388
    %v3392 = vpop.xlane.xlu0 %3391
    %3393 = vadd.xlane.f32.xlu0 %v3389
    %v3394 = vpop.xlane.xlu0 %3393
    %3395 = vadd.xlane.f32.xlu0 %v3390
    %v3396 = vpop.xlane.xlu0 %3395
    %v3397 = vmul.f32 %v3392, %v194
    %v3398 = vmul.f32 %v3394, %v194
    %v3399 = vmul.f32 %v3396, %v194
    %v3400 = vadd.f32 %v3397, 1e-05
    %v3401 = vadd.f32 %v3398, 1e-05
    %v3402 = vadd.f32 %v3399, 1e-05
    %v3403 = vrsqrt.pop %v3400
    %v3404 = vrsqrt.pop %v3401
    %v3405 = vrsqrt.pop %v3402
    %v3406 = vmul.f32 %v3385, %v3403
    %v3407 = vmul.f32 %v3386, %v3404
    %v3408 = vmul.f32 %v3387, %v3405
    %v3409 = vmul.f32 %v3406, %v303
    %v3410 = vmul.f32 %v3407, %v303
    %v3411 = vmul.f32 %v3408, %v303
    %v3412 = vadd.f32 %v3409, %v304
    %v3413 = vadd.f32 %v3410, %v304
    %v3414 = vadd.f32 %v3411, %v304
    %s3415 = scalar_lea.vmem [#allocation11], 50
    %v3416 = vld [vmem:[%s3415] ss:$8 sm:$0x7]
    %v3417 = vld [vmem:[#allocation11 + $0x33] ss:$0 sm:$0xff]
    %v3418 = vld [vmem:[#allocation11 + $0x34] ss:$0 sm:$0xff]
    %v3419 = vld [vmem:[#allocation11 + $0x35] ss:$0 sm:$0xff]
    %v3420 = vld [vmem:[#allocation11 + $0x36] ss:$0 sm:$0xff]
    %v3421 = vld [vmem:[#allocation11 + $0x37] ss:$0 sm:$0xff]
    %v3422 = vld [vmem:[#allocation11 + $0x48] ss:$0 sm:$0xff]
    %v3423 = vld [vmem:[#allocation11 + $0x49] ss:$0 sm:$0xff]
    %s3424 = scalar_lea.vmem [#allocation2], 192
    %v3425 = vld [vmem:[%s3424] sm:$0xff]
    %v3426 = vld [vmem:[%s3424 + $0x8] sm:$0xf]
    %v3427 = vld [vmem:[%s3424 + $0xc] sm:$0xff]
    %v3428 = vld [vmem:[%s3424 + $0x14] sm:$0xf]
    %v3429 = vld [vmem:[%s3424 + $0x18] sm:$0xff]
    %v3430 = vld [vmem:[%s3424 + $0x20] sm:$0xf]
    %v3431 = vld [vmem:[%s3424 + $0x24] sm:$0xff]
    %v3432 = vld [vmem:[%s3424 + $0x2c] sm:$0xf]
    %v3433 = vld [vmem:[%s3424 + $0x30] sm:$0xff]
    %v3434 = vld [vmem:[%s3424 + $0x38] sm:$0xf]
    %v3435 = vld [vmem:[%s3424 + $0x3c] sm:$0xff]
    %v3436 = vld [vmem:[%s3424 + $0x44] sm:$0xf]
    %v3437 = vld [vmem:[%s3424 + $0x48] sm:$0xff]
    %v3438 = vld [vmem:[%s3424 + $0x50] sm:$0xf]
    %v3439 = vld [vmem:[%s3424 + $0x54] sm:$0xff]
    %v3440 = vld [vmem:[%s3424 + $0x5c] sm:$0xf]
    %v3441 = vld [vmem:[%s3424 + $0x60] sm:$0xff]
    %v3442 = vld [vmem:[%s3424 + $0x68] sm:$0xf]
    %v3443 = vld [vmem:[%s3424 + $0x6c] sm:$0xff]
    %v3444 = vld [vmem:[%s3424 + $0x74] sm:$0xf]
    %v3445 = vld [vmem:[%s3424 + $0x78] sm:$0xff]
    %v3446 = vld [vmem:[%s3424 + $0x80] sm:$0xf]
    %v3447 = vld [vmem:[%s3424 + $0x84] sm:$0xff]
    %v3448 = vld [vmem:[%s3424 + $0x8c] sm:$0xf]
    %v3449 = vld [vmem:[%s3424 + $0x90] sm:$0xff]
    %v3450 = vld [vmem:[%s3424 + $0x98] sm:$0xf]
    %v3451 = vld [vmem:[%s3424 + $0x9c] sm:$0xff]
    %v3452 = vld [vmem:[%s3424 + $0xa4] sm:$0xf]
    %v3453 = vld [vmem:[%s3424 + $0xa8] sm:$0xff]
    %v3454 = vld [vmem:[%s3424 + $0xb0] sm:$0xf]
    %v3455 = vld [vmem:[%s3424 + $0xb4] sm:$0xff]
    %v3456 = vld [vmem:[%s3424 + $0xbc] sm:$0xf]
    %v3457 = vpack.c.bf16 %v3413, %v3412
    %v3458 = vpack.c.bf16 %v3414, %v3414
    %v3460 = vlaneseq
    %v3461 = vshrl.u32 %v3460, 7
    %v3462 = vsub.s32 0, %v3461
    %v3463 = vrot.slane %v3416, %v3462
    %v3464 = vlaneseq
    %v3465 = vshrl.u32 %v3464, 7
    %v3466 = vsub.s32 1, %v3465
    %v3467 = vrot.slane %v3416, %v3466
    %v3468 = vlaneseq
    %v3469 = vshrl.u32 %v3468, 7
    %v3470 = vsub.s32 2, %v3469
    %v3471 = vrot.slane %v3416, %v3470
    %v3507 = vunpack.c.l.b16 %v3425
    %v3508 = vunpack.c.h.b16 %v3425
    %v3509 = vunpack.c.l.b16 %v3426
    %v3510 = vunpack.c.l.b16 %v3427
    %v3511 = vunpack.c.h.b16 %v3427
    %v3512 = vunpack.c.l.b16 %v3428
    %v3513 = vunpack.c.l.b16 %v3429
    %v3514 = vunpack.c.h.b16 %v3429
    %v3515 = vunpack.c.l.b16 %v3430
    %v3516 = vunpack.c.l.b16 %v3431
    %v3517 = vunpack.c.h.b16 %v3431
    %v3518 = vunpack.c.l.b16 %v3432
    %v3519 = vunpack.c.l.b16 %v3433
    %v3520 = vunpack.c.h.b16 %v3433
    %v3521 = vunpack.c.l.b16 %v3434
    %v3522 = vunpack.c.l.b16 %v3435
    %v3523 = vunpack.c.h.b16 %v3435
    %v3524 = vunpack.c.l.b16 %v3436
    %v3525 = vunpack.c.l.b16 %v3437
    %v3526 = vunpack.c.h.b16 %v3437
    %v3527 = vunpack.c.l.b16 %v3438
    %v3528 = vunpack.c.l.b16 %v3439
    %v3529 = vunpack.c.h.b16 %v3439
    %v3530 = vunpack.c.l.b16 %v3440
    %v3531 = vunpack.c.l.b16 %v3441
    %v3532 = vunpack.c.h.b16 %v3441
    %v3533 = vunpack.c.l.b16 %v3442
    %v3534 = vunpack.c.l.b16 %v3443
    %v3535 = vunpack.c.h.b16 %v3443
    %v3536 = vunpack.c.l.b16 %v3444
    %v3537 = vunpack.c.l.b16 %v3445
    %v3538 = vunpack.c.h.b16 %v3445
    %v3539 = vunpack.c.l.b16 %v3446
    %v3540 = vunpack.c.l.b16 %v3447
    %v3541 = vunpack.c.h.b16 %v3447
    %v3542 = vunpack.c.l.b16 %v3448
    %v3543 = vunpack.c.l.b16 %v3449
    %v3544 = vunpack.c.h.b16 %v3449
    %v3545 = vunpack.c.l.b16 %v3450
    %v3546 = vunpack.c.l.b16 %v3451
    %v3547 = vunpack.c.h.b16 %v3451
    %v3548 = vunpack.c.l.b16 %v3452
    %v3549 = vunpack.c.l.b16 %v3453
    %v3550 = vunpack.c.h.b16 %v3453
    %v3551 = vunpack.c.l.b16 %v3454
    %v3552 = vunpack.c.l.b16 %v3455
    %v3553 = vunpack.c.h.b16 %v3455
    %v3554 = vunpack.c.l.b16 %v3456
    %v3555 = vpack.c.b16 %v3510, %v3507
    %v3556 = vpack.c.b16 %v3511, %v3508
    %v3557 = vpack.c.b16 %v3512, %v3509
    %v3558 = vpack.c.b16 %v3516, %v3513
    %v3559 = vpack.c.b16 %v3517, %v3514
    %v3560 = vpack.c.b16 %v3518, %v3515
    %v3561 = vpack.c.b16 %v3522, %v3519
    %v3562 = vpack.c.b16 %v3523, %v3520
    %v3563 = vpack.c.b16 %v3524, %v3521
    %v3564 = vpack.c.b16 %v3528, %v3525
    %v3565 = vpack.c.b16 %v3529, %v3526
    %v3566 = vpack.c.b16 %v3530, %v3527
    %v3567 = vpack.c.b16 %v3534, %v3531
    %v3568 = vpack.c.b16 %v3535, %v3532
    %v3569 = vpack.c.b16 %v3536, %v3533
    %v3570 = vpack.c.b16 %v3540, %v3537
    %v3571 = vpack.c.b16 %v3541, %v3538
    %v3572 = vpack.c.b16 %v3542, %v3539
    %v3573 = vpack.c.b16 %v3546, %v3543
    %v3574 = vpack.c.b16 %v3547, %v3544
    %v3575 = vpack.c.b16 %v3548, %v3545
    %v3576 = vpack.c.b16 %v3552, %v3549
    %v3577 = vpack.c.b16 %v3553, %v3550
    %v3578 = vpack.c.b16 %v3554, %v3551
    %3603 = vmatprep.subr.bf16.mxu0 %v3556
    %3604 = vmatpush1.bf16.msra.mxu0 %v3555
    %3605 = vmatprep.subr.bf16.mxu0 %v3559
    %3606 = vmatpush1.bf16.msra.mxu0 %v3558
    %3607 = vmatprep.subr.bf16.mxu0 %v3562
    %3608 = vmatpush1.bf16.msra.mxu0 %v3561
    %3609 = vmatprep.subr.bf16.mxu0 %v3565
    %3610 = vmatpush1.bf16.msra.mxu0 %v3564
    %3611 = vmatprep.subr.bf16.mxu0 %v3568
    %3612 = vmatpush1.bf16.msra.mxu0 %v3567
    %3613 = vmatprep.subr.bf16.mxu0 %v3571
    %3614 = vmatpush1.bf16.msra.mxu0 %v3570
    %3615 = vmatprep.subr.bf16.mxu0 %v3574
    %3616 = vmatpush1.bf16.msra.mxu0 %v3573
    %3617 = vmatprep.subr.bf16.mxu0 %v3577
    %3618 = vmatpush1.bf16.msra.mxu0 %v3576
    %3619 = vmatprep.subr.bf16.mxu0 0
    %3620 = vmatpush1.bf16.msra.mxu0 0
    %3621 = vmatprep.subr.bf16.mxu0 0
    %3622 = vmatpush1.bf16.msra.mxu0 0
    %3623 = vmatprep.subr.bf16.mxu0 0
    %3624 = vmatpush1.bf16.msra.mxu0 0
    %3625 = vmatprep.subr.bf16.mxu0 0
    %3626 = vmatpush1.bf16.msra.mxu0 0
    %3627 = vmatprep.subr.bf16.mxu0 0
    %3628 = vmatpush1.bf16.msra.mxu0 0
    %3629 = vmatprep.subr.bf16.mxu0 0
    %3630 = vmatpush1.bf16.msra.mxu0 0
    %3631 = vmatprep.subr.bf16.mxu0 0
    %3632 = vmatpush1.bf16.msra.mxu0 0
    %3633 = vmatprep.subr.bf16.mxu0 0
    %3634 = vmatpush1.bf16.msra.mxu0 0
    %3635 = vmatprep.mubr.bf16.mxu0 0
    %3636 = vmatmul.mubr.bf16.gmra.mrb[0].mxu0 %v3457
    %v3637 = vpop.f32.mrb[0].mxu0
    %v3638 = vadd.f32 %v3463, %v3637
    %v3639 = vpop.f32.mrb[0].mxu0
    %v3640 = vadd.f32 %v3467, %v3639
    %v3641 = vpop.f32.mrb[0].mxu0
    %v3642 = vadd.f32 %v3463, %v3641
    %v3643 = vpop.f32.mrb[0].mxu0
    %v3644 = vadd.f32 %v3467, %v3643
    %3645 = vmatprep.mubr.bf16.mxu0 0
    %3646 = vmatmul.mubr.bf16.gmra.mrb[0].mxu0 %v3458
    %v3647 = vpop.f32.mrb[0].mxu0
    %v3648 = vadd.f32 %v3463, %v3647
    %v3649 = vpop.f32.mrb[0].mxu0
    %v3650 = vadd.f32 %v3467, %v3649
    %v3651 = vpop.f32.mrb[0].mxu0
    %v3652 = vpop.f32.mrb[0].mxu0
    %3653 = vdwg.mxu0
    %3654 = vmatprep.subr.bf16.mxu0 0
    %3655 = vmatpush1.bf16.msra.mxu0 %v3557
    %3656 = vmatprep.subr.bf16.mxu0 0
    %3657 = vmatpush1.bf16.msra.mxu0 %v3560
    %3658 = vmatprep.subr.bf16.mxu0 0
    %3659 = vmatpush1.bf16.msra.mxu0 %v3563
    %3660 = vmatprep.subr.bf16.mxu0 0
    %3661 = vmatpush1.bf16.msra.mxu0 %v3566
    %3662 = vmatprep.subr.bf16.mxu0 0
    %3663 = vmatpush1.bf16.msra.mxu0 %v3569
    %3664 = vmatprep.subr.bf16.mxu0 0
    %3665 = vmatpush1.bf16.msra.mxu0 %v3572
    %3666 = vmatprep.subr.bf16.mxu0 0
    %3667 = vmatpush1.bf16.msra.mxu0 %v3575
    %3668 = vmatprep.subr.bf16.mxu0 0
    %3669 = vmatpush1.bf16.msra.mxu0 %v3578
    %3670 = vmatprep.subr.bf16.mxu0 0
    %3671 = vmatpush1.bf16.msra.mxu0 0
    %3672 = vmatprep.subr.bf16.mxu0 0
    %3673 = vmatpush1.bf16.msra.mxu0 0
    %3674 = vmatprep.subr.bf16.mxu0 0
    %3675 = vmatpush1.bf16.msra.mxu0 0
    %3676 = vmatprep.subr.bf16.mxu0 0
    %3677 = vmatpush1.bf16.msra.mxu0 0
    %3678 = vmatprep.subr.bf16.mxu0 0
    %3679 = vmatpush1.bf16.msra.mxu0 0
    %3680 = vmatprep.subr.bf16.mxu0 0
    %3681 = vmatpush1.bf16.msra.mxu0 0
    %3682 = vmatprep.subr.bf16.mxu0 0
    %3683 = vmatpush1.bf16.msra.mxu0 0
    %3684 = vmatprep.subr.bf16.mxu0 0
    %3685 = vmatpush1.bf16.msra.mxu0 0
    %3686 = vmatprep.mubr.bf16.mxu0 0
    %3687 = vmatmul.mubr.bf16.gmra.mrb[0].mxu0 %v3457
    %v3688 = vpop.f32.mrb[0].mxu0
    %v3689 = vadd.f32 %v3471, %v3688
    %v3690 = vpop.f32.mrb[0].mxu0
    %v3691 = vpop.f32.mrb[0].mxu0
    %v3692 = vadd.f32 %v3471, %v3691
    %v3693 = vpop.f32.mrb[0].mxu0
    %3694 = vmatprep.mubr.bf16.mxu0 0
    %3695 = vmatmul.mubr.bf16.gmra.mrb[0].mxu0 %v3458
    %v3696 = vpop.f32.mrb[0].mxu0
    %v3697 = vadd.f32 %v3471, %v3696
    %v3698 = vpop.f32.mrb[0].mxu0
    %v3699 = vpop.f32.mrb[0].mxu0
    %v3700 = vpop.f32.mrb[0].mxu0
    %3701 = vdwg.mxu0
    %3705 = vrot.lane.b32.xlu0 %v3638, 96
    %v3706 = vpop.permute.xlu0 %3705
    %3707 = vrot.lane.b32.xlu0 %v3642, 96
    %v3708 = vpop.permute.xlu0 %3707
    %3709 = vrot.lane.b32.xlu0 %v3648, 96
    %v3710 = vpop.permute.xlu0 %3709
    %3714 = vrot.lane.b32.xlu0 %v3638, 64
    %v3715 = vpop.permute.xlu0 %3714
    %3716 = vrot.lane.b32.xlu0 %v3642, 64
    %v3717 = vpop.permute.xlu0 %3716
    %3718 = vrot.lane.b32.xlu0 %v3648, 64
    %v3719 = vpop.permute.xlu0 %3718
    %3723 = vrot.lane.b32.xlu0 %v3638, 32
    %v3724 = vpop.permute.xlu0 %3723
    %3725 = vrot.lane.b32.xlu0 %v3642, 32
    %v3726 = vpop.permute.xlu0 %3725
    %3727 = vrot.lane.b32.xlu0 %v3648, 32
    %v3728 = vpop.permute.xlu0 %3727
    %v3732 = vcombine.low %v3638, %v3715
    %v3733 = vcombine.high %v3638, %v3715
    %v3735 = vunpack.c.l.s4 1983009808
    %v3736 = vunpack.c.0.s8 %v3735
    %v3737 = vlaneseq
    %v3738 = vshrl.u32 %v3737, 7
    %v3739 = vsub.s32 %v3736, %v3738
    %v3740 = vrot.slane %v3732, %v3739
    %v3742 = vunpack.c.l.s4 1983009808
    %v3743 = vunpack.c.0.s8 %v3742
    %v3744 = vlaneseq
    %v3745 = vshrl.u32 %v3744, 7
    %v3746 = vsub.s32 %v3743, %v3745
    %v3747 = vrot.slane %v3733, %v3746
    %v3748 = vcombine.low %v3706, %v3724
    %v3749 = vcombine.high %v3706, %v3724
    %v3751 = vunpack.c.l.s4 1983009808
    %v3752 = vunpack.c.0.s8 %v3751
    %v3753 = vlaneseq
    %v3754 = vshrl.u32 %v3753, 7
    %v3755 = vsub.s32 %v3752, %v3754
    %v3756 = vrot.slane %v3748, %v3755
    %v3758 = vunpack.c.l.s4 1983009808
    %v3759 = vunpack.c.0.s8 %v3758
    %v3760 = vlaneseq
    %v3761 = vshrl.u32 %v3760, 7
    %v3762 = vsub.s32 %v3759, %v3761
    %v3763 = vrot.slane %v3749, %v3762
    %v3764 = vcombine.low %v3740, %v3756
    %v3765 = vcombine.high %v3740, %v3756
    %v3767 = vunpack.c.l.s4 1934713408
    %v3768 = vunpack.c.0.s8 %v3767
    %v3769 = vlaneseq
    %v3770 = vshrl.u32 %v3769, 7
    %v3771 = vsub.s32 %v3768, %v3770
    %v3772 = vrot.slane %v3764, %v3771
    %v3774 = vunpack.c.l.s4 1934713408
    %v3775 = vunpack.c.0.s8 %v3774
    %v3776 = vlaneseq
    %v3777 = vshrl.u32 %v3776, 7
    %v3778 = vsub.s32 %v3775, %v3777
    %v3779 = vrot.slane %v3765, %v3778
    %v3780 = vcombine.low %v3747, %v3763
    %v3781 = vcombine.high %v3747, %v3763
    %v3783 = vunpack.c.l.s4 1934713408
    %v3784 = vunpack.c.0.s8 %v3783
    %v3785 = vlaneseq
    %v3786 = vshrl.u32 %v3785, 7
    %v3787 = vsub.s32 %v3784, %v3786
    %v3788 = vrot.slane %v3780, %v3787
    %v3790 = vunpack.c.l.s4 1934713408
    %v3791 = vunpack.c.0.s8 %v3790
    %v3792 = vlaneseq
    %v3793 = vshrl.u32 %v3792, 7
    %v3794 = vsub.s32 %v3791, %v3793
    %v3795 = vrot.slane %v3781, %v3794
    %v3796 = vcombine.high %v3772, 0.0
    %v3797 = vcombine.high %v3779, 0.0
    %v3798 = vcombine.high %v3788, 0.0
    %v3799 = vcombine.high %v3795, 0.0
    %v3800 = vcombine.low %v3642, %v3717
    %v3801 = vcombine.high %v3642, %v3717
    %v3803 = vunpack.c.l.s4 1983009808
    %v3804 = vunpack.c.0.s8 %v3803
    %v3805 = vlaneseq
    %v3806 = vshrl.u32 %v3805, 7
    %v3807 = vsub.s32 %v3804, %v3806
    %v3808 = vrot.slane %v3800, %v3807
    %v3810 = vunpack.c.l.s4 1983009808
    %v3811 = vunpack.c.0.s8 %v3810
    %v3812 = vlaneseq
    %v3813 = vshrl.u32 %v3812, 7
    %v3814 = vsub.s32 %v3811, %v3813
    %v3815 = vrot.slane %v3801, %v3814
    %v3816 = vcombine.low %v3708, %v3726
    %v3817 = vcombine.high %v3708, %v3726
    %v3819 = vunpack.c.l.s4 1983009808
    %v3820 = vunpack.c.0.s8 %v3819
    %v3821 = vlaneseq
    %v3822 = vshrl.u32 %v3821, 7
    %v3823 = vsub.s32 %v3820, %v3822
    %v3824 = vrot.slane %v3816, %v3823
    %v3826 = vunpack.c.l.s4 1983009808
    %v3827 = vunpack.c.0.s8 %v3826
    %v3828 = vlaneseq
    %v3829 = vshrl.u32 %v3828, 7
    %v3830 = vsub.s32 %v3827, %v3829
    %v3831 = vrot.slane %v3817, %v3830
    %v3832 = vcombine.low %v3808, %v3824
    %v3833 = vcombine.high %v3808, %v3824
    %v3835 = vunpack.c.l.s4 1934713408
    %v3836 = vunpack.c.0.s8 %v3835
    %v3837 = vlaneseq
    %v3838 = vshrl.u32 %v3837, 7
    %v3839 = vsub.s32 %v3836, %v3838
    %v3840 = vrot.slane %v3832, %v3839
    %v3842 = vunpack.c.l.s4 1934713408
    %v3843 = vunpack.c.0.s8 %v3842
    %v3844 = vlaneseq
    %v3845 = vshrl.u32 %v3844, 7
    %v3846 = vsub.s32 %v3843, %v3845
    %v3847 = vrot.slane %v3833, %v3846
    %v3848 = vcombine.low %v3815, %v3831
    %v3849 = vcombine.high %v3815, %v3831
    %v3851 = vunpack.c.l.s4 1934713408
    %v3852 = vunpack.c.0.s8 %v3851
    %v3853 = vlaneseq
    %v3854 = vshrl.u32 %v3853, 7
    %v3855 = vsub.s32 %v3852, %v3854
    %v3856 = vrot.slane %v3848, %v3855
    %v3858 = vunpack.c.l.s4 1934713408
    %v3859 = vunpack.c.0.s8 %v3858
    %v3860 = vlaneseq
    %v3861 = vshrl.u32 %v3860, 7
    %v3862 = vsub.s32 %v3859, %v3861
    %v3863 = vrot.slane %v3849, %v3862
    %v3864 = vcombine.high %v3840, 0.0
    %v3865 = vcombine.high %v3847, 0.0
    %v3866 = vcombine.high %v3856, 0.0
    %v3867 = vcombine.high %v3863, 0.0
    %v3868 = vcombine.low %v3648, %v3719
    %v3869 = vcombine.high %v3648, %v3719
    %v3871 = vunpack.c.l.s4 1983009808
    %v3872 = vunpack.c.0.s8 %v3871
    %v3873 = vlaneseq
    %v3874 = vshrl.u32 %v3873, 7
    %v3875 = vsub.s32 %v3872, %v3874
    %v3876 = vrot.slane %v3868, %v3875
    %v3878 = vunpack.c.l.s4 1983009808
    %v3879 = vunpack.c.0.s8 %v3878
    %v3880 = vlaneseq
    %v3881 = vshrl.u32 %v3880, 7
    %v3882 = vsub.s32 %v3879, %v3881
    %v3883 = vrot.slane %v3869, %v3882
    %v3884 = vcombine.low %v3710, %v3728
    %v3885 = vcombine.high %v3710, %v3728
    %v3887 = vunpack.c.l.s4 1983009808
    %v3888 = vunpack.c.0.s8 %v3887
    %v3889 = vlaneseq
    %v3890 = vshrl.u32 %v3889, 7
    %v3891 = vsub.s32 %v3888, %v3890
    %v3892 = vrot.slane %v3884, %v3891
    %v3894 = vunpack.c.l.s4 1983009808
    %v3895 = vunpack.c.0.s8 %v3894
    %v3896 = vlaneseq
    %v3897 = vshrl.u32 %v3896, 7
    %v3898 = vsub.s32 %v3895, %v3897
    %v3899 = vrot.slane %v3885, %v3898
    %v3900 = vcombine.low %v3876, %v3892
    %v3901 = vcombine.high %v3876, %v3892
    %v3903 = vunpack.c.l.s4 1934713408
    %v3904 = vunpack.c.0.s8 %v3903
    %v3905 = vlaneseq
    %v3906 = vshrl.u32 %v3905, 7
    %v3907 = vsub.s32 %v3904, %v3906
    %v3908 = vrot.slane %v3900, %v3907
    %v3910 = vunpack.c.l.s4 1934713408
    %v3911 = vunpack.c.0.s8 %v3910
    %v3912 = vlaneseq
    %v3913 = vshrl.u32 %v3912, 7
    %v3914 = vsub.s32 %v3911, %v3913
    %v3915 = vrot.slane %v3901, %v3914
    %v3916 = vcombine.low %v3883, %v3899
    %v3917 = vcombine.high %v3883, %v3899
    %v3919 = vunpack.c.l.s4 1934713408
    %v3920 = vunpack.c.0.s8 %v3919
    %v3921 = vlaneseq
    %v3922 = vshrl.u32 %v3921, 7
    %v3923 = vsub.s32 %v3920, %v3922
    %v3924 = vrot.slane %v3916, %v3923
    %v3926 = vunpack.c.l.s4 1934713408
    %v3927 = vunpack.c.0.s8 %v3926
    %v3928 = vlaneseq
    %v3929 = vshrl.u32 %v3928, 7
    %v3930 = vsub.s32 %v3927, %v3929
    %v3931 = vrot.slane %v3917, %v3930
    %v3932 = vcombine.high %v3908, 0.0
    %v3933 = vcombine.high %v3915, 0.0
    %v3934 = vcombine.high %v3924, 0.0
    %v3935 = vcombine.high %v3931, 0.0
    %v3936 = vcombine.low %v3772, %v3779
    %v3938 = vunpack.c.l.s4 1983009808
    %v3939 = vunpack.c.0.s8 %v3938
    %v3940 = vlaneseq
    %v3941 = vshrl.u32 %v3940, 7
    %v3942 = vsub.s32 %v3939, %v3941
    %v3943 = vrot.slane %v3936, %v3942
    %v3944 = vcombine.low %v3796, %v3797
    %v3946 = vunpack.c.l.s4 1983009808
    %v3947 = vunpack.c.0.s8 %v3946
    %v3948 = vlaneseq
    %v3949 = vshrl.u32 %v3948, 7
    %v3950 = vsub.s32 %v3947, %v3949
    %v3951 = vrot.slane %v3944, %v3950
    %v3952 = vcombine.low %v3788, %v3795
    %v3954 = vunpack.c.l.s4 1983009808
    %v3955 = vunpack.c.0.s8 %v3954
    %v3956 = vlaneseq
    %v3957 = vshrl.u32 %v3956, 7
    %v3958 = vsub.s32 %v3955, %v3957
    %v3959 = vrot.slane %v3952, %v3958
    %v3960 = vcombine.low %v3798, %v3799
    %v3962 = vunpack.c.l.s4 1983009808
    %v3963 = vunpack.c.0.s8 %v3962
    %v3964 = vlaneseq
    %v3965 = vshrl.u32 %v3964, 7
    %v3966 = vsub.s32 %v3963, %v3965
    %v3967 = vrot.slane %v3960, %v3966
    %v3968 = vcombine.low %v3943, %v3951
    %v3969 = vcombine.high %v3943, %v3951
    %v3971 = vunpack.c.l.s4 1934713408
    %v3972 = vunpack.c.0.s8 %v3971
    %v3973 = vlaneseq
    %v3974 = vshrl.u32 %v3973, 7
    %v3975 = vsub.s32 %v3972, %v3974
    %v3976 = vrot.slane %v3968, %v3975
    %v3978 = vunpack.c.l.s4 1934713408
    %v3979 = vunpack.c.0.s8 %v3978
    %v3980 = vlaneseq
    %v3981 = vshrl.u32 %v3980, 7
    %v3982 = vsub.s32 %v3979, %v3981
    %v3983 = vrot.slane %v3969, %v3982
    %v3984 = vcombine.low %v3959, %v3967
    %v3985 = vcombine.high %v3959, %v3967
    %v3987 = vunpack.c.l.s4 1934713408
    %v3988 = vunpack.c.0.s8 %v3987
    %v3989 = vlaneseq
    %v3990 = vshrl.u32 %v3989, 7
    %v3991 = vsub.s32 %v3988, %v3990
    %v3992 = vrot.slane %v3984, %v3991
    %v3994 = vunpack.c.l.s4 1934713408
    %v3995 = vunpack.c.0.s8 %v3994
    %v3996 = vlaneseq
    %v3997 = vshrl.u32 %v3996, 7
    %v3998 = vsub.s32 %v3995, %v3997
    %v3999 = vrot.slane %v3985, %v3998
    %v4000 = vcombine.low %v3976, %v3992
    %v4001 = vcombine.high %v3976, %v3992
    %v4002 = vcombine.low %v3983, %v3999
    %v4003 = vcombine.high %v3983, %v3999
    %v4004 = vcombine.low %v3840, %v3847
    %v4006 = vunpack.c.l.s4 1983009808
    %v4007 = vunpack.c.0.s8 %v4006
    %v4008 = vlaneseq
    %v4009 = vshrl.u32 %v4008, 7
    %v4010 = vsub.s32 %v4007, %v4009
    %v4011 = vrot.slane %v4004, %v4010
    %v4012 = vcombine.low %v3864, %v3865
    %v4014 = vunpack.c.l.s4 1983009808
    %v4015 = vunpack.c.0.s8 %v4014
    %v4016 = vlaneseq
    %v4017 = vshrl.u32 %v4016, 7
    %v4018 = vsub.s32 %v4015, %v4017
    %v4019 = vrot.slane %v4012, %v4018
    %v4020 = vcombine.low %v3856, %v3863
    %v4022 = vunpack.c.l.s4 1983009808
    %v4023 = vunpack.c.0.s8 %v4022
    %v4024 = vlaneseq
    %v4025 = vshrl.u32 %v4024, 7
    %v4026 = vsub.s32 %v4023, %v4025
    %v4027 = vrot.slane %v4020, %v4026
    %v4028 = vcombine.low %v3866, %v3867
    %v4030 = vunpack.c.l.s4 1983009808
    %v4031 = vunpack.c.0.s8 %v4030
    %v4032 = vlaneseq
    %v4033 = vshrl.u32 %v4032, 7
    %v4034 = vsub.s32 %v4031, %v4033
    %v4035 = vrot.slane %v4028, %v4034
    %v4036 = vcombine.low %v4011, %v4019
    %v4037 = vcombine.high %v4011, %v4019
    %v4039 = vunpack.c.l.s4 1934713408
    %v4040 = vunpack.c.0.s8 %v4039
    %v4041 = vlaneseq
    %v4042 = vshrl.u32 %v4041, 7
    %v4043 = vsub.s32 %v4040, %v4042
    %v4044 = vrot.slane %v4036, %v4043
    %v4046 = vunpack.c.l.s4 1934713408
    %v4047 = vunpack.c.0.s8 %v4046
    %v4048 = vlaneseq
    %v4049 = vshrl.u32 %v4048, 7
    %v4050 = vsub.s32 %v4047, %v4049
    %v4051 = vrot.slane %v4037, %v4050
    %v4052 = vcombine.low %v4027, %v4035
    %v4053 = vcombine.high %v4027, %v4035
    %v4055 = vunpack.c.l.s4 1934713408
    %v4056 = vunpack.c.0.s8 %v4055
    %v4057 = vlaneseq
    %v4058 = vshrl.u32 %v4057, 7
    %v4059 = vsub.s32 %v4056, %v4058
    %v4060 = vrot.slane %v4052, %v4059
    %v4062 = vunpack.c.l.s4 1934713408
    %v4063 = vunpack.c.0.s8 %v4062
    %v4064 = vlaneseq
    %v4065 = vshrl.u32 %v4064, 7
    %v4066 = vsub.s32 %v4063, %v4065
    %v4067 = vrot.slane %v4053, %v4066
    %v4068 = vcombine.low %v4044, %v4060
    %v4069 = vcombine.high %v4044, %v4060
    %v4070 = vcombine.low %v4051, %v4067
    %v4071 = vcombine.high %v4051, %v4067
    %v4072 = vcombine.low %v3908, %v3915
    %v4074 = vunpack.c.l.s4 1983009808
    %v4075 = vunpack.c.0.s8 %v4074
    %v4076 = vlaneseq
    %v4077 = vshrl.u32 %v4076, 7
    %v4078 = vsub.s32 %v4075, %v4077
    %v4079 = vrot.slane %v4072, %v4078
    %v4080 = vcombine.low %v3932, %v3933
    %v4082 = vunpack.c.l.s4 1983009808
    %v4083 = vunpack.c.0.s8 %v4082
    %v4084 = vlaneseq
    %v4085 = vshrl.u32 %v4084, 7
    %v4086 = vsub.s32 %v4083, %v4085
    %v4087 = vrot.slane %v4080, %v4086
    %v4088 = vcombine.low %v3924, %v3931
    %v4090 = vunpack.c.l.s4 1983009808
    %v4091 = vunpack.c.0.s8 %v4090
    %v4092 = vlaneseq
    %v4093 = vshrl.u32 %v4092, 7
    %v4094 = vsub.s32 %v4091, %v4093
    %v4095 = vrot.slane %v4088, %v4094
    %v4096 = vcombine.low %v3934, %v3935
    %v4098 = vunpack.c.l.s4 1983009808
    %v4099 = vunpack.c.0.s8 %v4098
    %v4100 = vlaneseq
    %v4101 = vshrl.u32 %v4100, 7
    %v4102 = vsub.s32 %v4099, %v4101
    %v4103 = vrot.slane %v4096, %v4102
    %v4104 = vcombine.low %v4079, %v4087
    %v4105 = vcombine.high %v4079, %v4087
    %v4107 = vunpack.c.l.s4 1934713408
    %v4108 = vunpack.c.0.s8 %v4107
    %v4109 = vlaneseq
    %v4110 = vshrl.u32 %v4109, 7
    %v4111 = vsub.s32 %v4108, %v4110
    %v4112 = vrot.slane %v4104, %v4111
    %v4114 = vunpack.c.l.s4 1934713408
    %v4115 = vunpack.c.0.s8 %v4114
    %v4116 = vlaneseq
    %v4117 = vshrl.u32 %v4116, 7
    %v4118 = vsub.s32 %v4115, %v4117
    %v4119 = vrot.slane %v4105, %v4118
    %v4120 = vcombine.low %v4095, %v4103
    %v4121 = vcombine.high %v4095, %v4103
    %v4123 = vunpack.c.l.s4 1934713408
    %v4124 = vunpack.c.0.s8 %v4123
    %v4125 = vlaneseq
    %v4126 = vshrl.u32 %v4125, 7
    %v4127 = vsub.s32 %v4124, %v4126
    %v4128 = vrot.slane %v4120, %v4127
    %v4130 = vunpack.c.l.s4 1934713408
    %v4131 = vunpack.c.0.s8 %v4130
    %v4132 = vlaneseq
    %v4133 = vshrl.u32 %v4132, 7
    %v4134 = vsub.s32 %v4131, %v4133
    %v4135 = vrot.slane %v4121, %v4134
    %v4136 = vcombine.low %v4112, %v4128
    %v4137 = vcombine.high %v4112, %v4128
    %v4138 = vcombine.low %v4119, %v4135
    %v4139 = vcombine.high %v4119, %v4135
    %4143 = vrot.lane.b32.xlu0 %v3640, 96
    %v4144 = vpop.permute.xlu0 %4143
    %4145 = vrot.lane.b32.xlu0 %v3644, 96
    %v4146 = vpop.permute.xlu0 %4145
    %4147 = vrot.lane.b32.xlu0 %v3650, 96
    %v4148 = vpop.permute.xlu0 %4147
    %4152 = vrot.lane.b32.xlu0 %v3640, 64
    %v4153 = vpop.permute.xlu0 %4152
    %4154 = vrot.lane.b32.xlu0 %v3644, 64
    %v4155 = vpop.permute.xlu0 %4154
    %4156 = vrot.lane.b32.xlu0 %v3650, 64
    %v4157 = vpop.permute.xlu0 %4156
    %4161 = vrot.lane.b32.xlu0 %v3640, 32
    %v4162 = vpop.permute.xlu0 %4161
    %4163 = vrot.lane.b32.xlu0 %v3644, 32
    %v4164 = vpop.permute.xlu0 %4163
    %4165 = vrot.lane.b32.xlu0 %v3650, 32
    %v4166 = vpop.permute.xlu0 %4165
    %v4170 = vcombine.low %v3640, %v4153
    %v4171 = vcombine.high %v3640, %v4153
    %v4173 = vunpack.c.l.s4 1983009808
    %v4174 = vunpack.c.0.s8 %v4173
    %v4175 = vlaneseq
    %v4176 = vshrl.u32 %v4175, 7
    %v4177 = vsub.s32 %v4174, %v4176
    %v4178 = vrot.slane %v4170, %v4177
    %v4180 = vunpack.c.l.s4 1983009808
    %v4181 = vunpack.c.0.s8 %v4180
    %v4182 = vlaneseq
    %v4183 = vshrl.u32 %v4182, 7
    %v4184 = vsub.s32 %v4181, %v4183
    %v4185 = vrot.slane %v4171, %v4184
    %v4186 = vcombine.low %v4144, %v4162
    %v4187 = vcombine.high %v4144, %v4162
    %v4189 = vunpack.c.l.s4 1983009808
    %v4190 = vunpack.c.0.s8 %v4189
    %v4191 = vlaneseq
    %v4192 = vshrl.u32 %v4191, 7
    %v4193 = vsub.s32 %v4190, %v4192
    %v4194 = vrot.slane %v4186, %v4193
    %v4196 = vunpack.c.l.s4 1983009808
    %v4197 = vunpack.c.0.s8 %v4196
    %v4198 = vlaneseq
    %v4199 = vshrl.u32 %v4198, 7
    %v4200 = vsub.s32 %v4197, %v4199
    %v4201 = vrot.slane %v4187, %v4200
    %v4202 = vcombine.low %v4178, %v4194
    %v4203 = vcombine.high %v4178, %v4194
    %v4205 = vunpack.c.l.s4 1934713408
    %v4206 = vunpack.c.0.s8 %v4205
    %v4207 = vlaneseq
    %v4208 = vshrl.u32 %v4207, 7
    %v4209 = vsub.s32 %v4206, %v4208
    %v4210 = vrot.slane %v4202, %v4209
    %v4212 = vunpack.c.l.s4 1934713408
    %v4213 = vunpack.c.0.s8 %v4212
    %v4214 = vlaneseq
    %v4215 = vshrl.u32 %v4214, 7
    %v4216 = vsub.s32 %v4213, %v4215
    %v4217 = vrot.slane %v4203, %v4216
    %v4218 = vcombine.low %v4185, %v4201
    %v4219 = vcombine.high %v4185, %v4201
    %v4221 = vunpack.c.l.s4 1934713408
    %v4222 = vunpack.c.0.s8 %v4221
    %v4223 = vlaneseq
    %v4224 = vshrl.u32 %v4223, 7
    %v4225 = vsub.s32 %v4222, %v4224
    %v4226 = vrot.slane %v4218, %v4225
    %v4228 = vunpack.c.l.s4 1934713408
    %v4229 = vunpack.c.0.s8 %v4228
    %v4230 = vlaneseq
    %v4231 = vshrl.u32 %v4230, 7
    %v4232 = vsub.s32 %v4229, %v4231
    %v4233 = vrot.slane %v4219, %v4232
    %v4234 = vcombine.high %v4210, 0.0
    %v4235 = vcombine.high %v4217, 0.0
    %v4236 = vcombine.high %v4226, 0.0
    %v4237 = vcombine.high %v4233, 0.0
    %v4238 = vcombine.low %v3644, %v4155
    %v4239 = vcombine.high %v3644, %v4155
    %v4241 = vunpack.c.l.s4 1983009808
    %v4242 = vunpack.c.0.s8 %v4241
    %v4243 = vlaneseq
    %v4244 = vshrl.u32 %v4243, 7
    %v4245 = vsub.s32 %v4242, %v4244
    %v4246 = vrot.slane %v4238, %v4245
    %v4248 = vunpack.c.l.s4 1983009808
    %v4249 = vunpack.c.0.s8 %v4248
    %v4250 = vlaneseq
    %v4251 = vshrl.u32 %v4250, 7
    %v4252 = vsub.s32 %v4249, %v4251
    %v4253 = vrot.slane %v4239, %v4252
    %v4254 = vcombine.low %v4146, %v4164
    %v4255 = vcombine.high %v4146, %v4164
    %v4257 = vunpack.c.l.s4 1983009808
    %v4258 = vunpack.c.0.s8 %v4257
    %v4259 = vlaneseq
    %v4260 = vshrl.u32 %v4259, 7
    %v4261 = vsub.s32 %v4258, %v4260
    %v4262 = vrot.slane %v4254, %v4261
    %v4264 = vunpack.c.l.s4 1983009808
    %v4265 = vunpack.c.0.s8 %v4264
    %v4266 = vlaneseq
    %v4267 = vshrl.u32 %v4266, 7
    %v4268 = vsub.s32 %v4265, %v4267
    %v4269 = vrot.slane %v4255, %v4268
    %v4270 = vcombine.low %v4246, %v4262
    %v4271 = vcombine.high %v4246, %v4262
    %v4273 = vunpack.c.l.s4 1934713408
    %v4274 = vunpack.c.0.s8 %v4273
    %v4275 = vlaneseq
    %v4276 = vshrl.u32 %v4275, 7
    %v4277 = vsub.s32 %v4274, %v4276
    %v4278 = vrot.slane %v4270, %v4277
    %v4280 = vunpack.c.l.s4 1934713408
    %v4281 = vunpack.c.0.s8 %v4280
    %v4282 = vlaneseq
    %v4283 = vshrl.u32 %v4282, 7
    %v4284 = vsub.s32 %v4281, %v4283
    %v4285 = vrot.slane %v4271, %v4284
    %v4286 = vcombine.low %v4253, %v4269
    %v4287 = vcombine.high %v4253, %v4269
    %v4289 = vunpack.c.l.s4 1934713408
    %v4290 = vunpack.c.0.s8 %v4289
    %v4291 = vlaneseq
    %v4292 = vshrl.u32 %v4291, 7
    %v4293 = vsub.s32 %v4290, %v4292
    %v4294 = vrot.slane %v4286, %v4293
    %v4296 = vunpack.c.l.s4 1934713408
    %v4297 = vunpack.c.0.s8 %v4296
    %v4298 = vlaneseq
    %v4299 = vshrl.u32 %v4298, 7
    %v4300 = vsub.s32 %v4297, %v4299
    %v4301 = vrot.slane %v4287, %v4300
    %v4302 = vcombine.high %v4278, 0.0
    %v4303 = vcombine.high %v4285, 0.0
    %v4304 = vcombine.high %v4294, 0.0
    %v4305 = vcombine.high %v4301, 0.0
    %v4306 = vcombine.low %v3650, %v4157
    %v4307 = vcombine.high %v3650, %v4157
    %v4309 = vunpack.c.l.s4 1983009808
    %v4310 = vunpack.c.0.s8 %v4309
    %v4311 = vlaneseq
    %v4312 = vshrl.u32 %v4311, 7
    %v4313 = vsub.s32 %v4310, %v4312
    %v4314 = vrot.slane %v4306, %v4313
    %v4316 = vunpack.c.l.s4 1983009808
    %v4317 = vunpack.c.0.s8 %v4316
    %v4318 = vlaneseq
    %v4319 = vshrl.u32 %v4318, 7
    %v4320 = vsub.s32 %v4317, %v4319
    %v4321 = vrot.slane %v4307, %v4320
    %v4322 = vcombine.low %v4148, %v4166
    %v4323 = vcombine.high %v4148, %v4166
    %v4325 = vunpack.c.l.s4 1983009808
    %v4326 = vunpack.c.0.s8 %v4325
    %v4327 = vlaneseq
    %v4328 = vshrl.u32 %v4327, 7
    %v4329 = vsub.s32 %v4326, %v4328
    %v4330 = vrot.slane %v4322, %v4329
    %v4332 = vunpack.c.l.s4 1983009808
    %v4333 = vunpack.c.0.s8 %v4332
    %v4334 = vlaneseq
    %v4335 = vshrl.u32 %v4334, 7
    %v4336 = vsub.s32 %v4333, %v4335
    %v4337 = vrot.slane %v4323, %v4336
    %v4338 = vcombine.low %v4314, %v4330
    %v4339 = vcombine.high %v4314, %v4330
    %v4341 = vunpack.c.l.s4 1934713408
    %v4342 = vunpack.c.0.s8 %v4341
    %v4343 = vlaneseq
    %v4344 = vshrl.u32 %v4343, 7
    %v4345 = vsub.s32 %v4342, %v4344
    %v4346 = vrot.slane %v4338, %v4345
    %v4348 = vunpack.c.l.s4 1934713408
    %v4349 = vunpack.c.0.s8 %v4348
    %v4350 = vlaneseq
    %v4351 = vshrl.u32 %v4350, 7
    %v4352 = vsub.s32 %v4349, %v4351
    %v4353 = vrot.slane %v4339, %v4352
    %v4354 = vcombine.low %v4321, %v4337
    %v4355 = vcombine.high %v4321, %v4337
    %v4357 = vunpack.c.l.s4 1934713408
    %v4358 = vunpack.c.0.s8 %v4357
    %v4359 = vlaneseq
    %v4360 = vshrl.u32 %v4359, 7
    %v4361 = vsub.s32 %v4358, %v4360
    %v4362 = vrot.slane %v4354, %v4361
    %v4364 = vunpack.c.l.s4 1934713408
    %v4365 = vunpack.c.0.s8 %v4364
    %v4366 = vlaneseq
    %v4367 = vshrl.u32 %v4366, 7
    %v4368 = vsub.s32 %v4365, %v4367
    %v4369 = vrot.slane %v4355, %v4368
    %v4370 = vcombine.high %v4346, 0.0
    %v4371 = vcombine.high %v4353, 0.0
    %v4372 = vcombine.high %v4362, 0.0
    %v4373 = vcombine.high %v4369, 0.0
    %v4374 = vcombine.low %v4210, %v4217
    %v4376 = vunpack.c.l.s4 1983009808
    %v4377 = vunpack.c.0.s8 %v4376
    %v4378 = vlaneseq
    %v4379 = vshrl.u32 %v4378, 7
    %v4380 = vsub.s32 %v4377, %v4379
    %v4381 = vrot.slane %v4374, %v4380
    %v4382 = vcombine.low %v4234, %v4235
    %v4384 = vunpack.c.l.s4 1983009808
    %v4385 = vunpack.c.0.s8 %v4384
    %v4386 = vlaneseq
    %v4387 = vshrl.u32 %v4386, 7
    %v4388 = vsub.s32 %v4385, %v4387
    %v4389 = vrot.slane %v4382, %v4388
    %v4390 = vcombine.low %v4226, %v4233
    %v4392 = vunpack.c.l.s4 1983009808
    %v4393 = vunpack.c.0.s8 %v4392
    %v4394 = vlaneseq
    %v4395 = vshrl.u32 %v4394, 7
    %v4396 = vsub.s32 %v4393, %v4395
    %v4397 = vrot.slane %v4390, %v4396
    %v4398 = vcombine.low %v4236, %v4237
    %v4400 = vunpack.c.l.s4 1983009808
    %v4401 = vunpack.c.0.s8 %v4400
    %v4402 = vlaneseq
    %v4403 = vshrl.u32 %v4402, 7
    %v4404 = vsub.s32 %v4401, %v4403
    %v4405 = vrot.slane %v4398, %v4404
    %v4406 = vcombine.low %v4381, %v4389
    %v4407 = vcombine.high %v4381, %v4389
    %v4409 = vunpack.c.l.s4 1934713408
    %v4410 = vunpack.c.0.s8 %v4409
    %v4411 = vlaneseq
    %v4412 = vshrl.u32 %v4411, 7
    %v4413 = vsub.s32 %v4410, %v4412
    %v4414 = vrot.slane %v4406, %v4413
    %v4416 = vunpack.c.l.s4 1934713408
    %v4417 = vunpack.c.0.s8 %v4416
    %v4418 = vlaneseq
    %v4419 = vshrl.u32 %v4418, 7
    %v4420 = vsub.s32 %v4417, %v4419
    %v4421 = vrot.slane %v4407, %v4420
    %v4422 = vcombine.low %v4397, %v4405
    %v4423 = vcombine.high %v4397, %v4405
    %v4425 = vunpack.c.l.s4 1934713408
    %v4426 = vunpack.c.0.s8 %v4425
    %v4427 = vlaneseq
    %v4428 = vshrl.u32 %v4427, 7
    %v4429 = vsub.s32 %v4426, %v4428
    %v4430 = vrot.slane %v4422, %v4429
    %v4432 = vunpack.c.l.s4 1934713408
    %v4433 = vunpack.c.0.s8 %v4432
    %v4434 = vlaneseq
    %v4435 = vshrl.u32 %v4434, 7
    %v4436 = vsub.s32 %v4433, %v4435
    %v4437 = vrot.slane %v4423, %v4436
    %v4438 = vcombine.low %v4414, %v4430
    %v4439 = vcombine.high %v4414, %v4430
    %v4440 = vcombine.low %v4421, %v4437
    %v4441 = vcombine.high %v4421, %v4437
    %v4442 = vcombine.low %v4278, %v4285
    %v4444 = vunpack.c.l.s4 1983009808
    %v4445 = vunpack.c.0.s8 %v4444
    %v4446 = vlaneseq
    %v4447 = vshrl.u32 %v4446, 7
    %v4448 = vsub.s32 %v4445, %v4447
    %v4449 = vrot.slane %v4442, %v4448
    %v4450 = vcombine.low %v4302, %v4303
    %v4452 = vunpack.c.l.s4 1983009808
    %v4453 = vunpack.c.0.s8 %v4452
    %v4454 = vlaneseq
    %v4455 = vshrl.u32 %v4454, 7
    %v4456 = vsub.s32 %v4453, %v4455
    %v4457 = vrot.slane %v4450, %v4456
    %v4458 = vcombine.low %v4294, %v4301
    %v4460 = vunpack.c.l.s4 1983009808
    %v4461 = vunpack.c.0.s8 %v4460
    %v4462 = vlaneseq
    %v4463 = vshrl.u32 %v4462, 7
    %v4464 = vsub.s32 %v4461, %v4463
    %v4465 = vrot.slane %v4458, %v4464
    %v4466 = vcombine.low %v4304, %v4305
    %v4468 = vunpack.c.l.s4 1983009808
    %v4469 = vunpack.c.0.s8 %v4468
    %v4470 = vlaneseq
    %v4471 = vshrl.u32 %v4470, 7
    %v4472 = vsub.s32 %v4469, %v4471
    %v4473 = vrot.slane %v4466, %v4472
    %v4474 = vcombine.low %v4449, %v4457
    %v4475 = vcombine.high %v4449, %v4457
    %v4477 = vunpack.c.l.s4 1934713408
    %v4478 = vunpack.c.0.s8 %v4477
    %v4479 = vlaneseq
    %v4480 = vshrl.u32 %v4479, 7
    %v4481 = vsub.s32 %v4478, %v4480
    %v4482 = vrot.slane %v4474, %v4481
    %v4484 = vunpack.c.l.s4 1934713408
    %v4485 = vunpack.c.0.s8 %v4484
    %v4486 = vlaneseq
    %v4487 = vshrl.u32 %v4486, 7
    %v4488 = vsub.s32 %v4485, %v4487
    %v4489 = vrot.slane %v4475, %v4488
    %v4490 = vcombine.low %v4465, %v4473
    %v4491 = vcombine.high %v4465, %v4473
    %v4493 = vunpack.c.l.s4 1934713408
    %v4494 = vunpack.c.0.s8 %v4493
    %v4495 = vlaneseq
    %v4496 = vshrl.u32 %v4495, 7
    %v4497 = vsub.s32 %v4494, %v4496
    %v4498 = vrot.slane %v4490, %v4497
    %v4500 = vunpack.c.l.s4 1934713408
    %v4501 = vunpack.c.0.s8 %v4500
    %v4502 = vlaneseq
    %v4503 = vshrl.u32 %v4502, 7
    %v4504 = vsub.s32 %v4501, %v4503
    %v4505 = vrot.slane %v4491, %v4504
    %v4506 = vcombine.low %v4482, %v4498
    %v4507 = vcombine.high %v4482, %v4498
    %v4508 = vcombine.low %v4489, %v4505
    %v4509 = vcombine.high %v4489, %v4505
    %v4510 = vcombine.low %v4346, %v4353
    %v4512 = vunpack.c.l.s4 1983009808
    %v4513 = vunpack.c.0.s8 %v4512
    %v4514 = vlaneseq
    %v4515 = vshrl.u32 %v4514, 7
    %v4516 = vsub.s32 %v4513, %v4515
    %v4517 = vrot.slane %v4510, %v4516
    %v4518 = vcombine.low %v4370, %v4371
    %v4520 = vunpack.c.l.s4 1983009808
    %v4521 = vunpack.c.0.s8 %v4520
    %v4522 = vlaneseq
    %v4523 = vshrl.u32 %v4522, 7
    %v4524 = vsub.s32 %v4521, %v4523
    %v4525 = vrot.slane %v4518, %v4524
    %v4526 = vcombine.low %v4362, %v4369
    %v4528 = vunpack.c.l.s4 1983009808
    %v4529 = vunpack.c.0.s8 %v4528
    %v4530 = vlaneseq
    %v4531 = vshrl.u32 %v4530, 7
    %v4532 = vsub.s32 %v4529, %v4531
    %v4533 = vrot.slane %v4526, %v4532
    %v4534 = vcombine.low %v4372, %v4373
    %v4536 = vunpack.c.l.s4 1983009808
    %v4537 = vunpack.c.0.s8 %v4536
    %v4538 = vlaneseq
    %v4539 = vshrl.u32 %v4538, 7
    %v4540 = vsub.s32 %v4537, %v4539
    %v4541 = vrot.slane %v4534, %v4540
    %v4542 = vcombine.low %v4517, %v4525
    %v4543 = vcombine.high %v4517, %v4525
    %v4545 = vunpack.c.l.s4 1934713408
    %v4546 = vunpack.c.0.s8 %v4545
    %v4547 = vlaneseq
    %v4548 = vshrl.u32 %v4547, 7
    %v4549 = vsub.s32 %v4546, %v4548
    %v4550 = vrot.slane %v4542, %v4549
    %v4552 = vunpack.c.l.s4 1934713408
    %v4553 = vunpack.c.0.s8 %v4552
    %v4554 = vlaneseq
    %v4555 = vshrl.u32 %v4554, 7
    %v4556 = vsub.s32 %v4553, %v4555
    %v4557 = vrot.slane %v4543, %v4556
    %v4558 = vcombine.low %v4533, %v4541
    %v4559 = vcombine.high %v4533, %v4541
    %v4561 = vunpack.c.l.s4 1934713408
    %v4562 = vunpack.c.0.s8 %v4561
    %v4563 = vlaneseq
    %v4564 = vshrl.u32 %v4563, 7
    %v4565 = vsub.s32 %v4562, %v4564
    %v4566 = vrot.slane %v4558, %v4565
    %v4568 = vunpack.c.l.s4 1934713408
    %v4569 = vunpack.c.0.s8 %v4568
    %v4570 = vlaneseq
    %v4571 = vshrl.u32 %v4570, 7
    %v4572 = vsub.s32 %v4569, %v4571
    %v4573 = vrot.slane %v4559, %v4572
    %v4574 = vcombine.low %v4550, %v4566
    %v4575 = vcombine.high %v4550, %v4566
    %v4576 = vcombine.low %v4557, %v4573
    %v4577 = vcombine.high %v4557, %v4573
    %4581 = vrot.lane.b32.xlu0 %v3689, 96
    %v4582 = vpop.permute.xlu0 %4581
    %4583 = vrot.lane.b32.xlu0 %v3692, 96
    %v4584 = vpop.permute.xlu0 %4583
    %4585 = vrot.lane.b32.xlu0 %v3697, 96
    %v4586 = vpop.permute.xlu0 %4585
    %4590 = vrot.lane.b32.xlu0 %v3689, 64
    %v4591 = vpop.permute.xlu0 %4590
    %4592 = vrot.lane.b32.xlu0 %v3692, 64
    %v4593 = vpop.permute.xlu0 %4592
    %4594 = vrot.lane.b32.xlu0 %v3697, 64
    %v4595 = vpop.permute.xlu0 %4594
    %4599 = vrot.lane.b32.xlu0 %v3689, 32
    %v4600 = vpop.permute.xlu0 %4599
    %4601 = vrot.lane.b32.xlu0 %v3692, 32
    %v4602 = vpop.permute.xlu0 %4601
    %4603 = vrot.lane.b32.xlu0 %v3697, 32
    %v4604 = vpop.permute.xlu0 %4603
    %v4608 = vcombine.low %v3689, %v4591
    %v4609 = vcombine.high %v3689, %v4591
    %v4611 = vunpack.c.l.s4 1983009808
    %v4612 = vunpack.c.0.s8 %v4611
    %v4613 = vlaneseq
    %v4614 = vshrl.u32 %v4613, 7
    %v4615 = vsub.s32 %v4612, %v4614
    %v4616 = vrot.slane %v4608, %v4615
    %v4618 = vunpack.c.l.s4 1983009808
    %v4619 = vunpack.c.0.s8 %v4618
    %v4620 = vlaneseq
    %v4621 = vshrl.u32 %v4620, 7
    %v4622 = vsub.s32 %v4619, %v4621
    %v4623 = vrot.slane %v4609, %v4622
    %v4624 = vcombine.low %v4582, %v4600
    %v4625 = vcombine.high %v4582, %v4600
    %v4627 = vunpack.c.l.s4 1983009808
    %v4628 = vunpack.c.0.s8 %v4627
    %v4629 = vlaneseq
    %v4630 = vshrl.u32 %v4629, 7
    %v4631 = vsub.s32 %v4628, %v4630
    %v4632 = vrot.slane %v4624, %v4631
    %v4634 = vunpack.c.l.s4 1983009808
    %v4635 = vunpack.c.0.s8 %v4634
    %v4636 = vlaneseq
    %v4637 = vshrl.u32 %v4636, 7
    %v4638 = vsub.s32 %v4635, %v4637
    %v4639 = vrot.slane %v4625, %v4638
    %v4640 = vcombine.low %v4616, %v4632
    %v4641 = vcombine.high %v4616, %v4632
    %v4643 = vunpack.c.l.s4 1934713408
    %v4644 = vunpack.c.0.s8 %v4643
    %v4645 = vlaneseq
    %v4646 = vshrl.u32 %v4645, 7
    %v4647 = vsub.s32 %v4644, %v4646
    %v4648 = vrot.slane %v4640, %v4647
    %v4650 = vunpack.c.l.s4 1934713408
    %v4651 = vunpack.c.0.s8 %v4650
    %v4652 = vlaneseq
    %v4653 = vshrl.u32 %v4652, 7
    %v4654 = vsub.s32 %v4651, %v4653
    %v4655 = vrot.slane %v4641, %v4654
    %v4656 = vcombine.low %v4623, %v4639
    %v4657 = vcombine.high %v4623, %v4639
    %v4659 = vunpack.c.l.s4 1934713408
    %v4660 = vunpack.c.0.s8 %v4659
    %v4661 = vlaneseq
    %v4662 = vshrl.u32 %v4661, 7
    %v4663 = vsub.s32 %v4660, %v4662
    %v4664 = vrot.slane %v4656, %v4663
    %v4666 = vunpack.c.l.s4 1934713408
    %v4667 = vunpack.c.0.s8 %v4666
    %v4668 = vlaneseq
    %v4669 = vshrl.u32 %v4668, 7
    %v4670 = vsub.s32 %v4667, %v4669
    %v4671 = vrot.slane %v4657, %v4670
    %v4672 = vcombine.high %v4648, 0.0
    %v4673 = vcombine.high %v4655, 0.0
    %v4674 = vcombine.high %v4664, 0.0
    %v4675 = vcombine.high %v4671, 0.0
    %v4676 = vcombine.low %v3692, %v4593
    %v4677 = vcombine.high %v3692, %v4593
    %v4679 = vunpack.c.l.s4 1983009808
    %v4680 = vunpack.c.0.s8 %v4679
    %v4681 = vlaneseq
    %v4682 = vshrl.u32 %v4681, 7
    %v4683 = vsub.s32 %v4680, %v4682
    %v4684 = vrot.slane %v4676, %v4683
    %v4686 = vunpack.c.l.s4 1983009808
    %v4687 = vunpack.c.0.s8 %v4686
    %v4688 = vlaneseq
    %v4689 = vshrl.u32 %v4688, 7
    %v4690 = vsub.s32 %v4687, %v4689
    %v4691 = vrot.slane %v4677, %v4690
    %v4692 = vcombine.low %v4584, %v4602
    %v4693 = vcombine.high %v4584, %v4602
    %v4695 = vunpack.c.l.s4 1983009808
    %v4696 = vunpack.c.0.s8 %v4695
    %v4697 = vlaneseq
    %v4698 = vshrl.u32 %v4697, 7
    %v4699 = vsub.s32 %v4696, %v4698
    %v4700 = vrot.slane %v4692, %v4699
    %v4702 = vunpack.c.l.s4 1983009808
    %v4703 = vunpack.c.0.s8 %v4702
    %v4704 = vlaneseq
    %v4705 = vshrl.u32 %v4704, 7
    %v4706 = vsub.s32 %v4703, %v4705
    %v4707 = vrot.slane %v4693, %v4706
    %v4708 = vcombine.low %v4684, %v4700
    %v4709 = vcombine.high %v4684, %v4700
    %v4711 = vunpack.c.l.s4 1934713408
    %v4712 = vunpack.c.0.s8 %v4711
    %v4713 = vlaneseq
    %v4714 = vshrl.u32 %v4713, 7
    %v4715 = vsub.s32 %v4712, %v4714
    %v4716 = vrot.slane %v4708, %v4715
    %v4718 = vunpack.c.l.s4 1934713408
    %v4719 = vunpack.c.0.s8 %v4718
    %v4720 = vlaneseq
    %v4721 = vshrl.u32 %v4720, 7
    %v4722 = vsub.s32 %v4719, %v4721
    %v4723 = vrot.slane %v4709, %v4722
    %v4724 = vcombine.low %v4691, %v4707
    %v4725 = vcombine.high %v4691, %v4707
    %v4727 = vunpack.c.l.s4 1934713408
    %v4728 = vunpack.c.0.s8 %v4727
    %v4729 = vlaneseq
    %v4730 = vshrl.u32 %v4729, 7
    %v4731 = vsub.s32 %v4728, %v4730
    %v4732 = vrot.slane %v4724, %v4731
    %v4734 = vunpack.c.l.s4 1934713408
    %v4735 = vunpack.c.0.s8 %v4734
    %v4736 = vlaneseq
    %v4737 = vshrl.u32 %v4736, 7
    %v4738 = vsub.s32 %v4735, %v4737
    %v4739 = vrot.slane %v4725, %v4738
    %v4740 = vcombine.high %v4716, 0.0
    %v4741 = vcombine.high %v4723, 0.0
    %v4742 = vcombine.high %v4732, 0.0
    %v4743 = vcombine.high %v4739, 0.0
    %v4744 = vcombine.low %v3697, %v4595
    %v4745 = vcombine.high %v3697, %v4595
    %v4747 = vunpack.c.l.s4 1983009808
    %v4748 = vunpack.c.0.s8 %v4747
    %v4749 = vlaneseq
    %v4750 = vshrl.u32 %v4749, 7
    %v4751 = vsub.s32 %v4748, %v4750
    %v4752 = vrot.slane %v4744, %v4751
    %v4754 = vunpack.c.l.s4 1983009808
    %v4755 = vunpack.c.0.s8 %v4754
    %v4756 = vlaneseq
    %v4757 = vshrl.u32 %v4756, 7
    %v4758 = vsub.s32 %v4755, %v4757
    %v4759 = vrot.slane %v4745, %v4758
    %v4760 = vcombine.low %v4586, %v4604
    %v4761 = vcombine.high %v4586, %v4604
    %v4763 = vunpack.c.l.s4 1983009808
    %v4764 = vunpack.c.0.s8 %v4763
    %v4765 = vlaneseq
    %v4766 = vshrl.u32 %v4765, 7
    %v4767 = vsub.s32 %v4764, %v4766
    %v4768 = vrot.slane %v4760, %v4767
    %v4770 = vunpack.c.l.s4 1983009808
    %v4771 = vunpack.c.0.s8 %v4770
    %v4772 = vlaneseq
    %v4773 = vshrl.u32 %v4772, 7
    %v4774 = vsub.s32 %v4771, %v4773
    %v4775 = vrot.slane %v4761, %v4774
    %v4776 = vcombine.low %v4752, %v4768
    %v4777 = vcombine.high %v4752, %v4768
    %v4779 = vunpack.c.l.s4 1934713408
    %v4780 = vunpack.c.0.s8 %v4779
    %v4781 = vlaneseq
    %v4782 = vshrl.u32 %v4781, 7
    %v4783 = vsub.s32 %v4780, %v4782
    %v4784 = vrot.slane %v4776, %v4783
    %v4786 = vunpack.c.l.s4 1934713408
    %v4787 = vunpack.c.0.s8 %v4786
    %v4788 = vlaneseq
    %v4789 = vshrl.u32 %v4788, 7
    %v4790 = vsub.s32 %v4787, %v4789
    %v4791 = vrot.slane %v4777, %v4790
    %v4792 = vcombine.low %v4759, %v4775
    %v4793 = vcombine.high %v4759, %v4775
    %v4795 = vunpack.c.l.s4 1934713408
    %v4796 = vunpack.c.0.s8 %v4795
    %v4797 = vlaneseq
    %v4798 = vshrl.u32 %v4797, 7
    %v4799 = vsub.s32 %v4796, %v4798
    %v4800 = vrot.slane %v4792, %v4799
    %v4802 = vunpack.c.l.s4 1934713408
    %v4803 = vunpack.c.0.s8 %v4802
    %v4804 = vlaneseq
    %v4805 = vshrl.u32 %v4804, 7
    %v4806 = vsub.s32 %v4803, %v4805
    %v4807 = vrot.slane %v4793, %v4806
    %v4808 = vcombine.high %v4784, 0.0
    %v4809 = vcombine.high %v4791, 0.0
    %v4810 = vcombine.high %v4800, 0.0
    %v4811 = vcombine.high %v4807, 0.0
    %v4812 = vcombine.low %v4648, %v4655
    %v4814 = vunpack.c.l.s4 1983009808
    %v4815 = vunpack.c.0.s8 %v4814
    %v4816 = vlaneseq
    %v4817 = vshrl.u32 %v4816, 7
    %v4818 = vsub.s32 %v4815, %v4817
    %v4819 = vrot.slane %v4812, %v4818
    %v4820 = vcombine.low %v4672, %v4673
    %v4822 = vunpack.c.l.s4 1983009808
    %v4823 = vunpack.c.0.s8 %v4822
    %v4824 = vlaneseq
    %v4825 = vshrl.u32 %v4824, 7
    %v4826 = vsub.s32 %v4823, %v4825
    %v4827 = vrot.slane %v4820, %v4826
    %v4828 = vcombine.low %v4664, %v4671
    %v4830 = vunpack.c.l.s4 1983009808
    %v4831 = vunpack.c.0.s8 %v4830
    %v4832 = vlaneseq
    %v4833 = vshrl.u32 %v4832, 7
    %v4834 = vsub.s32 %v4831, %v4833
    %v4835 = vrot.slane %v4828, %v4834
    %v4836 = vcombine.low %v4674, %v4675
    %v4838 = vunpack.c.l.s4 1983009808
    %v4839 = vunpack.c.0.s8 %v4838
    %v4840 = vlaneseq
    %v4841 = vshrl.u32 %v4840, 7
    %v4842 = vsub.s32 %v4839, %v4841
    %v4843 = vrot.slane %v4836, %v4842
    %v4844 = vcombine.low %v4819, %v4827
    %v4845 = vcombine.high %v4819, %v4827
    %v4847 = vunpack.c.l.s4 1934713408
    %v4848 = vunpack.c.0.s8 %v4847
    %v4849 = vlaneseq
    %v4850 = vshrl.u32 %v4849, 7
    %v4851 = vsub.s32 %v4848, %v4850
    %v4852 = vrot.slane %v4844, %v4851
    %v4854 = vunpack.c.l.s4 1934713408
    %v4855 = vunpack.c.0.s8 %v4854
    %v4856 = vlaneseq
    %v4857 = vshrl.u32 %v4856, 7
    %v4858 = vsub.s32 %v4855, %v4857
    %v4859 = vrot.slane %v4845, %v4858
    %v4860 = vcombine.low %v4835, %v4843
    %v4861 = vcombine.high %v4835, %v4843
    %v4863 = vunpack.c.l.s4 1934713408
    %v4864 = vunpack.c.0.s8 %v4863
    %v4865 = vlaneseq
    %v4866 = vshrl.u32 %v4865, 7
    %v4867 = vsub.s32 %v4864, %v4866
    %v4868 = vrot.slane %v4860, %v4867
    %v4870 = vunpack.c.l.s4 1934713408
    %v4871 = vunpack.c.0.s8 %v4870
    %v4872 = vlaneseq
    %v4873 = vshrl.u32 %v4872, 7
    %v4874 = vsub.s32 %v4871, %v4873
    %v4875 = vrot.slane %v4861, %v4874
    %v4876 = vcombine.low %v4852, %v4868
    %v4877 = vcombine.high %v4852, %v4868
    %v4878 = vcombine.low %v4859, %v4875
    %v4879 = vcombine.high %v4859, %v4875
    %v4880 = vcombine.low %v4716, %v4723
    %v4882 = vunpack.c.l.s4 1983009808
    %v4883 = vunpack.c.0.s8 %v4882
    %v4884 = vlaneseq
    %v4885 = vshrl.u32 %v4884, 7
    %v4886 = vsub.s32 %v4883, %v4885
    %v4887 = vrot.slane %v4880, %v4886
    %v4888 = vcombine.low %v4740, %v4741
    %v4890 = vunpack.c.l.s4 1983009808
    %v4891 = vunpack.c.0.s8 %v4890
    %v4892 = vlaneseq
    %v4893 = vshrl.u32 %v4892, 7
    %v4894 = vsub.s32 %v4891, %v4893
    %v4895 = vrot.slane %v4888, %v4894
    %v4896 = vcombine.low %v4732, %v4739
    %v4898 = vunpack.c.l.s4 1983009808
    %v4899 = vunpack.c.0.s8 %v4898
    %v4900 = vlaneseq
    %v4901 = vshrl.u32 %v4900, 7
    %v4902 = vsub.s32 %v4899, %v4901
    %v4903 = vrot.slane %v4896, %v4902
    %v4904 = vcombine.low %v4742, %v4743
    %v4906 = vunpack.c.l.s4 1983009808
    %v4907 = vunpack.c.0.s8 %v4906
    %v4908 = vlaneseq
    %v4909 = vshrl.u32 %v4908, 7
    %v4910 = vsub.s32 %v4907, %v4909
    %v4911 = vrot.slane %v4904, %v4910
    %v4912 = vcombine.low %v4887, %v4895
    %v4913 = vcombine.high %v4887, %v4895
    %v4915 = vunpack.c.l.s4 1934713408
    %v4916 = vunpack.c.0.s8 %v4915
    %v4917 = vlaneseq
    %v4918 = vshrl.u32 %v4917, 7
    %v4919 = vsub.s32 %v4916, %v4918
    %v4920 = vrot.slane %v4912, %v4919
    %v4922 = vunpack.c.l.s4 1934713408
    %v4923 = vunpack.c.0.s8 %v4922
    %v4924 = vlaneseq
    %v4925 = vshrl.u32 %v4924, 7
    %v4926 = vsub.s32 %v4923, %v4925
    %v4927 = vrot.slane %v4913, %v4926
    %v4928 = vcombine.low %v4903, %v4911
    %v4929 = vcombine.high %v4903, %v4911
    %v4931 = vunpack.c.l.s4 1934713408
    %v4932 = vunpack.c.0.s8 %v4931
    %v4933 = vlaneseq
    %v4934 = vshrl.u32 %v4933, 7
    %v4935 = vsub.s32 %v4932, %v4934
    %v4936 = vrot.slane %v4928, %v4935
    %v4938 = vunpack.c.l.s4 1934713408
    %v4939 = vunpack.c.0.s8 %v4938
    %v4940 = vlaneseq
    %v4941 = vshrl.u32 %v4940, 7
    %v4942 = vsub.s32 %v4939, %v4941
    %v4943 = vrot.slane %v4929, %v4942
    %v4944 = vcombine.low %v4920, %v4936
    %v4945 = vcombine.high %v4920, %v4936
    %v4946 = vcombine.low %v4927, %v4943
    %v4947 = vcombine.high %v4927, %v4943
    %v4948 = vcombine.low %v4784, %v4791
    %v4950 = vunpack.c.l.s4 1983009808
    %v4951 = vunpack.c.0.s8 %v4950
    %v4952 = vlaneseq
    %v4953 = vshrl.u32 %v4952, 7
    %v4954 = vsub.s32 %v4951, %v4953
    %v4955 = vrot.slane %v4948, %v4954
    %v4956 = vcombine.low %v4808, %v4809
    %v4958 = vunpack.c.l.s4 1983009808
    %v4959 = vunpack.c.0.s8 %v4958
    %v4960 = vlaneseq
    %v4961 = vshrl.u32 %v4960, 7
    %v4962 = vsub.s32 %v4959, %v4961
    %v4963 = vrot.slane %v4956, %v4962
    %v4964 = vcombine.low %v4800, %v4807
    %v4966 = vunpack.c.l.s4 1983009808
    %v4967 = vunpack.c.0.s8 %v4966
    %v4968 = vlaneseq
    %v4969 = vshrl.u32 %v4968, 7
    %v4970 = vsub.s32 %v4967, %v4969
    %v4971 = vrot.slane %v4964, %v4970
    %v4972 = vcombine.low %v4810, %v4811
    %v4974 = vunpack.c.l.s4 1983009808
    %v4975 = vunpack.c.0.s8 %v4974
    %v4976 = vlaneseq
    %v4977 = vshrl.u32 %v4976, 7
    %v4978 = vsub.s32 %v4975, %v4977
    %v4979 = vrot.slane %v4972, %v4978
    %v4980 = vcombine.low %v4955, %v4963
    %v4981 = vcombine.high %v4955, %v4963
    %v4983 = vunpack.c.l.s4 1934713408
    %v4984 = vunpack.c.0.s8 %v4983
    %v4985 = vlaneseq
    %v4986 = vshrl.u32 %v4985, 7
    %v4987 = vsub.s32 %v4984, %v4986
    %v4988 = vrot.slane %v4980, %v4987
    %v4990 = vunpack.c.l.s4 1934713408
    %v4991 = vunpack.c.0.s8 %v4990
    %v4992 = vlaneseq
    %v4993 = vshrl.u32 %v4992, 7
    %v4994 = vsub.s32 %v4991, %v4993
    %v4995 = vrot.slane %v4981, %v4994
    %v4996 = vcombine.low %v4971, %v4979
    %v4997 = vcombine.high %v4971, %v4979
    %v4999 = vunpack.c.l.s4 1934713408
    %v5000 = vunpack.c.0.s8 %v4999
    %v5001 = vlaneseq
    %v5002 = vshrl.u32 %v5001, 7
    %v5003 = vsub.s32 %v5000, %v5002
    %v5004 = vrot.slane %v4996, %v5003
    %v5006 = vunpack.c.l.s4 1934713408
    %v5007 = vunpack.c.0.s8 %v5006
    %v5008 = vlaneseq
    %v5009 = vshrl.u32 %v5008, 7
    %v5010 = vsub.s32 %v5007, %v5009
    %v5011 = vrot.slane %v4997, %v5010
    %v5012 = vcombine.low %v4988, %v5004
    %v5013 = vcombine.high %v4988, %v5004
    %v5014 = vcombine.low %v4995, %v5011
    %v5015 = vcombine.high %v4995, %v5011
    %v5016 = vpack.c.bf16 %v4068, %v4000
    %v5017 = vpack.c.bf16 %v4136, %v4136
    %v5018 = vpack.c.bf16 %v4069, %v4001
    %v5019 = vpack.c.bf16 %v4137, %v4137
    %v5020 = vpack.c.bf16 %v4070, %v4002
    %v5021 = vpack.c.bf16 %v4138, %v4138
    %v5022 = vpack.c.bf16 %v4071, %v4003
    %v5023 = vpack.c.bf16 %v4139, %v4139
    %v5024 = vpack.c.bf16 %v4506, %v4438
    %v5025 = vpack.c.bf16 %v4574, %v4574
    %v5026 = vpack.c.bf16 %v4507, %v4439
    %v5027 = vpack.c.bf16 %v4575, %v4575
    %v5028 = vpack.c.bf16 %v4508, %v4440
    %v5029 = vpack.c.bf16 %v4576, %v4576
    %v5030 = vpack.c.bf16 %v4509, %v4441
    %v5031 = vpack.c.bf16 %v4577, %v4577
    %v5033 = vsel %vm1912, %v5016, 0
    %v5036 = vsel %vm1912, %v5017, 0
    %v5039 = vsel %vm1912, %v5024, 0
    %v5042 = vsel %vm1912, %v5025, 0
    %5044 = vmatprep.subr.bf16.mxu0 0
    %5045 = vmatpush1.bf16.xpose.msra.mxu0 %v5039
    %5046 = vmatprep.subr.bf16.mxu0 0
    %5047 = vmatpush1.bf16.xpose.msra.mxu0 %v5042
    %5048 = vmatprep.subr.bf16.mxu0 0
    %5049 = vmatpush1.bf16.xpose.msra.mxu0 0
    %5050 = vmatprep.subr.bf16.mxu0 0
    %5051 = vmatpush1.bf16.xpose.msra.mxu0 0
    %5052 = vmatprep.subr.bf16.mxu0 0
    %5053 = vmatpush1.bf16.xpose.msra.mxu0 0
    %5054 = vmatprep.subr.bf16.mxu0 0
    %5055 = vmatpush1.bf16.xpose.msra.mxu0 0
    %5056 = vmatprep.subr.bf16.mxu0 0
    %5057 = vmatpush1.bf16.xpose.msra.mxu0 0
    %5058 = vmatprep.subr.bf16.mxu0 0
    %5059 = vmatpush1.bf16.xpose.msra.mxu0 0
    %5060 = vmatprep.subr.bf16.mxu0 0
    %5061 = vmatpush1.bf16.xpose.msra.mxu0 0
    %5062 = vmatprep.subr.bf16.mxu0 0
    %5063 = vmatpush1.bf16.xpose.msra.mxu0 0
    %5064 = vmatprep.subr.bf16.mxu0 0
    %5065 = vmatpush1.bf16.xpose.msra.mxu0 0
    %5066 = vmatprep.subr.bf16.mxu0 0
    %5067 = vmatpush1.bf16.xpose.msra.mxu0 0
    %5068 = vmatprep.subr.bf16.mxu0 0
    %5069 = vmatpush1.bf16.xpose.msra.mxu0 0
    %5070 = vmatprep.subr.bf16.mxu0 0
    %5071 = vmatpush1.bf16.xpose.msra.mxu0 0
    %5072 = vmatprep.subr.bf16.mxu0 0
    %5073 = vmatpush1.bf16.xpose.msra.mxu0 0
    %5074 = vmatprep.subr.bf16.mxu0 0
    %5075 = vmatpush1.bf16.xpose.msra.mxu0 0
    %5076 = vmatprep.mubr.bf16.mxu0 0
    %5077 = vmatmul.mubr.bf16.gmra.mrb[0].mxu0 %v5033
    %v5078 = vpop.f32.mrb[0].mxu0
    %v5079 = vadd.f32 %v293, %v5078
    %v5080 = vpop.f32.mrb[0].mxu0
    %v5081 = vpop.f32.mrb[0].mxu0
    %v5082 = vadd.f32 %v294, %v5081
    %v5083 = vpop.f32.mrb[0].mxu0
    %5084 = vmatprep.mubr.bf16.mxu0 0
    %5085 = vmatmul.mubr.bf16.gmra.mrb[0].mxu0 %v5036
    %v5086 = vpop.f32.mrb[0].mxu0
    %v5087 = vadd.f32 %v295, %v5086
    %v5088 = vpop.f32.mrb[0].mxu0
    %v5089 = vpop.f32.mrb[0].mxu0
    %v5090 = vpop.f32.mrb[0].mxu0
    %5091 = vdwg.mxu0
    %v5093 = vsel %vm1912, %v5018, 0
    %v5096 = vsel %vm1912, %v5019, 0
    %v5099 = vsel %vm1912, %v5026, 0
    %v5102 = vsel %vm1912, %v5027, 0
    %5104 = vmatprep.subr.bf16.mxu0 0
    %5105 = vmatpush1.bf16.xpose.msra.mxu0 %v5099
    %5106 = vmatprep.subr.bf16.mxu0 0
    %5107 = vmatpush1.bf16.xpose.msra.mxu0 %v5102
    %5108 = vmatprep.subr.bf16.mxu0 0
    %5109 = vmatpush1.bf16.xpose.msra.mxu0 0
    %5110 = vmatprep.subr.bf16.mxu0 0
    %5111 = vmatpush1.bf16.xpose.msra.mxu0 0
    %5112 = vmatprep.subr.bf16.mxu0 0
    %5113 = vmatpush1.bf16.xpose.msra.mxu0 0
    %5114 = vmatprep.subr.bf16.mxu0 0
    %5115 = vmatpush1.bf16.xpose.msra.mxu0 0
    %5116 = vmatprep.subr.bf16.mxu0 0
    %5117 = vmatpush1.bf16.xpose.msra.mxu0 0
    %5118 = vmatprep.subr.bf16.mxu0 0
    %5119 = vmatpush1.bf16.xpose.msra.mxu0 0
    %5120 = vmatprep.subr.bf16.mxu0 0
    %5121 = vmatpush1.bf16.xpose.msra.mxu0 0
    %5122 = vmatprep.subr.bf16.mxu0 0
    %5123 = vmatpush1.bf16.xpose.msra.mxu0 0
    %5124 = vmatprep.subr.bf16.mxu0 0
    %5125 = vmatpush1.bf16.xpose.msra.mxu0 0
    %5126 = vmatprep.subr.bf16.mxu0 0
    %5127 = vmatpush1.bf16.xpose.msra.mxu0 0
    %5128 = vmatprep.subr.bf16.mxu0 0
    %5129 = vmatpush1.bf16.xpose.msra.mxu0 0
    %5130 = vmatprep.subr.bf16.mxu0 0
    %5131 = vmatpush1.bf16.xpose.msra.mxu0 0
    %5132 = vmatprep.subr.bf16.mxu0 0
    %5133 = vmatpush1.bf16.xpose.msra.mxu0 0
    %5134 = vmatprep.subr.bf16.mxu0 0
    %5135 = vmatpush1.bf16.xpose.msra.mxu0 0
    %5136 = vmatprep.mubr.bf16.mxu0 0
    %5137 = vmatmul.mubr.bf16.gmra.mrb[0].mxu0 %v5093
    %v5138 = vpop.f32.mrb[0].mxu0
    %v5139 = vadd.f32 %v293, %v5138
    %v5140 = vpop.f32.mrb[0].mxu0
    %v5141 = vpop.f32.mrb[0].mxu0
    %v5142 = vadd.f32 %v294, %v5141
    %v5143 = vpop.f32.mrb[0].mxu0
    %5144 = vmatprep.mubr.bf16.mxu0 0
    %5145 = vmatmul.mubr.bf16.gmra.mrb[0].mxu0 %v5096
    %v5146 = vpop.f32.mrb[0].mxu0
    %v5147 = vadd.f32 %v295, %v5146
    %v5148 = vpop.f32.mrb[0].mxu0
    %v5149 = vpop.f32.mrb[0].mxu0
    %v5150 = vpop.f32.mrb[0].mxu0
    %5151 = vdwg.mxu0
    %v5153 = vsel %vm1912, %v5020, 0
    %v5156 = vsel %vm1912, %v5021, 0
    %v5159 = vsel %vm1912, %v5028, 0
    %v5162 = vsel %vm1912, %v5029, 0
    %5164 = vmatprep.subr.bf16.mxu0 0
    %5165 = vmatpush1.bf16.xpose.msra.mxu0 %v5159
    %5166 = vmatprep.subr.bf16.mxu0 0
    %5167 = vmatpush1.bf16.xpose.msra.mxu0 %v5162
    %5168 = vmatprep.subr.bf16.mxu0 0
    %5169 = vmatpush1.bf16.xpose.msra.mxu0 0
    %5170 = vmatprep.subr.bf16.mxu0 0
    %5171 = vmatpush1.bf16.xpose.msra.mxu0 0
    %5172 = vmatprep.subr.bf16.mxu0 0
    %5173 = vmatpush1.bf16.xpose.msra.mxu0 0
    %5174 = vmatprep.subr.bf16.mxu0 0
    %5175 = vmatpush1.bf16.xpose.msra.mxu0 0
    %5176 = vmatprep.subr.bf16.mxu0 0
    %5177 = vmatpush1.bf16.xpose.msra.mxu0 0
    %5178 = vmatprep.subr.bf16.mxu0 0
    %5179 = vmatpush1.bf16.xpose.msra.mxu0 0
    %5180 = vmatprep.subr.bf16.mxu0 0
    %5181 = vmatpush1.bf16.xpose.msra.mxu0 0
    %5182 = vmatprep.subr.bf16.mxu0 0
    %5183 = vmatpush1.bf16.xpose.msra.mxu0 0
    %5184 = vmatprep.subr.bf16.mxu0 0
    %5185 = vmatpush1.bf16.xpose.msra.mxu0 0
    %5186 = vmatprep.subr.bf16.mxu0 0
    %5187 = vmatpush1.bf16.xpose.msra.mxu0 0
    %5188 = vmatprep.subr.bf16.mxu0 0
    %5189 = vmatpush1.bf16.xpose.msra.mxu0 0
    %5190 = vmatprep.subr.bf16.mxu0 0
    %5191 = vmatpush1.bf16.xpose.msra.mxu0 0
    %5192 = vmatprep.subr.bf16.mxu0 0
    %5193 = vmatpush1.bf16.xpose.msra.mxu0 0
    %5194 = vmatprep.subr.bf16.mxu0 0
    %5195 = vmatpush1.bf16.xpose.msra.mxu0 0
    %5196 = vmatprep.mubr.bf16.mxu0 0
    %5197 = vmatmul.mubr.bf16.gmra.mrb[0].mxu0 %v5153
    %v5198 = vpop.f32.mrb[0].mxu0
    %v5199 = vadd.f32 %v293, %v5198
    %v5200 = vpop.f32.mrb[0].mxu0
    %v5201 = vpop.f32.mrb[0].mxu0
    %v5202 = vadd.f32 %v294, %v5201
    %v5203 = vpop.f32.mrb[0].mxu0
    %5204 = vmatprep.mubr.bf16.mxu0 0
    %5205 = vmatmul.mubr.bf16.gmra.mrb[0].mxu0 %v5156
    %v5206 = vpop.f32.mrb[0].mxu0
    %v5207 = vadd.f32 %v295, %v5206
    %v5208 = vpop.f32.mrb[0].mxu0
    %v5209 = vpop.f32.mrb[0].mxu0
    %v5210 = vpop.f32.mrb[0].mxu0
    %5211 = vdwg.mxu0
    %v5213 = vsel %vm1912, %v5022, 0
    %v5216 = vsel %vm1912, %v5023, 0
    %v5219 = vsel %vm1912, %v5030, 0
    %v5222 = vsel %vm1912, %v5031, 0
    %5224 = vmatprep.subr.bf16.mxu0 0
    %5225 = vmatpush1.bf16.xpose.msra.mxu0 %v5219
    %5226 = vmatprep.subr.bf16.mxu0 0
    %5227 = vmatpush1.bf16.xpose.msra.mxu0 %v5222
    %5228 = vmatprep.subr.bf16.mxu0 0
    %5229 = vmatpush1.bf16.xpose.msra.mxu0 0
    %5230 = vmatprep.subr.bf16.mxu0 0
    %5231 = vmatpush1.bf16.xpose.msra.mxu0 0
    %5232 = vmatprep.subr.bf16.mxu0 0
    %5233 = vmatpush1.bf16.xpose.msra.mxu0 0
    %5234 = vmatprep.subr.bf16.mxu0 0
    %5235 = vmatpush1.bf16.xpose.msra.mxu0 0
    %5236 = vmatprep.subr.bf16.mxu0 0
    %5237 = vmatpush1.bf16.xpose.msra.mxu0 0
    %5238 = vmatprep.subr.bf16.mxu0 0
    %5239 = vmatpush1.bf16.xpose.msra.mxu0 0
    %5240 = vmatprep.subr.bf16.mxu0 0
    %5241 = vmatpush1.bf16.xpose.msra.mxu0 0
    %5242 = vmatprep.subr.bf16.mxu0 0
    %5243 = vmatpush1.bf16.xpose.msra.mxu0 0
    %5244 = vmatprep.subr.bf16.mxu0 0
    %5245 = vmatpush1.bf16.xpose.msra.mxu0 0
    %5246 = vmatprep.subr.bf16.mxu0 0
    %5247 = vmatpush1.bf16.xpose.msra.mxu0 0
    %5248 = vmatprep.subr.bf16.mxu0 0
    %5249 = vmatpush1.bf16.xpose.msra.mxu0 0
    %5250 = vmatprep.subr.bf16.mxu0 0
    %5251 = vmatpush1.bf16.xpose.msra.mxu0 0
    %5252 = vmatprep.subr.bf16.mxu0 0
    %5253 = vmatpush1.bf16.xpose.msra.mxu0 0
    %5254 = vmatprep.subr.bf16.mxu0 0
    %5255 = vmatpush1.bf16.xpose.msra.mxu0 0
    %5256 = vmatprep.mubr.bf16.mxu0 0
    %5257 = vmatmul.mubr.bf16.gmra.mrb[0].mxu0 %v5213
    %v5258 = vpop.f32.mrb[0].mxu0
    %v5259 = vadd.f32 %v293, %v5258
    %v5260 = vpop.f32.mrb[0].mxu0
    %v5261 = vpop.f32.mrb[0].mxu0
    %v5262 = vadd.f32 %v294, %v5261
    %v5263 = vpop.f32.mrb[0].mxu0
    %5264 = vmatprep.mubr.bf16.mxu0 0
    %5265 = vmatmul.mubr.bf16.gmra.mrb[0].mxu0 %v5216
    %v5266 = vpop.f32.mrb[0].mxu0
    %v5267 = vadd.f32 %v295, %v5266
    %v5268 = vpop.f32.mrb[0].mxu0
    %v5269 = vpop.f32.mrb[0].mxu0
    %v5270 = vpop.f32.mrb[0].mxu0
    %5271 = vdwg.mxu0
    %v5272 = vsel %vm2153, %v5079, -inf
    %5273 = vmax.xlane.f32.xlu0 %v5272
    %v5274 = vpop.xlane.xlu0 %5273
    %v5275 = vsel %vm2153, %v5082, -inf
    %5276 = vmax.xlane.f32.xlu0 %v5275
    %v5277 = vpop.xlane.xlu0 %5276
    %v5278 = vsel %vm2153, %v5087, -inf
    %5279 = vmax.xlane.f32.xlu0 %v5278
    %v5280 = vpop.xlane.xlu0 %5279
    %v5281 = vsel %vm2153, %v5139, -inf
    %5282 = vmax.xlane.f32.xlu0 %v5281
    %v5283 = vpop.xlane.xlu0 %5282
    %v5284 = vsel %vm2153, %v5142, -inf
    %5285 = vmax.xlane.f32.xlu0 %v5284
    %v5286 = vpop.xlane.xlu0 %5285
    %v5287 = vsel %vm2153, %v5147, -inf
    %5288 = vmax.xlane.f32.xlu0 %v5287
    %v5289 = vpop.xlane.xlu0 %5288
    %v5290 = vsel %vm2153, %v5199, -inf
    %5291 = vmax.xlane.f32.xlu0 %v5290
    %v5292 = vpop.xlane.xlu0 %5291
    %v5293 = vsel %vm2153, %v5202, -inf
    %5294 = vmax.xlane.f32.xlu0 %v5293
    %v5295 = vpop.xlane.xlu0 %5294
    %v5296 = vsel %vm2153, %v5207, -inf
    %5297 = vmax.xlane.f32.xlu0 %v5296
    %v5298 = vpop.xlane.xlu0 %5297
    %v5299 = vsel %vm2153, %v5259, -inf
    %5300 = vmax.xlane.f32.xlu0 %v5299
    %v5301 = vpop.xlane.xlu0 %5300
    %v5302 = vsel %vm2153, %v5262, -inf
    %5303 = vmax.xlane.f32.xlu0 %v5302
    %v5304 = vpop.xlane.xlu0 %5303
    %v5305 = vsel %vm2153, %v5267, -inf
    %5306 = vmax.xlane.f32.xlu0 %v5305
    %v5307 = vpop.xlane.xlu0 %5306
    %v5308 = vsub.f32 %v5079, %v5274
    %v5309 = vsub.f32 %v5082, %v5277
    %v5310 = vsub.f32 %v5087, %v5280
    %v5311 = vsub.f32 %v5139, %v5283
    %v5312 = vsub.f32 %v5142, %v5286
    %v5313 = vsub.f32 %v5147, %v5289
    %v5314 = vsub.f32 %v5199, %v5292
    %v5315 = vsub.f32 %v5202, %v5295
    %v5316 = vsub.f32 %v5207, %v5298
    %v5317 = vsub.f32 %v5259, %v5301
    %v5318 = vsub.f32 %v5262, %v5304
    %v5319 = vsub.f32 %v5267, %v5307
    %v5320 = vmul.f32 %v5308, 1.442695
    %v5321 = vpow.pop %v5320
    %v5322 = vmul.f32 %v5309, 1.442695
    %v5323 = vpow.pop %v5322
    %v5324 = vmul.f32 %v5310, 1.442695
    %v5325 = vpow.pop %v5324
    %v5326 = vmul.f32 %v5311, 1.442695
    %v5327 = vpow.pop %v5326
    %v5328 = vmul.f32 %v5312, 1.442695
    %v5329 = vpow.pop %v5328
    %v5330 = vmul.f32 %v5313, 1.442695
    %v5331 = vpow.pop %v5330
    %v5332 = vmul.f32 %v5314, 1.442695
    %v5333 = vpow.pop %v5332
    %v5334 = vmul.f32 %v5315, 1.442695
    %v5335 = vpow.pop %v5334
    %v5336 = vmul.f32 %v5316, 1.442695
    %v5337 = vpow.pop %v5336
    %v5338 = vmul.f32 %v5317, 1.442695
    %v5339 = vpow.pop %v5338
    %v5340 = vmul.f32 %v5318, 1.442695
    %v5341 = vpow.pop %v5340
    %v5342 = vmul.f32 %v5319, 1.442695
    %v5343 = vpow.pop %v5342
    %v5344 = vsel %vm2153, %v5321, 0.0
    %5345 = vadd.xlane.f32.xlu0 %v5344
    %v5346 = vpop.xlane.xlu0 %5345
    %v5347 = vsel %vm2153, %v5323, 0.0
    %5348 = vadd.xlane.f32.xlu0 %v5347
    %v5349 = vpop.xlane.xlu0 %5348
    %v5350 = vsel %vm2153, %v5325, 0.0
    %5351 = vadd.xlane.f32.xlu0 %v5350
    %v5352 = vpop.xlane.xlu0 %5351
    %v5353 = vsel %vm2153, %v5327, 0.0
    %5354 = vadd.xlane.f32.xlu0 %v5353
    %v5355 = vpop.xlane.xlu0 %5354
    %v5356 = vsel %vm2153, %v5329, 0.0
    %5357 = vadd.xlane.f32.xlu0 %v5356
    %v5358 = vpop.xlane.xlu0 %5357
    %v5359 = vsel %vm2153, %v5331, 0.0
    %5360 = vadd.xlane.f32.xlu0 %v5359
    %v5361 = vpop.xlane.xlu0 %5360
    %v5362 = vsel %vm2153, %v5333, 0.0
    %5363 = vadd.xlane.f32.xlu0 %v5362
    %v5364 = vpop.xlane.xlu0 %5363
    %v5365 = vsel %vm2153, %v5335, 0.0
    %5366 = vadd.xlane.f32.xlu0 %v5365
    %v5367 = vpop.xlane.xlu0 %5366
    %v5368 = vsel %vm2153, %v5337, 0.0
    %5369 = vadd.xlane.f32.xlu0 %v5368
    %v5370 = vpop.xlane.xlu0 %5369
    %v5371 = vsel %vm2153, %v5339, 0.0
    %5372 = vadd.xlane.f32.xlu0 %v5371
    %v5373 = vpop.xlane.xlu0 %5372
    %v5374 = vsel %vm2153, %v5341, 0.0
    %5375 = vadd.xlane.f32.xlu0 %v5374
    %v5376 = vpop.xlane.xlu0 %5375
    %v5377 = vsel %vm2153, %v5343, 0.0
    %5378 = vadd.xlane.f32.xlu0 %v5377
    %v5379 = vpop.xlane.xlu0 %5378
    %v5380 = vrcp.pop %v5346
    %v5381 = vmul.f32 %v5321, %v5380
    %v5382 = vrcp.pop %v5349
    %v5383 = vmul.f32 %v5323, %v5382
    %v5384 = vrcp.pop %v5352
    %v5385 = vmul.f32 %v5325, %v5384
    %v5386 = vrcp.pop %v5355
    %v5387 = vmul.f32 %v5327, %v5386
    %v5388 = vrcp.pop %v5358
    %v5389 = vmul.f32 %v5329, %v5388
    %v5390 = vrcp.pop %v5361
    %v5391 = vmul.f32 %v5331, %v5390
    %v5392 = vrcp.pop %v5364
    %v5393 = vmul.f32 %v5333, %v5392
    %v5394 = vrcp.pop %v5367
    %v5395 = vmul.f32 %v5335, %v5394
    %v5396 = vrcp.pop %v5370
    %v5397 = vmul.f32 %v5337, %v5396
    %v5398 = vrcp.pop %v5373
    %v5399 = vmul.f32 %v5339, %v5398
    %v5400 = vrcp.pop %v5376
    %v5401 = vmul.f32 %v5341, %v5400
    %v5402 = vrcp.pop %v5379
    %v5403 = vmul.f32 %v5343, %v5402
    %v5404 = vpack.c.bf16 %v5383, %v5381
    %v5405 = vpack.c.bf16 %v5385, %v5385
    %v5406 = vpack.c.bf16 %v5389, %v5387
    %v5407 = vpack.c.bf16 %v5391, %v5391
    %v5408 = vpack.c.bf16 %v5395, %v5393
    %v5409 = vpack.c.bf16 %v5397, %v5397
    %v5410 = vpack.c.bf16 %v5401, %v5399
    %v5411 = vpack.c.bf16 %v5403, %v5403
    %v5412 = vpack.c.bf16 %v4944, %v4876
    %v5413 = vpack.c.bf16 %v5012, %v5012
    %v5414 = vpack.c.bf16 %v4945, %v4877
    %v5415 = vpack.c.bf16 %v5013, %v5013
    %v5416 = vpack.c.bf16 %v4946, %v4878
    %v5417 = vpack.c.bf16 %v5014, %v5014
    %v5418 = vpack.c.bf16 %v4947, %v4879
    %v5419 = vpack.c.bf16 %v5015, %v5015
    %v5421 = vsel %vm2153, %v5404, 0
    %v5424 = vsel %vm2153, %v5405, 0
    %v5427 = vsel %vm2308, %v5413, 0
    %5429 = vmatprep.subr.bf16.mxu0 0
    %5430 = vmatpush1.bf16.msra.mxu0 %v5412
    %5431 = vmatprep.subr.bf16.mxu0 0
    %5432 = vmatpush1.bf16.msra.mxu0 %v5427
    %5433 = vmatprep.subr.bf16.mxu0 0
    %5434 = vmatpush1.bf16.msra.mxu0 0
    %5435 = vmatprep.subr.bf16.mxu0 0
    %5436 = vmatpush1.bf16.msra.mxu0 0
    %5437 = vmatprep.subr.bf16.mxu0 0
    %5438 = vmatpush1.bf16.msra.mxu0 0
    %5439 = vmatprep.subr.bf16.mxu0 0
    %5440 = vmatpush1.bf16.msra.mxu0 0
    %5441 = vmatprep.subr.bf16.mxu0 0
    %5442 = vmatpush1.bf16.msra.mxu0 0
    %5443 = vmatprep.subr.bf16.mxu0 0
    %5444 = vmatpush1.bf16.msra.mxu0 0
    %5445 = vmatprep.subr.bf16.mxu0 0
    %5446 = vmatpush1.bf16.msra.mxu0 0
    %5447 = vmatprep.subr.bf16.mxu0 0
    %5448 = vmatpush1.bf16.msra.mxu0 0
    %5449 = vmatprep.subr.bf16.mxu0 0
    %5450 = vmatpush1.bf16.msra.mxu0 0
    %5451 = vmatprep.subr.bf16.mxu0 0
    %5452 = vmatpush1.bf16.msra.mxu0 0
    %5453 = vmatprep.subr.bf16.mxu0 0
    %5454 = vmatpush1.bf16.msra.mxu0 0
    %5455 = vmatprep.subr.bf16.mxu0 0
    %5456 = vmatpush1.bf16.msra.mxu0 0
    %5457 = vmatprep.subr.bf16.mxu0 0
    %5458 = vmatpush1.bf16.msra.mxu0 0
    %5459 = vmatprep.subr.bf16.mxu0 0
    %5460 = vmatpush1.bf16.msra.mxu0 0
    %5461 = vmatprep.mubr.bf16.mxu0 0
    %5462 = vmatmul.mubr.bf16.gmra.mrb[0].mxu0 %v5421
    %v5463 = vpop.f32.mrb[0].mxu0
    %v5464 = vadd.f32 0.0, %v5463
    %v5465 = vpop.f32.mrb[0].mxu0
    %v5466 = vpop.f32.mrb[0].mxu0
    %v5467 = vadd.f32 0.0, %v5466
    %v5468 = vpop.f32.mrb[0].mxu0
    %5469 = vmatprep.mubr.bf16.mxu0 0
    %5470 = vmatmul.mubr.bf16.gmra.mrb[0].mxu0 %v5424
    %v5471 = vpop.f32.mrb[0].mxu0
    %v5472 = vadd.f32 0.0, %v5471
    %v5473 = vpop.f32.mrb[0].mxu0
    %v5474 = vpop.f32.mrb[0].mxu0
    %v5475 = vpop.f32.mrb[0].mxu0
    %5476 = vdwg.mxu0
    %v5478 = vsel %vm2153, %v5406, 0
    %v5481 = vsel %vm2153, %v5407, 0
    %v5484 = vsel %vm2308, %v5415, 0
    %5486 = vmatprep.subr.bf16.mxu0 0
    %5487 = vmatpush1.bf16.msra.mxu0 %v5414
    %5488 = vmatprep.subr.bf16.mxu0 0
    %5489 = vmatpush1.bf16.msra.mxu0 %v5484
    %5490 = vmatprep.subr.bf16.mxu0 0
    %5491 = vmatpush1.bf16.msra.mxu0 0
    %5492 = vmatprep.subr.bf16.mxu0 0
    %5493 = vmatpush1.bf16.msra.mxu0 0
    %5494 = vmatprep.subr.bf16.mxu0 0
    %5495 = vmatpush1.bf16.msra.mxu0 0
    %5496 = vmatprep.subr.bf16.mxu0 0
    %5497 = vmatpush1.bf16.msra.mxu0 0
    %5498 = vmatprep.subr.bf16.mxu0 0
    %5499 = vmatpush1.bf16.msra.mxu0 0
    %5500 = vmatprep.subr.bf16.mxu0 0
    %5501 = vmatpush1.bf16.msra.mxu0 0
    %5502 = vmatprep.subr.bf16.mxu0 0
    %5503 = vmatpush1.bf16.msra.mxu0 0
    %5504 = vmatprep.subr.bf16.mxu0 0
    %5505 = vmatpush1.bf16.msra.mxu0 0
    %5506 = vmatprep.subr.bf16.mxu0 0
    %5507 = vmatpush1.bf16.msra.mxu0 0
    %5508 = vmatprep.subr.bf16.mxu0 0
    %5509 = vmatpush1.bf16.msra.mxu0 0
    %5510 = vmatprep.subr.bf16.mxu0 0
    %5511 = vmatpush1.bf16.msra.mxu0 0
    %5512 = vmatprep.subr.bf16.mxu0 0
    %5513 = vmatpush1.bf16.msra.mxu0 0
    %5514 = vmatprep.subr.bf16.mxu0 0
    %5515 = vmatpush1.bf16.msra.mxu0 0
    %5516 = vmatprep.subr.bf16.mxu0 0
    %5517 = vmatpush1.bf16.msra.mxu0 0
    %5518 = vmatprep.mubr.bf16.mxu0 0
    %5519 = vmatmul.mubr.bf16.gmra.mrb[0].mxu0 %v5478
    %v5520 = vpop.f32.mrb[0].mxu0
    %v5521 = vadd.f32 0.0, %v5520
    %v5522 = vpop.f32.mrb[0].mxu0
    %v5523 = vpop.f32.mrb[0].mxu0
    %v5524 = vadd.f32 0.0, %v5523
    %v5525 = vpop.f32.mrb[0].mxu0
    %5526 = vmatprep.mubr.bf16.mxu0 0
    %5527 = vmatmul.mubr.bf16.gmra.mrb[0].mxu0 %v5481
    %v5528 = vpop.f32.mrb[0].mxu0
    %v5529 = vadd.f32 0.0, %v5528
    %v5530 = vpop.f32.mrb[0].mxu0
    %v5531 = vpop.f32.mrb[0].mxu0
    %v5532 = vpop.f32.mrb[0].mxu0
    %5533 = vdwg.mxu0
    %v5535 = vsel %vm2153, %v5408, 0
    %v5538 = vsel %vm2153, %v5409, 0
    %v5541 = vsel %vm2308, %v5417, 0
    %5543 = vmatprep.subr.bf16.mxu0 0
    %5544 = vmatpush1.bf16.msra.mxu0 %v5416
    %5545 = vmatprep.subr.bf16.mxu0 0
    %5546 = vmatpush1.bf16.msra.mxu0 %v5541
    %5547 = vmatprep.subr.bf16.mxu0 0
    %5548 = vmatpush1.bf16.msra.mxu0 0
    %5549 = vmatprep.subr.bf16.mxu0 0
    %5550 = vmatpush1.bf16.msra.mxu0 0
    %5551 = vmatprep.subr.bf16.mxu0 0
    %5552 = vmatpush1.bf16.msra.mxu0 0
    %5553 = vmatprep.subr.bf16.mxu0 0
    %5554 = vmatpush1.bf16.msra.mxu0 0
    %5555 = vmatprep.subr.bf16.mxu0 0
    %5556 = vmatpush1.bf16.msra.mxu0 0
    %5557 = vmatprep.subr.bf16.mxu0 0
    %5558 = vmatpush1.bf16.msra.mxu0 0
    %5559 = vmatprep.subr.bf16.mxu0 0
    %5560 = vmatpush1.bf16.msra.mxu0 0
    %5561 = vmatprep.subr.bf16.mxu0 0
    %5562 = vmatpush1.bf16.msra.mxu0 0
    %5563 = vmatprep.subr.bf16.mxu0 0
    %5564 = vmatpush1.bf16.msra.mxu0 0
    %5565 = vmatprep.subr.bf16.mxu0 0
    %5566 = vmatpush1.bf16.msra.mxu0 0
    %5567 = vmatprep.subr.bf16.mxu0 0
    %5568 = vmatpush1.bf16.msra.mxu0 0
    %5569 = vmatprep.subr.bf16.mxu0 0
    %5570 = vmatpush1.bf16.msra.mxu0 0
    %5571 = vmatprep.subr.bf16.mxu0 0
    %5572 = vmatpush1.bf16.msra.mxu0 0
    %5573 = vmatprep.subr.bf16.mxu0 0
    %5574 = vmatpush1.bf16.msra.mxu0 0
    %5575 = vmatprep.mubr.bf16.mxu0 0
    %5576 = vmatmul.mubr.bf16.gmra.mrb[0].mxu0 %v5535
    %v5577 = vpop.f32.mrb[0].mxu0
    %v5578 = vadd.f32 0.0, %v5577
    %v5579 = vpop.f32.mrb[0].mxu0
    %v5580 = vpop.f32.mrb[0].mxu0
    %v5581 = vadd.f32 0.0, %v5580
    %v5582 = vpop.f32.mrb[0].mxu0
    %5583 = vmatprep.mubr.bf16.mxu0 0
    %5584 = vmatmul.mubr.bf16.gmra.mrb[0].mxu0 %v5538
    %v5585 = vpop.f32.mrb[0].mxu0
    %v5586 = vadd.f32 0.0, %v5585
    %v5587 = vpop.f32.mrb[0].mxu0
    %v5588 = vpop.f32.mrb[0].mxu0
    %v5589 = vpop.f32.mrb[0].mxu0
    %5590 = vdwg.mxu0
    %v5592 = vsel %vm2153, %v5410, 0
    %v5595 = vsel %vm2153, %v5411, 0
    %v5598 = vsel %vm2308, %v5419, 0
    %5600 = vmatprep.subr.bf16.mxu0 0
    %5601 = vmatpush1.bf16.msra.mxu0 %v5418
    %5602 = vmatprep.subr.bf16.mxu0 0
    %5603 = vmatpush1.bf16.msra.mxu0 %v5598
    %5604 = vmatprep.subr.bf16.mxu0 0
    %5605 = vmatpush1.bf16.msra.mxu0 0
    %5606 = vmatprep.subr.bf16.mxu0 0
    %5607 = vmatpush1.bf16.msra.mxu0 0
    %5608 = vmatprep.subr.bf16.mxu0 0
    %5609 = vmatpush1.bf16.msra.mxu0 0
    %5610 = vmatprep.subr.bf16.mxu0 0
    %5611 = vmatpush1.bf16.msra.mxu0 0
    %5612 = vmatprep.subr.bf16.mxu0 0
    %5613 = vmatpush1.bf16.msra.mxu0 0
    %5614 = vmatprep.subr.bf16.mxu0 0
    %5615 = vmatpush1.bf16.msra.mxu0 0
    %5616 = vmatprep.subr.bf16.mxu0 0
    %5617 = vmatpush1.bf16.msra.mxu0 0
    %5618 = vmatprep.subr.bf16.mxu0 0
    %5619 = vmatpush1.bf16.msra.mxu0 0
    %5620 = vmatprep.subr.bf16.mxu0 0
    %5621 = vmatpush1.bf16.msra.mxu0 0
    %5622 = vmatprep.subr.bf16.mxu0 0
    %5623 = vmatpush1.bf16.msra.mxu0 0
    %5624 = vmatprep.subr.bf16.mxu0 0
    %5625 = vmatpush1.bf16.msra.mxu0 0
    %5626 = vmatprep.subr.bf16.mxu0 0
    %5627 = vmatpush1.bf16.msra.mxu0 0
    %5628 = vmatprep.subr.bf16.mxu0 0
    %5629 = vmatpush1.bf16.msra.mxu0 0
    %5630 = vmatprep.subr.bf16.mxu0 0
    %5631 = vmatpush1.bf16.msra.mxu0 0
    %5632 = vmatprep.mubr.bf16.mxu0 0
    %5633 = vmatmul.mubr.bf16.gmra.mrb[0].mxu0 %v5592
    %v5634 = vpop.f32.mrb[0].mxu0
    %v5635 = vadd.f32 0.0, %v5634
    %v5636 = vpop.f32.mrb[0].mxu0
    %v5637 = vpop.f32.mrb[0].mxu0
    %v5638 = vadd.f32 0.0, %v5637
    %v5639 = vpop.f32.mrb[0].mxu0
    %5640 = vmatprep.mubr.bf16.mxu0 0
    %5641 = vmatmul.mubr.bf16.gmra.mrb[0].mxu0 %v5595
    %v5642 = vpop.f32.mrb[0].mxu0
    %v5643 = vadd.f32 0.0, %v5642
    %v5644 = vpop.f32.mrb[0].mxu0
    %v5645 = vpop.f32.mrb[0].mxu0
    %v5646 = vpop.f32.mrb[0].mxu0
    %5647 = vdwg.mxu0
    %v5648 = vcombine.low %v5464, %v5578
    %v5649 = vcombine.high %v5464, %v5578
    %v5651 = vunpack.c.l.s4 1983009808
    %v5652 = vunpack.c.0.s8 %v5651
    %v5653 = vlaneseq
    %v5654 = vshrl.u32 %v5653, 7
    %v5655 = vsub.s32 %v5652, %v5654
    %v5656 = vrot.slane %v5648, %v5655
    %v5658 = vunpack.c.l.s4 1983009808
    %v5659 = vunpack.c.0.s8 %v5658
    %v5660 = vlaneseq
    %v5661 = vshrl.u32 %v5660, 7
    %v5662 = vsub.s32 %v5659, %v5661
    %v5663 = vrot.slane %v5649, %v5662
    %v5664 = vcombine.low %v5521, %v5635
    %v5665 = vcombine.high %v5521, %v5635
    %v5667 = vunpack.c.l.s4 1983009808
    %v5668 = vunpack.c.0.s8 %v5667
    %v5669 = vlaneseq
    %v5670 = vshrl.u32 %v5669, 7
    %v5671 = vsub.s32 %v5668, %v5670
    %v5672 = vrot.slane %v5664, %v5671
    %v5674 = vunpack.c.l.s4 1983009808
    %v5675 = vunpack.c.0.s8 %v5674
    %v5676 = vlaneseq
    %v5677 = vshrl.u32 %v5676, 7
    %v5678 = vsub.s32 %v5675, %v5677
    %v5679 = vrot.slane %v5665, %v5678
    %v5680 = vcombine.low %v5656, %v5672
    %v5681 = vcombine.high %v5656, %v5672
    %v5683 = vunpack.c.l.s4 1934713408
    %v5684 = vunpack.c.0.s8 %v5683
    %v5685 = vlaneseq
    %v5686 = vshrl.u32 %v5685, 7
    %v5687 = vsub.s32 %v5684, %v5686
    %v5688 = vrot.slane %v5680, %v5687
    %v5690 = vunpack.c.l.s4 1934713408
    %v5691 = vunpack.c.0.s8 %v5690
    %v5692 = vlaneseq
    %v5693 = vshrl.u32 %v5692, 7
    %v5694 = vsub.s32 %v5691, %v5693
    %v5695 = vrot.slane %v5681, %v5694
    %v5696 = vcombine.low %v5663, %v5679
    %v5697 = vcombine.high %v5663, %v5679
    %v5699 = vunpack.c.l.s4 1934713408
    %v5700 = vunpack.c.0.s8 %v5699
    %v5701 = vlaneseq
    %v5702 = vshrl.u32 %v5701, 7
    %v5703 = vsub.s32 %v5700, %v5702
    %v5704 = vrot.slane %v5696, %v5703
    %v5706 = vunpack.c.l.s4 1934713408
    %v5707 = vunpack.c.0.s8 %v5706
    %v5708 = vlaneseq
    %v5709 = vshrl.u32 %v5708, 7
    %v5710 = vsub.s32 %v5707, %v5709
    %v5711 = vrot.slane %v5697, %v5710
    %v5712 = vcombine.high %v5688, 0.0
    %v5713 = vcombine.high %v5695, 0.0
    %v5714 = vcombine.high %v5704, 0.0
    %v5715 = vcombine.high %v5711, 0.0
    %v5716 = vcombine.low %v5467, %v5581
    %v5717 = vcombine.high %v5467, %v5581
    %v5719 = vunpack.c.l.s4 1983009808
    %v5720 = vunpack.c.0.s8 %v5719
    %v5721 = vlaneseq
    %v5722 = vshrl.u32 %v5721, 7
    %v5723 = vsub.s32 %v5720, %v5722
    %v5724 = vrot.slane %v5716, %v5723
    %v5726 = vunpack.c.l.s4 1983009808
    %v5727 = vunpack.c.0.s8 %v5726
    %v5728 = vlaneseq
    %v5729 = vshrl.u32 %v5728, 7
    %v5730 = vsub.s32 %v5727, %v5729
    %v5731 = vrot.slane %v5717, %v5730
    %v5732 = vcombine.low %v5524, %v5638
    %v5733 = vcombine.high %v5524, %v5638
    %v5735 = vunpack.c.l.s4 1983009808
    %v5736 = vunpack.c.0.s8 %v5735
    %v5737 = vlaneseq
    %v5738 = vshrl.u32 %v5737, 7
    %v5739 = vsub.s32 %v5736, %v5738
    %v5740 = vrot.slane %v5732, %v5739
    %v5742 = vunpack.c.l.s4 1983009808
    %v5743 = vunpack.c.0.s8 %v5742
    %v5744 = vlaneseq
    %v5745 = vshrl.u32 %v5744, 7
    %v5746 = vsub.s32 %v5743, %v5745
    %v5747 = vrot.slane %v5733, %v5746
    %v5748 = vcombine.low %v5724, %v5740
    %v5749 = vcombine.high %v5724, %v5740
    %v5751 = vunpack.c.l.s4 1934713408
    %v5752 = vunpack.c.0.s8 %v5751
    %v5753 = vlaneseq
    %v5754 = vshrl.u32 %v5753, 7
    %v5755 = vsub.s32 %v5752, %v5754
    %v5756 = vrot.slane %v5748, %v5755
    %v5758 = vunpack.c.l.s4 1934713408
    %v5759 = vunpack.c.0.s8 %v5758
    %v5760 = vlaneseq
    %v5761 = vshrl.u32 %v5760, 7
    %v5762 = vsub.s32 %v5759, %v5761
    %v5763 = vrot.slane %v5749, %v5762
    %v5764 = vcombine.low %v5731, %v5747
    %v5765 = vcombine.high %v5731, %v5747
    %v5767 = vunpack.c.l.s4 1934713408
    %v5768 = vunpack.c.0.s8 %v5767
    %v5769 = vlaneseq
    %v5770 = vshrl.u32 %v5769, 7
    %v5771 = vsub.s32 %v5768, %v5770
    %v5772 = vrot.slane %v5764, %v5771
    %v5774 = vunpack.c.l.s4 1934713408
    %v5775 = vunpack.c.0.s8 %v5774
    %v5776 = vlaneseq
    %v5777 = vshrl.u32 %v5776, 7
    %v5778 = vsub.s32 %v5775, %v5777
    %v5779 = vrot.slane %v5765, %v5778
    %v5780 = vcombine.high %v5756, 0.0
    %v5781 = vcombine.high %v5763, 0.0
    %v5782 = vcombine.high %v5772, 0.0
    %v5783 = vcombine.high %v5779, 0.0
    %v5784 = vcombine.low %v5472, %v5586
    %v5785 = vcombine.high %v5472, %v5586
    %v5787 = vunpack.c.l.s4 1983009808
    %v5788 = vunpack.c.0.s8 %v5787
    %v5789 = vlaneseq
    %v5790 = vshrl.u32 %v5789, 7
    %v5791 = vsub.s32 %v5788, %v5790
    %v5792 = vrot.slane %v5784, %v5791
    %v5794 = vunpack.c.l.s4 1983009808
    %v5795 = vunpack.c.0.s8 %v5794
    %v5796 = vlaneseq
    %v5797 = vshrl.u32 %v5796, 7
    %v5798 = vsub.s32 %v5795, %v5797
    %v5799 = vrot.slane %v5785, %v5798
    %v5800 = vcombine.low %v5529, %v5643
    %v5801 = vcombine.high %v5529, %v5643
    %v5803 = vunpack.c.l.s4 1983009808
    %v5804 = vunpack.c.0.s8 %v5803
    %v5805 = vlaneseq
    %v5806 = vshrl.u32 %v5805, 7
    %v5807 = vsub.s32 %v5804, %v5806
    %v5808 = vrot.slane %v5800, %v5807
    %v5810 = vunpack.c.l.s4 1983009808
    %v5811 = vunpack.c.0.s8 %v5810
    %v5812 = vlaneseq
    %v5813 = vshrl.u32 %v5812, 7
    %v5814 = vsub.s32 %v5811, %v5813
    %v5815 = vrot.slane %v5801, %v5814
    %v5816 = vcombine.low %v5792, %v5808
    %v5817 = vcombine.high %v5792, %v5808
    %v5819 = vunpack.c.l.s4 1934713408
    %v5820 = vunpack.c.0.s8 %v5819
    %v5821 = vlaneseq
    %v5822 = vshrl.u32 %v5821, 7
    %v5823 = vsub.s32 %v5820, %v5822
    %v5824 = vrot.slane %v5816, %v5823
    %v5826 = vunpack.c.l.s4 1934713408
    %v5827 = vunpack.c.0.s8 %v5826
    %v5828 = vlaneseq
    %v5829 = vshrl.u32 %v5828, 7
    %v5830 = vsub.s32 %v5827, %v5829
    %v5831 = vrot.slane %v5817, %v5830
    %v5832 = vcombine.low %v5799, %v5815
    %v5833 = vcombine.high %v5799, %v5815
    %v5835 = vunpack.c.l.s4 1934713408
    %v5836 = vunpack.c.0.s8 %v5835
    %v5837 = vlaneseq
    %v5838 = vshrl.u32 %v5837, 7
    %v5839 = vsub.s32 %v5836, %v5838
    %v5840 = vrot.slane %v5832, %v5839
    %v5842 = vunpack.c.l.s4 1934713408
    %v5843 = vunpack.c.0.s8 %v5842
    %v5844 = vlaneseq
    %v5845 = vshrl.u32 %v5844, 7
    %v5846 = vsub.s32 %v5843, %v5845
    %v5847 = vrot.slane %v5833, %v5846
    %v5848 = vcombine.high %v5824, 0.0
    %v5849 = vcombine.high %v5831, 0.0
    %v5850 = vcombine.high %v5840, 0.0
    %v5851 = vcombine.high %v5847, 0.0
    %v5852 = vcombine.low %v5688, %v5695
    %v5854 = vunpack.c.l.s4 1983009808
    %v5855 = vunpack.c.0.s8 %v5854
    %v5856 = vlaneseq
    %v5857 = vshrl.u32 %v5856, 7
    %v5858 = vsub.s32 %v5855, %v5857
    %v5859 = vrot.slane %v5852, %v5858
    %v5860 = vcombine.low %v5712, %v5713
    %v5862 = vunpack.c.l.s4 1983009808
    %v5863 = vunpack.c.0.s8 %v5862
    %v5864 = vlaneseq
    %v5865 = vshrl.u32 %v5864, 7
    %v5866 = vsub.s32 %v5863, %v5865
    %v5867 = vrot.slane %v5860, %v5866
    %v5868 = vcombine.low %v5704, %v5711
    %v5870 = vunpack.c.l.s4 1983009808
    %v5871 = vunpack.c.0.s8 %v5870
    %v5872 = vlaneseq
    %v5873 = vshrl.u32 %v5872, 7
    %v5874 = vsub.s32 %v5871, %v5873
    %v5875 = vrot.slane %v5868, %v5874
    %v5876 = vcombine.low %v5714, %v5715
    %v5878 = vunpack.c.l.s4 1983009808
    %v5879 = vunpack.c.0.s8 %v5878
    %v5880 = vlaneseq
    %v5881 = vshrl.u32 %v5880, 7
    %v5882 = vsub.s32 %v5879, %v5881
    %v5883 = vrot.slane %v5876, %v5882
    %v5884 = vcombine.low %v5859, %v5867
    %v5885 = vcombine.high %v5859, %v5867
    %v5887 = vunpack.c.l.s4 1934713408
    %v5888 = vunpack.c.0.s8 %v5887
    %v5889 = vlaneseq
    %v5890 = vshrl.u32 %v5889, 7
    %v5891 = vsub.s32 %v5888, %v5890
    %v5892 = vrot.slane %v5884, %v5891
    %v5894 = vunpack.c.l.s4 1934713408
    %v5895 = vunpack.c.0.s8 %v5894
    %v5896 = vlaneseq
    %v5897 = vshrl.u32 %v5896, 7
    %v5898 = vsub.s32 %v5895, %v5897
    %v5899 = vrot.slane %v5885, %v5898
    %v5900 = vcombine.low %v5875, %v5883
    %v5901 = vcombine.high %v5875, %v5883
    %v5903 = vunpack.c.l.s4 1934713408
    %v5904 = vunpack.c.0.s8 %v5903
    %v5905 = vlaneseq
    %v5906 = vshrl.u32 %v5905, 7
    %v5907 = vsub.s32 %v5904, %v5906
    %v5908 = vrot.slane %v5900, %v5907
    %v5910 = vunpack.c.l.s4 1934713408
    %v5911 = vunpack.c.0.s8 %v5910
    %v5912 = vlaneseq
    %v5913 = vshrl.u32 %v5912, 7
    %v5914 = vsub.s32 %v5911, %v5913
    %v5915 = vrot.slane %v5901, %v5914
    %v5916 = vcombine.low %v5892, %v5908
    %v5917 = vcombine.high %v5892, %v5908
    %v5918 = vcombine.low %v5899, %v5915
    %v5919 = vcombine.high %v5899, %v5915
    %v5920 = vcombine.low %v5756, %v5763
    %v5922 = vunpack.c.l.s4 1983009808
    %v5923 = vunpack.c.0.s8 %v5922
    %v5924 = vlaneseq
    %v5925 = vshrl.u32 %v5924, 7
    %v5926 = vsub.s32 %v5923, %v5925
    %v5927 = vrot.slane %v5920, %v5926
    %v5928 = vcombine.low %v5780, %v5781
    %v5930 = vunpack.c.l.s4 1983009808
    %v5931 = vunpack.c.0.s8 %v5930
    %v5932 = vlaneseq
    %v5933 = vshrl.u32 %v5932, 7
    %v5934 = vsub.s32 %v5931, %v5933
    %v5935 = vrot.slane %v5928, %v5934
    %v5936 = vcombine.low %v5772, %v5779
    %v5938 = vunpack.c.l.s4 1983009808
    %v5939 = vunpack.c.0.s8 %v5938
    %v5940 = vlaneseq
    %v5941 = vshrl.u32 %v5940, 7
    %v5942 = vsub.s32 %v5939, %v5941
    %v5943 = vrot.slane %v5936, %v5942
    %v5944 = vcombine.low %v5782, %v5783
    %v5946 = vunpack.c.l.s4 1983009808
    %v5947 = vunpack.c.0.s8 %v5946
    %v5948 = vlaneseq
    %v5949 = vshrl.u32 %v5948, 7
    %v5950 = vsub.s32 %v5947, %v5949
    %v5951 = vrot.slane %v5944, %v5950
    %v5952 = vcombine.low %v5927, %v5935
    %v5953 = vcombine.high %v5927, %v5935
    %v5955 = vunpack.c.l.s4 1934713408
    %v5956 = vunpack.c.0.s8 %v5955
    %v5957 = vlaneseq
    %v5958 = vshrl.u32 %v5957, 7
    %v5959 = vsub.s32 %v5956, %v5958
    %v5960 = vrot.slane %v5952, %v5959
    %v5962 = vunpack.c.l.s4 1934713408
    %v5963 = vunpack.c.0.s8 %v5962
    %v5964 = vlaneseq
    %v5965 = vshrl.u32 %v5964, 7
    %v5966 = vsub.s32 %v5963, %v5965
    %v5967 = vrot.slane %v5953, %v5966
    %v5968 = vcombine.low %v5943, %v5951
    %v5969 = vcombine.high %v5943, %v5951
    %v5971 = vunpack.c.l.s4 1934713408
    %v5972 = vunpack.c.0.s8 %v5971
    %v5973 = vlaneseq
    %v5974 = vshrl.u32 %v5973, 7
    %v5975 = vsub.s32 %v5972, %v5974
    %v5976 = vrot.slane %v5968, %v5975
    %v5978 = vunpack.c.l.s4 1934713408
    %v5979 = vunpack.c.0.s8 %v5978
    %v5980 = vlaneseq
    %v5981 = vshrl.u32 %v5980, 7
    %v5982 = vsub.s32 %v5979, %v5981
    %v5983 = vrot.slane %v5969, %v5982
    %v5984 = vcombine.low %v5960, %v5976
    %v5985 = vcombine.high %v5960, %v5976
    %v5986 = vcombine.low %v5967, %v5983
    %v5987 = vcombine.high %v5967, %v5983
    %v5988 = vcombine.low %v5824, %v5831
    %v5990 = vunpack.c.l.s4 1983009808
    %v5991 = vunpack.c.0.s8 %v5990
    %v5992 = vlaneseq
    %v5993 = vshrl.u32 %v5992, 7
    %v5994 = vsub.s32 %v5991, %v5993
    %v5995 = vrot.slane %v5988, %v5994
    %v5996 = vcombine.low %v5848, %v5849
    %v5998 = vunpack.c.l.s4 1983009808
    %v5999 = vunpack.c.0.s8 %v5998
    %v6000 = vlaneseq
    %v6001 = vshrl.u32 %v6000, 7
    %v6002 = vsub.s32 %v5999, %v6001
    %v6003 = vrot.slane %v5996, %v6002
    %v6004 = vcombine.low %v5840, %v5847
    %v6006 = vunpack.c.l.s4 1983009808
    %v6007 = vunpack.c.0.s8 %v6006
    %v6008 = vlaneseq
    %v6009 = vshrl.u32 %v6008, 7
    %v6010 = vsub.s32 %v6007, %v6009
    %v6011 = vrot.slane %v6004, %v6010
    %v6012 = vcombine.low %v5850, %v5851
    %v6014 = vunpack.c.l.s4 1983009808
    %v6015 = vunpack.c.0.s8 %v6014
    %v6016 = vlaneseq
    %v6017 = vshrl.u32 %v6016, 7
    %v6018 = vsub.s32 %v6015, %v6017
    %v6019 = vrot.slane %v6012, %v6018
    %v6020 = vcombine.low %v5995, %v6003
    %v6021 = vcombine.high %v5995, %v6003
    %v6023 = vunpack.c.l.s4 1934713408
    %v6024 = vunpack.c.0.s8 %v6023
    %v6025 = vlaneseq
    %v6026 = vshrl.u32 %v6025, 7
    %v6027 = vsub.s32 %v6024, %v6026
    %v6028 = vrot.slane %v6020, %v6027
    %v6030 = vunpack.c.l.s4 1934713408
    %v6031 = vunpack.c.0.s8 %v6030
    %v6032 = vlaneseq
    %v6033 = vshrl.u32 %v6032, 7
    %v6034 = vsub.s32 %v6031, %v6033
    %v6035 = vrot.slane %v6021, %v6034
    %v6036 = vcombine.low %v6011, %v6019
    %v6037 = vcombine.high %v6011, %v6019
    %v6039 = vunpack.c.l.s4 1934713408
    %v6040 = vunpack.c.0.s8 %v6039
    %v6041 = vlaneseq
    %v6042 = vshrl.u32 %v6041, 7
    %v6043 = vsub.s32 %v6040, %v6042
    %v6044 = vrot.slane %v6036, %v6043
    %v6046 = vunpack.c.l.s4 1934713408
    %v6047 = vunpack.c.0.s8 %v6046
    %v6048 = vlaneseq
    %v6049 = vshrl.u32 %v6048, 7
    %v6050 = vsub.s32 %v6047, %v6049
    %v6051 = vrot.slane %v6037, %v6050
    %v6052 = vcombine.low %v6028, %v6044
    %v6053 = vcombine.high %v6028, %v6044
    %v6054 = vcombine.low %v6035, %v6051
    %v6055 = vcombine.high %v6035, %v6051
    %6059 = vrot.lane.b32.xlu0 %v5917, 32
    %v6060 = vpop.permute.xlu0 %6059
    %6061 = vrot.lane.b32.xlu0 %v5985, 32
    %v6062 = vpop.permute.xlu0 %6061
    %6063 = vrot.lane.b32.xlu0 %v6053, 32
    %v6064 = vpop.permute.xlu0 %6063
    %6071 = vrot.lane.b32.xlu0 %v5918, 64
    %v6072 = vpop.permute.xlu0 %6071
    %6073 = vrot.lane.b32.xlu0 %v5986, 64
    %v6074 = vpop.permute.xlu0 %6073
    %6075 = vrot.lane.b32.xlu0 %v6054, 64
    %v6076 = vpop.permute.xlu0 %6075
    %6083 = vrot.lane.b32.xlu0 %v5919, 96
    %v6084 = vpop.permute.xlu0 %6083
    %6085 = vrot.lane.b32.xlu0 %v5987, 96
    %v6086 = vpop.permute.xlu0 %6085
    %6087 = vrot.lane.b32.xlu0 %v6055, 96
    %v6088 = vpop.permute.xlu0 %6087
    %v6092 = vsel %vm1912, %v5916, %v6060
    %v6093 = vsel %vm1912, %v5984, %v6062
    %v6094 = vsel %vm1912, %v6052, %v6064
    %v6095 = vsel %vm2978, %v6092, %v6072
    %v6096 = vsel %vm2978, %v6093, %v6074
    %v6097 = vsel %vm2978, %v6094, %v6076
    %v6098 = vsel %vm2982, %v6095, %v6084
    %v6099 = vsel %vm2982, %v6096, %v6086
    %v6100 = vsel %vm2982, %v6097, %v6088
    %s6101 = scalar_lea.vmem %s7, 64
    %v6102 = vld [vmem:[%s6101] sm:$0xf]
    %v6103 = vld [vmem:[%s6101 + $0x4] sm:$0xf]
    %v6104 = vld [vmem:[%s6101 + $0x8] sm:$0xf]
    %v6105 = vld [vmem:[%s6101 + $0xc] sm:$0xf]
    %v6106 = vld [vmem:[%s6101 + $0x10] sm:$0xf]
    %v6107 = vld [vmem:[%s6101 + $0x14] sm:$0xf]
    %v6108 = vld [vmem:[%s6101 + $0x18] sm:$0xf]
    %v6109 = vld [vmem:[%s6101 + $0x1c] sm:$0xf]
    %v6110 = vld [vmem:[%s6101 + $0x20] sm:$0xf]
    %v6111 = vld [vmem:[%s6101 + $0x24] sm:$0xf]
    %v6112 = vld [vmem:[%s6101 + $0x28] sm:$0xf]
    %v6113 = vld [vmem:[%s6101 + $0x2c] sm:$0xf]
    %v6114 = vld [vmem:[%s6101 + $0x30] sm:$0xf]
    %v6115 = vld [vmem:[%s6101 + $0x34] sm:$0xf]
    %v6116 = vld [vmem:[%s6101 + $0x38] sm:$0xf]
    %v6117 = vld [vmem:[%s6101 + $0x3c] sm:$0xf]
    %v6118 = vpack.c.bf16 %v6099, %v6098
    %v6119 = vpack.c.bf16 %v6100, %v6100
    %v6136 = vunpack.c.l.b16 %v6102
    %v6137 = vunpack.c.l.b16 %v6103
    %v6138 = vunpack.c.l.b16 %v6104
    %v6139 = vunpack.c.l.b16 %v6105
    %v6140 = vunpack.c.l.b16 %v6106
    %v6141 = vunpack.c.l.b16 %v6107
    %v6142 = vunpack.c.l.b16 %v6108
    %v6143 = vunpack.c.l.b16 %v6109
    %v6144 = vunpack.c.l.b16 %v6110
    %v6145 = vunpack.c.l.b16 %v6111
    %v6146 = vunpack.c.l.b16 %v6112
    %v6147 = vunpack.c.l.b16 %v6113
    %v6148 = vunpack.c.l.b16 %v6114
    %v6149 = vunpack.c.l.b16 %v6115
    %v6150 = vunpack.c.l.b16 %v6116
    %v6151 = vunpack.c.l.b16 %v6117
    %v6152 = vpack.c.b16 %v6137, %v6136
    %v6153 = vpack.c.b16 %v6139, %v6138
    %v6154 = vpack.c.b16 %v6141, %v6140
    %v6155 = vpack.c.b16 %v6143, %v6142
    %v6156 = vpack.c.b16 %v6145, %v6144
    %v6157 = vpack.c.b16 %v6147, %v6146
    %v6158 = vpack.c.b16 %v6149, %v6148
    %v6159 = vpack.c.b16 %v6151, %v6150
    %6168 = vmatprep.subr.bf16.mxu0 0
    %6169 = vmatpush1.bf16.msra.mxu0 %v6152
    %6170 = vmatprep.subr.bf16.mxu0 0
    %6171 = vmatpush1.bf16.msra.mxu0 %v6153
    %6172 = vmatprep.subr.bf16.mxu0 0
    %6173 = vmatpush1.bf16.msra.mxu0 %v6154
    %6174 = vmatprep.subr.bf16.mxu0 0
    %6175 = vmatpush1.bf16.msra.mxu0 %v6155
    %6176 = vmatprep.subr.bf16.mxu0 0
    %6177 = vmatpush1.bf16.msra.mxu0 %v6156
    %6178 = vmatprep.subr.bf16.mxu0 0
    %6179 = vmatpush1.bf16.msra.mxu0 %v6157
    %6180 = vmatprep.subr.bf16.mxu0 0
    %6181 = vmatpush1.bf16.msra.mxu0 %v6158
    %6182 = vmatprep.subr.bf16.mxu0 0
    %6183 = vmatpush1.bf16.msra.mxu0 %v6159
    %6184 = vmatprep.subr.bf16.mxu0 0
    %6185 = vmatpush1.bf16.msra.mxu0 0
    %6186 = vmatprep.subr.bf16.mxu0 0
    %6187 = vmatpush1.bf16.msra.mxu0 0
    %6188 = vmatprep.subr.bf16.mxu0 0
    %6189 = vmatpush1.bf16.msra.mxu0 0
    %6190 = vmatprep.subr.bf16.mxu0 0
    %6191 = vmatpush1.bf16.msra.mxu0 0
    %6192 = vmatprep.subr.bf16.mxu0 0
    %6193 = vmatpush1.bf16.msra.mxu0 0
    %6194 = vmatprep.subr.bf16.mxu0 0
    %6195 = vmatpush1.bf16.msra.mxu0 0
    %6196 = vmatprep.subr.bf16.mxu0 0
    %6197 = vmatpush1.bf16.msra.mxu0 0
    %6198 = vmatprep.subr.bf16.mxu0 0
    %6199 = vmatpush1.bf16.msra.mxu0 0
    %6200 = vmatprep.mubr.bf16.mxu0 0
    %6201 = vmatmul.mubr.bf16.gmra.mrb[0].mxu0 %v6118
    %v6202 = vpop.f32.mrb[0].mxu0
    %v6203 = vadd.f32 %v3417, %v6202
    %v6204 = vpop.f32.mrb[0].mxu0
    %v6205 = vpop.f32.mrb[0].mxu0
    %v6206 = vadd.f32 %v3417, %v6205
    %v6207 = vpop.f32.mrb[0].mxu0
    %6208 = vmatprep.mubr.bf16.mxu0 0
    %6209 = vmatmul.mubr.bf16.gmra.mrb[0].mxu0 %v6119
    %v6210 = vpop.f32.mrb[0].mxu0
    %v6211 = vadd.f32 %v3417, %v6210
    %v6212 = vpop.f32.mrb[0].mxu0
    %v6213 = vpop.f32.mrb[0].mxu0
    %v6214 = vpop.f32.mrb[0].mxu0
    %6215 = vdwg.mxu0
    %v6216 = vadd.f32 %v3412, %v6203
    %v6217 = vadd.f32 %v3413, %v6206
    %v6218 = vadd.f32 %v3414, %v6211
    %6219 = vadd.xlane.f32.xlu0 %v6216
    %v6220 = vpop.xlane.xlu0 %6219
    %6221 = vadd.xlane.f32.xlu0 %v6217
    %v6222 = vpop.xlane.xlu0 %6221
    %6223 = vadd.xlane.f32.xlu0 %v6218
    %v6224 = vpop.xlane.xlu0 %6223
    %v6225 = vmul.f32 %v6220, %v194
    %v6226 = vmul.f32 %v6222, %v194
    %v6227 = vmul.f32 %v6224, %v194
    %v6228 = vsub.f32 %v6216, %v6225
    %v6229 = vsub.f32 %v6217, %v6226
    %v6230 = vsub.f32 %v6218, %v6227
    %v6231 = vmul.f32 %v6228, %v6228
    %v6232 = vmul.f32 %v6229, %v6229
    %v6233 = vmul.f32 %v6230, %v6230
    %6234 = vadd.xlane.f32.xlu0 %v6231
    %v6235 = vpop.xlane.xlu0 %6234
    %6236 = vadd.xlane.f32.xlu0 %v6232
    %v6237 = vpop.xlane.xlu0 %6236
    %6238 = vadd.xlane.f32.xlu0 %v6233
    %v6239 = vpop.xlane.xlu0 %6238
    %v6240 = vmul.f32 %v6235, %v194
    %v6241 = vmul.f32 %v6237, %v194
    %v6242 = vmul.f32 %v6239, %v194
    %v6243 = vadd.f32 %v6240, 1e-05
    %v6244 = vadd.f32 %v6241, 1e-05
    %v6245 = vadd.f32 %v6242, 1e-05
    %v6246 = vrsqrt.pop %v6243
    %v6247 = vrsqrt.pop %v6244
    %v6248 = vrsqrt.pop %v6245
    %v6249 = vmul.f32 %v6228, %v6246
    %v6250 = vmul.f32 %v6229, %v6247
    %v6251 = vmul.f32 %v6230, %v6248
    %v6252 = vmul.f32 %v6249, %v3418
    %v6253 = vmul.f32 %v6250, %v3418
    %v6254 = vmul.f32 %v6251, %v3418
    %v6255 = vadd.f32 %v6252, %v3419
    %v6256 = vadd.f32 %v6253, %v3419
    %v6257 = vadd.f32 %v6254, %v3419
    %s6258 = scalar_lea.vmem [#allocation5], 64
    %v6259 = vld [vmem:[%s6258] sm:$0xf]
    %v6260 = vld [vmem:[%s6258 + $0x4] sm:$0xf]
    %v6261 = vld [vmem:[%s6258 + $0x8] sm:$0xf]
    %v6262 = vld [vmem:[%s6258 + $0xc] sm:$0xf]
    %v6263 = vld [vmem:[%s6258 + $0x10] sm:$0xf]
    %v6264 = vld [vmem:[%s6258 + $0x14] sm:$0xf]
    %v6265 = vld [vmem:[%s6258 + $0x18] sm:$0xf]
    %v6266 = vld [vmem:[%s6258 + $0x1c] sm:$0xf]
    %v6267 = vld [vmem:[%s6258 + $0x20] sm:$0xf]
    %v6268 = vld [vmem:[%s6258 + $0x24] sm:$0xf]
    %v6269 = vld [vmem:[%s6258 + $0x28] sm:$0xf]
    %v6270 = vld [vmem:[%s6258 + $0x2c] sm:$0xf]
    %v6271 = vld [vmem:[%s6258 + $0x30] sm:$0xf]
    %v6272 = vld [vmem:[%s6258 + $0x34] sm:$0xf]
    %v6273 = vld [vmem:[%s6258 + $0x38] sm:$0xf]
    %v6274 = vld [vmem:[%s6258 + $0x3c] sm:$0xf]
    %v6275 = vpack.c.bf16 %v6256, %v6255
    %v6276 = vpack.c.bf16 %v6257, %v6257
    %v6293 = vunpack.c.l.b16 %v6259
    %v6294 = vunpack.c.l.b16 %v6260
    %v6295 = vunpack.c.l.b16 %v6261
    %v6296 = vunpack.c.l.b16 %v6262
    %v6297 = vunpack.c.l.b16 %v6263
    %v6298 = vunpack.c.l.b16 %v6264
    %v6299 = vunpack.c.l.b16 %v6265
    %v6300 = vunpack.c.l.b16 %v6266
    %v6301 = vunpack.c.l.b16 %v6267
    %v6302 = vunpack.c.l.b16 %v6268
    %v6303 = vunpack.c.l.b16 %v6269
    %v6304 = vunpack.c.l.b16 %v6270
    %v6305 = vunpack.c.l.b16 %v6271
    %v6306 = vunpack.c.l.b16 %v6272
    %v6307 = vunpack.c.l.b16 %v6273
    %v6308 = vunpack.c.l.b16 %v6274
    %v6309 = vpack.c.b16 %v6294, %v6293
    %v6310 = vpack.c.b16 %v6296, %v6295
    %v6311 = vpack.c.b16 %v6298, %v6297
    %v6312 = vpack.c.b16 %v6300, %v6299
    %v6313 = vpack.c.b16 %v6302, %v6301
    %v6314 = vpack.c.b16 %v6304, %v6303
    %v6315 = vpack.c.b16 %v6306, %v6305
    %v6316 = vpack.c.b16 %v6308, %v6307
    %6325 = vmatprep.subr.bf16.mxu0 0
    %6326 = vmatpush1.bf16.msra.mxu0 %v6309
    %6327 = vmatprep.subr.bf16.mxu0 0
    %6328 = vmatpush1.bf16.msra.mxu0 %v6310
    %6329 = vmatprep.subr.bf16.mxu0 0
    %6330 = vmatpush1.bf16.msra.mxu0 %v6311
    %6331 = vmatprep.subr.bf16.mxu0 0
    %6332 = vmatpush1.bf16.msra.mxu0 %v6312
    %6333 = vmatprep.subr.bf16.mxu0 0
    %6334 = vmatpush1.bf16.msra.mxu0 %v6313
    %6335 = vmatprep.subr.bf16.mxu0 0
    %6336 = vmatpush1.bf16.msra.mxu0 %v6314
    %6337 = vmatprep.subr.bf16.mxu0 0
    %6338 = vmatpush1.bf16.msra.mxu0 %v6315
    %6339 = vmatprep.subr.bf16.mxu0 0
    %6340 = vmatpush1.bf16.msra.mxu0 %v6316
    %6341 = vmatprep.subr.bf16.mxu0 0
    %6342 = vmatpush1.bf16.msra.mxu0 0
    %6343 = vmatprep.subr.bf16.mxu0 0
    %6344 = vmatpush1.bf16.msra.mxu0 0
    %6345 = vmatprep.subr.bf16.mxu0 0
    %6346 = vmatpush1.bf16.msra.mxu0 0
    %6347 = vmatprep.subr.bf16.mxu0 0
    %6348 = vmatpush1.bf16.msra.mxu0 0
    %6349 = vmatprep.subr.bf16.mxu0 0
    %6350 = vmatpush1.bf16.msra.mxu0 0
    %6351 = vmatprep.subr.bf16.mxu0 0
    %6352 = vmatpush1.bf16.msra.mxu0 0
    %6353 = vmatprep.subr.bf16.mxu0 0
    %6354 = vmatpush1.bf16.msra.mxu0 0
    %6355 = vmatprep.subr.bf16.mxu0 0
    %6356 = vmatpush1.bf16.msra.mxu0 0
    %6357 = vmatprep.mubr.bf16.mxu0 0
    %6358 = vmatmul.mubr.bf16.gmra.mrb[0].mxu0 %v6275
    %v6359 = vpop.f32.mrb[0].mxu0
    %v6360 = vadd.f32 %v3420, %v6359
    %v6361 = vpop.f32.mrb[0].mxu0
    %v6362 = vpop.f32.mrb[0].mxu0
    %v6363 = vadd.f32 %v3420, %v6362
    %v6364 = vpop.f32.mrb[0].mxu0
    %6365 = vmatprep.mubr.bf16.mxu0 0
    %6366 = vmatmul.mubr.bf16.gmra.mrb[0].mxu0 %v6276
    %v6367 = vpop.f32.mrb[0].mxu0
    %v6368 = vadd.f32 %v3420, %v6367
    %v6369 = vpop.f32.mrb[0].mxu0
    %v6370 = vpop.f32.mrb[0].mxu0
    %v6371 = vpop.f32.mrb[0].mxu0
    %6372 = vdwg.mxu0
    %v6373 = vmax.f32 %v6360, 0.0
    %v6374 = vmax.f32 %v6363, 0.0
    %v6375 = vmax.f32 %v6368, 0.0
    %s6376 = scalar_lea.vmem [#allocation7], 64
    %v6377 = vld [vmem:[%s6376] sm:$0xf]
    %v6378 = vld [vmem:[%s6376 + $0x4] sm:$0xf]
    %v6379 = vld [vmem:[%s6376 + $0x8] sm:$0xf]
    %v6380 = vld [vmem:[%s6376 + $0xc] sm:$0xf]
    %v6381 = vld [vmem:[%s6376 + $0x10] sm:$0xf]
    %v6382 = vld [vmem:[%s6376 + $0x14] sm:$0xf]
    %v6383 = vld [vmem:[%s6376 + $0x18] sm:$0xf]
    %v6384 = vld [vmem:[%s6376 + $0x1c] sm:$0xf]
    %v6385 = vld [vmem:[%s6376 + $0x20] sm:$0xf]
    %v6386 = vld [vmem:[%s6376 + $0x24] sm:$0xf]
    %v6387 = vld [vmem:[%s6376 + $0x28] sm:$0xf]
    %v6388 = vld [vmem:[%s6376 + $0x2c] sm:$0xf]
    %v6389 = vld [vmem:[%s6376 + $0x30] sm:$0xf]
    %v6390 = vld [vmem:[%s6376 + $0x34] sm:$0xf]
    %v6391 = vld [vmem:[%s6376 + $0x38] sm:$0xf]
    %v6392 = vld [vmem:[%s6376 + $0x3c] sm:$0xf]
    %v6393 = vpack.c.bf16 %v6374, %v6373
    %v6394 = vpack.c.bf16 %v6375, %v6375
    %v6411 = vunpack.c.l.b16 %v6377
    %v6412 = vunpack.c.l.b16 %v6378
    %v6413 = vunpack.c.l.b16 %v6379
    %v6414 = vunpack.c.l.b16 %v6380
    %v6415 = vunpack.c.l.b16 %v6381
    %v6416 = vunpack.c.l.b16 %v6382
    %v6417 = vunpack.c.l.b16 %v6383
    %v6418 = vunpack.c.l.b16 %v6384
    %v6419 = vunpack.c.l.b16 %v6385
    %v6420 = vunpack.c.l.b16 %v6386
    %v6421 = vunpack.c.l.b16 %v6387
    %v6422 = vunpack.c.l.b16 %v6388
    %v6423 = vunpack.c.l.b16 %v6389
    %v6424 = vunpack.c.l.b16 %v6390
    %v6425 = vunpack.c.l.b16 %v6391
    %v6426 = vunpack.c.l.b16 %v6392
    %v6427 = vpack.c.b16 %v6412, %v6411
    %v6428 = vpack.c.b16 %v6414, %v6413
    %v6429 = vpack.c.b16 %v6416, %v6415
    %v6430 = vpack.c.b16 %v6418, %v6417
    %v6431 = vpack.c.b16 %v6420, %v6419
    %v6432 = vpack.c.b16 %v6422, %v6421
    %v6433 = vpack.c.b16 %v6424, %v6423
    %v6434 = vpack.c.b16 %v6426, %v6425
    %6443 = vmatprep.subr.bf16.mxu0 0
    %6444 = vmatpush1.bf16.msra.mxu0 %v6427
    %6445 = vmatprep.subr.bf16.mxu0 0
    %6446 = vmatpush1.bf16.msra.mxu0 %v6428
    %6447 = vmatprep.subr.bf16.mxu0 0
    %6448 = vmatpush1.bf16.msra.mxu0 %v6429
    %6449 = vmatprep.subr.bf16.mxu0 0
    %6450 = vmatpush1.bf16.msra.mxu0 %v6430
    %6451 = vmatprep.subr.bf16.mxu0 0
    %6452 = vmatpush1.bf16.msra.mxu0 %v6431
    %6453 = vmatprep.subr.bf16.mxu0 0
    %6454 = vmatpush1.bf16.msra.mxu0 %v6432
    %6455 = vmatprep.subr.bf16.mxu0 0
    %6456 = vmatpush1.bf16.msra.mxu0 %v6433
    %6457 = vmatprep.subr.bf16.mxu0 0
    %6458 = vmatpush1.bf16.msra.mxu0 %v6434
    %6459 = vmatprep.subr.bf16.mxu0 0
    %6460 = vmatpush1.bf16.msra.mxu0 0
    %6461 = vmatprep.subr.bf16.mxu0 0
    %6462 = vmatpush1.bf16.msra.mxu0 0
    %6463 = vmatprep.subr.bf16.mxu0 0
    %6464 = vmatpush1.bf16.msra.mxu0 0
    %6465 = vmatprep.subr.bf16.mxu0 0
    %6466 = vmatpush1.bf16.msra.mxu0 0
    %6467 = vmatprep.subr.bf16.mxu0 0
    %6468 = vmatpush1.bf16.msra.mxu0 0
    %6469 = vmatprep.subr.bf16.mxu0 0
    %6470 = vmatpush1.bf16.msra.mxu0 0
    %6471 = vmatprep.subr.bf16.mxu0 0
    %6472 = vmatpush1.bf16.msra.mxu0 0
    %6473 = vmatprep.subr.bf16.mxu0 0
    %6474 = vmatpush1.bf16.msra.mxu0 0
    %6475 = vmatprep.mubr.bf16.mxu0 0
    %6476 = vmatmul.mubr.bf16.gmra.mrb[0].mxu0 %v6393
    %v6477 = vpop.f32.mrb[0].mxu0
    %v6478 = vpop.f32.mrb[0].mxu0
    %v6479 = vpop.f32.mrb[0].mxu0
    %v6480 = vpop.f32.mrb[0].mxu0
    %6481 = vmatprep.mubr.bf16.mxu0 0
    %6482 = vmatmul.mubr.bf16.gmra.mrb[0].mxu0 %v6394
    %v6483 = vpop.f32.mrb[0].mxu0
    %v6484 = vadd.f32 %v3421, %v6483
    %v6485 = vpop.f32.mrb[0].mxu0
    %v6486 = vpop.f32.mrb[0].mxu0
    %v6487 = vpop.f32.mrb[0].mxu0
    %6488 = vdwg.mxu0
    %v6489 = vadd.f32 %v6257, %v6484
    %6490 = vadd.xlane.f32.xlu0 %v6489
    %v6491 = vpop.xlane.xlu0 %6490
    %v6492 = vmul.f32 %v6491, %v194
    %v6493 = vsub.f32 %v6489, %v6492
    %v6494 = vmul.f32 %v6493, %v6493
    %6495 = vadd.xlane.f32.xlu0 %v6494
    %v6496 = vpop.xlane.xlu0 %6495
    %v6497 = vmul.f32 %v6496, %v194
    %v6498 = vadd.f32 %v6497, 1e-05
    %v6499 = vrsqrt.pop %v6498
    %v6500 = vmul.f32 %v6493, %v6499
    %v6501 = vmul.f32 %v6500, %v3422
    %v6502 = vadd.f32 %v6501, %v3423
    %v6503 = vld [vmem:[#allocation8] sm:$0xf]
    %v6504 = vld [vmem:[#allocation8 + $0x4] sm:$0xf]
    %v6505 = vld [vmem:[#allocation8 + $0x8] sm:$0xf]
    %v6506 = vld [vmem:[#allocation8 + $0xc] sm:$0xf]
    %v6507 = vld [vmem:[#allocation8 + $0x10] sm:$0xf]
    %v6508 = vld [vmem:[#allocation8 + $0x14] sm:$0xf]
    %v6509 = vld [vmem:[#allocation8 + $0x18] sm:$0xf]
    %v6510 = vld [vmem:[#allocation8 + $0x1c] sm:$0xf]
    %v6511 = vld [vmem:[#allocation8 + $0x20] sm:$0xf]
    %v6512 = vld [vmem:[#allocation8 + $0x24] sm:$0xf]
    %v6513 = vld [vmem:[#allocation8 + $0x28] sm:$0xf]
    %v6514 = vld [vmem:[#allocation8 + $0x2c] sm:$0xf]
    %v6515 = vld [vmem:[#allocation8 + $0x30] sm:$0xf]
    %v6516 = vld [vmem:[#allocation8 + $0x34] sm:$0xf]
    %v6517 = vld [vmem:[#allocation8 + $0x38] sm:$0xf]
    %v6518 = vld [vmem:[#allocation8 + $0x3c] sm:$0xf]
    %v6519 = vpack.c.bf16 %v6502, %v6502
    %v6520 = vld [vmem:[#allocation11 + $0x6] ss:$0 sm:$0xff]
    %v6537 = vunpack.c.l.b16 %v6503
    %v6538 = vunpack.c.l.b16 %v6504
    %v6539 = vunpack.c.l.b16 %v6505
    %v6540 = vunpack.c.l.b16 %v6506
    %v6541 = vunpack.c.l.b16 %v6507
    %v6542 = vunpack.c.l.b16 %v6508
    %v6543 = vunpack.c.l.b16 %v6509
    %v6544 = vunpack.c.l.b16 %v6510
    %v6545 = vunpack.c.l.b16 %v6511
    %v6546 = vunpack.c.l.b16 %v6512
    %v6547 = vunpack.c.l.b16 %v6513
    %v6548 = vunpack.c.l.b16 %v6514
    %v6549 = vunpack.c.l.b16 %v6515
    %v6550 = vunpack.c.l.b16 %v6516
    %v6551 = vunpack.c.l.b16 %v6517
    %v6552 = vunpack.c.l.b16 %v6518
    %v6553 = vpack.c.b16 %v6538, %v6537
    %v6554 = vpack.c.b16 %v6540, %v6539
    %v6555 = vpack.c.b16 %v6542, %v6541
    %v6556 = vpack.c.b16 %v6544, %v6543
    %v6557 = vpack.c.b16 %v6546, %v6545
    %v6558 = vpack.c.b16 %v6548, %v6547
    %v6559 = vpack.c.b16 %v6550, %v6549
    %v6560 = vpack.c.b16 %v6552, %v6551
    %6569 = vmatprep.subr.bf16.mxu0 0
    %6570 = vmatpush1.bf16.msra.mxu0 %v6553
    %6571 = vmatprep.subr.bf16.mxu0 0
    %6572 = vmatpush1.bf16.msra.mxu0 %v6554
    %6573 = vmatprep.subr.bf16.mxu0 0
    %6574 = vmatpush1.bf16.msra.mxu0 %v6555
    %6575 = vmatprep.subr.bf16.mxu0 0
    %6576 = vmatpush1.bf16.msra.mxu0 %v6556
    %6577 = vmatprep.subr.bf16.mxu0 0
    %6578 = vmatpush1.bf16.msra.mxu0 %v6557
    %6579 = vmatprep.subr.bf16.mxu0 0
    %6580 = vmatpush1.bf16.msra.mxu0 %v6558
    %6581 = vmatprep.subr.bf16.mxu0 0
    %6582 = vmatpush1.bf16.msra.mxu0 %v6559
    %6583 = vmatprep.subr.bf16.mxu0 0
    %6584 = vmatpush1.bf16.msra.mxu0 %v6560
    %6585 = vmatprep.subr.bf16.mxu0 0
    %6586 = vmatpush1.bf16.msra.mxu0 0
    %6587 = vmatprep.subr.bf16.mxu0 0
    %6588 = vmatpush1.bf16.msra.mxu0 0
    %6589 = vmatprep.subr.bf16.mxu0 0
    %6590 = vmatpush1.bf16.msra.mxu0 0
    %6591 = vmatprep.subr.bf16.mxu0 0
    %6592 = vmatpush1.bf16.msra.mxu0 0
    %6593 = vmatprep.subr.bf16.mxu0 0
    %6594 = vmatpush1.bf16.msra.mxu0 0
    %6595 = vmatprep.subr.bf16.mxu0 0
    %6596 = vmatpush1.bf16.msra.mxu0 0
    %6597 = vmatprep.subr.bf16.mxu0 0
    %6598 = vmatpush1.bf16.msra.mxu0 0
    %6599 = vmatprep.subr.bf16.mxu0 0
    %6600 = vmatpush1.bf16.msra.mxu0 0
    %6601 = vmatprep.mubr.bf16.mxu0 0
    %6602 = vmatmul.mubr.bf16.gmra.mrb[0].mxu0 %v6519
    %v6603 = vpop.f32.mrb[0].mxu0
    %v6604 = vadd.f32 %v6520, %v6603
    %v6605 = vpop.f32.mrb[0].mxu0
    %v6606 = vpop.f32.mrb[0].mxu0
    %v6607 = vpop.f32.mrb[0].mxu0
    %6608 = vdwg.mxu0
    %v6609 = vld [vmem:[#allocation11 + $0x7] ss:$0 sm:$0xff]
    %v6610 = vld [vmem:[#allocation11 + $0x18] ss:$0 sm:$0xff]
    %6611 = vadd.xlane.f32.xlu0 %v6604
    %v6612 = vpop.xlane.xlu0 %6611
    %v6613 = vmul.f32 %v6612, %v194
    %v6614 = vsub.f32 %v6604, %v6613
    %v6615 = vmul.f32 %v6614, %v6614
    %6616 = vadd.xlane.f32.xlu0 %v6615
    %v6617 = vpop.xlane.xlu0 %6616
    %v6618 = vmul.f32 %v6617, %v194
    %v6619 = vadd.f32 %v6618, 1e-05
    %v6620 = vrsqrt.pop %v6619
    %v6621 = vmul.f32 %v6614, %v6620
    %v6622 = vmul.f32 %v6621, %v6609
    %v6623 = vadd.f32 %v6622, %v6610
    %v6624 = vmax.f32 %v6623, 0.0
    %v6625 = vld [vmem:[#allocation10] sm:$0xf]
    %v6626 = vld [vmem:[#allocation10 + $0x4] sm:$0xf]
    %v6627 = vld [vmem:[#allocation10 + $0x8] sm:$0xf]
    %v6628 = vld [vmem:[#allocation10 + $0xc] sm:$0xf]
    %v6629 = vld [vmem:[#allocation10 + $0x10] sm:$0xf]
    %v6630 = vld [vmem:[#allocation10 + $0x14] sm:$0xf]
    %v6631 = vld [vmem:[#allocation10 + $0x18] sm:$0xf]
    %v6632 = vld [vmem:[#allocation10 + $0x1c] sm:$0xf]
    %v6633 = vld [vmem:[#allocation10 + $0x20] sm:$0xf]
    %v6634 = vld [vmem:[#allocation10 + $0x24] sm:$0xf]
    %v6635 = vld [vmem:[#allocation10 + $0x28] sm:$0xf]
    %v6636 = vld [vmem:[#allocation10 + $0x2c] sm:$0xf]
    %v6637 = vld [vmem:[#allocation10 + $0x30] sm:$0xf]
    %v6638 = vld [vmem:[#allocation10 + $0x34] sm:$0xf]
    %v6639 = vld [vmem:[#allocation10 + $0x38] sm:$0xf]
    %v6640 = vld [vmem:[#allocation10 + $0x3c] sm:$0xf]
    %v6641 = vpack.c.bf16 %v6624, %v6624
    %v6642 = vld [vmem:[#allocation11 + $0x19] ss:$0 sm:$0xff]
    %v6659 = vunpack.c.l.b16 %v6625
    %v6660 = vunpack.c.l.b16 %v6626
    %v6661 = vunpack.c.l.b16 %v6627
    %v6662 = vunpack.c.l.b16 %v6628
    %v6663 = vunpack.c.l.b16 %v6629
    %v6664 = vunpack.c.l.b16 %v6630
    %v6665 = vunpack.c.l.b16 %v6631
    %v6666 = vunpack.c.l.b16 %v6632
    %v6667 = vunpack.c.l.b16 %v6633
    %v6668 = vunpack.c.l.b16 %v6634
    %v6669 = vunpack.c.l.b16 %v6635
    %v6670 = vunpack.c.l.b16 %v6636
    %v6671 = vunpack.c.l.b16 %v6637
    %v6672 = vunpack.c.l.b16 %v6638
    %v6673 = vunpack.c.l.b16 %v6639
    %v6674 = vunpack.c.l.b16 %v6640
    %v6675 = vpack.c.b16 %v6660, %v6659
    %v6676 = vpack.c.b16 %v6662, %v6661
    %v6677 = vpack.c.b16 %v6664, %v6663
    %v6678 = vpack.c.b16 %v6666, %v6665
    %v6679 = vpack.c.b16 %v6668, %v6667
    %v6680 = vpack.c.b16 %v6670, %v6669
    %v6681 = vpack.c.b16 %v6672, %v6671
    %v6682 = vpack.c.b16 %v6674, %v6673
    %6691 = vmatprep.subr.bf16.mxu0 0
    %6692 = vmatpush1.bf16.msra.mxu0 %v6675
    %6693 = vmatprep.subr.bf16.mxu0 0
    %6694 = vmatpush1.bf16.msra.mxu0 %v6676
    %6695 = vmatprep.subr.bf16.mxu0 0
    %6696 = vmatpush1.bf16.msra.mxu0 %v6677
    %6697 = vmatprep.subr.bf16.mxu0 0
    %6698 = vmatpush1.bf16.msra.mxu0 %v6678
    %6699 = vmatprep.subr.bf16.mxu0 0
    %6700 = vmatpush1.bf16.msra.mxu0 %v6679
    %6701 = vmatprep.subr.bf16.mxu0 0
    %6702 = vmatpush1.bf16.msra.mxu0 %v6680
    %6703 = vmatprep.subr.bf16.mxu0 0
    %6704 = vmatpush1.bf16.msra.mxu0 %v6681
    %6705 = vmatprep.subr.bf16.mxu0 0
    %6706 = vmatpush1.bf16.msra.mxu0 %v6682
    %6707 = vmatprep.subr.bf16.mxu0 0
    %6708 = vmatpush1.bf16.msra.mxu0 0
    %6709 = vmatprep.subr.bf16.mxu0 0
    %6710 = vmatpush1.bf16.msra.mxu0 0
    %6711 = vmatprep.subr.bf16.mxu0 0
    %6712 = vmatpush1.bf16.msra.mxu0 0
    %6713 = vmatprep.subr.bf16.mxu0 0
    %6714 = vmatpush1.bf16.msra.mxu0 0
    %6715 = vmatprep.subr.bf16.mxu0 0
    %6716 = vmatpush1.bf16.msra.mxu0 0
    %6717 = vmatprep.subr.bf16.mxu0 0
    %6718 = vmatpush1.bf16.msra.mxu0 0
    %6719 = vmatprep.subr.bf16.mxu0 0
    %6720 = vmatpush1.bf16.msra.mxu0 0
    %6721 = vmatprep.subr.bf16.mxu0 0
    %6722 = vmatpush1.bf16.msra.mxu0 0
    %6723 = vmatprep.mubr.bf16.mxu0 0
    %6724 = vmatmul.mubr.bf16.gmra.mrb[0].mxu0 %v6641
    %v6725 = vpop.f32.mrb[0].mxu0
    %v6726 = vadd.f32 %v6642, %v6725
    %v6727 = vpop.f32.mrb[0].mxu0
    %v6728 = vpop.f32.mrb[0].mxu0
    %v6729 = vpop.f32.mrb[0].mxu0
    %6730 = vdwg.mxu0
    %6731 = vst [vmem:[#allocation13] sm:$0xff] %v6726
    // Predicated region
    $region78: #{forward.1} parent=1 // pred_check
      _
    $region79: #{forward.1} parent=1 // pred_check_branch
      %6733 = sbr.rel (0) target = $region81
    $region80: #{forward.1} parent=1 // pred_region
      %s6735 = ssub.s32 128, 128
      %6736 = vsyncadd [#allocation4], %s6735
      %s6738 = sshll.u32 [#allocation13], 4
      %s6739 = int_to_ptr.vmem [resolvable:$true] %s6738
      %6741 = dma.vmem_to_hbm [thread:$0]  %s6739, 128, %s13, [#allocation4]
    $region81: #{forward.1} parent=1 // pred_fallthru
      _
    // Predicated region
    $region82: #{forward.1} parent=1 // pred_check
      _
    $region83: #{forward.1} parent=1 // pred_check_branch
      %6743 = sbr.rel (0) target = $region85
    $region84: #{forward.1} parent=1 // pred_region
      %6744 = dma.done [#allocation4], 128
    $region85: #{forward.1} parent=1 // pred_fallthru
      _
    %6745 = vsyncpa [#allocation3], 1
    %6746 = vsyncpa [#allocation6], 1
    %6747 = vsyncpa [#allocation9], 1
    %6748 = vsyncpa [#allocation12], 1
    %6749 = vsyncpa [#allocation4], 1

</llo_original>
